<compile_context>
chip_gen: v7x
topology: tpu7x:2x2x1
jax: 0.10.0
libtpu: 0.0.40
codegen_flags: <defaults>
</compile_context>

<pallas_src>
import functools

import jax
import jax.numpy as jnp
import numpy as np
from jax.experimental import pallas as pl
from jax.experimental.pallas import tpu as pltpu

_DILATIONS = (6, 12, 18)
_PAD = max(_DILATIONS)          # spatial zero pad (conv padding == dilation)


def _round_up(n, m):
    return ((n + m - 1) // m) * m


def _vmem_capacity_bytes():
    try:
        return int(pltpu.get_tpu_info().vmem_capacity_bytes)
    except Exception:
        return 64 * 1024 * 1024  # conservative (v7x per-TC VMEM)


def _pick_row_tile(H, W, max_rows):
    """Largest divisor of H whose tile (tr*W pixel-rows) stays <= max_rows,
    preferring >=2 row tiles so the grid shards across megacore cores."""
    best = 1
    for tr in range(1, H + 1):
        if H % tr == 0 and tr * W <= max_rows:
            best = tr
    if best == H and H > 1:
        for tr in range(H - 1, 0, -1):
            if H % tr == 0 and tr * W <= max_rows:
                return tr
    # NOTE: if W alone exceeds max_rows this returns tr=1 (rows = W > max_rows);
    # still correct.  TODO(synk): split along W with a column halo for huge W.
    return best


def _vmem_limit_bytes(Hp, Wp, Cp, tr, W, cap):
    """Scoped-VMEM budget from the actual resident blocks + f32 temporaries."""
    rows = tr * W
    need = (Hp * Wp * Cp * 2              # padded image, single-buffered bf16
            + 32 * Cp * Cp * 2            # w1 + wd(27) + wm(4), single-buffered
            + 2 * (5 * Cp) * 4            # biases + per-batch global row (tiny)
            + 2 * rows * Cp * 4           # double-buffered f32 output blocks
            + 6 * rows * Cp * 4)          # live f32 temporaries in the tap loop
    need = int(need * 1.2) + (2 << 20)    # headroom for compiler scratch
    return max(32 << 20, min(need, min(100 << 20, cap)))


# ----------------------------------------------------------------------------
# Fused kernel: all branches + out_merge for one (batch, row-tile) block.
# ----------------------------------------------------------------------------
def _aspp_fused_kernel(xp_ref, gb_ref, w1_ref, b1_ref, wd_ref, bd_ref, wm_ref,
                       o_ref, *, tr, w, pad, dilations):
    i = pl.program_id(1)
    r0 = i * tr                              # first output row of this tile
    cp = o_ref.shape[-1]                     # padded channel count (lane-dense)
    rows = tr * w

    def tap(dy, dx):
        # Shifted (tr, w) window of the zero-padded image, flattened to rows.
        # Row start is dynamic (grid position); column start is a static int.
        sl = xp_ref[pl.ds(pad + r0 + dy, tr), pl.ds(pad + dx, w), :]
        return sl.reshape(rows, cp)

    # ---- branch 1: 1x1 conv + bias + ReLU, then its slice of out_merge ------
    a1 = jnp.dot(tap(0, 0), w1_ref[...], preferred_element_type=jnp.float32)
    a1 = jnp.maximum(a1 + b1_ref[...], 0.0)
    # accumulator starts from the per-batch global-branch merge contribution
    acc = gb_ref[...] + jnp.dot(a1.astype(jnp.bfloat16), wm_ref[0],
                                preferred_element_type=jnp.float32)

    # ---- branches 2-4: dilated 3x3 convs as 9 shifted matmuls each ----------
    for j, d in enumerate(dilations):
        pre = None
        for ky in range(3):
            for kx in range(3):
                contrib = jnp.dot(tap((ky - 1) * d, (kx - 1) * d),
                                  wd_ref[j * 9 + ky * 3 + kx],
                                  preferred_element_type=jnp.float32)
                pre = contrib if pre is None else pre + contrib
        a = jnp.maximum(pre + bd_ref[j], 0.0)
        acc = acc + jnp.dot(a.astype(jnp.bfloat16), wm_ref[j + 1],
                            preferred_element_type=jnp.float32)

    o_ref[...] = acc.reshape(tr, w, cp).astype(o_ref.dtype)


# ----------------------------------------------------------------------------
# ASPP forward (single fused pallas_call)
# ----------------------------------------------------------------------------
def aspp_forward(x_nchw, kp, *, out_layout="NCHW", out_dtype=jnp.float32):
    B, C, H, W = x_nchw.shape
    Cp = kp["w1"].shape[0]                  # channels padded to a multiple of 128

    # Global branch (tiny): pooled feature -> 1x1 conv -> ReLU -> out_merge slice.
    # Mean is taken from the NCHW input directly (no read of the transposed copy).
    g = jnp.mean(x_nchw, axis=(2, 3))                               # (B, C)
    g = jnp.maximum(g @ kp["w0"] + kp["b0"][None, :], 0.0)
    gb = g @ kp["wm0"]                                              # (B, C)
    gb = jnp.pad(gb, ((0, 0), (0, Cp - C)))[:, None, :].astype(jnp.float32)

    # One fused pass: NCHW -> NHWC transpose + bf16 cast + spatial/channel pad.
    # Width rounded to a sublane multiple (extra columns are never read).
    Hp = H + 2 * _PAD
    Wp = _round_up(W + 2 * _PAD, 8)
    xp = jnp.pad(
        jnp.transpose(x_nchw, (0, 2, 3, 1)).astype(jnp.bfloat16),
        ((0, 0), (_PAD, _PAD), (_PAD, Wp - W - _PAD), (0, Cp - C)))

    cap = _vmem_capacity_bytes()
    max_rows = 2048 if cap >= (100 << 20) else 1024   # v5e/v6e bigger, v7x smaller
    tr = _pick_row_tile(H, W, max_rows)
    vmem_limit = _vmem_limit_bytes(Hp, Wp, Cp, tr, W, cap)

    kern = functools.partial(_aspp_fused_kernel, tr=tr, w=W, pad=_PAD,
                             dilations=_DILATIONS)

    # Single-buffer operands whose block never changes (weights/biases) or
    # changes only on the slow batch axis (the padded image): double-buffering
    # them only duplicates the dominant VMEM residency.
    single = pl.Buffered(1)

    out = pl.pallas_call(
        kern,
        out_shape=jax.ShapeDtypeStruct((B, H, W, Cp), out_dtype),
        grid_spec=pltpu.PrefetchScalarGridSpec(
            num_scalar_prefetch=0,
            grid=(B, H // tr),
            in_specs=[
                # padded image: fetched once and kept resident per batch element
                pl.BlockSpec((None, Hp, Wp, Cp), lambda b, i: (b, 0, 0, 0),
                             pipeline_mode=single),
                # per-batch global-branch bias row (already through out_merge)
                pl.BlockSpec((None, 1, Cp), lambda b, i: (b, 0, 0)),
                # weights / biases: constant index -> resident in VMEM
                pl.BlockSpec((Cp, Cp), lambda b, i: (0, 0), pipeline_mode=single),
                pl.BlockSpec((1, Cp), lambda b, i: (0, 0), pipeline_mode=single),
                pl.BlockSpec((27, Cp, Cp), lambda b, i: (0, 0, 0),
                             pipeline_mode=single),
                pl.BlockSpec((3, 1, Cp), lambda b, i: (0, 0, 0),
                             pipeline_mode=single),
                pl.BlockSpec((4, Cp, Cp), lambda b, i: (0, 0, 0),
                             pipeline_mode=single),
            ],
            out_specs=pl.BlockSpec((None, tr, W, Cp), lambda b, i: (b, i, 0, 0)),
        ),
        compiler_params=pltpu.CompilerParams(
            dimension_semantics=("parallel", "parallel"),
            vmem_limit_bytes=vmem_limit),
    )(xp, gb, kp["w1"], kp["b1"], kp["wd"], kp["bd"], kp["wm"])

    if Cp != C:                                  # drop channel padding (no-op at C%128==0)
        out = out[..., :C]
    if out_layout == "NHWC":                     # avoids the final HBM transpose pass
        return out
    return jnp.transpose(out, (0, 3, 1, 2))      # NCHW, matching the PyTorch module


# ----------------------------------------------------------------------------
# Parameter init (deterministic, kaiming-normal like PyTorch's _init_weight)
# ----------------------------------------------------------------------------
def init_params(key, C):
    ks = jax.random.split(key, 12)

    def kaiming(k, shape):                       # torch layout (co, ci, kh, kw)
        fan_in = shape[1] * shape[2] * shape[3]
        return jax.random.normal(k, shape, jnp.float32) * jnp.sqrt(2.0 / fan_in)

    def bias(k, fan_in):
        bound = 1.0 / jnp.sqrt(fan_in)
        return jax.random.uniform(k, (C,), jnp.float32, -bound, bound)

    p = {}
    p["w0_t"] = kaiming(ks[0], (C, C, 1, 1)); p["b0"] = bias(ks[1], C)
    p["w1_t"] = kaiming(ks[2], (C, C, 1, 1)); p["b1"] = bias(ks[3], C)
    p["w2_t"] = kaiming(ks[4], (C, C, 3, 3)); p["b2"] = bias(ks[5], 9 * C)
    p["w3_t"] = kaiming(ks[6], (C, C, 3, 3)); p["b3"] = bias(ks[7], 9 * C)
    p["w4_t"] = kaiming(ks[8], (C, C, 3, 3)); p["b4"] = bias(ks[9], 9 * C)
    p["wm_t"] = kaiming(ks[10], (C, 5 * C, 1, 1))          # out_merge, bias=False
    return p


def prep_kernel_params(p, C):
    """Matmul-layout, channel-padded (to 128 lanes), bf16 operands for the kernel."""
    Cp = _round_up(C, 128)

    def pad2(a):                                  # (C, C) -> (Cp, Cp)
        return jnp.pad(a, ((0, Cp - C), (0, Cp - C)))

    def pad_row(v):                               # (C,) -> (1, Cp)
        return jnp.pad(v, (0, Cp - C))[None, :]

    wm_mat = p["wm_t"][:, :, 0, 0].T              # (5C, C); row blocks = [g,b1,b2,b3,b4]
    kp = {
        # global branch (tiny; stays f32 / plain JAX)
        "w0": p["w0_t"][:, :, 0, 0].T,            # (C, C), ci -> co
        "b0": p["b0"],
        "wm0": wm_mat[0:C],                       # (C, C)
        # fused-kernel operands
        "w1": pad2(p["w1_t"][:, :, 0, 0].T).astype(jnp.bfloat16),      # (Cp, Cp)
        "b1": pad_row(p["b1"]).astype(jnp.float32),                    # (1, Cp)
        "bd": jnp.stack([pad_row(p["b2"]), pad_row(p["b3"]),
                         pad_row(p["b4"])], 0).astype(jnp.float32),    # (3, 1, Cp)
        "wm": jnp.stack([pad2(wm_mat[(k + 1) * C:(k + 2) * C])
                         for k in range(4)], 0).astype(jnp.bfloat16),  # (4, Cp, Cp)
    }
    taps = []
    for name in ("w2_t", "w3_t", "w4_t"):
        wt = p[name]                              # (co, ci, 3, 3)
        for ky in range(3):
            for kx in range(3):
                taps.append(pad2(wt[:, :, ky, kx].T))                  # (Cp, Cp) ci->co
    kp["wd"] = jnp.stack(taps, 0).astype(jnp.bfloat16)                 # (27, Cp, Cp)
    return kp


# ----------------------------------------------------------------------------
# Pure-JAX reference (lax.conv, f32) for validation
# ----------------------------------------------------------------------------
def aspp_reference(x_nchw, p):
    def conv(x, w, b, dil):
        k = w.shape[-1]
        padv = dil if k == 3 else 0
        y = jax.lax.conv_general_dilated(
            x, w, window_strides=(1, 1), padding=[(padv, padv), (padv, padv)],
            rhs_dilation=(dil, dil),
            dimension_numbers=("NCHW", "OIHW", "NCHW"))
        if b is not None:
            y = y + b[None, :, None, None]
        return y

    B, C, H, W = x_nchw.shape
    g = jnp.mean(x_nchw, axis=(2, 3), keepdims=True)
    g = jax.nn.relu(conv(g, p["w0_t"], p["b0"], 1))
    g = jnp.broadcast_to(g, (B, C, H, W))
    b1 = jax.nn.relu(conv(x_nchw, p["w1_t"], p["b1"], 1))
    b2 = jax.nn.relu(conv(x_nchw, p["w2_t"], p["b2"], 6))
    b3 = jax.nn.relu(conv(x_nchw, p["w3_t"], p["b3"], 12))
    b4 = jax.nn.relu(conv(x_nchw, p["w4_t"], p["b4"], 18))
    cat = jnp.concatenate([g, b1, b2, b3, b4], axis=1)
    return conv(cat, p["wm_t"], None, 1)


# ----------------------------------------------------------------------------
if __name__ == "__main__":
    B, C, H, W = 2, 32, 16, 16  # small test shapes; C plays the role of out_channels
    key = jax.random.PRNGKey(0)
    k_x, k_p = jax.random.split(key)
    x = jax.random.normal(k_x, (B, C, H, W), jnp.float32)
    params = init_params(k_p, C)
    kparams = prep_kernel_params(params, C)

    out = jax.jit(aspp_forward)(x, kparams)
    out = jax.block_until_ready(out)
    assert out.shape == (B, C, H, W)

    ref = jax.block_until_ready(jax.jit(aspp_reference)(x, params))
    # bf16 MXU operands with f32 accumulation -> slightly looser atol than pure f32
    np.testing.assert_allclose(np.asarray(out), np.asarray(ref), rtol=5e-2, atol=1e-1)

    print("KERNEL_OK")
</pallas_src>

<mosaic_0001>
module attributes {stable_mosaic.version = 11 : i64} {
  func.func @_aspp_fused_kernel(%arg0: i32, %arg1: i32, %arg2: memref<1x52x56x128xbf16, #tpu.memory_space<vmem>>, %arg3: memref<1x1x128xf32, #tpu.memory_space<vmem>>, %arg4: memref<128x128xbf16, #tpu.memory_space<vmem>>, %arg5: memref<1x128xf32, #tpu.memory_space<vmem>>, %arg6: memref<27x128x128xbf16, #tpu.memory_space<vmem>>, %arg7: memref<3x1x128xf32, #tpu.memory_space<vmem>>, %arg8: memref<4x128x128xbf16, #tpu.memory_space<vmem>>, %arg9: memref<1x8x16x128xf32, #tpu.memory_space<vmem>>) attributes {dimension_semantics = [#tpu.dimension_semantics<parallel>, #tpu.dimension_semantics<parallel>], iteration_bounds = array<i64: 2, 2>, scalar_prefetch = 0 : i64, scratch_operands = 0 : i64, tpu.core_type = #tpu.core_type<tc>, window_params = [{pipeline_mode = #tpu.pipeline_mode<synchronous>, transform_indices = @transform_0, window_bounds = array<i64: 1, 52, 56, 128>}, {transform_indices = @transform_1, window_bounds = array<i64: 1, 1, 128>}, {pipeline_mode = #tpu.pipeline_mode<synchronous>, transform_indices = @transform_2, window_bounds = array<i64: 128, 128>}, {pipeline_mode = #tpu.pipeline_mode<synchronous>, transform_indices = @transform_3, window_bounds = array<i64: 1, 128>}, {pipeline_mode = #tpu.pipeline_mode<synchronous>, transform_indices = @transform_4, window_bounds = array<i64: 27, 128, 128>}, {pipeline_mode = #tpu.pipeline_mode<synchronous>, transform_indices = @transform_5, window_bounds = array<i64: 3, 1, 128>}, {pipeline_mode = #tpu.pipeline_mode<synchronous>, transform_indices = @transform_6, window_bounds = array<i64: 4, 128, 128>}, {transform_indices = @transform_7, window_bounds = array<i64: 1, 8, 16, 128>}]} {
    %c8_i32 = arith.constant 8 : i32
    %0 = arith.muli %arg1, %c8_i32 : i32
    %c18_i32 = arith.constant 18 : i32
    %1 = arith.addi %c18_i32, %0 : i32
    %c0_i32 = arith.constant 0 : i32
    %2 = arith.addi %1, %c0_i32 : i32
    %c0 = arith.constant 0 : index
    %3 = arith.index_cast %2 : i32 to index
    %c18 = arith.constant 18 : index
    %c0_0 = arith.constant 0 : index
    %4 = vector.load %arg2[%c0, %3, %c18, %c0_0] : memref<1x52x56x128xbf16, #tpu.memory_space<vmem>>, vector<1x8x16x128xbf16>
    %5 = vector.shape_cast %4 : vector<1x8x16x128xbf16> to vector<8x16x128xbf16>
    %6 = vector.shape_cast %5 : vector<8x16x128xbf16> to vector<128x128xbf16>
    %c0_1 = arith.constant 0 : index
    %c0_2 = arith.constant 0 : index
    %7 = vector.load %arg4[%c0_1, %c0_2] : memref<128x128xbf16, #tpu.memory_space<vmem>>, vector<128x128xbf16>
    %cst = arith.constant dense<0.000000e+00> : vector<128x128xf32>
    %8 = tpu.matmul %6, %7, %cst {dimension_numbers = #tpu.dot_dimension_numbers<[1], [0], [0], [1], [0, 0, 1, 1], [], []>} : vector<128x128xbf16>, vector<128x128xbf16>, vector<128x128xf32> -> vector<128x128xf32>
    %c0_3 = arith.constant 0 : index
    %c0_4 = arith.constant 0 : index
    %9 = vector.load %arg5[%c0_3, %c0_4] : memref<1x128xf32, #tpu.memory_space<vmem>>, vector<1x128xf32>
    %10 = vector.broadcast %9 : vector<1x128xf32> to vector<128x128xf32>
    %11 = arith.addf %8, %10 : vector<128x128xf32>
    %cst_5 = arith.constant 0.000000e+00 : f32
    %12 = vector.broadcast %cst_5 : f32 to vector<128x128xf32>
    %13 = arith.maximumf %11, %12 : vector<128x128xf32>
    %c0_6 = arith.constant 0 : index
    %c0_7 = arith.constant 0 : index
    %c0_8 = arith.constant 0 : index
    %14 = vector.load %arg3[%c0_6, %c0_7, %c0_8] : memref<1x1x128xf32, #tpu.memory_space<vmem>>, vector<1x1x128xf32>
    %15 = vector.shape_cast %14 : vector<1x1x128xf32> to vector<1x128xf32>
    %16 = arith.truncf %13 : vector<128x128xf32> to vector<128x128xbf16>
    %c0_9 = arith.constant 0 : index
    %c0_10 = arith.constant 0 : index
    %c0_11 = arith.constant 0 : index
    %17 = vector.load %arg8[%c0_9, %c0_10, %c0_11] : memref<4x128x128xbf16, #tpu.memory_space<vmem>>, vector<1x128x128xbf16>
    %18 = vector.shape_cast %17 : vector<1x128x128xbf16> to vector<128x128xbf16>
    %cst_12 = arith.constant dense<0.000000e+00> : vector<128x128xf32>
    %19 = tpu.matmul %16, %18, %cst_12 {dimension_numbers = #tpu.dot_dimension_numbers<[1], [0], [0], [1], [0, 0, 1, 1], [], []>} : vector<128x128xbf16>, vector<128x128xbf16>, vector<128x128xf32> -> vector<128x128xf32>
    %20 = vector.broadcast %15 : vector<1x128xf32> to vector<128x128xf32>
    %21 = arith.addf %20, %19 : vector<128x128xf32>
    %c18_i32_13 = arith.constant 18 : i32
    %22 = arith.addi %c18_i32_13, %0 : i32
    %c-6_i32 = arith.constant -6 : i32
    %23 = arith.addi %22, %c-6_i32 : i32
    %c0_14 = arith.constant 0 : index
    %24 = arith.index_cast %23 : i32 to index
    %c12 = arith.constant 12 : index
    %c0_15 = arith.constant 0 : index
    %25 = vector.load %arg2[%c0_14, %24, %c12, %c0_15] : memref<1x52x56x128xbf16, #tpu.memory_space<vmem>>, vector<1x8x16x128xbf16>
    %26 = vector.shape_cast %25 : vector<1x8x16x128xbf16> to vector<8x16x128xbf16>
    %27 = vector.shape_cast %26 : vector<8x16x128xbf16> to vector<128x128xbf16>
    %c0_16 = arith.constant 0 : index
    %c0_17 = arith.constant 0 : index
    %c0_18 = arith.constant 0 : index
    %28 = vector.load %arg6[%c0_16, %c0_17, %c0_18] : memref<27x128x128xbf16, #tpu.memory_space<vmem>>, vector<1x128x128xbf16>
    %29 = vector.shape_cast %28 : vector<1x128x128xbf16> to vector<128x128xbf16>
    %cst_19 = arith.constant dense<0.000000e+00> : vector<128x128xf32>
    %30 = tpu.matmul %27, %29, %cst_19 {dimension_numbers = #tpu.dot_dimension_numbers<[1], [0], [0], [1], [0, 0, 1, 1], [], []>} : vector<128x128xbf16>, vector<128x128xbf16>, vector<128x128xf32> -> vector<128x128xf32>
    %c18_i32_20 = arith.constant 18 : i32
    %31 = arith.addi %c18_i32_20, %0 : i32
    %c-6_i32_21 = arith.constant -6 : i32
    %32 = arith.addi %31, %c-6_i32_21 : i32
    %c0_22 = arith.constant 0 : index
    %33 = arith.index_cast %32 : i32 to index
    %c18_23 = arith.constant 18 : index
    %c0_24 = arith.constant 0 : index
    %34 = vector.load %arg2[%c0_22, %33, %c18_23, %c0_24] : memref<1x52x56x128xbf16, #tpu.memory_space<vmem>>, vector<1x8x16x128xbf16>
    %35 = vector.shape_cast %34 : vector<1x8x16x128xbf16> to vector<8x16x128xbf16>
    %36 = vector.shape_cast %35 : vector<8x16x128xbf16> to vector<128x128xbf16>
    %c1 = arith.constant 1 : index
    %c0_25 = arith.constant 0 : index
    %c0_26 = arith.constant 0 : index
    %37 = vector.load %arg6[%c1, %c0_25, %c0_26] : memref<27x128x128xbf16, #tpu.memory_space<vmem>>, vector<1x128x128xbf16>
    %38 = vector.shape_cast %37 : vector<1x128x128xbf16> to vector<128x128xbf16>
    %cst_27 = arith.constant dense<0.000000e+00> : vector<128x128xf32>
    %39 = tpu.matmul %36, %38, %cst_27 {dimension_numbers = #tpu.dot_dimension_numbers<[1], [0], [0], [1], [0, 0, 1, 1], [], []>} : vector<128x128xbf16>, vector<128x128xbf16>, vector<128x128xf32> -> vector<128x128xf32>
    %40 = arith.addf %30, %39 : vector<128x128xf32>
    %c18_i32_28 = arith.constant 18 : i32
    %41 = arith.addi %c18_i32_28, %0 : i32
    %c-6_i32_29 = arith.constant -6 : i32
    %42 = arith.addi %41, %c-6_i32_29 : i32
    %c0_30 = arith.constant 0 : index
    %43 = arith.index_cast %42 : i32 to index
    %c24 = arith.constant 24 : index
    %c0_31 = arith.constant 0 : index
    %44 = vector.load %arg2[%c0_30, %43, %c24, %c0_31] : memref<1x52x56x128xbf16, #tpu.memory_space<vmem>>, vector<1x8x16x128xbf16>
    %45 = vector.shape_cast %44 : vector<1x8x16x128xbf16> to vector<8x16x128xbf16>
    %46 = vector.shape_cast %45 : vector<8x16x128xbf16> to vector<128x128xbf16>
    %c2 = arith.constant 2 : index
    %c0_32 = arith.constant 0 : index
    %c0_33 = arith.constant 0 : index
    %47 = vector.load %arg6[%c2, %c0_32, %c0_33] : memref<27x128x128xbf16, #tpu.memory_space<vmem>>, vector<1x128x128xbf16>
    %48 = vector.shape_cast %47 : vector<1x128x128xbf16> to vector<128x128xbf16>
    %cst_34 = arith.constant dense<0.000000e+00> : vector<128x128xf32>
    %49 = tpu.matmul %46, %48, %cst_34 {dimension_numbers = #tpu.dot_dimension_numbers<[1], [0], [0], [1], [0, 0, 1, 1], [], []>} : vector<128x128xbf16>, vector<128x128xbf16>, vector<128x128xf32> -> vector<128x128xf32>
    %50 = arith.addf %40, %49 : vector<128x128xf32>
    %c18_i32_35 = arith.constant 18 : i32
    %51 = arith.addi %c18_i32_35, %0 : i32
    %c0_i32_36 = arith.constant 0 : i32
    %52 = arith.addi %51, %c0_i32_36 : i32
    %c0_37 = arith.constant 0 : index
    %53 = arith.index_cast %52 : i32 to index
    %c12_38 = arith.constant 12 : index
    %c0_39 = arith.constant 0 : index
    %54 = vector.load %arg2[%c0_37, %53, %c12_38, %c0_39] : memref<1x52x56x128xbf16, #tpu.memory_space<vmem>>, vector<1x8x16x128xbf16>
    %55 = vector.shape_cast %54 : vector<1x8x16x128xbf16> to vector<8x16x128xbf16>
    %56 = vector.shape_cast %55 : vector<8x16x128xbf16> to vector<128x128xbf16>
    %c3 = arith.constant 3 : index
    %c0_40 = arith.constant 0 : index
    %c0_41 = arith.constant 0 : index
    %57 = vector.load %arg6[%c3, %c0_40, %c0_41] : memref<27x128x128xbf16, #tpu.memory_space<vmem>>, vector<1x128x128xbf16>
    %58 = vector.shape_cast %57 : vector<1x128x128xbf16> to vector<128x128xbf16>
    %cst_42 = arith.constant dense<0.000000e+00> : vector<128x128xf32>
    %59 = tpu.matmul %56, %58, %cst_42 {dimension_numbers = #tpu.dot_dimension_numbers<[1], [0], [0], [1], [0, 0, 1, 1], [], []>} : vector<128x128xbf16>, vector<128x128xbf16>, vector<128x128xf32> -> vector<128x128xf32>
    %60 = arith.addf %50, %59 : vector<128x128xf32>
    %c18_i32_43 = arith.constant 18 : i32
    %61 = arith.addi %c18_i32_43, %0 : i32
    %c0_i32_44 = arith.constant 0 : i32
    %62 = arith.addi %61, %c0_i32_44 : i32
    %c0_45 = arith.constant 0 : index
    %63 = arith.index_cast %62 : i32 to index
    %c18_46 = arith.constant 18 : index
    %c0_47 = arith.constant 0 : index
    %64 = vector.load %arg2[%c0_45, %63, %c18_46, %c0_47] : memref<1x52x56x128xbf16, #tpu.memory_space<vmem>>, vector<1x8x16x128xbf16>
    %65 = vector.shape_cast %64 : vector<1x8x16x128xbf16> to vector<8x16x128xbf16>
    %66 = vector.shape_cast %65 : vector<8x16x128xbf16> to vector<128x128xbf16>
    %c4 = arith.constant 4 : index
    %c0_48 = arith.constant 0 : index
    %c0_49 = arith.constant 0 : index
    %67 = vector.load %arg6[%c4, %c0_48, %c0_49] : memref<27x128x128xbf16, #tpu.memory_space<vmem>>, vector<1x128x128xbf16>
    %68 = vector.shape_cast %67 : vector<1x128x128xbf16> to vector<128x128xbf16>
    %cst_50 = arith.constant dense<0.000000e+00> : vector<128x128xf32>
    %69 = tpu.matmul %66, %68, %cst_50 {dimension_numbers = #tpu.dot_dimension_numbers<[1], [0], [0], [1], [0, 0, 1, 1], [], []>} : vector<128x128xbf16>, vector<128x128xbf16>, vector<128x128xf32> -> vector<128x128xf32>
    %70 = arith.addf %60, %69 : vector<128x128xf32>
    %c18_i32_51 = arith.constant 18 : i32
    %71 = arith.addi %c18_i32_51, %0 : i32
    %c0_i32_52 = arith.constant 0 : i32
    %72 = arith.addi %71, %c0_i32_52 : i32
    %c0_53 = arith.constant 0 : index
    %73 = arith.index_cast %72 : i32 to index
    %c24_54 = arith.constant 24 : index
    %c0_55 = arith.constant 0 : index
    %74 = vector.load %arg2[%c0_53, %73, %c24_54, %c0_55] : memref<1x52x56x128xbf16, #tpu.memory_space<vmem>>, vector<1x8x16x128xbf16>
    %75 = vector.shape_cast %74 : vector<1x8x16x128xbf16> to vector<8x16x128xbf16>
    %76 = vector.shape_cast %75 : vector<8x16x128xbf16> to vector<128x128xbf16>
    %c5 = arith.constant 5 : index
    %c0_56 = arith.constant 0 : index
    %c0_57 = arith.constant 0 : index
    %77 = vector.load %arg6[%c5, %c0_56, %c0_57] : memref<27x128x128xbf16, #tpu.memory_space<vmem>>, vector<1x128x128xbf16>
    %78 = vector.shape_cast %77 : vector<1x128x128xbf16> to vector<128x128xbf16>
    %cst_58 = arith.constant dense<0.000000e+00> : vector<128x128xf32>
    %79 = tpu.matmul %76, %78, %cst_58 {dimension_numbers = #tpu.dot_dimension_numbers<[1], [0], [0], [1], [0, 0, 1, 1], [], []>} : vector<128x128xbf16>, vector<128x128xbf16>, vector<128x128xf32> -> vector<128x128xf32>
    %80 = arith.addf %70, %79 : vector<128x128xf32>
    %c18_i32_59 = arith.constant 18 : i32
    %81 = arith.addi %c18_i32_59, %0 : i32
    %c6_i32 = arith.constant 6 : i32
    %82 = arith.addi %81, %c6_i32 : i32
    %c0_60 = arith.constant 0 : index
    %83 = arith.index_cast %82 : i32 to index
    %c12_61 = arith.constant 12 : index
    %c0_62 = arith.constant 0 : index
    %84 = vector.load %arg2[%c0_60, %83, %c12_61, %c0_62] : memref<1x52x56x128xbf16, #tpu.memory_space<vmem>>, vector<1x8x16x128xbf16>
    %85 = vector.shape_cast %84 : vector<1x8x16x128xbf16> to vector<8x16x128xbf16>
    %86 = vector.shape_cast %85 : vector<8x16x128xbf16> to vector<128x128xbf16>
    %c6 = arith.constant 6 : index
    %c0_63 = arith.constant 0 : index
    %c0_64 = arith.constant 0 : index
    %87 = vector.load %arg6[%c6, %c0_63, %c0_64] : memref<27x128x128xbf16, #tpu.memory_space<vmem>>, vector<1x128x128xbf16>
    %88 = vector.shape_cast %87 : vector<1x128x128xbf16> to vector<128x128xbf16>
    %cst_65 = arith.constant dense<0.000000e+00> : vector<128x128xf32>
    %89 = tpu.matmul %86, %88, %cst_65 {dimension_numbers = #tpu.dot_dimension_numbers<[1], [0], [0], [1], [0, 0, 1, 1], [], []>} : vector<128x128xbf16>, vector<128x128xbf16>, vector<128x128xf32> -> vector<128x128xf32>
    %90 = arith.addf %80, %89 : vector<128x128xf32>
    %c18_i32_66 = arith.constant 18 : i32
    %91 = arith.addi %c18_i32_66, %0 : i32
    %c6_i32_67 = arith.constant 6 : i32
    %92 = arith.addi %91, %c6_i32_67 : i32
    %c0_68 = arith.constant 0 : index
    %93 = arith.index_cast %92 : i32 to index
    %c18_69 = arith.constant 18 : index
    %c0_70 = arith.constant 0 : index
    %94 = vector.load %arg2[%c0_68, %93, %c18_69, %c0_70] : memref<1x52x56x128xbf16, #tpu.memory_space<vmem>>, vector<1x8x16x128xbf16>
    %95 = vector.shape_cast %94 : vector<1x8x16x128xbf16> to vector<8x16x128xbf16>
    %96 = vector.shape_cast %95 : vector<8x16x128xbf16> to vector<128x128xbf16>
    %c7 = arith.constant 7 : index
    %c0_71 = arith.constant 0 : index
    %c0_72 = arith.constant 0 : index
    %97 = vector.load %arg6[%c7, %c0_71, %c0_72] : memref<27x128x128xbf16, #tpu.memory_space<vmem>>, vector<1x128x128xbf16>
    %98 = vector.shape_cast %97 : vector<1x128x128xbf16> to vector<128x128xbf16>
    %cst_73 = arith.constant dense<0.000000e+00> : vector<128x128xf32>
    %99 = tpu.matmul %96, %98, %cst_73 {dimension_numbers = #tpu.dot_dimension_numbers<[1], [0], [0], [1], [0, 0, 1, 1], [], []>} : vector<128x128xbf16>, vector<128x128xbf16>, vector<128x128xf32> -> vector<128x128xf32>
    %100 = arith.addf %90, %99 : vector<128x128xf32>
    %c18_i32_74 = arith.constant 18 : i32
    %101 = arith.addi %c18_i32_74, %0 : i32
    %c6_i32_75 = arith.constant 6 : i32
    %102 = arith.addi %101, %c6_i32_75 : i32
    %c0_76 = arith.constant 0 : index
    %103 = arith.index_cast %102 : i32 to index
    %c24_77 = arith.constant 24 : index
    %c0_78 = arith.constant 0 : index
    %104 = vector.load %arg2[%c0_76, %103, %c24_77, %c0_78] : memref<1x52x56x128xbf16, #tpu.memory_space<vmem>>, vector<1x8x16x128xbf16>
    %105 = vector.shape_cast %104 : vector<1x8x16x128xbf16> to vector<8x16x128xbf16>
    %106 = vector.shape_cast %105 : vector<8x16x128xbf16> to vector<128x128xbf16>
    %c8 = arith.constant 8 : index
    %c0_79 = arith.constant 0 : index
    %c0_80 = arith.constant 0 : index
    %107 = vector.load %arg6[%c8, %c0_79, %c0_80] : memref<27x128x128xbf16, #tpu.memory_space<vmem>>, vector<1x128x128xbf16>
    %108 = vector.shape_cast %107 : vector<1x128x128xbf16> to vector<128x128xbf16>
    %cst_81 = arith.constant dense<0.000000e+00> : vector<128x128xf32>
    %109 = tpu.matmul %106, %108, %cst_81 {dimension_numbers = #tpu.dot_dimension_numbers<[1], [0], [0], [1], [0, 0, 1, 1], [], []>} : vector<128x128xbf16>, vector<128x128xbf16>, vector<128x128xf32> -> vector<128x128xf32>
    %110 = arith.addf %100, %109 : vector<128x128xf32>
    %c0_82 = arith.constant 0 : index
    %c0_83 = arith.constant 0 : index
    %c0_84 = arith.constant 0 : index
    %111 = vector.load %arg7[%c0_82, %c0_83, %c0_84] : memref<3x1x128xf32, #tpu.memory_space<vmem>>, vector<1x1x128xf32>
    %112 = vector.shape_cast %111 : vector<1x1x128xf32> to vector<1x128xf32>
    %113 = vector.broadcast %112 : vector<1x128xf32> to vector<128x128xf32>
    %114 = arith.addf %110, %113 : vector<128x128xf32>
    %cst_85 = arith.constant 0.000000e+00 : f32
    %115 = vector.broadcast %cst_85 : f32 to vector<128x128xf32>
    %116 = arith.maximumf %114, %115 : vector<128x128xf32>
    %117 = arith.truncf %116 : vector<128x128xf32> to vector<128x128xbf16>
    %c1_86 = arith.constant 1 : index
    %c0_87 = arith.constant 0 : index
    %c0_88 = arith.constant 0 : index
    %118 = vector.load %arg8[%c1_86, %c0_87, %c0_88] : memref<4x128x128xbf16, #tpu.memory_space<vmem>>, vector<1x128x128xbf16>
    %119 = vector.shape_cast %118 : vector<1x128x128xbf16> to vector<128x128xbf16>
    %cst_89 = arith.constant dense<0.000000e+00> : vector<128x128xf32>
    %120 = tpu.matmul %117, %119, %cst_89 {dimension_numbers = #tpu.dot_dimension_numbers<[1], [0], [0], [1], [0, 0, 1, 1], [], []>} : vector<128x128xbf16>, vector<128x128xbf16>, vector<128x128xf32> -> vector<128x128xf32>
    %121 = arith.addf %21, %120 : vector<128x128xf32>
    %c18_i32_90 = arith.constant 18 : i32
    %122 = arith.addi %c18_i32_90, %0 : i32
    %c-12_i32 = arith.constant -12 : i32
    %123 = arith.addi %122, %c-12_i32 : i32
    %c0_91 = arith.constant 0 : index
    %124 = arith.index_cast %123 : i32 to index
    %c6_92 = arith.constant 6 : index
    %c0_93 = arith.constant 0 : index
    %125 = vector.load %arg2[%c0_91, %124, %c6_92, %c0_93] : memref<1x52x56x128xbf16, #tpu.memory_space<vmem>>, vector<1x8x16x128xbf16>
    %126 = vector.shape_cast %125 : vector<1x8x16x128xbf16> to vector<8x16x128xbf16>
    %127 = vector.shape_cast %126 : vector<8x16x128xbf16> to vector<128x128xbf16>
    %c9 = arith.constant 9 : index
    %c0_94 = arith.constant 0 : index
    %c0_95 = arith.constant 0 : index
    %128 = vector.load %arg6[%c9, %c0_94, %c0_95] : memref<27x128x128xbf16, #tpu.memory_space<vmem>>, vector<1x128x128xbf16>
    %129 = vector.shape_cast %128 : vector<1x128x128xbf16> to vector<128x128xbf16>
    %cst_96 = arith.constant dense<0.000000e+00> : vector<128x128xf32>
    %130 = tpu.matmul %127, %129, %cst_96 {dimension_numbers = #tpu.dot_dimension_numbers<[1], [0], [0], [1], [0, 0, 1, 1], [], []>} : vector<128x128xbf16>, vector<128x128xbf16>, vector<128x128xf32> -> vector<128x128xf32>
    %c18_i32_97 = arith.constant 18 : i32
    %131 = arith.addi %c18_i32_97, %0 : i32
    %c-12_i32_98 = arith.constant -12 : i32
    %132 = arith.addi %131, %c-12_i32_98 : i32
    %c0_99 = arith.constant 0 : index
    %133 = arith.index_cast %132 : i32 to index
    %c18_100 = arith.constant 18 : index
    %c0_101 = arith.constant 0 : index
    %134 = vector.load %arg2[%c0_99, %133, %c18_100, %c0_101] : memref<1x52x56x128xbf16, #tpu.memory_space<vmem>>, vector<1x8x16x128xbf16>
    %135 = vector.shape_cast %134 : vector<1x8x16x128xbf16> to vector<8x16x128xbf16>
    %136 = vector.shape_cast %135 : vector<8x16x128xbf16> to vector<128x128xbf16>
    %c10 = arith.constant 10 : index
    %c0_102 = arith.constant 0 : index
    %c0_103 = arith.constant 0 : index
    %137 = vector.load %arg6[%c10, %c0_102, %c0_103] : memref<27x128x128xbf16, #tpu.memory_space<vmem>>, vector<1x128x128xbf16>
    %138 = vector.shape_cast %137 : vector<1x128x128xbf16> to vector<128x128xbf16>
    %cst_104 = arith.constant dense<0.000000e+00> : vector<128x128xf32>
    %139 = tpu.matmul %136, %138, %cst_104 {dimension_numbers = #tpu.dot_dimension_numbers<[1], [0], [0], [1], [0, 0, 1, 1], [], []>} : vector<128x128xbf16>, vector<128x128xbf16>, vector<128x128xf32> -> vector<128x128xf32>
    %140 = arith.addf %130, %139 : vector<128x128xf32>
    %c18_i32_105 = arith.constant 18 : i32
    %141 = arith.addi %c18_i32_105, %0 : i32
    %c-12_i32_106 = arith.constant -12 : i32
    %142 = arith.addi %141, %c-12_i32_106 : i32
    %c0_107 = arith.constant 0 : index
    %143 = arith.index_cast %142 : i32 to index
    %c30 = arith.constant 30 : index
    %c0_108 = arith.constant 0 : index
    %144 = vector.load %arg2[%c0_107, %143, %c30, %c0_108] : memref<1x52x56x128xbf16, #tpu.memory_space<vmem>>, vector<1x8x16x128xbf16>
    %145 = vector.shape_cast %144 : vector<1x8x16x128xbf16> to vector<8x16x128xbf16>
    %146 = vector.shape_cast %145 : vector<8x16x128xbf16> to vector<128x128xbf16>
    %c11 = arith.constant 11 : index
    %c0_109 = arith.constant 0 : index
    %c0_110 = arith.constant 0 : index
    %147 = vector.load %arg6[%c11, %c0_109, %c0_110] : memref<27x128x128xbf16, #tpu.memory_space<vmem>>, vector<1x128x128xbf16>
    %148 = vector.shape_cast %147 : vector<1x128x128xbf16> to vector<128x128xbf16>
    %cst_111 = arith.constant dense<0.000000e+00> : vector<128x128xf32>
    %149 = tpu.matmul %146, %148, %cst_111 {dimension_numbers = #tpu.dot_dimension_numbers<[1], [0], [0], [1], [0, 0, 1, 1], [], []>} : vector<128x128xbf16>, vector<128x128xbf16>, vector<128x128xf32> -> vector<128x128xf32>
    %150 = arith.addf %140, %149 : vector<128x128xf32>
    %c18_i32_112 = arith.constant 18 : i32
    %151 = arith.addi %c18_i32_112, %0 : i32
    %c0_i32_113 = arith.constant 0 : i32
    %152 = arith.addi %151, %c0_i32_113 : i32
    %c0_114 = arith.constant 0 : index
    %153 = arith.index_cast %152 : i32 to index
    %c6_115 = arith.constant 6 : index
    %c0_116 = arith.constant 0 : index
    %154 = vector.load %arg2[%c0_114, %153, %c6_115, %c0_116] : memref<1x52x56x128xbf16, #tpu.memory_space<vmem>>, vector<1x8x16x128xbf16>
    %155 = vector.shape_cast %154 : vector<1x8x16x128xbf16> to vector<8x16x128xbf16>
    %156 = vector.shape_cast %155 : vector<8x16x128xbf16> to vector<128x128xbf16>
    %c12_117 = arith.constant 12 : index
    %c0_118 = arith.constant 0 : index
    %c0_119 = arith.constant 0 : index
    %157 = vector.load %arg6[%c12_117, %c0_118, %c0_119] : memref<27x128x128xbf16, #tpu.memory_space<vmem>>, vector<1x128x128xbf16>
    %158 = vector.shape_cast %157 : vector<1x128x128xbf16> to vector<128x128xbf16>
    %cst_120 = arith.constant dense<0.000000e+00> : vector<128x128xf32>
    %159 = tpu.matmul %156, %158, %cst_120 {dimension_numbers = #tpu.dot_dimension_numbers<[1], [0], [0], [1], [0, 0, 1, 1], [], []>} : vector<128x128xbf16>, vector<128x128xbf16>, vector<128x128xf32> -> vector<128x128xf32>
    %160 = arith.addf %150, %159 : vector<128x128xf32>
    %c18_i32_121 = arith.constant 18 : i32
    %161 = arith.addi %c18_i32_121, %0 : i32
    %c0_i32_122 = arith.constant 0 : i32
    %162 = arith.addi %161, %c0_i32_122 : i32
    %c0_123 = arith.constant 0 : index
    %163 = arith.index_cast %162 : i32 to index
    %c18_124 = arith.constant 18 : index
    %c0_125 = arith.constant 0 : index
    %164 = vector.load %arg2[%c0_123, %163, %c18_124, %c0_125] : memref<1x52x56x128xbf16, #tpu.memory_space<vmem>>, vector<1x8x16x128xbf16>
    %165 = vector.shape_cast %164 : vector<1x8x16x128xbf16> to vector<8x16x128xbf16>
    %166 = vector.shape_cast %165 : vector<8x16x128xbf16> to vector<128x128xbf16>
    %c13 = arith.constant 13 : index
    %c0_126 = arith.constant 0 : index
    %c0_127 = arith.constant 0 : index
    %167 = vector.load %arg6[%c13, %c0_126, %c0_127] : memref<27x128x128xbf16, #tpu.memory_space<vmem>>, vector<1x128x128xbf16>
    %168 = vector.shape_cast %167 : vector<1x128x128xbf16> to vector<128x128xbf16>
    %cst_128 = arith.constant dense<0.000000e+00> : vector<128x128xf32>
    %169 = tpu.matmul %166, %168, %cst_128 {dimension_numbers = #tpu.dot_dimension_numbers<[1], [0], [0], [1], [0, 0, 1, 1], [], []>} : vector<128x128xbf16>, vector<128x128xbf16>, vector<128x128xf32> -> vector<128x128xf32>
    %170 = arith.addf %160, %169 : vector<128x128xf32>
    %c18_i32_129 = arith.constant 18 : i32
    %171 = arith.addi %c18_i32_129, %0 : i32
    %c0_i32_130 = arith.constant 0 : i32
    %172 = arith.addi %171, %c0_i32_130 : i32
    %c0_131 = arith.constant 0 : index
    %173 = arith.index_cast %172 : i32 to index
    %c30_132 = arith.constant 30 : index
    %c0_133 = arith.constant 0 : index
    %174 = vector.load %arg2[%c0_131, %173, %c30_132, %c0_133] : memref<1x52x56x128xbf16, #tpu.memory_space<vmem>>, vector<1x8x16x128xbf16>
    %175 = vector.shape_cast %174 : vector<1x8x16x128xbf16> to vector<8x16x128xbf16>
    %176 = vector.shape_cast %175 : vector<8x16x128xbf16> to vector<128x128xbf16>
    %c14 = arith.constant 14 : index
    %c0_134 = arith.constant 0 : index
    %c0_135 = arith.constant 0 : index
    %177 = vector.load %arg6[%c14, %c0_134, %c0_135] : memref<27x128x128xbf16, #tpu.memory_space<vmem>>, vector<1x128x128xbf16>
    %178 = vector.shape_cast %177 : vector<1x128x128xbf16> to vector<128x128xbf16>
    %cst_136 = arith.constant dense<0.000000e+00> : vector<128x128xf32>
    %179 = tpu.matmul %176, %178, %cst_136 {dimension_numbers = #tpu.dot_dimension_numbers<[1], [0], [0], [1], [0, 0, 1, 1], [], []>} : vector<128x128xbf16>, vector<128x128xbf16>, vector<128x128xf32> -> vector<128x128xf32>
    %180 = arith.addf %170, %179 : vector<128x128xf32>
    %c18_i32_137 = arith.constant 18 : i32
    %181 = arith.addi %c18_i32_137, %0 : i32
    %c12_i32 = arith.constant 12 : i32
    %182 = arith.addi %181, %c12_i32 : i32
    %c0_138 = arith.constant 0 : index
    %183 = arith.index_cast %182 : i32 to index
    %c6_139 = arith.constant 6 : index
    %c0_140 = arith.constant 0 : index
    %184 = vector.load %arg2[%c0_138, %183, %c6_139, %c0_140] : memref<1x52x56x128xbf16, #tpu.memory_space<vmem>>, vector<1x8x16x128xbf16>
    %185 = vector.shape_cast %184 : vector<1x8x16x128xbf16> to vector<8x16x128xbf16>
    %186 = vector.shape_cast %185 : vector<8x16x128xbf16> to vector<128x128xbf16>
    %c15 = arith.constant 15 : index
    %c0_141 = arith.constant 0 : index
    %c0_142 = arith.constant 0 : index
    %187 = vector.load %arg6[%c15, %c0_141, %c0_142] : memref<27x128x128xbf16, #tpu.memory_space<vmem>>, vector<1x128x128xbf16>
    %188 = vector.shape_cast %187 : vector<1x128x128xbf16> to vector<128x128xbf16>
    %cst_143 = arith.constant dense<0.000000e+00> : vector<128x128xf32>
    %189 = tpu.matmul %186, %188, %cst_143 {dimension_numbers = #tpu.dot_dimension_numbers<[1], [0], [0], [1], [0, 0, 1, 1], [], []>} : vector<128x128xbf16>, vector<128x128xbf16>, vector<128x128xf32> -> vector<128x128xf32>
    %190 = arith.addf %180, %189 : vector<128x128xf32>
    %c18_i32_144 = arith.constant 18 : i32
    %191 = arith.addi %c18_i32_144, %0 : i32
    %c12_i32_145 = arith.constant 12 : i32
    %192 = arith.addi %191, %c12_i32_145 : i32
    %c0_146 = arith.constant 0 : index
    %193 = arith.index_cast %192 : i32 to index
    %c18_147 = arith.constant 18 : index
    %c0_148 = arith.constant 0 : index
    %194 = vector.load %arg2[%c0_146, %193, %c18_147, %c0_148] : memref<1x52x56x128xbf16, #tpu.memory_space<vmem>>, vector<1x8x16x128xbf16>
    %195 = vector.shape_cast %194 : vector<1x8x16x128xbf16> to vector<8x16x128xbf16>
    %196 = vector.shape_cast %195 : vector<8x16x128xbf16> to vector<128x128xbf16>
    %c16 = arith.constant 16 : index
    %c0_149 = arith.constant 0 : index
    %c0_150 = arith.constant 0 : index
    %197 = vector.load %arg6[%c16, %c0_149, %c0_150] : memref<27x128x128xbf16, #tpu.memory_space<vmem>>, vector<1x128x128xbf16>
    %198 = vector.shape_cast %197 : vector<1x128x128xbf16> to vector<128x128xbf16>
    %cst_151 = arith.constant dense<0.000000e+00> : vector<128x128xf32>
    %199 = tpu.matmul %196, %198, %cst_151 {dimension_numbers = #tpu.dot_dimension_numbers<[1], [0], [0], [1], [0, 0, 1, 1], [], []>} : vector<128x128xbf16>, vector<128x128xbf16>, vector<128x128xf32> -> vector<128x128xf32>
    %200 = arith.addf %190, %199 : vector<128x128xf32>
    %c18_i32_152 = arith.constant 18 : i32
    %201 = arith.addi %c18_i32_152, %0 : i32
    %c12_i32_153 = arith.constant 12 : i32
    %202 = arith.addi %201, %c12_i32_153 : i32
    %c0_154 = arith.constant 0 : index
    %203 = arith.index_cast %202 : i32 to index
    %c30_155 = arith.constant 30 : index
    %c0_156 = arith.constant 0 : index
    %204 = vector.load %arg2[%c0_154, %203, %c30_155, %c0_156] : memref<1x52x56x128xbf16, #tpu.memory_space<vmem>>, vector<1x8x16x128xbf16>
    %205 = vector.shape_cast %204 : vector<1x8x16x128xbf16> to vector<8x16x128xbf16>
    %206 = vector.shape_cast %205 : vector<8x16x128xbf16> to vector<128x128xbf16>
    %c17 = arith.constant 17 : index
    %c0_157 = arith.constant 0 : index
    %c0_158 = arith.constant 0 : index
    %207 = vector.load %arg6[%c17, %c0_157, %c0_158] : memref<27x128x128xbf16, #tpu.memory_space<vmem>>, vector<1x128x128xbf16>
    %208 = vector.shape_cast %207 : vector<1x128x128xbf16> to vector<128x128xbf16>
    %cst_159 = arith.constant dense<0.000000e+00> : vector<128x128xf32>
    %209 = tpu.matmul %206, %208, %cst_159 {dimension_numbers = #tpu.dot_dimension_numbers<[1], [0], [0], [1], [0, 0, 1, 1], [], []>} : vector<128x128xbf16>, vector<128x128xbf16>, vector<128x128xf32> -> vector<128x128xf32>
    %210 = arith.addf %200, %209 : vector<128x128xf32>
    %c1_160 = arith.constant 1 : index
    %c0_161 = arith.constant 0 : index
    %c0_162 = arith.constant 0 : index
    %211 = vector.load %arg7[%c1_160, %c0_161, %c0_162] : memref<3x1x128xf32, #tpu.memory_space<vmem>>, vector<1x1x128xf32>
    %212 = vector.shape_cast %211 : vector<1x1x128xf32> to vector<1x128xf32>
    %213 = vector.broadcast %212 : vector<1x128xf32> to vector<128x128xf32>
    %214 = arith.addf %210, %213 : vector<128x128xf32>
    %cst_163 = arith.constant 0.000000e+00 : f32
    %215 = vector.broadcast %cst_163 : f32 to vector<128x128xf32>
    %216 = arith.maximumf %214, %215 : vector<128x128xf32>
    %217 = arith.truncf %216 : vector<128x128xf32> to vector<128x128xbf16>
    %c2_164 = arith.constant 2 : index
    %c0_165 = arith.constant 0 : index
    %c0_166 = arith.constant 0 : index
    %218 = vector.load %arg8[%c2_164, %c0_165, %c0_166] : memref<4x128x128xbf16, #tpu.memory_space<vmem>>, vector<1x128x128xbf16>
    %219 = vector.shape_cast %218 : vector<1x128x128xbf16> to vector<128x128xbf16>
    %cst_167 = arith.constant dense<0.000000e+00> : vector<128x128xf32>
    %220 = tpu.matmul %217, %219, %cst_167 {dimension_numbers = #tpu.dot_dimension_numbers<[1], [0], [0], [1], [0, 0, 1, 1], [], []>} : vector<128x128xbf16>, vector<128x128xbf16>, vector<128x128xf32> -> vector<128x128xf32>
    %221 = arith.addf %121, %220 : vector<128x128xf32>
    %c18_i32_168 = arith.constant 18 : i32
    %222 = arith.addi %c18_i32_168, %0 : i32
    %c-18_i32 = arith.constant -18 : i32
    %223 = arith.addi %222, %c-18_i32 : i32
    %c0_169 = arith.constant 0 : index
    %224 = arith.index_cast %223 : i32 to index
    %c0_170 = arith.constant 0 : index
    %c0_171 = arith.constant 0 : index
    %225 = vector.load %arg2[%c0_169, %224, %c0_170, %c0_171] : memref<1x52x56x128xbf16, #tpu.memory_space<vmem>>, vector<1x8x16x128xbf16>
    %226 = vector.shape_cast %225 : vector<1x8x16x128xbf16> to vector<8x16x128xbf16>
    %227 = vector.shape_cast %226 : vector<8x16x128xbf16> to vector<128x128xbf16>
    %c18_172 = arith.constant 18 : index
    %c0_173 = arith.constant 0 : index
    %c0_174 = arith.constant 0 : index
    %228 = vector.load %arg6[%c18_172, %c0_173, %c0_174] : memref<27x128x128xbf16, #tpu.memory_space<vmem>>, vector<1x128x128xbf16>
    %229 = vector.shape_cast %228 : vector<1x128x128xbf16> to vector<128x128xbf16>
    %cst_175 = arith.constant dense<0.000000e+00> : vector<128x128xf32>
    %230 = tpu.matmul %227, %229, %cst_175 {dimension_numbers = #tpu.dot_dimension_numbers<[1], [0], [0], [1], [0, 0, 1, 1], [], []>} : vector<128x128xbf16>, vector<128x128xbf16>, vector<128x128xf32> -> vector<128x128xf32>
    %c18_i32_176 = arith.constant 18 : i32
    %231 = arith.addi %c18_i32_176, %0 : i32
    %c-18_i32_177 = arith.constant -18 : i32
    %232 = arith.addi %231, %c-18_i32_177 : i32
    %c0_178 = arith.constant 0 : index
    %233 = arith.index_cast %232 : i32 to index
    %c18_179 = arith.constant 18 : index
    %c0_180 = arith.constant 0 : index
    %234 = vector.load %arg2[%c0_178, %233, %c18_179, %c0_180] : memref<1x52x56x128xbf16, #tpu.memory_space<vmem>>, vector<1x8x16x128xbf16>
    %235 = vector.shape_cast %234 : vector<1x8x16x128xbf16> to vector<8x16x128xbf16>
    %236 = vector.shape_cast %235 : vector<8x16x128xbf16> to vector<128x128xbf16>
    %c19 = arith.constant 19 : index
    %c0_181 = arith.constant 0 : index
    %c0_182 = arith.constant 0 : index
    %237 = vector.load %arg6[%c19, %c0_181, %c0_182] : memref<27x128x128xbf16, #tpu.memory_space<vmem>>, vector<1x128x128xbf16>
    %238 = vector.shape_cast %237 : vector<1x128x128xbf16> to vector<128x128xbf16>
    %cst_183 = arith.constant dense<0.000000e+00> : vector<128x128xf32>
    %239 = tpu.matmul %236, %238, %cst_183 {dimension_numbers = #tpu.dot_dimension_numbers<[1], [0], [0], [1], [0, 0, 1, 1], [], []>} : vector<128x128xbf16>, vector<128x128xbf16>, vector<128x128xf32> -> vector<128x128xf32>
    %240 = arith.addf %230, %239 : vector<128x128xf32>
    %c18_i32_184 = arith.constant 18 : i32
    %241 = arith.addi %c18_i32_184, %0 : i32
    %c-18_i32_185 = arith.constant -18 : i32
    %242 = arith.addi %241, %c-18_i32_185 : i32
    %c0_186 = arith.constant 0 : index
    %243 = arith.index_cast %242 : i32 to index
    %c36 = arith.constant 36 : index
    %c0_187 = arith.constant 0 : index
    %244 = vector.load %arg2[%c0_186, %243, %c36, %c0_187] : memref<1x52x56x128xbf16, #tpu.memory_space<vmem>>, vector<1x8x16x128xbf16>
    %245 = vector.shape_cast %244 : vector<1x8x16x128xbf16> to vector<8x16x128xbf16>
    %246 = vector.shape_cast %245 : vector<8x16x128xbf16> to vector<128x128xbf16>
    %c20 = arith.constant 20 : index
    %c0_188 = arith.constant 0 : index
    %c0_189 = arith.constant 0 : index
    %247 = vector.load %arg6[%c20, %c0_188, %c0_189] : memref<27x128x128xbf16, #tpu.memory_space<vmem>>, vector<1x128x128xbf16>
    %248 = vector.shape_cast %247 : vector<1x128x128xbf16> to vector<128x128xbf16>
    %cst_190 = arith.constant dense<0.000000e+00> : vector<128x128xf32>
    %249 = tpu.matmul %246, %248, %cst_190 {dimension_numbers = #tpu.dot_dimension_numbers<[1], [0], [0], [1], [0, 0, 1, 1], [], []>} : vector<128x128xbf16>, vector<128x128xbf16>, vector<128x128xf32> -> vector<128x128xf32>
    %250 = arith.addf %240, %249 : vector<128x128xf32>
    %c18_i32_191 = arith.constant 18 : i32
    %251 = arith.addi %c18_i32_191, %0 : i32
    %c0_i32_192 = arith.constant 0 : i32
    %252 = arith.addi %251, %c0_i32_192 : i32
    %c0_193 = arith.constant 0 : index
    %253 = arith.index_cast %252 : i32 to index
    %c0_194 = arith.constant 0 : index
    %c0_195 = arith.constant 0 : index
    %254 = vector.load %arg2[%c0_193, %253, %c0_194, %c0_195] : memref<1x52x56x128xbf16, #tpu.memory_space<vmem>>, vector<1x8x16x128xbf16>
    %255 = vector.shape_cast %254 : vector<1x8x16x128xbf16> to vector<8x16x128xbf16>
    %256 = vector.shape_cast %255 : vector<8x16x128xbf16> to vector<128x128xbf16>
    %c21 = arith.constant 21 : index
    %c0_196 = arith.constant 0 : index
    %c0_197 = arith.constant 0 : index
    %257 = vector.load %arg6[%c21, %c0_196, %c0_197] : memref<27x128x128xbf16, #tpu.memory_space<vmem>>, vector<1x128x128xbf16>
    %258 = vector.shape_cast %257 : vector<1x128x128xbf16> to vector<128x128xbf16>
    %cst_198 = arith.constant dense<0.000000e+00> : vector<128x128xf32>
    %259 = tpu.matmul %256, %258, %cst_198 {dimension_numbers = #tpu.dot_dimension_numbers<[1], [0], [0], [1], [0, 0, 1, 1], [], []>} : vector<128x128xbf16>, vector<128x128xbf16>, vector<128x128xf32> -> vector<128x128xf32>
    %260 = arith.addf %250, %259 : vector<128x128xf32>
    %c18_i32_199 = arith.constant 18 : i32
    %261 = arith.addi %c18_i32_199, %0 : i32
    %c0_i32_200 = arith.constant 0 : i32
    %262 = arith.addi %261, %c0_i32_200 : i32
    %c0_201 = arith.constant 0 : index
    %263 = arith.index_cast %262 : i32 to index
    %c18_202 = arith.constant 18 : index
    %c0_203 = arith.constant 0 : index
    %264 = vector.load %arg2[%c0_201, %263, %c18_202, %c0_203] : memref<1x52x56x128xbf16, #tpu.memory_space<vmem>>, vector<1x8x16x128xbf16>
    %265 = vector.shape_cast %264 : vector<1x8x16x128xbf16> to vector<8x16x128xbf16>
    %266 = vector.shape_cast %265 : vector<8x16x128xbf16> to vector<128x128xbf16>
    %c22 = arith.constant 22 : index
    %c0_204 = arith.constant 0 : index
    %c0_205 = arith.constant 0 : index
    %267 = vector.load %arg6[%c22, %c0_204, %c0_205] : memref<27x128x128xbf16, #tpu.memory_space<vmem>>, vector<1x128x128xbf16>
    %268 = vector.shape_cast %267 : vector<1x128x128xbf16> to vector<128x128xbf16>
    %cst_206 = arith.constant dense<0.000000e+00> : vector<128x128xf32>
    %269 = tpu.matmul %266, %268, %cst_206 {dimension_numbers = #tpu.dot_dimension_numbers<[1], [0], [0], [1], [0, 0, 1, 1], [], []>} : vector<128x128xbf16>, vector<128x128xbf16>, vector<128x128xf32> -> vector<128x128xf32>
    %270 = arith.addf %260, %269 : vector<128x128xf32>
    %c18_i32_207 = arith.constant 18 : i32
    %271 = arith.addi %c18_i32_207, %0 : i32
    %c0_i32_208 = arith.constant 0 : i32
    %272 = arith.addi %271, %c0_i32_208 : i32
    %c0_209 = arith.constant 0 : index
    %273 = arith.index_cast %272 : i32 to index
    %c36_210 = arith.constant 36 : index
    %c0_211 = arith.constant 0 : index
    %274 = vector.load %arg2[%c0_209, %273, %c36_210, %c0_211] : memref<1x52x56x128xbf16, #tpu.memory_space<vmem>>, vector<1x8x16x128xbf16>
    %275 = vector.shape_cast %274 : vector<1x8x16x128xbf16> to vector<8x16x128xbf16>
    %276 = vector.shape_cast %275 : vector<8x16x128xbf16> to vector<128x128xbf16>
    %c23 = arith.constant 23 : index
    %c0_212 = arith.constant 0 : index
    %c0_213 = arith.constant 0 : index
    %277 = vector.load %arg6[%c23, %c0_212, %c0_213] : memref<27x128x128xbf16, #tpu.memory_space<vmem>>, vector<1x128x128xbf16>
    %278 = vector.shape_cast %277 : vector<1x128x128xbf16> to vector<128x128xbf16>
    %cst_214 = arith.constant dense<0.000000e+00> : vector<128x128xf32>
    %279 = tpu.matmul %276, %278, %cst_214 {dimension_numbers = #tpu.dot_dimension_numbers<[1], [0], [0], [1], [0, 0, 1, 1], [], []>} : vector<128x128xbf16>, vector<128x128xbf16>, vector<128x128xf32> -> vector<128x128xf32>
    %280 = arith.addf %270, %279 : vector<128x128xf32>
    %c18_i32_215 = arith.constant 18 : i32
    %281 = arith.addi %c18_i32_215, %0 : i32
    %c18_i32_216 = arith.constant 18 : i32
    %282 = arith.addi %281, %c18_i32_216 : i32
    %c0_217 = arith.constant 0 : index
    %283 = arith.index_cast %282 : i32 to index
    %c0_218 = arith.constant 0 : index
    %c0_219 = arith.constant 0 : index
    %284 = vector.load %arg2[%c0_217, %283, %c0_218, %c0_219] : memref<1x52x56x128xbf16, #tpu.memory_space<vmem>>, vector<1x8x16x128xbf16>
    %285 = vector.shape_cast %284 : vector<1x8x16x128xbf16> to vector<8x16x128xbf16>
    %286 = vector.shape_cast %285 : vector<8x16x128xbf16> to vector<128x128xbf16>
    %c24_220 = arith.constant 24 : index
    %c0_221 = arith.constant 0 : index
    %c0_222 = arith.constant 0 : index
    %287 = vector.load %arg6[%c24_220, %c0_221, %c0_222] : memref<27x128x128xbf16, #tpu.memory_space<vmem>>, vector<1x128x128xbf16>
    %288 = vector.shape_cast %287 : vector<1x128x128xbf16> to vector<128x128xbf16>
    %cst_223 = arith.constant dense<0.000000e+00> : vector<128x128xf32>
    %289 = tpu.matmul %286, %288, %cst_223 {dimension_numbers = #tpu.dot_dimension_numbers<[1], [0], [0], [1], [0, 0, 1, 1], [], []>} : vector<128x128xbf16>, vector<128x128xbf16>, vector<128x128xf32> -> vector<128x128xf32>
    %290 = arith.addf %280, %289 : vector<128x128xf32>
    %c18_i32_224 = arith.constant 18 : i32
    %291 = arith.addi %c18_i32_224, %0 : i32
    %c18_i32_225 = arith.constant 18 : i32
    %292 = arith.addi %291, %c18_i32_225 : i32
    %c0_226 = arith.constant 0 : index
    %293 = arith.index_cast %292 : i32 to index
    %c18_227 = arith.constant 18 : index
    %c0_228 = arith.constant 0 : index
    %294 = vector.load %arg2[%c0_226, %293, %c18_227, %c0_228] : memref<1x52x56x128xbf16, #tpu.memory_space<vmem>>, vector<1x8x16x128xbf16>
    %295 = vector.shape_cast %294 : vector<1x8x16x128xbf16> to vector<8x16x128xbf16>
    %296 = vector.shape_cast %295 : vector<8x16x128xbf16> to vector<128x128xbf16>
    %c25 = arith.constant 25 : index
    %c0_229 = arith.constant 0 : index
    %c0_230 = arith.constant 0 : index
    %297 = vector.load %arg6[%c25, %c0_229, %c0_230] : memref<27x128x128xbf16, #tpu.memory_space<vmem>>, vector<1x128x128xbf16>
    %298 = vector.shape_cast %297 : vector<1x128x128xbf16> to vector<128x128xbf16>
    %cst_231 = arith.constant dense<0.000000e+00> : vector<128x128xf32>
    %299 = tpu.matmul %296, %298, %cst_231 {dimension_numbers = #tpu.dot_dimension_numbers<[1], [0], [0], [1], [0, 0, 1, 1], [], []>} : vector<128x128xbf16>, vector<128x128xbf16>, vector<128x128xf32> -> vector<128x128xf32>
    %300 = arith.addf %290, %299 : vector<128x128xf32>
    %c18_i32_232 = arith.constant 18 : i32
    %301 = arith.addi %c18_i32_232, %0 : i32
    %c18_i32_233 = arith.constant 18 : i32
    %302 = arith.addi %301, %c18_i32_233 : i32
    %c0_234 = arith.constant 0 : index
    %303 = arith.index_cast %302 : i32 to index
    %c36_235 = arith.constant 36 : index
    %c0_236 = arith.constant 0 : index
    %304 = vector.load %arg2[%c0_234, %303, %c36_235, %c0_236] : memref<1x52x56x128xbf16, #tpu.memory_space<vmem>>, vector<1x8x16x128xbf16>
    %305 = vector.shape_cast %304 : vector<1x8x16x128xbf16> to vector<8x16x128xbf16>
    %306 = vector.shape_cast %305 : vector<8x16x128xbf16> to vector<128x128xbf16>
    %c26 = arith.constant 26 : index
    %c0_237 = arith.constant 0 : index
    %c0_238 = arith.constant 0 : index
    %307 = vector.load %arg6[%c26, %c0_237, %c0_238] : memref<27x128x128xbf16, #tpu.memory_space<vmem>>, vector<1x128x128xbf16>
    %308 = vector.shape_cast %307 : vector<1x128x128xbf16> to vector<128x128xbf16>
    %cst_239 = arith.constant dense<0.000000e+00> : vector<128x128xf32>
    %309 = tpu.matmul %306, %308, %cst_239 {dimension_numbers = #tpu.dot_dimension_numbers<[1], [0], [0], [1], [0, 0, 1, 1], [], []>} : vector<128x128xbf16>, vector<128x128xbf16>, vector<128x128xf32> -> vector<128x128xf32>
    %310 = arith.addf %300, %309 : vector<128x128xf32>
    %c2_240 = arith.constant 2 : index
    %c0_241 = arith.constant 0 : index
    %c0_242 = arith.constant 0 : index
    %311 = vector.load %arg7[%c2_240, %c0_241, %c0_242] : memref<3x1x128xf32, #tpu.memory_space<vmem>>, vector<1x1x128xf32>
    %312 = vector.shape_cast %311 : vector<1x1x128xf32> to vector<1x128xf32>
    %313 = vector.broadcast %312 : vector<1x128xf32> to vector<128x128xf32>
    %314 = arith.addf %310, %313 : vector<128x128xf32>
    %cst_243 = arith.constant 0.000000e+00 : f32
    %315 = vector.broadcast %cst_243 : f32 to vector<128x128xf32>
    %316 = arith.maximumf %314, %315 : vector<128x128xf32>
    %317 = arith.truncf %316 : vector<128x128xf32> to vector<128x128xbf16>
    %c3_244 = arith.constant 3 : index
    %c0_245 = arith.constant 0 : index
    %c0_246 = arith.constant 0 : index
    %318 = vector.load %arg8[%c3_244, %c0_245, %c0_246] : memref<4x128x128xbf16, #tpu.memory_space<vmem>>, vector<1x128x128xbf16>
    %319 = vector.shape_cast %318 : vector<1x128x128xbf16> to vector<128x128xbf16>
    %cst_247 = arith.constant dense<0.000000e+00> : vector<128x128xf32>
    %320 = tpu.matmul %317, %319, %cst_247 {dimension_numbers = #tpu.dot_dimension_numbers<[1], [0], [0], [1], [0, 0, 1, 1], [], []>} : vector<128x128xbf16>, vector<128x128xbf16>, vector<128x128xf32> -> vector<128x128xf32>
    %321 = arith.addf %221, %320 : vector<128x128xf32>
    %322 = vector.shape_cast %321 : vector<128x128xf32> to vector<8x16x128xf32>
    %c0_248 = arith.constant 0 : index
    %c0_249 = arith.constant 0 : index
    %c0_250 = arith.constant 0 : index
    %c0_251 = arith.constant 0 : index
    %323 = vector.load %arg9[%c0_248, %c0_249, %c0_250, %c0_251] : memref<1x8x16x128xf32, #tpu.memory_space<vmem>>, vector<1x8x16x128xf32>
    %324 = vector.shape_cast %323 : vector<1x8x16x128xf32> to vector<8x16x128xf32>
    %325 = vector.shape_cast %322 : vector<8x16x128xf32> to vector<1x8x16x128xf32>
    tpu.vector_store %arg9[%c0_248, %c0_249, %c0_250, %c0_251], %325 {strides = array<i32>} : memref<1x8x16x128xf32, #tpu.memory_space<vmem>>, vector<1x8x16x128xf32>,
    return
  }
  func.func @transform_0(%arg0: i32, %arg1: i32) -> (i32, i32, i32, i32) {
    %c0_i32 = arith.constant 0 : i32
    %c0_i32_0 = arith.constant 0 : i32
    %c0_i32_1 = arith.constant 0 : i32
    %c0_i32_2 = arith.constant 0 : i32
    return %arg0, %c0_i32, %c0_i32_0, %c0_i32_1 : i32, i32, i32, i32
  }
  func.func @transform_1(%arg0: i32, %arg1: i32) -> (i32, i32, i32) {
    %c0_i32 = arith.constant 0 : i32
    %c0_i32_0 = arith.constant 0 : i32
    %c0_i32_1 = arith.constant 0 : i32
    return %arg0, %c0_i32, %c0_i32_0 : i32, i32, i32
  }
  func.func @transform_2(%arg0: i32, %arg1: i32) -> (i32, i32) {
    %c0_i32 = arith.constant 0 : i32
    %c0_i32_0 = arith.constant 0 : i32
    %c0_i32_1 = arith.constant 0 : i32
    return %c0_i32, %c0_i32_0 : i32, i32
  }
  func.func @transform_3(%arg0: i32, %arg1: i32) -> (i32, i32) {
    %c0_i32 = arith.constant 0 : i32
    %c0_i32_0 = arith.constant 0 : i32
    %c0_i32_1 = arith.constant 0 : i32
    return %c0_i32, %c0_i32_0 : i32, i32
  }
  func.func @transform_4(%arg0: i32, %arg1: i32) -> (i32, i32, i32) {
    %c0_i32 = arith.constant 0 : i32
    %c0_i32_0 = arith.constant 0 : i32
    %c0_i32_1 = arith.constant 0 : i32
    %c0_i32_2 = arith.constant 0 : i32
    return %c0_i32, %c0_i32_0, %c0_i32_1 : i32, i32, i32
  }
  func.func @transform_5(%arg0: i32, %arg1: i32) -> (i32, i32, i32) {
    %c0_i32 = arith.constant 0 : i32
    %c0_i32_0 = arith.constant 0 : i32
    %c0_i32_1 = arith.constant 0 : i32
    %c0_i32_2 = arith.constant 0 : i32
    return %c0_i32, %c0_i32_0, %c0_i32_1 : i32, i32, i32
  }
  func.func @transform_6(%arg0: i32, %arg1: i32) -> (i32, i32, i32) {
    %c0_i32 = arith.constant 0 : i32
    %c0_i32_0 = arith.constant 0 : i32
    %c0_i32_1 = arith.constant 0 : i32
    %c0_i32_2 = arith.constant 0 : i32
    return %c0_i32, %c0_i32_0, %c0_i32_1 : i32, i32, i32
  }
  func.func @transform_7(%arg0: i32, %arg1: i32) -> (i32, i32, i32, i32) {
    %c0_i32 = arith.constant 0 : i32
    %c0_i32_0 = arith.constant 0 : i32
    %c0_i32_1 = arith.constant 0 : i32
    return %arg0, %arg1, %c0_i32, %c0_i32_0 : i32, i32, i32, i32
  }
}

</mosaic_0001>

<llo_original>
// kernel: aspp_forward.1
$region0: #{aspp_forward.1}
  #allocation0 [shape = 'u32[]', space=smem, size = 0x4, offset = 0x4, fixed_abs, tag = 'smem constant byte address 0x4 - core index']
  #allocation1 [shape = 'u32[144,128]{1,0:T(1,128)}', space=vmem, size = 0x12000, scoped, tag = 'internal scratch']
  %s0 = inlined_call_operand.vmem [shape: bf16[2,52,56,128], index: 0, kind: input, shape index: {}]
  %s1 = inlined_call_operand.vmem [shape: f32[2,1,128], index: 1, kind: input, shape index: {}]
  %s2 = inlined_call_operand.vmem [shape: bf16[128,128], index: 2, kind: input, shape index: {}]
  %s3 = inlined_call_operand.vmem [shape: f32[1,128], index: 3, kind: input, shape index: {}]
  %s4 = inlined_call_operand.vmem [shape: bf16[27,128,128], index: 4, kind: input, shape index: {}]
  %s5 = inlined_call_operand.vmem [shape: f32[3,1,128], index: 5, kind: input, shape index: {}]
  %s6 = inlined_call_operand.vmem [shape: bf16[4,128,128], index: 6, kind: input, shape index: {}]
  %s7 = inlined_call_operand.vmem [shape: f32[2,16,16,128], index: 7, kind: output, shape index: {}]
  %s8 = sld [smem:[#allocation0]]
  $region61: #{aspp_forward.1} parent=0
    _
  %s10 = ssub.s32 1, %s8
  %s11 = scalar_select 0, %s10, %s8
  loop: start=0, step=1, limit=6
  $region2: #{aspp_forward.1} parent=0 // loop_pre_header
    _
  $region3: #{aspp_forward.1} parent=0 // loop_header
    %s13 = sphi 0, %s17
    %p14 = scmp.ge.s32.totalorder %s13, 6
    %s20 = sphi 0, %s32
    %s21 = sphi 0, %s28
    %s22 = sphi 0, %s20
    %s23 = sphi 0, %s21
    %s24 = sphi 0, %s22
    %s25 = sphi 0, %s23
    %s35 = sphi 0, %s37
    %s38 = sphi 0, %s35
    %s39 = sphi 0, %s38
    %s55 = sphi 0, %s39
    %s61 = sphi 0, %s63
    %s64 = sphi 0, %s61
    %s65 = sphi 0, %s64
    %s81 = sphi 0, %s65
    %s85 = sphi 0, %s85
    %s87 = sphi 0, %s85
    %s88 = sphi 0, %s87
    %s102 = sphi 0, %s88
    %s106 = sphi 0, %s106
    %s108 = sphi 0, %s106
    %s109 = sphi 0, %s108
    %s123 = sphi 0, %s109
    %s127 = sphi 0, %s127
    %s129 = sphi 0, %s127
    %s130 = sphi 0, %s129
    %s144 = sphi 0, %s130
    %s148 = sphi 0, %s148
    %s150 = sphi 0, %s148
    %s151 = sphi 0, %s150
    %s165 = sphi 0, %s151
    %s169 = sphi 0, %s169
    %s171 = sphi 0, %s169
    %s172 = sphi 0, %s171
    %s186 = sphi 0, %s172
    %s194 = sphi 0, %s196
    %s197 = sphi 0, %s194
    %s198 = sphi 0, %s197
    %s214 = sphi 0, %s198
  $region4: #{aspp_forward.1} parent=0 // loop_header_branch
    %16 = sbr.rel (%p14) target = $region8
  $region5: #{aspp_forward.1} parent=0 // loop_body
    %s18 = ssub.s32 %s13, 1
    %s19 = ssub.s32 %s13, 2
    %s26 = sadd.s32 1, %s21
    %p27 = scmp.ge.s32.totalorder %s26, 2
    %s28 = scalar_select %p27, 0, %s26
    %s29 = sadd.s32 1, %s20
    %s30 = scalar_select %p27, %s29, %s20
    %p31 = scmp.ge.s32.totalorder %s30, 2
    %s32 = scalar_select %p31, 0, %s30
    %s33 = ssub.s32 %s20, %s32
    %p34 = scmp.eq.s32.totalorder %s33, 0
    %s36 = sadd.s32 %s35, 1
    %s37 = scalar_select %p34, %s35, %s36
    %p40 = pneg %p34
    %p41 = scmp.eq.s32.totalorder %s13, 3
    %p42 = por %p40, %p41
    %p43 = scmp.ne.s32.totalorder %s35, %s38
    %p44 = scmp.eq.s32.totalorder %s13, 0
    %p45 = por %p43, %p44
    %p46 = scmp.ne.s32.totalorder %s35, %s38
    %p47 = scmp.eq.s32.totalorder %s18, 3
    %p48 = por %p46, %p47
    %p49 = scmp.ne.s32.totalorder %s38, %s39
    %p50 = scmp.eq.s32.totalorder %s18, 0
    %p51 = por %p49, %p50
    %p52 = scmp.ne.s32.totalorder %s38, %s39
    %p53 = scmp.eq.s32.totalorder %s19, 3
    %p54 = por %p52, %p53
    %p56 = scmp.ne.s32.totalorder %s39, %s55
    %p57 = scmp.eq.s32.totalorder %s19, 0
    %p58 = por %p56, %p57
    %s59 = ssub.s32 %s20, %s32
    %p60 = scmp.eq.s32.totalorder %s59, 0
    %s62 = sadd.s32 %s61, 1
    %s63 = scalar_select %p60, %s61, %s62
    %p66 = pneg %p60
    %p67 = scmp.eq.s32.totalorder %s13, 3
    %p68 = por %p66, %p67
    %p69 = scmp.ne.s32.totalorder %s61, %s64
    %p70 = scmp.eq.s32.totalorder %s13, 0
    %p71 = por %p69, %p70
    %p72 = scmp.ne.s32.totalorder %s61, %s64
    %p73 = scmp.eq.s32.totalorder %s18, 3
    %p74 = por %p72, %p73
    %p75 = scmp.ne.s32.totalorder %s64, %s65
    %p76 = scmp.eq.s32.totalorder %s18, 0
    %p77 = por %p75, %p76
    %p78 = scmp.ne.s32.totalorder %s64, %s65
    %p79 = scmp.eq.s32.totalorder %s19, 3
    %p80 = por %p78, %p79
    %p82 = scmp.ne.s32.totalorder %s65, %s81
    %p83 = scmp.eq.s32.totalorder %s19, 0
    %p84 = por %p82, %p83
    %s86 = sadd.s32 %s85, 1
    %p89 = scmp.eq.s32.totalorder %s13, 3
    %p90 = scmp.ne.s32.totalorder %s85, %s87
    %p91 = scmp.eq.s32.totalorder %s13, 0
    %p92 = por %p90, %p91
    %p93 = scmp.ne.s32.totalorder %s85, %s87
    %p94 = scmp.eq.s32.totalorder %s18, 3
    %p95 = por %p93, %p94
    %p96 = scmp.ne.s32.totalorder %s87, %s88
    %p97 = scmp.eq.s32.totalorder %s18, 0
    %p98 = por %p96, %p97
    %p99 = scmp.ne.s32.totalorder %s87, %s88
    %p100 = scmp.eq.s32.totalorder %s19, 3
    %p101 = por %p99, %p100
    %p103 = scmp.ne.s32.totalorder %s88, %s102
    %p104 = scmp.eq.s32.totalorder %s19, 0
    %p105 = por %p103, %p104
    %s107 = sadd.s32 %s106, 1
    %p110 = scmp.eq.s32.totalorder %s13, 3
    %p111 = scmp.ne.s32.totalorder %s106, %s108
    %p112 = scmp.eq.s32.totalorder %s13, 0
    %p113 = por %p111, %p112
    %p114 = scmp.ne.s32.totalorder %s106, %s108
    %p115 = scmp.eq.s32.totalorder %s18, 3
    %p116 = por %p114, %p115
    %p117 = scmp.ne.s32.totalorder %s108, %s109
    %p118 = scmp.eq.s32.totalorder %s18, 0
    %p119 = por %p117, %p118
    %p120 = scmp.ne.s32.totalorder %s108, %s109
    %p121 = scmp.eq.s32.totalorder %s19, 3
    %p122 = por %p120, %p121
    %p124 = scmp.ne.s32.totalorder %s109, %s123
    %p125 = scmp.eq.s32.totalorder %s19, 0
    %p126 = por %p124, %p125
    %s128 = sadd.s32 %s127, 1
    %p131 = scmp.eq.s32.totalorder %s13, 3
    %p132 = scmp.ne.s32.totalorder %s127, %s129
    %p133 = scmp.eq.s32.totalorder %s13, 0
    %p134 = por %p132, %p133
    %p135 = scmp.ne.s32.totalorder %s127, %s129
    %p136 = scmp.eq.s32.totalorder %s18, 3
    %p137 = por %p135, %p136
    %p138 = scmp.ne.s32.totalorder %s129, %s130
    %p139 = scmp.eq.s32.totalorder %s18, 0
    %p140 = por %p138, %p139
    %p141 = scmp.ne.s32.totalorder %s129, %s130
    %p142 = scmp.eq.s32.totalorder %s19, 3
    %p143 = por %p141, %p142
    %p145 = scmp.ne.s32.totalorder %s130, %s144
    %p146 = scmp.eq.s32.totalorder %s19, 0
    %p147 = por %p145, %p146
    %s149 = sadd.s32 %s148, 1
    %p152 = scmp.eq.s32.totalorder %s13, 3
    %p153 = scmp.ne.s32.totalorder %s148, %s150
    %p154 = scmp.eq.s32.totalorder %s13, 0
    %p155 = por %p153, %p154
    %p156 = scmp.ne.s32.totalorder %s148, %s150
    %p157 = scmp.eq.s32.totalorder %s18, 3
    %p158 = por %p156, %p157
    %p159 = scmp.ne.s32.totalorder %s150, %s151
    %p160 = scmp.eq.s32.totalorder %s18, 0
    %p161 = por %p159, %p160
    %p162 = scmp.ne.s32.totalorder %s150, %s151
    %p163 = scmp.eq.s32.totalorder %s19, 3
    %p164 = por %p162, %p163
    %p166 = scmp.ne.s32.totalorder %s151, %s165
    %p167 = scmp.eq.s32.totalorder %s19, 0
    %p168 = por %p166, %p167
    %s170 = sadd.s32 %s169, 1
    %p173 = scmp.eq.s32.totalorder %s13, 3
    %p174 = scmp.ne.s32.totalorder %s169, %s171
    %p175 = scmp.eq.s32.totalorder %s13, 0
    %p176 = por %p174, %p175
    %p177 = scmp.ne.s32.totalorder %s169, %s171
    %p178 = scmp.eq.s32.totalorder %s18, 3
    %p179 = por %p177, %p178
    %p180 = scmp.ne.s32.totalorder %s171, %s172
    %p181 = scmp.eq.s32.totalorder %s18, 0
    %p182 = por %p180, %p181
    %p183 = scmp.ne.s32.totalorder %s171, %s172
    %p184 = scmp.eq.s32.totalorder %s19, 3
    %p185 = por %p183, %p184
    %p187 = scmp.ne.s32.totalorder %s172, %s186
    %p188 = scmp.eq.s32.totalorder %s19, 0
    %p189 = por %p187, %p188
    %s190 = ssub.s32 %s20, %s32
    %s191 = ssub.s32 %s21, %s28
    %s192 = sor.u32 %s190, %s191
    %p193 = scmp.eq.s32.totalorder %s192, 0
    %s195 = sadd.s32 %s194, 1
    %s196 = scalar_select %p193, %s194, %s195
    %p199 = pneg %p193
    %p200 = scmp.eq.s32.totalorder %s13, 3
    %p201 = por %p199, %p200
    %p202 = scmp.ne.s32.totalorder %s194, %s197
    %p203 = scmp.eq.s32.totalorder %s13, 0
    %p204 = por %p202, %p203
    %p205 = scmp.ne.s32.totalorder %s194, %s197
    %p206 = scmp.eq.s32.totalorder %s18, 3
    %p207 = por %p205, %p206
    %p208 = scmp.ne.s32.totalorder %s197, %s198
    %p209 = scmp.eq.s32.totalorder %s18, 0
    %p210 = por %p208, %p209
    %p211 = scmp.ne.s32.totalorder %s197, %s198
    %p212 = scmp.eq.s32.totalorder %s19, 3
    %p213 = por %p211, %p212
    %p215 = scmp.ne.s32.totalorder %s198, %s214
    %p216 = scmp.eq.s32.totalorder %s19, 0
    %p217 = por %p215, %p216
    %p218 = scmp.le.s32.totalorder 1, %s13
    %p219 = scmp.lt.s32.totalorder %s13, 5
    %p220 = pnand %p218, %p219
    %p221 = pneg %p220
    // Predicated region
    $region9: #{aspp_forward.1} parent=5 // pred_check
      _
    $region10: #{aspp_forward.1} parent=5 // pred_check_branch
      %223 = sbr.rel (%p220) target = $region12
    $region11: #{aspp_forward.1} parent=5 // pred_region
      %s224 = ssub.s32 %s13, 1
      // Predicated region
      $region13: #{aspp_forward.1} parent=11 // pred_check
        %p225 = pneg %p51
      $region14: #{aspp_forward.1} parent=11 // pred_check_branch
        %227 = sbr.rel (%p225) target = $region16
      $region15: #{aspp_forward.1} parent=11 // pred_region
        %p228 = scmp.lt.s32.totalorder %s22, 1
        %s229 = scalar_select %p228, %s22, 1
        %s230 = smul.addr %s229, 364
        %s231 = smul.addr %s230, 4
        %s232 = scalar_lea.vmem %s0, %s231
      $region16: #{aspp_forward.1} parent=11 // pred_fallthru
        _
      // Predicated region
      $region17: #{aspp_forward.1} parent=11 // pred_check
        %p233 = pneg %p98
      $region18: #{aspp_forward.1} parent=11 // pred_check_branch
        %235 = sbr.rel (%p233) target = $region20
      $region19: #{aspp_forward.1} parent=11 // pred_region
        _
      $region20: #{aspp_forward.1} parent=11 // pred_fallthru
        _
      // Predicated region
      $region21: #{aspp_forward.1} parent=11 // pred_check
        %p236 = pneg %p119
      $region22: #{aspp_forward.1} parent=11 // pred_check_branch
        %238 = sbr.rel (%p236) target = $region24
      $region23: #{aspp_forward.1} parent=11 // pred_region
        _
      $region24: #{aspp_forward.1} parent=11 // pred_fallthru
        _
      // Predicated region
      $region25: #{aspp_forward.1} parent=11 // pred_check
        %p239 = pneg %p140
      $region26: #{aspp_forward.1} parent=11 // pred_check_branch
        %241 = sbr.rel (%p239) target = $region28
      $region27: #{aspp_forward.1} parent=11 // pred_region
        _
      $region28: #{aspp_forward.1} parent=11 // pred_fallthru
        _
      // Predicated region
      $region29: #{aspp_forward.1} parent=11 // pred_check
        %p242 = pneg %p161
      $region30: #{aspp_forward.1} parent=11 // pred_check_branch
        %244 = sbr.rel (%p242) target = $region32
      $region31: #{aspp_forward.1} parent=11 // pred_region
        _
      $region32: #{aspp_forward.1} parent=11 // pred_fallthru
        _
      // Predicated region
      $region33: #{aspp_forward.1} parent=11 // pred_check
        %p245 = pneg %p182
      $region34: #{aspp_forward.1} parent=11 // pred_check_branch
        %247 = sbr.rel (%p245) target = $region36
      $region35: #{aspp_forward.1} parent=11 // pred_region
        _
      $region36: #{aspp_forward.1} parent=11 // pred_fallthru
        _
    $region12: #{aspp_forward.1} parent=5 // pred_fallthru
      _
    %p248 = scmp.lt.s32.totalorder %s13, 4
    // Predicated region
    $region37: #{aspp_forward.1} parent=5 // pred_check
      %p249 = pneg %p248
    $region38: #{aspp_forward.1} parent=5 // pred_check_branch
      %251 = sbr.rel (%p249) target = $region40
    $region39: #{aspp_forward.1} parent=5 // pred_region
      // Predicated region
      $region41: #{aspp_forward.1} parent=39 // pred_check
        %p252 = pneg %p71
      $region42: #{aspp_forward.1} parent=39 // pred_check_branch
        %254 = sbr.rel (%p252) target = $region44
      $region43: #{aspp_forward.1} parent=39 // pred_region
        %p255 = scmp.lt.s32.totalorder %s20, 1
        %s256 = scalar_select %p255, %s20, 1
        %s257 = scalar_lea.vmem %s1, %s256
      $region44: #{aspp_forward.1} parent=39 // pred_fallthru
        _
    $region40: #{aspp_forward.1} parent=5 // pred_fallthru
      _
    %p258 = scmp.le.s32.totalorder 1, %s13
    %p259 = scmp.lt.s32.totalorder %s13, 5
    %p260 = pnand %p258, %p259
    %p261 = pneg %p260
    // Predicated region
    $region45: #{aspp_forward.1} parent=5 // pred_check
      _
    $region46: #{aspp_forward.1} parent=5 // pred_check_branch
      %263 = sbr.rel (%p260) target = $region48
    $region47: #{aspp_forward.1} parent=5 // pred_region
      %s264 = ssub.s32 %s13, 1
      %p265 = scmp.lt.s32.totalorder %s22, 1
      %s266 = scalar_select %p265, %s22, 1
      %s267 = smul.addr %s266, 364
      %s268 = smul.addr %s267, 4
      %s269 = scalar_lea.vmem %s0, %s268
      %p270 = pneg %p51
      %p271 = pneg %p48
      %p272 = scmp.lt.s32.totalorder %s22, 1
      %s273 = scalar_select %p272, %s22, 1
      %s274 = scalar_lea.vmem %s1, %s273
      %p275 = pneg %p77
      %p276 = pneg %p74
      %p277 = pneg %p98
      %p278 = pneg %p95
      %p279 = pneg %p119
      %p280 = pneg %p116
      %p281 = pneg %p140
      %p282 = pneg %p137
      %p283 = pneg %p161
      %p284 = pneg %p158
      %p285 = pneg %p182
      %p286 = pneg %p179
      %p287 = pneg %p210
      %p288 = pneg %p207
      %s289 = smul.u32 8, %s23
      %p290 = scmp.lt.s32.totalorder %s22, 1
      %s291 = scalar_select %p290, %s22, 1
      %p292 = scmp.lt.s32.totalorder %s289, 15
      %s293 = scalar_select %p292, %s289, 15
      %s294 = smul.addr %s293, 2
      %s295 = smul.addr %s291, 32
      %s296 = sadd.s32 %s294, %s295
      %s297 = smul.addr %s296, 8
      %s298 = scalar_lea.vmem %s7, %s297
      %p299 = scmp.lt.s32.totalorder %s22, 1
      %s300 = scalar_select %p299, %s22, 1
      %s301 = smul.addr %s300, 364
      %s302 = smul.addr %s301, 4
      %s303 = scalar_lea.vmem %s0, %s302
      %p304 = scmp.lt.s32.totalorder %s22, 1
      %s305 = scalar_select %p304, %s22, 1
      %s306 = scalar_lea.vmem %s1, %s305
      %s307 = smul.u32 8, %s23
      %p308 = scmp.lt.s32.totalorder %s22, 1
      %s309 = scalar_select %p308, %s22, 1
      %p310 = scmp.lt.s32.totalorder %s307, 15
      %s311 = scalar_select %p310, %s307, 15
      %s312 = smul.addr %s311, 2
      %s313 = smul.addr %s309, 32
      %s314 = sadd.s32 %s312, %s313
      %s315 = smul.addr %s314, 8
      %s316 = scalar_lea.vmem %s7, %s315
      %s317 = smul.u32 8, %s23
      %s319 = smul.u32 %s23, 8
      %s320 = sadd.s32 %s319, 18
      %s321 = smul.u32 %s320, 7
      %s322 = smul.addr %s321, 4
      %s323 = scalar_lea.vmem %s303, %s322
      %v324 = vld [vmem:[%s323 + $0x8] sm:$0xe]
      %v325 = vld [vmem:[%s323 + $0xc] sm:$0xf]
      %v326 = vld [vmem:[%s323 + $0x10] sm:$0x1]
      %v327 = vld [vmem:[%s323 + $0x24] sm:$0xe]
      %v328 = vld [vmem:[%s323 + $0x28] sm:$0xf]
      %v329 = vld [vmem:[%s323 + $0x2c] sm:$0x1]
      %v330 = vld [vmem:[%s323 + $0x40] sm:$0xe]
      %v331 = vld [vmem:[%s323 + $0x44] sm:$0xf]
      %v332 = vld [vmem:[%s323 + $0x48] sm:$0x1]
      %v333 = vld [vmem:[%s323 + $0x5c] sm:$0xe]
      %v334 = vld [vmem:[%s323 + $0x60] sm:$0xf]
      %v335 = vld [vmem:[%s323 + $0x64] sm:$0x1]
      %v336 = vld [vmem:[%s323 + $0x78] sm:$0xe]
      %v337 = vld [vmem:[%s323 + $0x7c] sm:$0xf]
      %v338 = vld [vmem:[%s323 + $0x80] sm:$0x1]
      %v339 = vld [vmem:[%s323 + $0x94] sm:$0xe]
      %v340 = vld [vmem:[%s323 + $0x98] sm:$0xf]
      %v341 = vld [vmem:[%s323 + $0x9c] sm:$0x1]
      %v342 = vld [vmem:[%s323 + $0xb0] sm:$0xe]
      %v343 = vld [vmem:[%s323 + $0xb4] sm:$0xf]
      %v344 = vld [vmem:[%s323 + $0xb8] sm:$0x1]
      %v345 = vld [vmem:[%s323 + $0xcc] sm:$0xe]
      %v346 = vld [vmem:[%s323 + $0xd0] sm:$0xf]
      %v347 = vld [vmem:[%s323 + $0xd4] sm:$0x1]
      %vm372 = vcmask 1042432
      %vm373 = vcmask 1046532
      %vm374 = vmor %vm372, %vm373
      %v375 = vrot.slane %v324, 5
      %v376 = vrot.slane %v375, 4
      %v377 = vrot.slane %v325, 5
      %v378 = vsel %vm374, %v376, %v377
      %v379 = vrot.slane %v377, 4
      %v380 = vrot.slane %v326, 5
      %v381 = vsel %vm374, %v379, %v380
      %v382 = vrot.slane %v327, 5
      %v383 = vrot.slane %v382, 4
      %v384 = vrot.slane %v328, 5
      %v385 = vsel %vm374, %v383, %v384
      %v386 = vrot.slane %v384, 4
      %v387 = vrot.slane %v329, 5
      %v388 = vsel %vm374, %v386, %v387
      %v389 = vrot.slane %v330, 5
      %v390 = vrot.slane %v389, 4
      %v391 = vrot.slane %v331, 5
      %v392 = vsel %vm374, %v390, %v391
      %v393 = vrot.slane %v391, 4
      %v394 = vrot.slane %v332, 5
      %v395 = vsel %vm374, %v393, %v394
      %v396 = vrot.slane %v333, 5
      %v397 = vrot.slane %v396, 4
      %v398 = vrot.slane %v334, 5
      %v399 = vsel %vm374, %v397, %v398
      %v400 = vrot.slane %v398, 4
      %v401 = vrot.slane %v335, 5
      %v402 = vsel %vm374, %v400, %v401
      %v403 = vrot.slane %v336, 5
      %v404 = vrot.slane %v403, 4
      %v405 = vrot.slane %v337, 5
      %v406 = vsel %vm374, %v404, %v405
      %v407 = vrot.slane %v405, 4
      %v408 = vrot.slane %v338, 5
      %v409 = vsel %vm374, %v407, %v408
      %v410 = vrot.slane %v339, 5
      %v411 = vrot.slane %v410, 4
      %v412 = vrot.slane %v340, 5
      %v413 = vsel %vm374, %v411, %v412
      %v414 = vrot.slane %v412, 4
      %v415 = vrot.slane %v341, 5
      %v416 = vsel %vm374, %v414, %v415
      %v417 = vrot.slane %v342, 5
      %v418 = vrot.slane %v417, 4
      %v419 = vrot.slane %v343, 5
      %v420 = vsel %vm374, %v418, %v419
      %v421 = vrot.slane %v419, 4
      %v422 = vrot.slane %v344, 5
      %v423 = vsel %vm374, %v421, %v422
      %v424 = vrot.slane %v345, 5
      %v425 = vrot.slane %v424, 4
      %v426 = vrot.slane %v346, 5
      %v427 = vsel %vm374, %v425, %v426
      %v428 = vrot.slane %v426, 4
      %v429 = vrot.slane %v347, 5
      %v430 = vsel %vm374, %v428, %v429
      %v431 = vld [vmem:[%s2] sm:$0xf]
      %v432 = vld [vmem:[%s2 + $0x4] sm:$0xf]
      %v433 = vld [vmem:[%s2 + $0x8] sm:$0xf]
      %v434 = vld [vmem:[%s2 + $0xc] sm:$0xf]
      %v435 = vld [vmem:[%s2 + $0x10] sm:$0xf]
      %v436 = vld [vmem:[%s2 + $0x14] sm:$0xf]
      %v437 = vld [vmem:[%s2 + $0x18] sm:$0xf]
      %v438 = vld [vmem:[%s2 + $0x1c] sm:$0xf]
      %v439 = vld [vmem:[%s2 + $0x20] sm:$0xf]
      %v440 = vld [vmem:[%s2 + $0x24] sm:$0xf]
      %v441 = vld [vmem:[%s2 + $0x28] sm:$0xf]
      %v442 = vld [vmem:[%s2 + $0x2c] sm:$0xf]
      %v443 = vld [vmem:[%s2 + $0x30] sm:$0xf]
      %v444 = vld [vmem:[%s2 + $0x34] sm:$0xf]
      %v445 = vld [vmem:[%s2 + $0x38] sm:$0xf]
      %v446 = vld [vmem:[%s2 + $0x3c] sm:$0xf]
      %v447 = vld [vmem:[%s3] sm:$0x1]
      %v449 = vlaneseq
      %v450 = vshrl.u32 %v449, 7
      %v451 = vsub.s32 0, %v450
      %v452 = vrot.slane %v447, %v451
      %v454 = vunpack.c.l.b16 %v378
      %v455 = vunpack.c.l.b16 %v381
      %v456 = vunpack.c.l.b16 %v385
      %v457 = vunpack.c.l.b16 %v388
      %v458 = vunpack.c.l.b16 %v392
      %v459 = vunpack.c.l.b16 %v395
      %v460 = vunpack.c.l.b16 %v399
      %v461 = vunpack.c.l.b16 %v402
      %v462 = vunpack.c.l.b16 %v406
      %v463 = vunpack.c.l.b16 %v409
      %v464 = vunpack.c.l.b16 %v413
      %v465 = vunpack.c.l.b16 %v416
      %v466 = vunpack.c.l.b16 %v420
      %v467 = vunpack.c.l.b16 %v423
      %v468 = vunpack.c.l.b16 %v427
      %v469 = vunpack.c.l.b16 %v430
      %v470 = vpack.c.b16 %v455, %v454
      %v471 = vpack.c.b16 %v457, %v456
      %v472 = vpack.c.b16 %v459, %v458
      %v473 = vpack.c.b16 %v461, %v460
      %v474 = vpack.c.b16 %v463, %v462
      %v475 = vpack.c.b16 %v465, %v464
      %v476 = vpack.c.b16 %v467, %v466
      %v477 = vpack.c.b16 %v469, %v468
      %v502 = vunpack.c.l.b16 %v431
      %v503 = vunpack.c.l.b16 %v432
      %v504 = vunpack.c.l.b16 %v433
      %v505 = vunpack.c.l.b16 %v434
      %v506 = vunpack.c.l.b16 %v435
      %v507 = vunpack.c.l.b16 %v436
      %v508 = vunpack.c.l.b16 %v437
      %v509 = vunpack.c.l.b16 %v438
      %v510 = vunpack.c.l.b16 %v439
      %v511 = vunpack.c.l.b16 %v440
      %v512 = vunpack.c.l.b16 %v441
      %v513 = vunpack.c.l.b16 %v442
      %v514 = vunpack.c.l.b16 %v443
      %v515 = vunpack.c.l.b16 %v444
      %v516 = vunpack.c.l.b16 %v445
      %v517 = vunpack.c.l.b16 %v446
      %v518 = vpack.c.b16 %v503, %v502
      %v519 = vpack.c.b16 %v505, %v504
      %v520 = vpack.c.b16 %v507, %v506
      %v521 = vpack.c.b16 %v509, %v508
      %v522 = vpack.c.b16 %v511, %v510
      %v523 = vpack.c.b16 %v513, %v512
      %v524 = vpack.c.b16 %v515, %v514
      %v525 = vpack.c.b16 %v517, %v516
      %534 = vmatprep.subr.bf16.mxu0 0
      %535 = vmatpush1.bf16.msra.mxu0 %v518
      %536 = vmatprep.subr.bf16.mxu0 0
      %537 = vmatpush1.bf16.msra.mxu0 %v519
      %538 = vmatprep.subr.bf16.mxu0 0
      %539 = vmatpush1.bf16.msra.mxu0 %v520
      %540 = vmatprep.subr.bf16.mxu0 0
      %541 = vmatpush1.bf16.msra.mxu0 %v521
      %542 = vmatprep.subr.bf16.mxu0 0
      %543 = vmatpush1.bf16.msra.mxu0 %v522
      %544 = vmatprep.subr.bf16.mxu0 0
      %545 = vmatpush1.bf16.msra.mxu0 %v523
      %546 = vmatprep.subr.bf16.mxu0 0
      %547 = vmatpush1.bf16.msra.mxu0 %v524
      %548 = vmatprep.subr.bf16.mxu0 0
      %549 = vmatpush1.bf16.msra.mxu0 %v525
      %550 = vmatprep.subr.bf16.mxu0 0
      %551 = vmatpush1.bf16.msra.mxu0 0
      %552 = vmatprep.subr.bf16.mxu0 0
      %553 = vmatpush1.bf16.msra.mxu0 0
      %554 = vmatprep.subr.bf16.mxu0 0
      %555 = vmatpush1.bf16.msra.mxu0 0
      %556 = vmatprep.subr.bf16.mxu0 0
      %557 = vmatpush1.bf16.msra.mxu0 0
      %558 = vmatprep.subr.bf16.mxu0 0
      %559 = vmatpush1.bf16.msra.mxu0 0
      %560 = vmatprep.subr.bf16.mxu0 0
      %561 = vmatpush1.bf16.msra.mxu0 0
      %562 = vmatprep.subr.bf16.mxu0 0
      %563 = vmatpush1.bf16.msra.mxu0 0
      %564 = vmatprep.subr.bf16.mxu0 0
      %565 = vmatpush1.bf16.msra.mxu0 0
      %566 = vmatprep.mubr.bf16.mxu0 0
      %567 = vmatmul.mubr.bf16.gmra.mrb[0].mxu0 %v470
      %v568 = vpop.f32.mrb[0].mxu0
      %v569 = vadd.f32 %v452, %v568
      %v570 = vpop.f32.mrb[0].mxu0
      %v571 = vpop.f32.mrb[0].mxu0
      %v572 = vadd.f32 %v452, %v571
      %v573 = vpop.f32.mrb[0].mxu0
      %574 = vmatprep.mubr.bf16.mxu0 0
      %575 = vmatmul.mubr.bf16.gmra.mrb[0].mxu0 %v471
      %v576 = vpop.f32.mrb[0].mxu0
      %v577 = vadd.f32 %v452, %v576
      %v578 = vpop.f32.mrb[0].mxu0
      %v579 = vpop.f32.mrb[0].mxu0
      %v580 = vadd.f32 %v452, %v579
      %v581 = vpop.f32.mrb[0].mxu0
      %582 = vmatprep.mubr.bf16.mxu0 0
      %583 = vmatmul.mubr.bf16.gmra.mrb[0].mxu0 %v472
      %v584 = vpop.f32.mrb[0].mxu0
      %v585 = vadd.f32 %v452, %v584
      %v586 = vpop.f32.mrb[0].mxu0
      %v587 = vpop.f32.mrb[0].mxu0
      %v588 = vadd.f32 %v452, %v587
      %v589 = vpop.f32.mrb[0].mxu0
      %590 = vmatprep.mubr.bf16.mxu0 0
      %591 = vmatmul.mubr.bf16.gmra.mrb[0].mxu0 %v473
      %v592 = vpop.f32.mrb[0].mxu0
      %v593 = vadd.f32 %v452, %v592
      %v594 = vpop.f32.mrb[0].mxu0
      %v595 = vpop.f32.mrb[0].mxu0
      %v596 = vadd.f32 %v452, %v595
      %v597 = vpop.f32.mrb[0].mxu0
      %598 = vmatprep.mubr.bf16.mxu0 0
      %599 = vmatmul.mubr.bf16.gmra.mrb[0].mxu0 %v474
      %v600 = vpop.f32.mrb[0].mxu0
      %v601 = vadd.f32 %v452, %v600
      %v602 = vpop.f32.mrb[0].mxu0
      %v603 = vpop.f32.mrb[0].mxu0
      %v604 = vadd.f32 %v452, %v603
      %v605 = vpop.f32.mrb[0].mxu0
      %606 = vmatprep.mubr.bf16.mxu0 0
      %607 = vmatmul.mubr.bf16.gmra.mrb[0].mxu0 %v475
      %v608 = vpop.f32.mrb[0].mxu0
      %v609 = vadd.f32 %v452, %v608
      %v610 = vpop.f32.mrb[0].mxu0
      %v611 = vpop.f32.mrb[0].mxu0
      %v612 = vadd.f32 %v452, %v611
      %v613 = vpop.f32.mrb[0].mxu0
      %614 = vmatprep.mubr.bf16.mxu0 0
      %615 = vmatmul.mubr.bf16.gmra.mrb[0].mxu0 %v476
      %v616 = vpop.f32.mrb[0].mxu0
      %v617 = vadd.f32 %v452, %v616
      %v618 = vpop.f32.mrb[0].mxu0
      %v619 = vpop.f32.mrb[0].mxu0
      %v620 = vadd.f32 %v452, %v619
      %v621 = vpop.f32.mrb[0].mxu0
      %622 = vmatprep.mubr.bf16.mxu0 0
      %623 = vmatmul.mubr.bf16.gmra.mrb[0].mxu0 %v477
      %v624 = vpop.f32.mrb[0].mxu0
      %v625 = vadd.f32 %v452, %v624
      %v626 = vpop.f32.mrb[0].mxu0
      %v627 = vpop.f32.mrb[0].mxu0
      %v628 = vadd.f32 %v452, %v627
      %v629 = vpop.f32.mrb[0].mxu0
      %630 = vdwg.mxu0
      %v631 = vmax.f32 %v569, 0.0
      %v632 = vmax.f32 %v572, 0.0
      %v633 = vmax.f32 %v577, 0.0
      %v634 = vmax.f32 %v580, 0.0
      %v635 = vmax.f32 %v585, 0.0
      %v636 = vmax.f32 %v588, 0.0
      %v637 = vmax.f32 %v593, 0.0
      %v638 = vmax.f32 %v596, 0.0
      %v639 = vmax.f32 %v601, 0.0
      %v640 = vmax.f32 %v604, 0.0
      %v641 = vmax.f32 %v609, 0.0
      %v642 = vmax.f32 %v612, 0.0
      %v643 = vmax.f32 %v617, 0.0
      %v644 = vmax.f32 %v620, 0.0
      %v645 = vmax.f32 %v625, 0.0
      %v646 = vmax.f32 %v628, 0.0
      %v647 = vld [vmem:[%s306] sm:$0x1]
      %v648 = vpack.c.bf16 %v632, %v631
      %v649 = vpack.c.bf16 %v634, %v633
      %v650 = vpack.c.bf16 %v636, %v635
      %v651 = vpack.c.bf16 %v638, %v637
      %v652 = vpack.c.bf16 %v640, %v639
      %v653 = vpack.c.bf16 %v642, %v641
      %v654 = vpack.c.bf16 %v644, %v643
      %v655 = vpack.c.bf16 %v646, %v645
      %v656 = vld [vmem:[%s6] sm:$0xf]
      %v657 = vld [vmem:[%s6 + $0x4] sm:$0xf]
      %v658 = vld [vmem:[%s6 + $0x8] sm:$0xf]
      %v659 = vld [vmem:[%s6 + $0xc] sm:$0xf]
      %v660 = vld [vmem:[%s6 + $0x10] sm:$0xf]
      %v661 = vld [vmem:[%s6 + $0x14] sm:$0xf]
      %v662 = vld [vmem:[%s6 + $0x18] sm:$0xf]
      %v663 = vld [vmem:[%s6 + $0x1c] sm:$0xf]
      %v664 = vld [vmem:[%s6 + $0x20] sm:$0xf]
      %v665 = vld [vmem:[%s6 + $0x24] sm:$0xf]
      %v666 = vld [vmem:[%s6 + $0x28] sm:$0xf]
      %v667 = vld [vmem:[%s6 + $0x2c] sm:$0xf]
      %v668 = vld [vmem:[%s6 + $0x30] sm:$0xf]
      %v669 = vld [vmem:[%s6 + $0x34] sm:$0xf]
      %v670 = vld [vmem:[%s6 + $0x38] sm:$0xf]
      %v671 = vld [vmem:[%s6 + $0x3c] sm:$0xf]
      %v688 = vunpack.c.l.b16 %v656
      %v689 = vunpack.c.l.b16 %v657
      %v690 = vunpack.c.l.b16 %v658
      %v691 = vunpack.c.l.b16 %v659
      %v692 = vunpack.c.l.b16 %v660
      %v693 = vunpack.c.l.b16 %v661
      %v694 = vunpack.c.l.b16 %v662
      %v695 = vunpack.c.l.b16 %v663
      %v696 = vunpack.c.l.b16 %v664
      %v697 = vunpack.c.l.b16 %v665
      %v698 = vunpack.c.l.b16 %v666
      %v699 = vunpack.c.l.b16 %v667
      %v700 = vunpack.c.l.b16 %v668
      %v701 = vunpack.c.l.b16 %v669
      %v702 = vunpack.c.l.b16 %v670
      %v703 = vunpack.c.l.b16 %v671
      %v704 = vpack.c.b16 %v689, %v688
      %v705 = vpack.c.b16 %v691, %v690
      %v706 = vpack.c.b16 %v693, %v692
      %v707 = vpack.c.b16 %v695, %v694
      %v708 = vpack.c.b16 %v697, %v696
      %v709 = vpack.c.b16 %v699, %v698
      %v710 = vpack.c.b16 %v701, %v700
      %v711 = vpack.c.b16 %v703, %v702
      %720 = vmatprep.subr.bf16.mxu0 0
      %721 = vmatpush1.bf16.msra.mxu0 %v704
      %722 = vmatprep.subr.bf16.mxu0 0
      %723 = vmatpush1.bf16.msra.mxu0 %v705
      %724 = vmatprep.subr.bf16.mxu0 0
      %725 = vmatpush1.bf16.msra.mxu0 %v706
      %726 = vmatprep.subr.bf16.mxu0 0
      %727 = vmatpush1.bf16.msra.mxu0 %v707
      %728 = vmatprep.subr.bf16.mxu0 0
      %729 = vmatpush1.bf16.msra.mxu0 %v708
      %730 = vmatprep.subr.bf16.mxu0 0
      %731 = vmatpush1.bf16.msra.mxu0 %v709
      %732 = vmatprep.subr.bf16.mxu0 0
      %733 = vmatpush1.bf16.msra.mxu0 %v710
      %734 = vmatprep.subr.bf16.mxu0 0
      %735 = vmatpush1.bf16.msra.mxu0 %v711
      %736 = vmatprep.subr.bf16.mxu0 0
      %737 = vmatpush1.bf16.msra.mxu0 0
      %738 = vmatprep.subr.bf16.mxu0 0
      %739 = vmatpush1.bf16.msra.mxu0 0
      %740 = vmatprep.subr.bf16.mxu0 0
      %741 = vmatpush1.bf16.msra.mxu0 0
      %742 = vmatprep.subr.bf16.mxu0 0
      %743 = vmatpush1.bf16.msra.mxu0 0
      %744 = vmatprep.subr.bf16.mxu0 0
      %745 = vmatpush1.bf16.msra.mxu0 0
      %746 = vmatprep.subr.bf16.mxu0 0
      %747 = vmatpush1.bf16.msra.mxu0 0
      %748 = vmatprep.subr.bf16.mxu0 0
      %749 = vmatpush1.bf16.msra.mxu0 0
      %750 = vmatprep.subr.bf16.mxu0 0
      %751 = vmatpush1.bf16.msra.mxu0 0
      %752 = vmatprep.mubr.bf16.mxu0 0
      %753 = vmatmul.mubr.bf16.gmra.mrb[0].mxu0 %v648
      %v754 = vpop.f32.mrb[0].mxu0
      %v755 = vadd.f32 0.0, %v754
      %v756 = vpop.f32.mrb[0].mxu0
      %v757 = vpop.f32.mrb[0].mxu0
      %v758 = vadd.f32 0.0, %v757
      %v759 = vpop.f32.mrb[0].mxu0
      %760 = vmatprep.mubr.bf16.mxu0 0
      %761 = vmatmul.mubr.bf16.gmra.mrb[0].mxu0 %v649
      %v762 = vpop.f32.mrb[0].mxu0
      %v763 = vadd.f32 0.0, %v762
      %v764 = vpop.f32.mrb[0].mxu0
      %v765 = vpop.f32.mrb[0].mxu0
      %v766 = vadd.f32 0.0, %v765
      %v767 = vpop.f32.mrb[0].mxu0
      %768 = vmatprep.mubr.bf16.mxu0 0
      %769 = vmatmul.mubr.bf16.gmra.mrb[0].mxu0 %v650
      %v770 = vpop.f32.mrb[0].mxu0
      %v771 = vadd.f32 0.0, %v770
      %v772 = vpop.f32.mrb[0].mxu0
      %v773 = vpop.f32.mrb[0].mxu0
      %v774 = vadd.f32 0.0, %v773
      %v775 = vpop.f32.mrb[0].mxu0
      %776 = vmatprep.mubr.bf16.mxu0 0
      %777 = vmatmul.mubr.bf16.gmra.mrb[0].mxu0 %v651
      %v778 = vpop.f32.mrb[0].mxu0
      %v779 = vadd.f32 0.0, %v778
      %v780 = vpop.f32.mrb[0].mxu0
      %v781 = vpop.f32.mrb[0].mxu0
      %v782 = vadd.f32 0.0, %v781
      %v783 = vpop.f32.mrb[0].mxu0
      %784 = vmatprep.mubr.bf16.mxu0 0
      %785 = vmatmul.mubr.bf16.gmra.mrb[0].mxu0 %v652
      %v786 = vpop.f32.mrb[0].mxu0
      %v787 = vadd.f32 0.0, %v786
      %v788 = vpop.f32.mrb[0].mxu0
      %v789 = vpop.f32.mrb[0].mxu0
      %v790 = vadd.f32 0.0, %v789
      %v791 = vpop.f32.mrb[0].mxu0
      %792 = vmatprep.mubr.bf16.mxu0 0
      %793 = vmatmul.mubr.bf16.gmra.mrb[0].mxu0 %v653
      %v794 = vpop.f32.mrb[0].mxu0
      %v795 = vadd.f32 0.0, %v794
      %v796 = vpop.f32.mrb[0].mxu0
      %v797 = vpop.f32.mrb[0].mxu0
      %v798 = vadd.f32 0.0, %v797
      %v799 = vpop.f32.mrb[0].mxu0
      %800 = vmatprep.mubr.bf16.mxu0 0
      %801 = vmatmul.mubr.bf16.gmra.mrb[0].mxu0 %v654
      %v802 = vpop.f32.mrb[0].mxu0
      %v803 = vadd.f32 0.0, %v802
      %v804 = vpop.f32.mrb[0].mxu0
      %v805 = vpop.f32.mrb[0].mxu0
      %v806 = vadd.f32 0.0, %v805
      %v807 = vpop.f32.mrb[0].mxu0
      %808 = vmatprep.mubr.bf16.mxu0 0
      %809 = vmatmul.mubr.bf16.gmra.mrb[0].mxu0 %v655
      %v810 = vpop.f32.mrb[0].mxu0
      %v811 = vadd.f32 0.0, %v810
      %v812 = vpop.f32.mrb[0].mxu0
      %v813 = vpop.f32.mrb[0].mxu0
      %v814 = vadd.f32 0.0, %v813
      %v815 = vpop.f32.mrb[0].mxu0
      %816 = vdwg.mxu0
      %v818 = vlaneseq
      %v819 = vshrl.u32 %v818, 7
      %v820 = vsub.s32 0, %v819
      %v821 = vrot.slane %v647, %v820
      %v823 = vadd.f32 %v821, %v755
      %v824 = vadd.f32 %v821, %v758
      %v825 = vadd.f32 %v821, %v763
      %v826 = vadd.f32 %v821, %v766
      %v827 = vadd.f32 %v821, %v771
      %v828 = vadd.f32 %v821, %v774
      %v829 = vadd.f32 %v821, %v779
      %v830 = vadd.f32 %v821, %v782
      %v831 = vadd.f32 %v821, %v787
      %v832 = vadd.f32 %v821, %v790
      %v833 = vadd.f32 %v821, %v795
      %v834 = vadd.f32 %v821, %v798
      %v835 = vadd.f32 %v821, %v803
      %v836 = vadd.f32 %v821, %v806
      %v837 = vadd.f32 %v821, %v811
      %v838 = vadd.f32 %v821, %v814
      %s839 = sadd.s32 %s319, 12
      %s840 = smul.u32 %s839, 7
      %s841 = smul.addr %s840, 4
      %s842 = scalar_lea.vmem %s303, %s841
      %v843 = vld [vmem:[%s842 + $0x4] sm:$0xc]
      %v844 = vld [vmem:[%s842 + $0x8] sm:$0xf]
      %v845 = vld [vmem:[%s842 + $0xc] sm:$0x3]
      %v846 = vld [vmem:[%s842 + $0x20] sm:$0xc]
      %v847 = vld [vmem:[%s842 + $0x24] sm:$0xf]
      %v848 = vld [vmem:[%s842 + $0x28] sm:$0x3]
      %v849 = vld [vmem:[%s842 + $0x3c] sm:$0xc]
      %v850 = vld [vmem:[%s842 + $0x40] sm:$0xf]
      %v851 = vld [vmem:[%s842 + $0x44] sm:$0x3]
      %v852 = vld [vmem:[%s842 + $0x58] sm:$0xc]
      %v853 = vld [vmem:[%s842 + $0x5c] sm:$0xf]
      %v854 = vld [vmem:[%s842 + $0x60] sm:$0x3]
      %v855 = vld [vmem:[%s842 + $0x74] sm:$0xc]
      %v856 = vld [vmem:[%s842 + $0x78] sm:$0xf]
      %v857 = vld [vmem:[%s842 + $0x7c] sm:$0x3]
      %v858 = vld [vmem:[%s842 + $0x90] sm:$0xc]
      %v859 = vld [vmem:[%s842 + $0x94] sm:$0xf]
      %v860 = vld [vmem:[%s842 + $0x98] sm:$0x3]
      %v861 = vld [vmem:[%s842 + $0xac] sm:$0xc]
      %v862 = vld [vmem:[%s842 + $0xb0] sm:$0xf]
      %v863 = vld [vmem:[%s842 + $0xb4] sm:$0x3]
      %v864 = vld [vmem:[%s842 + $0xc8] sm:$0xc]
      %v865 = vld [vmem:[%s842 + $0xcc] sm:$0xf]
      %v866 = vld [vmem:[%s842 + $0xd0] sm:$0x3]
      %vm891 = vcmask 1041408
      %vm892 = vcmask 1045508
      %vm893 = vmor %vm891, %vm892
      %v894 = vrot.slane %v843, 6
      %v895 = vrot.slane %v894, 4
      %v896 = vrot.slane %v844, 6
      %v897 = vsel %vm893, %v895, %v896
      %v898 = vrot.slane %v896, 4
      %v899 = vrot.slane %v845, 6
      %v900 = vsel %vm893, %v898, %v899
      %v901 = vrot.slane %v846, 6
      %v902 = vrot.slane %v901, 4
      %v903 = vrot.slane %v847, 6
      %v904 = vsel %vm893, %v902, %v903
      %v905 = vrot.slane %v903, 4
      %v906 = vrot.slane %v848, 6
      %v907 = vsel %vm893, %v905, %v906
      %v908 = vrot.slane %v849, 6
      %v909 = vrot.slane %v908, 4
      %v910 = vrot.slane %v850, 6
      %v911 = vsel %vm893, %v909, %v910
      %v912 = vrot.slane %v910, 4
      %v913 = vrot.slane %v851, 6
      %v914 = vsel %vm893, %v912, %v913
      %v915 = vrot.slane %v852, 6
      %v916 = vrot.slane %v915, 4
      %v917 = vrot.slane %v853, 6
      %v918 = vsel %vm893, %v916, %v917
      %v919 = vrot.slane %v917, 4
      %v920 = vrot.slane %v854, 6
      %v921 = vsel %vm893, %v919, %v920
      %v922 = vrot.slane %v855, 6
      %v923 = vrot.slane %v922, 4
      %v924 = vrot.slane %v856, 6
      %v925 = vsel %vm893, %v923, %v924
      %v926 = vrot.slane %v924, 4
      %v927 = vrot.slane %v857, 6
      %v928 = vsel %vm893, %v926, %v927
      %v929 = vrot.slane %v858, 6
      %v930 = vrot.slane %v929, 4
      %v931 = vrot.slane %v859, 6
      %v932 = vsel %vm893, %v930, %v931
      %v933 = vrot.slane %v931, 4
      %v934 = vrot.slane %v860, 6
      %v935 = vsel %vm893, %v933, %v934
      %v936 = vrot.slane %v861, 6
      %v937 = vrot.slane %v936, 4
      %v938 = vrot.slane %v862, 6
      %v939 = vsel %vm893, %v937, %v938
      %v940 = vrot.slane %v938, 4
      %v941 = vrot.slane %v863, 6
      %v942 = vsel %vm893, %v940, %v941
      %v943 = vrot.slane %v864, 6
      %v944 = vrot.slane %v943, 4
      %v945 = vrot.slane %v865, 6
      %v946 = vsel %vm893, %v944, %v945
      %v947 = vrot.slane %v945, 4
      %v948 = vrot.slane %v866, 6
      %v949 = vsel %vm893, %v947, %v948
      %v950 = vld [vmem:[%s4] sm:$0xf]
      %v951 = vld [vmem:[%s4 + $0x4] sm:$0xf]
      %v952 = vld [vmem:[%s4 + $0x8] sm:$0xf]
      %v953 = vld [vmem:[%s4 + $0xc] sm:$0xf]
      %v954 = vld [vmem:[%s4 + $0x10] sm:$0xf]
      %v955 = vld [vmem:[%s4 + $0x14] sm:$0xf]
      %v956 = vld [vmem:[%s4 + $0x18] sm:$0xf]
      %v957 = vld [vmem:[%s4 + $0x1c] sm:$0xf]
      %v958 = vld [vmem:[%s4 + $0x20] sm:$0xf]
      %v959 = vld [vmem:[%s4 + $0x24] sm:$0xf]
      %v960 = vld [vmem:[%s4 + $0x28] sm:$0xf]
      %v961 = vld [vmem:[%s4 + $0x2c] sm:$0xf]
      %v962 = vld [vmem:[%s4 + $0x30] sm:$0xf]
      %v963 = vld [vmem:[%s4 + $0x34] sm:$0xf]
      %v964 = vld [vmem:[%s4 + $0x38] sm:$0xf]
      %v965 = vld [vmem:[%s4 + $0x3c] sm:$0xf]
      %v966 = vld [vmem:[%s842 + $0x8] sm:$0xe]
      %v967 = vld [vmem:[%s842 + $0xc] sm:$0xf]
      %v968 = vld [vmem:[%s842 + $0x10] sm:$0x1]
      %v969 = vld [vmem:[%s842 + $0x24] sm:$0xe]
      %v970 = vld [vmem:[%s842 + $0x28] sm:$0xf]
      %v971 = vld [vmem:[%s842 + $0x2c] sm:$0x1]
      %v972 = vld [vmem:[%s842 + $0x40] sm:$0xe]
      %v973 = vld [vmem:[%s842 + $0x44] sm:$0xf]
      %v974 = vld [vmem:[%s842 + $0x48] sm:$0x1]
      %v975 = vld [vmem:[%s842 + $0x5c] sm:$0xe]
      %v976 = vld [vmem:[%s842 + $0x60] sm:$0xf]
      %v977 = vld [vmem:[%s842 + $0x64] sm:$0x1]
      %v978 = vld [vmem:[%s842 + $0x78] sm:$0xe]
      %v979 = vld [vmem:[%s842 + $0x7c] sm:$0xf]
      %v980 = vld [vmem:[%s842 + $0x80] sm:$0x1]
      %v981 = vld [vmem:[%s842 + $0x94] sm:$0xe]
      %v982 = vld [vmem:[%s842 + $0x98] sm:$0xf]
      %v983 = vld [vmem:[%s842 + $0x9c] sm:$0x1]
      %v984 = vld [vmem:[%s842 + $0xb0] sm:$0xe]
      %v985 = vld [vmem:[%s842 + $0xb4] sm:$0xf]
      %v986 = vld [vmem:[%s842 + $0xb8] sm:$0x1]
      %v987 = vld [vmem:[%s842 + $0xcc] sm:$0xe]
      %v988 = vld [vmem:[%s842 + $0xd0] sm:$0xf]
      %v989 = vld [vmem:[%s842 + $0xd4] sm:$0x1]
      %v1014 = vrot.slane %v966, 5
      %v1015 = vrot.slane %v1014, 4
      %v1016 = vrot.slane %v967, 5
      %v1017 = vsel %vm374, %v1015, %v1016
      %v1018 = vrot.slane %v1016, 4
      %v1019 = vrot.slane %v968, 5
      %v1020 = vsel %vm374, %v1018, %v1019
      %v1021 = vrot.slane %v969, 5
      %v1022 = vrot.slane %v1021, 4
      %v1023 = vrot.slane %v970, 5
      %v1024 = vsel %vm374, %v1022, %v1023
      %v1025 = vrot.slane %v1023, 4
      %v1026 = vrot.slane %v971, 5
      %v1027 = vsel %vm374, %v1025, %v1026
      %v1028 = vrot.slane %v972, 5
      %v1029 = vrot.slane %v1028, 4
      %v1030 = vrot.slane %v973, 5
      %v1031 = vsel %vm374, %v1029, %v1030
      %v1032 = vrot.slane %v1030, 4
      %v1033 = vrot.slane %v974, 5
      %v1034 = vsel %vm374, %v1032, %v1033
      %v1035 = vrot.slane %v975, 5
      %v1036 = vrot.slane %v1035, 4
      %v1037 = vrot.slane %v976, 5
      %v1038 = vsel %vm374, %v1036, %v1037
      %v1039 = vrot.slane %v1037, 4
      %v1040 = vrot.slane %v977, 5
      %v1041 = vsel %vm374, %v1039, %v1040
      %v1042 = vrot.slane %v978, 5
      %v1043 = vrot.slane %v1042, 4
      %v1044 = vrot.slane %v979, 5
      %v1045 = vsel %vm374, %v1043, %v1044
      %v1046 = vrot.slane %v1044, 4
      %v1047 = vrot.slane %v980, 5
      %v1048 = vsel %vm374, %v1046, %v1047
      %v1049 = vrot.slane %v981, 5
      %v1050 = vrot.slane %v1049, 4
      %v1051 = vrot.slane %v982, 5
      %v1052 = vsel %vm374, %v1050, %v1051
      %v1053 = vrot.slane %v1051, 4
      %v1054 = vrot.slane %v983, 5
      %v1055 = vsel %vm374, %v1053, %v1054
      %v1056 = vrot.slane %v984, 5
      %v1057 = vrot.slane %v1056, 4
      %v1058 = vrot.slane %v985, 5
      %v1059 = vsel %vm374, %v1057, %v1058
      %v1060 = vrot.slane %v1058, 4
      %v1061 = vrot.slane %v986, 5
      %v1062 = vsel %vm374, %v1060, %v1061
      %v1063 = vrot.slane %v987, 5
      %v1064 = vrot.slane %v1063, 4
      %v1065 = vrot.slane %v988, 5
      %v1066 = vsel %vm374, %v1064, %v1065
      %v1067 = vrot.slane %v1065, 4
      %v1068 = vrot.slane %v989, 5
      %v1069 = vsel %vm374, %v1067, %v1068
      %s1070 = scalar_lea.vmem %s4, 64
      %v1071 = vld [vmem:[%s1070] sm:$0xf]
      %v1072 = vld [vmem:[%s1070 + $0x4] sm:$0xf]
      %v1073 = vld [vmem:[%s1070 + $0x8] sm:$0xf]
      %v1074 = vld [vmem:[%s1070 + $0xc] sm:$0xf]
      %v1075 = vld [vmem:[%s1070 + $0x10] sm:$0xf]
      %v1076 = vld [vmem:[%s1070 + $0x14] sm:$0xf]
      %v1077 = vld [vmem:[%s1070 + $0x18] sm:$0xf]
      %v1078 = vld [vmem:[%s1070 + $0x1c] sm:$0xf]
      %v1079 = vld [vmem:[%s1070 + $0x20] sm:$0xf]
      %v1080 = vld [vmem:[%s1070 + $0x24] sm:$0xf]
      %v1081 = vld [vmem:[%s1070 + $0x28] sm:$0xf]
      %v1082 = vld [vmem:[%s1070 + $0x2c] sm:$0xf]
      %v1083 = vld [vmem:[%s1070 + $0x30] sm:$0xf]
      %v1084 = vld [vmem:[%s1070 + $0x34] sm:$0xf]
      %v1085 = vld [vmem:[%s1070 + $0x38] sm:$0xf]
      %v1086 = vld [vmem:[%s1070 + $0x3c] sm:$0xf]
      %v1087 = vunpack.c.l.b16 %v1017
      %v1088 = vunpack.c.l.b16 %v1020
      %v1089 = vunpack.c.l.b16 %v1024
      %v1090 = vunpack.c.l.b16 %v1027
      %v1091 = vunpack.c.l.b16 %v1031
      %v1092 = vunpack.c.l.b16 %v1034
      %v1093 = vunpack.c.l.b16 %v1038
      %v1094 = vunpack.c.l.b16 %v1041
      %v1095 = vunpack.c.l.b16 %v1045
      %v1096 = vunpack.c.l.b16 %v1048
      %v1097 = vunpack.c.l.b16 %v1052
      %v1098 = vunpack.c.l.b16 %v1055
      %v1099 = vunpack.c.l.b16 %v1059
      %v1100 = vunpack.c.l.b16 %v1062
      %v1101 = vunpack.c.l.b16 %v1066
      %v1102 = vunpack.c.l.b16 %v1069
      %v1103 = vpack.c.b16 %v1088, %v1087
      %v1104 = vpack.c.b16 %v1090, %v1089
      %v1105 = vpack.c.b16 %v1092, %v1091
      %v1106 = vpack.c.b16 %v1094, %v1093
      %v1107 = vpack.c.b16 %v1096, %v1095
      %v1108 = vpack.c.b16 %v1098, %v1097
      %v1109 = vpack.c.b16 %v1100, %v1099
      %v1110 = vpack.c.b16 %v1102, %v1101
      %v1135 = vunpack.c.l.b16 %v1071
      %v1136 = vunpack.c.l.b16 %v1072
      %v1137 = vunpack.c.l.b16 %v1073
      %v1138 = vunpack.c.l.b16 %v1074
      %v1139 = vunpack.c.l.b16 %v1075
      %v1140 = vunpack.c.l.b16 %v1076
      %v1141 = vunpack.c.l.b16 %v1077
      %v1142 = vunpack.c.l.b16 %v1078
      %v1143 = vunpack.c.l.b16 %v1079
      %v1144 = vunpack.c.l.b16 %v1080
      %v1145 = vunpack.c.l.b16 %v1081
      %v1146 = vunpack.c.l.b16 %v1082
      %v1147 = vunpack.c.l.b16 %v1083
      %v1148 = vunpack.c.l.b16 %v1084
      %v1149 = vunpack.c.l.b16 %v1085
      %v1150 = vunpack.c.l.b16 %v1086
      %v1151 = vpack.c.b16 %v1136, %v1135
      %v1152 = vpack.c.b16 %v1138, %v1137
      %v1153 = vpack.c.b16 %v1140, %v1139
      %v1154 = vpack.c.b16 %v1142, %v1141
      %v1155 = vpack.c.b16 %v1144, %v1143
      %v1156 = vpack.c.b16 %v1146, %v1145
      %v1157 = vpack.c.b16 %v1148, %v1147
      %v1158 = vpack.c.b16 %v1150, %v1149
      %1167 = vmatprep.subr.bf16.mxu0 0
      %1168 = vmatpush1.bf16.msra.mxu0 %v1151
      %1169 = vmatprep.subr.bf16.mxu0 0
      %1170 = vmatpush1.bf16.msra.mxu0 %v1152
      %1171 = vmatprep.subr.bf16.mxu0 0
      %1172 = vmatpush1.bf16.msra.mxu0 %v1153
      %1173 = vmatprep.subr.bf16.mxu0 0
      %1174 = vmatpush1.bf16.msra.mxu0 %v1154
      %1175 = vmatprep.subr.bf16.mxu0 0
      %1176 = vmatpush1.bf16.msra.mxu0 %v1155
      %1177 = vmatprep.subr.bf16.mxu0 0
      %1178 = vmatpush1.bf16.msra.mxu0 %v1156
      %1179 = vmatprep.subr.bf16.mxu0 0
      %1180 = vmatpush1.bf16.msra.mxu0 %v1157
      %1181 = vmatprep.subr.bf16.mxu0 0
      %1182 = vmatpush1.bf16.msra.mxu0 %v1158
      %1183 = vmatprep.subr.bf16.mxu0 0
      %1184 = vmatpush1.bf16.msra.mxu0 0
      %1185 = vmatprep.subr.bf16.mxu0 0
      %1186 = vmatpush1.bf16.msra.mxu0 0
      %1187 = vmatprep.subr.bf16.mxu0 0
      %1188 = vmatpush1.bf16.msra.mxu0 0
      %1189 = vmatprep.subr.bf16.mxu0 0
      %1190 = vmatpush1.bf16.msra.mxu0 0
      %1191 = vmatprep.subr.bf16.mxu0 0
      %1192 = vmatpush1.bf16.msra.mxu0 0
      %1193 = vmatprep.subr.bf16.mxu0 0
      %1194 = vmatpush1.bf16.msra.mxu0 0
      %1195 = vmatprep.subr.bf16.mxu0 0
      %1196 = vmatpush1.bf16.msra.mxu0 0
      %1197 = vmatprep.subr.bf16.mxu0 0
      %1198 = vmatpush1.bf16.msra.mxu0 0
      %1199 = vmatprep.mubr.bf16.mxu0 0
      %1200 = vmatmul.mubr.bf16.gmra.mrb[0].mxu0 %v1103
      %v1201 = vpop.f32.mrb[0].mxu0
      %v1202 = vadd.f32 0.0, %v1201
      %v1203 = vpop.f32.mrb[0].mxu0
      %v1204 = vpop.f32.mrb[0].mxu0
      %v1205 = vadd.f32 0.0, %v1204
      %v1206 = vpop.f32.mrb[0].mxu0
      %1207 = vmatprep.mubr.bf16.mxu0 0
      %1208 = vmatmul.mubr.bf16.gmra.mrb[0].mxu0 %v1104
      %v1209 = vpop.f32.mrb[0].mxu0
      %v1210 = vadd.f32 0.0, %v1209
      %v1211 = vpop.f32.mrb[0].mxu0
      %v1212 = vpop.f32.mrb[0].mxu0
      %v1213 = vadd.f32 0.0, %v1212
      %v1214 = vpop.f32.mrb[0].mxu0
      %1215 = vmatprep.mubr.bf16.mxu0 0
      %1216 = vmatmul.mubr.bf16.gmra.mrb[0].mxu0 %v1105
      %v1217 = vpop.f32.mrb[0].mxu0
      %v1218 = vadd.f32 0.0, %v1217
      %v1219 = vpop.f32.mrb[0].mxu0
      %v1220 = vpop.f32.mrb[0].mxu0
      %v1221 = vadd.f32 0.0, %v1220
      %v1222 = vpop.f32.mrb[0].mxu0
      %1223 = vmatprep.mubr.bf16.mxu0 0
      %1224 = vmatmul.mubr.bf16.gmra.mrb[0].mxu0 %v1106
      %v1225 = vpop.f32.mrb[0].mxu0
      %v1226 = vadd.f32 0.0, %v1225
      %v1227 = vpop.f32.mrb[0].mxu0
      %v1228 = vpop.f32.mrb[0].mxu0
      %v1229 = vadd.f32 0.0, %v1228
      %v1230 = vpop.f32.mrb[0].mxu0
      %1231 = vmatprep.mubr.bf16.mxu0 0
      %1232 = vmatmul.mubr.bf16.gmra.mrb[0].mxu0 %v1107
      %v1233 = vpop.f32.mrb[0].mxu0
      %v1234 = vadd.f32 0.0, %v1233
      %v1235 = vpop.f32.mrb[0].mxu0
      %v1236 = vpop.f32.mrb[0].mxu0
      %v1237 = vadd.f32 0.0, %v1236
      %v1238 = vpop.f32.mrb[0].mxu0
      %1239 = vmatprep.mubr.bf16.mxu0 0
      %1240 = vmatmul.mubr.bf16.gmra.mrb[0].mxu0 %v1108
      %v1241 = vpop.f32.mrb[0].mxu0
      %v1242 = vadd.f32 0.0, %v1241
      %v1243 = vpop.f32.mrb[0].mxu0
      %v1244 = vpop.f32.mrb[0].mxu0
      %v1245 = vadd.f32 0.0, %v1244
      %v1246 = vpop.f32.mrb[0].mxu0
      %1247 = vmatprep.mubr.bf16.mxu0 0
      %1248 = vmatmul.mubr.bf16.gmra.mrb[0].mxu0 %v1109
      %v1249 = vpop.f32.mrb[0].mxu0
      %v1250 = vadd.f32 0.0, %v1249
      %v1251 = vpop.f32.mrb[0].mxu0
      %v1252 = vpop.f32.mrb[0].mxu0
      %v1253 = vadd.f32 0.0, %v1252
      %v1254 = vpop.f32.mrb[0].mxu0
      %1255 = vmatprep.mubr.bf16.mxu0 0
      %1256 = vmatmul.mubr.bf16.gmra.mrb[0].mxu0 %v1110
      %v1257 = vpop.f32.mrb[0].mxu0
      %v1258 = vadd.f32 0.0, %v1257
      %v1259 = vpop.f32.mrb[0].mxu0
      %v1260 = vpop.f32.mrb[0].mxu0
      %v1261 = vadd.f32 0.0, %v1260
      %v1262 = vpop.f32.mrb[0].mxu0
      %1263 = vdwg.mxu0
      %v1264 = vunpack.c.l.b16 %v897
      %v1265 = vunpack.c.l.b16 %v900
      %v1266 = vunpack.c.l.b16 %v904
      %v1267 = vunpack.c.l.b16 %v907
      %v1268 = vunpack.c.l.b16 %v911
      %v1269 = vunpack.c.l.b16 %v914
      %v1270 = vunpack.c.l.b16 %v918
      %v1271 = vunpack.c.l.b16 %v921
      %v1272 = vunpack.c.l.b16 %v925
      %v1273 = vunpack.c.l.b16 %v928
      %v1274 = vunpack.c.l.b16 %v932
      %v1275 = vunpack.c.l.b16 %v935
      %v1276 = vunpack.c.l.b16 %v939
      %v1277 = vunpack.c.l.b16 %v942
      %v1278 = vunpack.c.l.b16 %v946
      %v1279 = vunpack.c.l.b16 %v949
      %v1280 = vpack.c.b16 %v1265, %v1264
      %v1281 = vpack.c.b16 %v1267, %v1266
      %v1282 = vpack.c.b16 %v1269, %v1268
      %v1283 = vpack.c.b16 %v1271, %v1270
      %v1284 = vpack.c.b16 %v1273, %v1272
      %v1285 = vpack.c.b16 %v1275, %v1274
      %v1286 = vpack.c.b16 %v1277, %v1276
      %v1287 = vpack.c.b16 %v1279, %v1278
      %v1312 = vunpack.c.l.b16 %v950
      %v1313 = vunpack.c.l.b16 %v951
      %v1314 = vunpack.c.l.b16 %v952
      %v1315 = vunpack.c.l.b16 %v953
      %v1316 = vunpack.c.l.b16 %v954
      %v1317 = vunpack.c.l.b16 %v955
      %v1318 = vunpack.c.l.b16 %v956
      %v1319 = vunpack.c.l.b16 %v957
      %v1320 = vunpack.c.l.b16 %v958
      %v1321 = vunpack.c.l.b16 %v959
      %v1322 = vunpack.c.l.b16 %v960
      %v1323 = vunpack.c.l.b16 %v961
      %v1324 = vunpack.c.l.b16 %v962
      %v1325 = vunpack.c.l.b16 %v963
      %v1326 = vunpack.c.l.b16 %v964
      %v1327 = vunpack.c.l.b16 %v965
      %v1328 = vpack.c.b16 %v1313, %v1312
      %v1329 = vpack.c.b16 %v1315, %v1314
      %v1330 = vpack.c.b16 %v1317, %v1316
      %v1331 = vpack.c.b16 %v1319, %v1318
      %v1332 = vpack.c.b16 %v1321, %v1320
      %v1333 = vpack.c.b16 %v1323, %v1322
      %v1334 = vpack.c.b16 %v1325, %v1324
      %v1335 = vpack.c.b16 %v1327, %v1326
      %1344 = vmatprep.subr.bf16.mxu0 0
      %1345 = vmatpush1.bf16.msra.mxu0 %v1328
      %1346 = vmatprep.subr.bf16.mxu0 0
      %1347 = vmatpush1.bf16.msra.mxu0 %v1329
      %1348 = vmatprep.subr.bf16.mxu0 0
      %1349 = vmatpush1.bf16.msra.mxu0 %v1330
      %1350 = vmatprep.subr.bf16.mxu0 0
      %1351 = vmatpush1.bf16.msra.mxu0 %v1331
      %1352 = vmatprep.subr.bf16.mxu0 0
      %1353 = vmatpush1.bf16.msra.mxu0 %v1332
      %1354 = vmatprep.subr.bf16.mxu0 0
      %1355 = vmatpush1.bf16.msra.mxu0 %v1333
      %1356 = vmatprep.subr.bf16.mxu0 0
      %1357 = vmatpush1.bf16.msra.mxu0 %v1334
      %1358 = vmatprep.subr.bf16.mxu0 0
      %1359 = vmatpush1.bf16.msra.mxu0 %v1335
      %1360 = vmatprep.subr.bf16.mxu0 0
      %1361 = vmatpush1.bf16.msra.mxu0 0
      %1362 = vmatprep.subr.bf16.mxu0 0
      %1363 = vmatpush1.bf16.msra.mxu0 0
      %1364 = vmatprep.subr.bf16.mxu0 0
      %1365 = vmatpush1.bf16.msra.mxu0 0
      %1366 = vmatprep.subr.bf16.mxu0 0
      %1367 = vmatpush1.bf16.msra.mxu0 0
      %1368 = vmatprep.subr.bf16.mxu0 0
      %1369 = vmatpush1.bf16.msra.mxu0 0
      %1370 = vmatprep.subr.bf16.mxu0 0
      %1371 = vmatpush1.bf16.msra.mxu0 0
      %1372 = vmatprep.subr.bf16.mxu0 0
      %1373 = vmatpush1.bf16.msra.mxu0 0
      %1374 = vmatprep.subr.bf16.mxu0 0
      %1375 = vmatpush1.bf16.msra.mxu0 0
      %1376 = vmatprep.mubr.bf16.mxu0 0
      %1377 = vmatmul.mubr.bf16.gmra.mrb[0].mxu0 %v1280
      %v1378 = vpop.f32.mrb[0].mxu0
      %v1379 = vadd.f32 %v1202, %v1378
      %v1380 = vpop.f32.mrb[0].mxu0
      %v1381 = vpop.f32.mrb[0].mxu0
      %v1382 = vadd.f32 %v1205, %v1381
      %v1383 = vpop.f32.mrb[0].mxu0
      %1384 = vmatprep.mubr.bf16.mxu0 0
      %1385 = vmatmul.mubr.bf16.gmra.mrb[0].mxu0 %v1281
      %v1386 = vpop.f32.mrb[0].mxu0
      %v1387 = vadd.f32 %v1210, %v1386
      %v1388 = vpop.f32.mrb[0].mxu0
      %v1389 = vpop.f32.mrb[0].mxu0
      %v1390 = vadd.f32 %v1213, %v1389
      %v1391 = vpop.f32.mrb[0].mxu0
      %1392 = vmatprep.mubr.bf16.mxu0 0
      %1393 = vmatmul.mubr.bf16.gmra.mrb[0].mxu0 %v1282
      %v1394 = vpop.f32.mrb[0].mxu0
      %v1395 = vadd.f32 %v1218, %v1394
      %v1396 = vpop.f32.mrb[0].mxu0
      %v1397 = vpop.f32.mrb[0].mxu0
      %v1398 = vadd.f32 %v1221, %v1397
      %v1399 = vpop.f32.mrb[0].mxu0
      %1400 = vmatprep.mubr.bf16.mxu0 0
      %1401 = vmatmul.mubr.bf16.gmra.mrb[0].mxu0 %v1283
      %v1402 = vpop.f32.mrb[0].mxu0
      %v1403 = vadd.f32 %v1226, %v1402
      %v1404 = vpop.f32.mrb[0].mxu0
      %v1405 = vpop.f32.mrb[0].mxu0
      %v1406 = vadd.f32 %v1229, %v1405
      %v1407 = vpop.f32.mrb[0].mxu0
      %1408 = vmatprep.mubr.bf16.mxu0 0
      %1409 = vmatmul.mubr.bf16.gmra.mrb[0].mxu0 %v1284
      %v1410 = vpop.f32.mrb[0].mxu0
      %v1411 = vadd.f32 %v1234, %v1410
      %v1412 = vpop.f32.mrb[0].mxu0
      %v1413 = vpop.f32.mrb[0].mxu0
      %v1414 = vadd.f32 %v1237, %v1413
      %v1415 = vpop.f32.mrb[0].mxu0
      %1416 = vmatprep.mubr.bf16.mxu0 0
      %1417 = vmatmul.mubr.bf16.gmra.mrb[0].mxu0 %v1285
      %v1418 = vpop.f32.mrb[0].mxu0
      %v1419 = vadd.f32 %v1242, %v1418
      %v1420 = vpop.f32.mrb[0].mxu0
      %v1421 = vpop.f32.mrb[0].mxu0
      %v1422 = vadd.f32 %v1245, %v1421
      %v1423 = vpop.f32.mrb[0].mxu0
      %1424 = vmatprep.mubr.bf16.mxu0 0
      %1425 = vmatmul.mubr.bf16.gmra.mrb[0].mxu0 %v1286
      %v1426 = vpop.f32.mrb[0].mxu0
      %v1427 = vadd.f32 %v1250, %v1426
      %v1428 = vpop.f32.mrb[0].mxu0
      %v1429 = vpop.f32.mrb[0].mxu0
      %v1430 = vadd.f32 %v1253, %v1429
      %v1431 = vpop.f32.mrb[0].mxu0
      %1432 = vmatprep.mubr.bf16.mxu0 0
      %1433 = vmatmul.mubr.bf16.gmra.mrb[0].mxu0 %v1287
      %v1434 = vpop.f32.mrb[0].mxu0
      %v1435 = vadd.f32 %v1258, %v1434
      %v1436 = vpop.f32.mrb[0].mxu0
      %v1437 = vpop.f32.mrb[0].mxu0
      %v1438 = vadd.f32 %v1261, %v1437
      %v1439 = vpop.f32.mrb[0].mxu0
      %1440 = vdwg.mxu0
      %v1441 = vld [vmem:[%s842 + $0x10] sm:$0xf]
      %v1442 = vld [vmem:[%s842 + $0x2c] sm:$0xf]
      %v1443 = vld [vmem:[%s842 + $0x48] sm:$0xf]
      %v1444 = vld [vmem:[%s842 + $0x64] sm:$0xf]
      %v1445 = vld [vmem:[%s842 + $0x80] sm:$0xf]
      %v1446 = vld [vmem:[%s842 + $0x9c] sm:$0xf]
      %v1447 = vld [vmem:[%s842 + $0xb8] sm:$0xf]
      %v1448 = vld [vmem:[%s842 + $0xd4] sm:$0xf]
      %s1449 = scalar_lea.vmem %s4, 128
      %v1450 = vld [vmem:[%s1449] sm:$0xf]
      %v1451 = vld [vmem:[%s1449 + $0x4] sm:$0xf]
      %v1452 = vld [vmem:[%s1449 + $0x8] sm:$0xf]
      %v1453 = vld [vmem:[%s1449 + $0xc] sm:$0xf]
      %v1454 = vld [vmem:[%s1449 + $0x10] sm:$0xf]
      %v1455 = vld [vmem:[%s1449 + $0x14] sm:$0xf]
      %v1456 = vld [vmem:[%s1449 + $0x18] sm:$0xf]
      %v1457 = vld [vmem:[%s1449 + $0x1c] sm:$0xf]
      %v1458 = vld [vmem:[%s1449 + $0x20] sm:$0xf]
      %v1459 = vld [vmem:[%s1449 + $0x24] sm:$0xf]
      %v1460 = vld [vmem:[%s1449 + $0x28] sm:$0xf]
      %v1461 = vld [vmem:[%s1449 + $0x2c] sm:$0xf]
      %v1462 = vld [vmem:[%s1449 + $0x30] sm:$0xf]
      %v1463 = vld [vmem:[%s1449 + $0x34] sm:$0xf]
      %v1464 = vld [vmem:[%s1449 + $0x38] sm:$0xf]
      %v1465 = vld [vmem:[%s1449 + $0x3c] sm:$0xf]
      %v1474 = vunpack.c.l.b16 %v967
      %v1475 = vunpack.c.l.b16 %v1441
      %v1476 = vunpack.c.l.b16 %v970
      %v1477 = vunpack.c.l.b16 %v1442
      %v1478 = vunpack.c.l.b16 %v973
      %v1479 = vunpack.c.l.b16 %v1443
      %v1480 = vunpack.c.l.b16 %v976
      %v1481 = vunpack.c.l.b16 %v1444
      %v1482 = vunpack.c.l.b16 %v979
      %v1483 = vunpack.c.l.b16 %v1445
      %v1484 = vunpack.c.l.b16 %v982
      %v1485 = vunpack.c.l.b16 %v1446
      %v1486 = vunpack.c.l.b16 %v985
      %v1487 = vunpack.c.l.b16 %v1447
      %v1488 = vunpack.c.l.b16 %v988
      %v1489 = vunpack.c.l.b16 %v1448
      %v1490 = vpack.c.b16 %v1475, %v1474
      %v1491 = vpack.c.b16 %v1477, %v1476
      %v1492 = vpack.c.b16 %v1479, %v1478
      %v1493 = vpack.c.b16 %v1481, %v1480
      %v1494 = vpack.c.b16 %v1483, %v1482
      %v1495 = vpack.c.b16 %v1485, %v1484
      %v1496 = vpack.c.b16 %v1487, %v1486
      %v1497 = vpack.c.b16 %v1489, %v1488
      %v1522 = vunpack.c.l.b16 %v1450
      %v1523 = vunpack.c.l.b16 %v1451
      %v1524 = vunpack.c.l.b16 %v1452
      %v1525 = vunpack.c.l.b16 %v1453
      %v1526 = vunpack.c.l.b16 %v1454
      %v1527 = vunpack.c.l.b16 %v1455
      %v1528 = vunpack.c.l.b16 %v1456
      %v1529 = vunpack.c.l.b16 %v1457
      %v1530 = vunpack.c.l.b16 %v1458
      %v1531 = vunpack.c.l.b16 %v1459
      %v1532 = vunpack.c.l.b16 %v1460
      %v1533 = vunpack.c.l.b16 %v1461
      %v1534 = vunpack.c.l.b16 %v1462
      %v1535 = vunpack.c.l.b16 %v1463
      %v1536 = vunpack.c.l.b16 %v1464
      %v1537 = vunpack.c.l.b16 %v1465
      %v1538 = vpack.c.b16 %v1523, %v1522
      %v1539 = vpack.c.b16 %v1525, %v1524
      %v1540 = vpack.c.b16 %v1527, %v1526
      %v1541 = vpack.c.b16 %v1529, %v1528
      %v1542 = vpack.c.b16 %v1531, %v1530
      %v1543 = vpack.c.b16 %v1533, %v1532
      %v1544 = vpack.c.b16 %v1535, %v1534
      %v1545 = vpack.c.b16 %v1537, %v1536
      %1554 = vmatprep.subr.bf16.mxu0 0
      %1555 = vmatpush1.bf16.msra.mxu0 %v1538
      %1556 = vmatprep.subr.bf16.mxu0 0
      %1557 = vmatpush1.bf16.msra.mxu0 %v1539
      %1558 = vmatprep.subr.bf16.mxu0 0
      %1559 = vmatpush1.bf16.msra.mxu0 %v1540
      %1560 = vmatprep.subr.bf16.mxu0 0
      %1561 = vmatpush1.bf16.msra.mxu0 %v1541
      %1562 = vmatprep.subr.bf16.mxu0 0
      %1563 = vmatpush1.bf16.msra.mxu0 %v1542
      %1564 = vmatprep.subr.bf16.mxu0 0
      %1565 = vmatpush1.bf16.msra.mxu0 %v1543
      %1566 = vmatprep.subr.bf16.mxu0 0
      %1567 = vmatpush1.bf16.msra.mxu0 %v1544
      %1568 = vmatprep.subr.bf16.mxu0 0
      %1569 = vmatpush1.bf16.msra.mxu0 %v1545
      %1570 = vmatprep.subr.bf16.mxu0 0
      %1571 = vmatpush1.bf16.msra.mxu0 0
      %1572 = vmatprep.subr.bf16.mxu0 0
      %1573 = vmatpush1.bf16.msra.mxu0 0
      %1574 = vmatprep.subr.bf16.mxu0 0
      %1575 = vmatpush1.bf16.msra.mxu0 0
      %1576 = vmatprep.subr.bf16.mxu0 0
      %1577 = vmatpush1.bf16.msra.mxu0 0
      %1578 = vmatprep.subr.bf16.mxu0 0
      %1579 = vmatpush1.bf16.msra.mxu0 0
      %1580 = vmatprep.subr.bf16.mxu0 0
      %1581 = vmatpush1.bf16.msra.mxu0 0
      %1582 = vmatprep.subr.bf16.mxu0 0
      %1583 = vmatpush1.bf16.msra.mxu0 0
      %1584 = vmatprep.subr.bf16.mxu0 0
      %1585 = vmatpush1.bf16.msra.mxu0 0
      %1586 = vmatprep.mubr.bf16.mxu0 0
      %1587 = vmatmul.mubr.bf16.gmra.mrb[0].mxu0 %v1490
      %v1588 = vpop.f32.mrb[0].mxu0
      %v1589 = vadd.f32 0.0, %v1588
      %v1590 = vpop.f32.mrb[0].mxu0
      %v1591 = vpop.f32.mrb[0].mxu0
      %v1592 = vadd.f32 0.0, %v1591
      %v1593 = vpop.f32.mrb[0].mxu0
      %1594 = vmatprep.mubr.bf16.mxu0 0
      %1595 = vmatmul.mubr.bf16.gmra.mrb[0].mxu0 %v1491
      %v1596 = vpop.f32.mrb[0].mxu0
      %v1597 = vadd.f32 0.0, %v1596
      %v1598 = vpop.f32.mrb[0].mxu0
      %v1599 = vpop.f32.mrb[0].mxu0
      %v1600 = vadd.f32 0.0, %v1599
      %v1601 = vpop.f32.mrb[0].mxu0
      %1602 = vmatprep.mubr.bf16.mxu0 0
      %1603 = vmatmul.mubr.bf16.gmra.mrb[0].mxu0 %v1492
      %v1604 = vpop.f32.mrb[0].mxu0
      %v1605 = vadd.f32 0.0, %v1604
      %v1606 = vpop.f32.mrb[0].mxu0
      %v1607 = vpop.f32.mrb[0].mxu0
      %v1608 = vadd.f32 0.0, %v1607
      %v1609 = vpop.f32.mrb[0].mxu0
      %1610 = vmatprep.mubr.bf16.mxu0 0
      %1611 = vmatmul.mubr.bf16.gmra.mrb[0].mxu0 %v1493
      %v1612 = vpop.f32.mrb[0].mxu0
      %v1613 = vadd.f32 0.0, %v1612
      %v1614 = vpop.f32.mrb[0].mxu0
      %v1615 = vpop.f32.mrb[0].mxu0
      %v1616 = vadd.f32 0.0, %v1615
      %v1617 = vpop.f32.mrb[0].mxu0
      %1618 = vmatprep.mubr.bf16.mxu0 0
      %1619 = vmatmul.mubr.bf16.gmra.mrb[0].mxu0 %v1494
      %v1620 = vpop.f32.mrb[0].mxu0
      %v1621 = vadd.f32 0.0, %v1620
      %v1622 = vpop.f32.mrb[0].mxu0
      %v1623 = vpop.f32.mrb[0].mxu0
      %v1624 = vadd.f32 0.0, %v1623
      %v1625 = vpop.f32.mrb[0].mxu0
      %1626 = vmatprep.mubr.bf16.mxu0 0
      %1627 = vmatmul.mubr.bf16.gmra.mrb[0].mxu0 %v1495
      %v1628 = vpop.f32.mrb[0].mxu0
      %v1629 = vadd.f32 0.0, %v1628
      %v1630 = vpop.f32.mrb[0].mxu0
      %v1631 = vpop.f32.mrb[0].mxu0
      %v1632 = vadd.f32 0.0, %v1631
      %v1633 = vpop.f32.mrb[0].mxu0
      %1634 = vmatprep.mubr.bf16.mxu0 0
      %1635 = vmatmul.mubr.bf16.gmra.mrb[0].mxu0 %v1496
      %v1636 = vpop.f32.mrb[0].mxu0
      %v1637 = vadd.f32 0.0, %v1636
      %v1638 = vpop.f32.mrb[0].mxu0
      %v1639 = vpop.f32.mrb[0].mxu0
      %v1640 = vadd.f32 0.0, %v1639
      %v1641 = vpop.f32.mrb[0].mxu0
      %1642 = vmatprep.mubr.bf16.mxu0 0
      %1643 = vmatmul.mubr.bf16.gmra.mrb[0].mxu0 %v1497
      %v1644 = vpop.f32.mrb[0].mxu0
      %v1645 = vadd.f32 0.0, %v1644
      %v1646 = vpop.f32.mrb[0].mxu0
      %v1647 = vpop.f32.mrb[0].mxu0
      %v1648 = vadd.f32 0.0, %v1647
      %v1649 = vpop.f32.mrb[0].mxu0
      %1650 = vdwg.mxu0
      %v1651 = vadd.f32 %v1379, %v1589
      %v1652 = vadd.f32 %v1382, %v1592
      %v1653 = vadd.f32 %v1387, %v1597
      %v1654 = vadd.f32 %v1390, %v1600
      %v1655 = vadd.f32 %v1395, %v1605
      %v1656 = vadd.f32 %v1398, %v1608
      %v1657 = vadd.f32 %v1403, %v1613
      %v1658 = vadd.f32 %v1406, %v1616
      %v1659 = vadd.f32 %v1411, %v1621
      %v1660 = vadd.f32 %v1414, %v1624
      %v1661 = vadd.f32 %v1419, %v1629
      %v1662 = vadd.f32 %v1422, %v1632
      %v1663 = vadd.f32 %v1427, %v1637
      %v1664 = vadd.f32 %v1430, %v1640
      %v1665 = vadd.f32 %v1435, %v1645
      %v1666 = vadd.f32 %v1438, %v1648
      %v1667 = vld [vmem:[%s323 + $0x4] sm:$0xc]
      %v1668 = vld [vmem:[%s323 + $0x8] sm:$0xf]
      %v1669 = vld [vmem:[%s323 + $0xc] sm:$0x3]
      %v1670 = vld [vmem:[%s323 + $0x20] sm:$0xc]
      %v1671 = vld [vmem:[%s323 + $0x24] sm:$0xf]
      %v1672 = vld [vmem:[%s323 + $0x28] sm:$0x3]
      %v1673 = vld [vmem:[%s323 + $0x3c] sm:$0xc]
      %v1674 = vld [vmem:[%s323 + $0x40] sm:$0xf]
      %v1675 = vld [vmem:[%s323 + $0x44] sm:$0x3]
      %v1676 = vld [vmem:[%s323 + $0x58] sm:$0xc]
      %v1677 = vld [vmem:[%s323 + $0x5c] sm:$0xf]
      %v1678 = vld [vmem:[%s323 + $0x60] sm:$0x3]
      %v1679 = vld [vmem:[%s323 + $0x74] sm:$0xc]
      %v1680 = vld [vmem:[%s323 + $0x78] sm:$0xf]
      %v1681 = vld [vmem:[%s323 + $0x7c] sm:$0x3]
      %v1682 = vld [vmem:[%s323 + $0x90] sm:$0xc]
      %v1683 = vld [vmem:[%s323 + $0x94] sm:$0xf]
      %v1684 = vld [vmem:[%s323 + $0x98] sm:$0x3]
      %v1685 = vld [vmem:[%s323 + $0xac] sm:$0xc]
      %v1686 = vld [vmem:[%s323 + $0xb0] sm:$0xf]
      %v1687 = vld [vmem:[%s323 + $0xb4] sm:$0x3]
      %v1688 = vld [vmem:[%s323 + $0xc8] sm:$0xc]
      %v1689 = vld [vmem:[%s323 + $0xcc] sm:$0xf]
      %v1690 = vld [vmem:[%s323 + $0xd0] sm:$0x3]
      %v1715 = vrot.slane %v1667, 6
      %v1716 = vrot.slane %v1715, 4
      %v1717 = vrot.slane %v1668, 6
      %v1718 = vsel %vm893, %v1716, %v1717
      %v1719 = vrot.slane %v1717, 4
      %v1720 = vrot.slane %v1669, 6
      %v1721 = vsel %vm893, %v1719, %v1720
      %v1722 = vrot.slane %v1670, 6
      %v1723 = vrot.slane %v1722, 4
      %v1724 = vrot.slane %v1671, 6
      %v1725 = vsel %vm893, %v1723, %v1724
      %v1726 = vrot.slane %v1724, 4
      %v1727 = vrot.slane %v1672, 6
      %v1728 = vsel %vm893, %v1726, %v1727
      %v1729 = vrot.slane %v1673, 6
      %v1730 = vrot.slane %v1729, 4
      %v1731 = vrot.slane %v1674, 6
      %v1732 = vsel %vm893, %v1730, %v1731
      %v1733 = vrot.slane %v1731, 4
      %v1734 = vrot.slane %v1675, 6
      %v1735 = vsel %vm893, %v1733, %v1734
      %v1736 = vrot.slane %v1676, 6
      %v1737 = vrot.slane %v1736, 4
      %v1738 = vrot.slane %v1677, 6
      %v1739 = vsel %vm893, %v1737, %v1738
      %v1740 = vrot.slane %v1738, 4
      %v1741 = vrot.slane %v1678, 6
      %v1742 = vsel %vm893, %v1740, %v1741
      %v1743 = vrot.slane %v1679, 6
      %v1744 = vrot.slane %v1743, 4
      %v1745 = vrot.slane %v1680, 6
      %v1746 = vsel %vm893, %v1744, %v1745
      %v1747 = vrot.slane %v1745, 4
      %v1748 = vrot.slane %v1681, 6
      %v1749 = vsel %vm893, %v1747, %v1748
      %v1750 = vrot.slane %v1682, 6
      %v1751 = vrot.slane %v1750, 4
      %v1752 = vrot.slane %v1683, 6
      %v1753 = vsel %vm893, %v1751, %v1752
      %v1754 = vrot.slane %v1752, 4
      %v1755 = vrot.slane %v1684, 6
      %v1756 = vsel %vm893, %v1754, %v1755
      %v1757 = vrot.slane %v1685, 6
      %v1758 = vrot.slane %v1757, 4
      %v1759 = vrot.slane %v1686, 6
      %v1760 = vsel %vm893, %v1758, %v1759
      %v1761 = vrot.slane %v1759, 4
      %v1762 = vrot.slane %v1687, 6
      %v1763 = vsel %vm893, %v1761, %v1762
      %v1764 = vrot.slane %v1688, 6
      %v1765 = vrot.slane %v1764, 4
      %v1766 = vrot.slane %v1689, 6
      %v1767 = vsel %vm893, %v1765, %v1766
      %v1768 = vrot.slane %v1766, 4
      %v1769 = vrot.slane %v1690, 6
      %v1770 = vsel %vm893, %v1768, %v1769
      %s1771 = scalar_lea.vmem %s4, 192
      %v1772 = vld [vmem:[%s1771] sm:$0xf]
      %v1773 = vld [vmem:[%s1771 + $0x4] sm:$0xf]
      %v1774 = vld [vmem:[%s1771 + $0x8] sm:$0xf]
      %v1775 = vld [vmem:[%s1771 + $0xc] sm:$0xf]
      %v1776 = vld [vmem:[%s1771 + $0x10] sm:$0xf]
      %v1777 = vld [vmem:[%s1771 + $0x14] sm:$0xf]
      %v1778 = vld [vmem:[%s1771 + $0x18] sm:$0xf]
      %v1779 = vld [vmem:[%s1771 + $0x1c] sm:$0xf]
      %v1780 = vld [vmem:[%s1771 + $0x20] sm:$0xf]
      %v1781 = vld [vmem:[%s1771 + $0x24] sm:$0xf]
      %v1782 = vld [vmem:[%s1771 + $0x28] sm:$0xf]
      %v1783 = vld [vmem:[%s1771 + $0x2c] sm:$0xf]
      %v1784 = vld [vmem:[%s1771 + $0x30] sm:$0xf]
      %v1785 = vld [vmem:[%s1771 + $0x34] sm:$0xf]
      %v1786 = vld [vmem:[%s1771 + $0x38] sm:$0xf]
      %v1787 = vld [vmem:[%s1771 + $0x3c] sm:$0xf]
      %v1788 = vunpack.c.l.b16 %v1718
      %v1789 = vunpack.c.l.b16 %v1721
      %v1790 = vunpack.c.l.b16 %v1725
      %v1791 = vunpack.c.l.b16 %v1728
      %v1792 = vunpack.c.l.b16 %v1732
      %v1793 = vunpack.c.l.b16 %v1735
      %v1794 = vunpack.c.l.b16 %v1739
      %v1795 = vunpack.c.l.b16 %v1742
      %v1796 = vunpack.c.l.b16 %v1746
      %v1797 = vunpack.c.l.b16 %v1749
      %v1798 = vunpack.c.l.b16 %v1753
      %v1799 = vunpack.c.l.b16 %v1756
      %v1800 = vunpack.c.l.b16 %v1760
      %v1801 = vunpack.c.l.b16 %v1763
      %v1802 = vunpack.c.l.b16 %v1767
      %v1803 = vunpack.c.l.b16 %v1770
      %v1804 = vpack.c.b16 %v1789, %v1788
      %v1805 = vpack.c.b16 %v1791, %v1790
      %v1806 = vpack.c.b16 %v1793, %v1792
      %v1807 = vpack.c.b16 %v1795, %v1794
      %v1808 = vpack.c.b16 %v1797, %v1796
      %v1809 = vpack.c.b16 %v1799, %v1798
      %v1810 = vpack.c.b16 %v1801, %v1800
      %v1811 = vpack.c.b16 %v1803, %v1802
      %v1836 = vunpack.c.l.b16 %v1772
      %v1837 = vunpack.c.l.b16 %v1773
      %v1838 = vunpack.c.l.b16 %v1774
      %v1839 = vunpack.c.l.b16 %v1775
      %v1840 = vunpack.c.l.b16 %v1776
      %v1841 = vunpack.c.l.b16 %v1777
      %v1842 = vunpack.c.l.b16 %v1778
      %v1843 = vunpack.c.l.b16 %v1779
      %v1844 = vunpack.c.l.b16 %v1780
      %v1845 = vunpack.c.l.b16 %v1781
      %v1846 = vunpack.c.l.b16 %v1782
      %v1847 = vunpack.c.l.b16 %v1783
      %v1848 = vunpack.c.l.b16 %v1784
      %v1849 = vunpack.c.l.b16 %v1785
      %v1850 = vunpack.c.l.b16 %v1786
      %v1851 = vunpack.c.l.b16 %v1787
      %v1852 = vpack.c.b16 %v1837, %v1836
      %v1853 = vpack.c.b16 %v1839, %v1838
      %v1854 = vpack.c.b16 %v1841, %v1840
      %v1855 = vpack.c.b16 %v1843, %v1842
      %v1856 = vpack.c.b16 %v1845, %v1844
      %v1857 = vpack.c.b16 %v1847, %v1846
      %v1858 = vpack.c.b16 %v1849, %v1848
      %v1859 = vpack.c.b16 %v1851, %v1850
      %1868 = vmatprep.subr.bf16.mxu0 0
      %1869 = vmatpush1.bf16.msra.mxu0 %v1852
      %1870 = vmatprep.subr.bf16.mxu0 0
      %1871 = vmatpush1.bf16.msra.mxu0 %v1853
      %1872 = vmatprep.subr.bf16.mxu0 0
      %1873 = vmatpush1.bf16.msra.mxu0 %v1854
      %1874 = vmatprep.subr.bf16.mxu0 0
      %1875 = vmatpush1.bf16.msra.mxu0 %v1855
      %1876 = vmatprep.subr.bf16.mxu0 0
      %1877 = vmatpush1.bf16.msra.mxu0 %v1856
      %1878 = vmatprep.subr.bf16.mxu0 0
      %1879 = vmatpush1.bf16.msra.mxu0 %v1857
      %1880 = vmatprep.subr.bf16.mxu0 0
      %1881 = vmatpush1.bf16.msra.mxu0 %v1858
      %1882 = vmatprep.subr.bf16.mxu0 0
      %1883 = vmatpush1.bf16.msra.mxu0 %v1859
      %1884 = vmatprep.subr.bf16.mxu0 0
      %1885 = vmatpush1.bf16.msra.mxu0 0
      %1886 = vmatprep.subr.bf16.mxu0 0
      %1887 = vmatpush1.bf16.msra.mxu0 0
      %1888 = vmatprep.subr.bf16.mxu0 0
      %1889 = vmatpush1.bf16.msra.mxu0 0
      %1890 = vmatprep.subr.bf16.mxu0 0
      %1891 = vmatpush1.bf16.msra.mxu0 0
      %1892 = vmatprep.subr.bf16.mxu0 0
      %1893 = vmatpush1.bf16.msra.mxu0 0
      %1894 = vmatprep.subr.bf16.mxu0 0
      %1895 = vmatpush1.bf16.msra.mxu0 0
      %1896 = vmatprep.subr.bf16.mxu0 0
      %1897 = vmatpush1.bf16.msra.mxu0 0
      %1898 = vmatprep.subr.bf16.mxu0 0
      %1899 = vmatpush1.bf16.msra.mxu0 0
      %1900 = vmatprep.mubr.bf16.mxu0 0
      %1901 = vmatmul.mubr.bf16.gmra.mrb[0].mxu0 %v1804
      %v1902 = vpop.f32.mrb[0].mxu0
      %v1903 = vadd.f32 0.0, %v1902
      %v1904 = vpop.f32.mrb[0].mxu0
      %v1905 = vpop.f32.mrb[0].mxu0
      %v1906 = vadd.f32 0.0, %v1905
      %v1907 = vpop.f32.mrb[0].mxu0
      %1908 = vmatprep.mubr.bf16.mxu0 0
      %1909 = vmatmul.mubr.bf16.gmra.mrb[0].mxu0 %v1805
      %v1910 = vpop.f32.mrb[0].mxu0
      %v1911 = vadd.f32 0.0, %v1910
      %v1912 = vpop.f32.mrb[0].mxu0
      %v1913 = vpop.f32.mrb[0].mxu0
      %v1914 = vadd.f32 0.0, %v1913
      %v1915 = vpop.f32.mrb[0].mxu0
      %1916 = vmatprep.mubr.bf16.mxu0 0
      %1917 = vmatmul.mubr.bf16.gmra.mrb[0].mxu0 %v1806
      %v1918 = vpop.f32.mrb[0].mxu0
      %v1919 = vadd.f32 0.0, %v1918
      %v1920 = vpop.f32.mrb[0].mxu0
      %v1921 = vpop.f32.mrb[0].mxu0
      %v1922 = vadd.f32 0.0, %v1921
      %v1923 = vpop.f32.mrb[0].mxu0
      %1924 = vmatprep.mubr.bf16.mxu0 0
      %1925 = vmatmul.mubr.bf16.gmra.mrb[0].mxu0 %v1807
      %v1926 = vpop.f32.mrb[0].mxu0
      %v1927 = vadd.f32 0.0, %v1926
      %v1928 = vpop.f32.mrb[0].mxu0
      %v1929 = vpop.f32.mrb[0].mxu0
      %v1930 = vadd.f32 0.0, %v1929
      %v1931 = vpop.f32.mrb[0].mxu0
      %1932 = vmatprep.mubr.bf16.mxu0 0
      %1933 = vmatmul.mubr.bf16.gmra.mrb[0].mxu0 %v1808
      %v1934 = vpop.f32.mrb[0].mxu0
      %v1935 = vadd.f32 0.0, %v1934
      %v1936 = vpop.f32.mrb[0].mxu0
      %v1937 = vpop.f32.mrb[0].mxu0
      %v1938 = vadd.f32 0.0, %v1937
      %v1939 = vpop.f32.mrb[0].mxu0
      %1940 = vmatprep.mubr.bf16.mxu0 0
      %1941 = vmatmul.mubr.bf16.gmra.mrb[0].mxu0 %v1809
      %v1942 = vpop.f32.mrb[0].mxu0
      %v1943 = vadd.f32 0.0, %v1942
      %v1944 = vpop.f32.mrb[0].mxu0
      %v1945 = vpop.f32.mrb[0].mxu0
      %v1946 = vadd.f32 0.0, %v1945
      %v1947 = vpop.f32.mrb[0].mxu0
      %1948 = vmatprep.mubr.bf16.mxu0 0
      %1949 = vmatmul.mubr.bf16.gmra.mrb[0].mxu0 %v1810
      %v1950 = vpop.f32.mrb[0].mxu0
      %v1951 = vadd.f32 0.0, %v1950
      %v1952 = vpop.f32.mrb[0].mxu0
      %v1953 = vpop.f32.mrb[0].mxu0
      %v1954 = vadd.f32 0.0, %v1953
      %v1955 = vpop.f32.mrb[0].mxu0
      %1956 = vmatprep.mubr.bf16.mxu0 0
      %1957 = vmatmul.mubr.bf16.gmra.mrb[0].mxu0 %v1811
      %v1958 = vpop.f32.mrb[0].mxu0
      %v1959 = vadd.f32 0.0, %v1958
      %v1960 = vpop.f32.mrb[0].mxu0
      %v1961 = vpop.f32.mrb[0].mxu0
      %v1962 = vadd.f32 0.0, %v1961
      %v1963 = vpop.f32.mrb[0].mxu0
      %1964 = vdwg.mxu0
      %v1965 = vadd.f32 %v1651, %v1903
      %v1966 = vadd.f32 %v1652, %v1906
      %v1967 = vadd.f32 %v1653, %v1911
      %v1968 = vadd.f32 %v1654, %v1914
      %v1969 = vadd.f32 %v1655, %v1919
      %v1970 = vadd.f32 %v1656, %v1922
      %v1971 = vadd.f32 %v1657, %v1927
      %v1972 = vadd.f32 %v1658, %v1930
      %v1973 = vadd.f32 %v1659, %v1935
      %v1974 = vadd.f32 %v1660, %v1938
      %v1975 = vadd.f32 %v1661, %v1943
      %v1976 = vadd.f32 %v1662, %v1946
      %v1977 = vadd.f32 %v1663, %v1951
      %v1978 = vadd.f32 %v1664, %v1954
      %v1979 = vadd.f32 %v1665, %v1959
      %v1980 = vadd.f32 %v1666, %v1962
      %s1981 = scalar_lea.vmem %s4, 256
      %v1982 = vld [vmem:[%s1981] sm:$0xf]
      %v1983 = vld [vmem:[%s1981 + $0x4] sm:$0xf]
      %v1984 = vld [vmem:[%s1981 + $0x8] sm:$0xf]
      %v1985 = vld [vmem:[%s1981 + $0xc] sm:$0xf]
      %v1986 = vld [vmem:[%s1981 + $0x10] sm:$0xf]
      %v1987 = vld [vmem:[%s1981 + $0x14] sm:$0xf]
      %v1988 = vld [vmem:[%s1981 + $0x18] sm:$0xf]
      %v1989 = vld [vmem:[%s1981 + $0x1c] sm:$0xf]
      %v1990 = vld [vmem:[%s1981 + $0x20] sm:$0xf]
      %v1991 = vld [vmem:[%s1981 + $0x24] sm:$0xf]
      %v1992 = vld [vmem:[%s1981 + $0x28] sm:$0xf]
      %v1993 = vld [vmem:[%s1981 + $0x2c] sm:$0xf]
      %v1994 = vld [vmem:[%s1981 + $0x30] sm:$0xf]
      %v1995 = vld [vmem:[%s1981 + $0x34] sm:$0xf]
      %v1996 = vld [vmem:[%s1981 + $0x38] sm:$0xf]
      %v1997 = vld [vmem:[%s1981 + $0x3c] sm:$0xf]
      %v2014 = vunpack.c.l.b16 %v1982
      %v2015 = vunpack.c.l.b16 %v1983
      %v2016 = vunpack.c.l.b16 %v1984
      %v2017 = vunpack.c.l.b16 %v1985
      %v2018 = vunpack.c.l.b16 %v1986
      %v2019 = vunpack.c.l.b16 %v1987
      %v2020 = vunpack.c.l.b16 %v1988
      %v2021 = vunpack.c.l.b16 %v1989
      %v2022 = vunpack.c.l.b16 %v1990
      %v2023 = vunpack.c.l.b16 %v1991
      %v2024 = vunpack.c.l.b16 %v1992
      %v2025 = vunpack.c.l.b16 %v1993
      %v2026 = vunpack.c.l.b16 %v1994
      %v2027 = vunpack.c.l.b16 %v1995
      %v2028 = vunpack.c.l.b16 %v1996
      %v2029 = vunpack.c.l.b16 %v1997
      %v2030 = vpack.c.b16 %v2015, %v2014
      %v2031 = vpack.c.b16 %v2017, %v2016
      %v2032 = vpack.c.b16 %v2019, %v2018
      %v2033 = vpack.c.b16 %v2021, %v2020
      %v2034 = vpack.c.b16 %v2023, %v2022
      %v2035 = vpack.c.b16 %v2025, %v2024
      %v2036 = vpack.c.b16 %v2027, %v2026
      %v2037 = vpack.c.b16 %v2029, %v2028
      %2046 = vmatprep.subr.bf16.mxu0 0
      %2047 = vmatpush1.bf16.msra.mxu0 %v2030
      %2048 = vmatprep.subr.bf16.mxu0 0
      %2049 = vmatpush1.bf16.msra.mxu0 %v2031
      %2050 = vmatprep.subr.bf16.mxu0 0
      %2051 = vmatpush1.bf16.msra.mxu0 %v2032
      %2052 = vmatprep.subr.bf16.mxu0 0
      %2053 = vmatpush1.bf16.msra.mxu0 %v2033
      %2054 = vmatprep.subr.bf16.mxu0 0
      %2055 = vmatpush1.bf16.msra.mxu0 %v2034
      %2056 = vmatprep.subr.bf16.mxu0 0
      %2057 = vmatpush1.bf16.msra.mxu0 %v2035
      %2058 = vmatprep.subr.bf16.mxu0 0
      %2059 = vmatpush1.bf16.msra.mxu0 %v2036
      %2060 = vmatprep.subr.bf16.mxu0 0
      %2061 = vmatpush1.bf16.msra.mxu0 %v2037
      %2062 = vmatprep.subr.bf16.mxu0 0
      %2063 = vmatpush1.bf16.msra.mxu0 0
      %2064 = vmatprep.subr.bf16.mxu0 0
      %2065 = vmatpush1.bf16.msra.mxu0 0
      %2066 = vmatprep.subr.bf16.mxu0 0
      %2067 = vmatpush1.bf16.msra.mxu0 0
      %2068 = vmatprep.subr.bf16.mxu0 0
      %2069 = vmatpush1.bf16.msra.mxu0 0
      %2070 = vmatprep.subr.bf16.mxu0 0
      %2071 = vmatpush1.bf16.msra.mxu0 0
      %2072 = vmatprep.subr.bf16.mxu0 0
      %2073 = vmatpush1.bf16.msra.mxu0 0
      %2074 = vmatprep.subr.bf16.mxu0 0
      %2075 = vmatpush1.bf16.msra.mxu0 0
      %2076 = vmatprep.subr.bf16.mxu0 0
      %2077 = vmatpush1.bf16.msra.mxu0 0
      %2078 = vmatprep.mubr.bf16.mxu0 0
      %2079 = vmatmul.mubr.bf16.gmra.mrb[0].mxu0 %v470
      %v2080 = vpop.f32.mrb[0].mxu0
      %v2081 = vadd.f32 0.0, %v2080
      %v2082 = vpop.f32.mrb[0].mxu0
      %v2083 = vpop.f32.mrb[0].mxu0
      %v2084 = vadd.f32 0.0, %v2083
      %v2085 = vpop.f32.mrb[0].mxu0
      %2086 = vmatprep.mubr.bf16.mxu0 0
      %2087 = vmatmul.mubr.bf16.gmra.mrb[0].mxu0 %v471
      %v2088 = vpop.f32.mrb[0].mxu0
      %v2089 = vadd.f32 0.0, %v2088
      %v2090 = vpop.f32.mrb[0].mxu0
      %v2091 = vpop.f32.mrb[0].mxu0
      %v2092 = vadd.f32 0.0, %v2091
      %v2093 = vpop.f32.mrb[0].mxu0
      %2094 = vmatprep.mubr.bf16.mxu0 0
      %2095 = vmatmul.mubr.bf16.gmra.mrb[0].mxu0 %v472
      %v2096 = vpop.f32.mrb[0].mxu0
      %v2097 = vadd.f32 0.0, %v2096
      %v2098 = vpop.f32.mrb[0].mxu0
      %v2099 = vpop.f32.mrb[0].mxu0
      %v2100 = vadd.f32 0.0, %v2099
      %v2101 = vpop.f32.mrb[0].mxu0
      %2102 = vmatprep.mubr.bf16.mxu0 0
      %2103 = vmatmul.mubr.bf16.gmra.mrb[0].mxu0 %v473
      %v2104 = vpop.f32.mrb[0].mxu0
      %v2105 = vadd.f32 0.0, %v2104
      %v2106 = vpop.f32.mrb[0].mxu0
      %v2107 = vpop.f32.mrb[0].mxu0
      %v2108 = vadd.f32 0.0, %v2107
      %v2109 = vpop.f32.mrb[0].mxu0
      %2110 = vmatprep.mubr.bf16.mxu0 0
      %2111 = vmatmul.mubr.bf16.gmra.mrb[0].mxu0 %v474
      %v2112 = vpop.f32.mrb[0].mxu0
      %v2113 = vadd.f32 0.0, %v2112
      %v2114 = vpop.f32.mrb[0].mxu0
      %v2115 = vpop.f32.mrb[0].mxu0
      %v2116 = vadd.f32 0.0, %v2115
      %v2117 = vpop.f32.mrb[0].mxu0
      %2118 = vmatprep.mubr.bf16.mxu0 0
      %2119 = vmatmul.mubr.bf16.gmra.mrb[0].mxu0 %v475
      %v2120 = vpop.f32.mrb[0].mxu0
      %v2121 = vadd.f32 0.0, %v2120
      %v2122 = vpop.f32.mrb[0].mxu0
      %v2123 = vpop.f32.mrb[0].mxu0
      %v2124 = vadd.f32 0.0, %v2123
      %v2125 = vpop.f32.mrb[0].mxu0
      %2126 = vmatprep.mubr.bf16.mxu0 0
      %2127 = vmatmul.mubr.bf16.gmra.mrb[0].mxu0 %v476
      %v2128 = vpop.f32.mrb[0].mxu0
      %v2129 = vadd.f32 0.0, %v2128
      %v2130 = vpop.f32.mrb[0].mxu0
      %v2131 = vpop.f32.mrb[0].mxu0
      %v2132 = vadd.f32 0.0, %v2131
      %v2133 = vpop.f32.mrb[0].mxu0
      %2134 = vmatprep.mubr.bf16.mxu0 0
      %2135 = vmatmul.mubr.bf16.gmra.mrb[0].mxu0 %v477
      %v2136 = vpop.f32.mrb[0].mxu0
      %v2137 = vadd.f32 0.0, %v2136
      %v2138 = vpop.f32.mrb[0].mxu0
      %v2139 = vpop.f32.mrb[0].mxu0
      %v2140 = vadd.f32 0.0, %v2139
      %v2141 = vpop.f32.mrb[0].mxu0
      %2142 = vdwg.mxu0
      %v2143 = vadd.f32 %v1965, %v2081
      %v2144 = vadd.f32 %v1966, %v2084
      %v2145 = vadd.f32 %v1967, %v2089
      %v2146 = vadd.f32 %v1968, %v2092
      %v2147 = vadd.f32 %v1969, %v2097
      %v2148 = vadd.f32 %v1970, %v2100
      %v2149 = vadd.f32 %v1971, %v2105
      %v2150 = vadd.f32 %v1972, %v2108
      %v2151 = vadd.f32 %v1973, %v2113
      %v2152 = vadd.f32 %v1974, %v2116
      %v2153 = vadd.f32 %v1975, %v2121
      %v2154 = vadd.f32 %v1976, %v2124
      %v2155 = vadd.f32 %v1977, %v2129
      %v2156 = vadd.f32 %v1978, %v2132
      %v2157 = vadd.f32 %v1979, %v2137
      %v2158 = vadd.f32 %v1980, %v2140
      %v2159 = vld [vmem:[%s323 + $0x10] sm:$0xf]
      %v2160 = vld [vmem:[%s323 + $0x2c] sm:$0xf]
      %v2161 = vld [vmem:[%s323 + $0x48] sm:$0xf]
      %v2162 = vld [vmem:[%s323 + $0x64] sm:$0xf]
      %v2163 = vld [vmem:[%s323 + $0x80] sm:$0xf]
      %v2164 = vld [vmem:[%s323 + $0x9c] sm:$0xf]
      %v2165 = vld [vmem:[%s323 + $0xb8] sm:$0xf]
      %v2166 = vld [vmem:[%s323 + $0xd4] sm:$0xf]
      %s2167 = scalar_lea.vmem %s4, 320
      %v2168 = vld [vmem:[%s2167] sm:$0xf]
      %v2169 = vld [vmem:[%s2167 + $0x4] sm:$0xf]
      %v2170 = vld [vmem:[%s2167 + $0x8] sm:$0xf]
      %v2171 = vld [vmem:[%s2167 + $0xc] sm:$0xf]
      %v2172 = vld [vmem:[%s2167 + $0x10] sm:$0xf]
      %v2173 = vld [vmem:[%s2167 + $0x14] sm:$0xf]
      %v2174 = vld [vmem:[%s2167 + $0x18] sm:$0xf]
      %v2175 = vld [vmem:[%s2167 + $0x1c] sm:$0xf]
      %v2176 = vld [vmem:[%s2167 + $0x20] sm:$0xf]
      %v2177 = vld [vmem:[%s2167 + $0x24] sm:$0xf]
      %v2178 = vld [vmem:[%s2167 + $0x28] sm:$0xf]
      %v2179 = vld [vmem:[%s2167 + $0x2c] sm:$0xf]
      %v2180 = vld [vmem:[%s2167 + $0x30] sm:$0xf]
      %v2181 = vld [vmem:[%s2167 + $0x34] sm:$0xf]
      %v2182 = vld [vmem:[%s2167 + $0x38] sm:$0xf]
      %v2183 = vld [vmem:[%s2167 + $0x3c] sm:$0xf]
      %v2192 = vunpack.c.l.b16 %v325
      %v2193 = vunpack.c.l.b16 %v2159
      %v2194 = vunpack.c.l.b16 %v328
      %v2195 = vunpack.c.l.b16 %v2160
      %v2196 = vunpack.c.l.b16 %v331
      %v2197 = vunpack.c.l.b16 %v2161
      %v2198 = vunpack.c.l.b16 %v334
      %v2199 = vunpack.c.l.b16 %v2162
      %v2200 = vunpack.c.l.b16 %v337
      %v2201 = vunpack.c.l.b16 %v2163
      %v2202 = vunpack.c.l.b16 %v340
      %v2203 = vunpack.c.l.b16 %v2164
      %v2204 = vunpack.c.l.b16 %v343
      %v2205 = vunpack.c.l.b16 %v2165
      %v2206 = vunpack.c.l.b16 %v346
      %v2207 = vunpack.c.l.b16 %v2166
      %v2208 = vpack.c.b16 %v2193, %v2192
      %v2209 = vpack.c.b16 %v2195, %v2194
      %v2210 = vpack.c.b16 %v2197, %v2196
      %v2211 = vpack.c.b16 %v2199, %v2198
      %v2212 = vpack.c.b16 %v2201, %v2200
      %v2213 = vpack.c.b16 %v2203, %v2202
      %v2214 = vpack.c.b16 %v2205, %v2204
      %v2215 = vpack.c.b16 %v2207, %v2206
      %v2240 = vunpack.c.l.b16 %v2168
      %v2241 = vunpack.c.l.b16 %v2169
      %v2242 = vunpack.c.l.b16 %v2170
      %v2243 = vunpack.c.l.b16 %v2171
      %v2244 = vunpack.c.l.b16 %v2172
      %v2245 = vunpack.c.l.b16 %v2173
      %v2246 = vunpack.c.l.b16 %v2174
      %v2247 = vunpack.c.l.b16 %v2175
      %v2248 = vunpack.c.l.b16 %v2176
      %v2249 = vunpack.c.l.b16 %v2177
      %v2250 = vunpack.c.l.b16 %v2178
      %v2251 = vunpack.c.l.b16 %v2179
      %v2252 = vunpack.c.l.b16 %v2180
      %v2253 = vunpack.c.l.b16 %v2181
      %v2254 = vunpack.c.l.b16 %v2182
      %v2255 = vunpack.c.l.b16 %v2183
      %v2256 = vpack.c.b16 %v2241, %v2240
      %v2257 = vpack.c.b16 %v2243, %v2242
      %v2258 = vpack.c.b16 %v2245, %v2244
      %v2259 = vpack.c.b16 %v2247, %v2246
      %v2260 = vpack.c.b16 %v2249, %v2248
      %v2261 = vpack.c.b16 %v2251, %v2250
      %v2262 = vpack.c.b16 %v2253, %v2252
      %v2263 = vpack.c.b16 %v2255, %v2254
      %2272 = vmatprep.subr.bf16.mxu0 0
      %2273 = vmatpush1.bf16.msra.mxu0 %v2256
      %2274 = vmatprep.subr.bf16.mxu0 0
      %2275 = vmatpush1.bf16.msra.mxu0 %v2257
      %2276 = vmatprep.subr.bf16.mxu0 0
      %2277 = vmatpush1.bf16.msra.mxu0 %v2258
      %2278 = vmatprep.subr.bf16.mxu0 0
      %2279 = vmatpush1.bf16.msra.mxu0 %v2259
      %2280 = vmatprep.subr.bf16.mxu0 0
      %2281 = vmatpush1.bf16.msra.mxu0 %v2260
      %2282 = vmatprep.subr.bf16.mxu0 0
      %2283 = vmatpush1.bf16.msra.mxu0 %v2261
      %2284 = vmatprep.subr.bf16.mxu0 0
      %2285 = vmatpush1.bf16.msra.mxu0 %v2262
      %2286 = vmatprep.subr.bf16.mxu0 0
      %2287 = vmatpush1.bf16.msra.mxu0 %v2263
      %2288 = vmatprep.subr.bf16.mxu0 0
      %2289 = vmatpush1.bf16.msra.mxu0 0
      %2290 = vmatprep.subr.bf16.mxu0 0
      %2291 = vmatpush1.bf16.msra.mxu0 0
      %2292 = vmatprep.subr.bf16.mxu0 0
      %2293 = vmatpush1.bf16.msra.mxu0 0
      %2294 = vmatprep.subr.bf16.mxu0 0
      %2295 = vmatpush1.bf16.msra.mxu0 0
      %2296 = vmatprep.subr.bf16.mxu0 0
      %2297 = vmatpush1.bf16.msra.mxu0 0
      %2298 = vmatprep.subr.bf16.mxu0 0
      %2299 = vmatpush1.bf16.msra.mxu0 0
      %2300 = vmatprep.subr.bf16.mxu0 0
      %2301 = vmatpush1.bf16.msra.mxu0 0
      %2302 = vmatprep.subr.bf16.mxu0 0
      %2303 = vmatpush1.bf16.msra.mxu0 0
      %2304 = vmatprep.mubr.bf16.mxu0 0
      %2305 = vmatmul.mubr.bf16.gmra.mrb[0].mxu0 %v2208
      %v2306 = vpop.f32.mrb[0].mxu0
      %v2307 = vadd.f32 0.0, %v2306
      %v2308 = vpop.f32.mrb[0].mxu0
      %v2309 = vpop.f32.mrb[0].mxu0
      %v2310 = vadd.f32 0.0, %v2309
      %v2311 = vpop.f32.mrb[0].mxu0
      %2312 = vmatprep.mubr.bf16.mxu0 0
      %2313 = vmatmul.mubr.bf16.gmra.mrb[0].mxu0 %v2209
      %v2314 = vpop.f32.mrb[0].mxu0
      %v2315 = vadd.f32 0.0, %v2314
      %v2316 = vpop.f32.mrb[0].mxu0
      %v2317 = vpop.f32.mrb[0].mxu0
      %v2318 = vadd.f32 0.0, %v2317
      %v2319 = vpop.f32.mrb[0].mxu0
      %2320 = vmatprep.mubr.bf16.mxu0 0
      %2321 = vmatmul.mubr.bf16.gmra.mrb[0].mxu0 %v2210
      %v2322 = vpop.f32.mrb[0].mxu0
      %v2323 = vadd.f32 0.0, %v2322
      %v2324 = vpop.f32.mrb[0].mxu0
      %v2325 = vpop.f32.mrb[0].mxu0
      %v2326 = vadd.f32 0.0, %v2325
      %v2327 = vpop.f32.mrb[0].mxu0
      %2328 = vmatprep.mubr.bf16.mxu0 0
      %2329 = vmatmul.mubr.bf16.gmra.mrb[0].mxu0 %v2211
      %v2330 = vpop.f32.mrb[0].mxu0
      %v2331 = vadd.f32 0.0, %v2330
      %v2332 = vpop.f32.mrb[0].mxu0
      %v2333 = vpop.f32.mrb[0].mxu0
      %v2334 = vadd.f32 0.0, %v2333
      %v2335 = vpop.f32.mrb[0].mxu0
      %2336 = vmatprep.mubr.bf16.mxu0 0
      %2337 = vmatmul.mubr.bf16.gmra.mrb[0].mxu0 %v2212
      %v2338 = vpop.f32.mrb[0].mxu0
      %v2339 = vadd.f32 0.0, %v2338
      %v2340 = vpop.f32.mrb[0].mxu0
      %v2341 = vpop.f32.mrb[0].mxu0
      %v2342 = vadd.f32 0.0, %v2341
      %v2343 = vpop.f32.mrb[0].mxu0
      %2344 = vmatprep.mubr.bf16.mxu0 0
      %2345 = vmatmul.mubr.bf16.gmra.mrb[0].mxu0 %v2213
      %v2346 = vpop.f32.mrb[0].mxu0
      %v2347 = vadd.f32 0.0, %v2346
      %v2348 = vpop.f32.mrb[0].mxu0
      %v2349 = vpop.f32.mrb[0].mxu0
      %v2350 = vadd.f32 0.0, %v2349
      %v2351 = vpop.f32.mrb[0].mxu0
      %2352 = vmatprep.mubr.bf16.mxu0 0
      %2353 = vmatmul.mubr.bf16.gmra.mrb[0].mxu0 %v2214
      %v2354 = vpop.f32.mrb[0].mxu0
      %v2355 = vadd.f32 0.0, %v2354
      %v2356 = vpop.f32.mrb[0].mxu0
      %v2357 = vpop.f32.mrb[0].mxu0
      %v2358 = vadd.f32 0.0, %v2357
      %v2359 = vpop.f32.mrb[0].mxu0
      %2360 = vmatprep.mubr.bf16.mxu0 0
      %2361 = vmatmul.mubr.bf16.gmra.mrb[0].mxu0 %v2215
      %v2362 = vpop.f32.mrb[0].mxu0
      %v2363 = vadd.f32 0.0, %v2362
      %v2364 = vpop.f32.mrb[0].mxu0
      %v2365 = vpop.f32.mrb[0].mxu0
      %v2366 = vadd.f32 0.0, %v2365
      %v2367 = vpop.f32.mrb[0].mxu0
      %2368 = vdwg.mxu0
      %v2369 = vadd.f32 %v2143, %v2307
      %v2370 = vadd.f32 %v2144, %v2310
      %v2371 = vadd.f32 %v2145, %v2315
      %v2372 = vadd.f32 %v2146, %v2318
      %v2373 = vadd.f32 %v2147, %v2323
      %v2374 = vadd.f32 %v2148, %v2326
      %v2375 = vadd.f32 %v2149, %v2331
      %v2376 = vadd.f32 %v2150, %v2334
      %v2377 = vadd.f32 %v2151, %v2339
      %v2378 = vadd.f32 %v2152, %v2342
      %v2379 = vadd.f32 %v2153, %v2347
      %v2380 = vadd.f32 %v2154, %v2350
      %v2381 = vadd.f32 %v2155, %v2355
      %v2382 = vadd.f32 %v2156, %v2358
      %v2383 = vadd.f32 %v2157, %v2363
      %v2384 = vadd.f32 %v2158, %v2366
      %s2385 = sadd.s32 %s319, 24
      %s2386 = smul.u32 %s2385, 7
      %s2387 = smul.addr %s2386, 4
      %s2388 = scalar_lea.vmem %s303, %s2387
      %v2389 = vld [vmem:[%s2388 + $0x4] sm:$0xc]
      %v2390 = vld [vmem:[%s2388 + $0x8] sm:$0xf]
      %v2391 = vld [vmem:[%s2388 + $0xc] sm:$0x3]
      %v2392 = vld [vmem:[%s2388 + $0x20] sm:$0xc]
      %v2393 = vld [vmem:[%s2388 + $0x24] sm:$0xf]
      %v2394 = vld [vmem:[%s2388 + $0x28] sm:$0x3]
      %v2395 = vld [vmem:[%s2388 + $0x3c] sm:$0xc]
      %v2396 = vld [vmem:[%s2388 + $0x40] sm:$0xf]
      %v2397 = vld [vmem:[%s2388 + $0x44] sm:$0x3]
      %v2398 = vld [vmem:[%s2388 + $0x58] sm:$0xc]
      %v2399 = vld [vmem:[%s2388 + $0x5c] sm:$0xf]
      %v2400 = vld [vmem:[%s2388 + $0x60] sm:$0x3]
      %v2401 = vld [vmem:[%s2388 + $0x74] sm:$0xc]
      %v2402 = vld [vmem:[%s2388 + $0x78] sm:$0xf]
      %v2403 = vld [vmem:[%s2388 + $0x7c] sm:$0x3]
      %v2404 = vld [vmem:[%s2388 + $0x90] sm:$0xc]
      %v2405 = vld [vmem:[%s2388 + $0x94] sm:$0xf]
      %v2406 = vld [vmem:[%s2388 + $0x98] sm:$0x3]
      %v2407 = vld [vmem:[%s2388 + $0xac] sm:$0xc]
      %v2408 = vld [vmem:[%s2388 + $0xb0] sm:$0xf]
      %v2409 = vld [vmem:[%s2388 + $0xb4] sm:$0x3]
      %v2410 = vld [vmem:[%s2388 + $0xc8] sm:$0xc]
      %v2411 = vld [vmem:[%s2388 + $0xcc] sm:$0xf]
      %v2412 = vld [vmem:[%s2388 + $0xd0] sm:$0x3]
      %v2437 = vrot.slane %v2389, 6
      %v2438 = vrot.slane %v2437, 4
      %v2439 = vrot.slane %v2390, 6
      %v2440 = vsel %vm893, %v2438, %v2439
      %v2441 = vrot.slane %v2439, 4
      %v2442 = vrot.slane %v2391, 6
      %v2443 = vsel %vm893, %v2441, %v2442
      %v2444 = vrot.slane %v2392, 6
      %v2445 = vrot.slane %v2444, 4
      %v2446 = vrot.slane %v2393, 6
      %v2447 = vsel %vm893, %v2445, %v2446
      %v2448 = vrot.slane %v2446, 4
      %v2449 = vrot.slane %v2394, 6
      %v2450 = vsel %vm893, %v2448, %v2449
      %v2451 = vrot.slane %v2395, 6
      %v2452 = vrot.slane %v2451, 4
      %v2453 = vrot.slane %v2396, 6
      %v2454 = vsel %vm893, %v2452, %v2453
      %v2455 = vrot.slane %v2453, 4
      %v2456 = vrot.slane %v2397, 6
      %v2457 = vsel %vm893, %v2455, %v2456
      %v2458 = vrot.slane %v2398, 6
      %v2459 = vrot.slane %v2458, 4
      %v2460 = vrot.slane %v2399, 6
      %v2461 = vsel %vm893, %v2459, %v2460
      %v2462 = vrot.slane %v2460, 4
      %v2463 = vrot.slane %v2400, 6
      %v2464 = vsel %vm893, %v2462, %v2463
      %v2465 = vrot.slane %v2401, 6
      %v2466 = vrot.slane %v2465, 4
      %v2467 = vrot.slane %v2402, 6
      %v2468 = vsel %vm893, %v2466, %v2467
      %v2469 = vrot.slane %v2467, 4
      %v2470 = vrot.slane %v2403, 6
      %v2471 = vsel %vm893, %v2469, %v2470
      %v2472 = vrot.slane %v2404, 6
      %v2473 = vrot.slane %v2472, 4
      %v2474 = vrot.slane %v2405, 6
      %v2475 = vsel %vm893, %v2473, %v2474
      %v2476 = vrot.slane %v2474, 4
      %v2477 = vrot.slane %v2406, 6
      %v2478 = vsel %vm893, %v2476, %v2477
      %v2479 = vrot.slane %v2407, 6
      %v2480 = vrot.slane %v2479, 4
      %v2481 = vrot.slane %v2408, 6
      %v2482 = vsel %vm893, %v2480, %v2481
      %v2483 = vrot.slane %v2481, 4
      %v2484 = vrot.slane %v2409, 6
      %v2485 = vsel %vm893, %v2483, %v2484
      %v2486 = vrot.slane %v2410, 6
      %v2487 = vrot.slane %v2486, 4
      %v2488 = vrot.slane %v2411, 6
      %v2489 = vsel %vm893, %v2487, %v2488
      %v2490 = vrot.slane %v2488, 4
      %v2491 = vrot.slane %v2412, 6
      %v2492 = vsel %vm893, %v2490, %v2491
      %s2493 = scalar_lea.vmem %s4, 384
      %v2494 = vld [vmem:[%s2493] sm:$0xf]
      %v2495 = vld [vmem:[%s2493 + $0x4] sm:$0xf]
      %v2496 = vld [vmem:[%s2493 + $0x8] sm:$0xf]
      %v2497 = vld [vmem:[%s2493 + $0xc] sm:$0xf]
      %v2498 = vld [vmem:[%s2493 + $0x10] sm:$0xf]
      %v2499 = vld [vmem:[%s2493 + $0x14] sm:$0xf]
      %v2500 = vld [vmem:[%s2493 + $0x18] sm:$0xf]
      %v2501 = vld [vmem:[%s2493 + $0x1c] sm:$0xf]
      %v2502 = vld [vmem:[%s2493 + $0x20] sm:$0xf]
      %v2503 = vld [vmem:[%s2493 + $0x24] sm:$0xf]
      %v2504 = vld [vmem:[%s2493 + $0x28] sm:$0xf]
      %v2505 = vld [vmem:[%s2493 + $0x2c] sm:$0xf]
      %v2506 = vld [vmem:[%s2493 + $0x30] sm:$0xf]
      %v2507 = vld [vmem:[%s2493 + $0x34] sm:$0xf]
      %v2508 = vld [vmem:[%s2493 + $0x38] sm:$0xf]
      %v2509 = vld [vmem:[%s2493 + $0x3c] sm:$0xf]
      %v2510 = vunpack.c.l.b16 %v2440
      %v2511 = vunpack.c.l.b16 %v2443
      %v2512 = vunpack.c.l.b16 %v2447
      %v2513 = vunpack.c.l.b16 %v2450
      %v2514 = vunpack.c.l.b16 %v2454
      %v2515 = vunpack.c.l.b16 %v2457
      %v2516 = vunpack.c.l.b16 %v2461
      %v2517 = vunpack.c.l.b16 %v2464
      %v2518 = vunpack.c.l.b16 %v2468
      %v2519 = vunpack.c.l.b16 %v2471
      %v2520 = vunpack.c.l.b16 %v2475
      %v2521 = vunpack.c.l.b16 %v2478
      %v2522 = vunpack.c.l.b16 %v2482
      %v2523 = vunpack.c.l.b16 %v2485
      %v2524 = vunpack.c.l.b16 %v2489
      %v2525 = vunpack.c.l.b16 %v2492
      %v2526 = vpack.c.b16 %v2511, %v2510
      %v2527 = vpack.c.b16 %v2513, %v2512
      %v2528 = vpack.c.b16 %v2515, %v2514
      %v2529 = vpack.c.b16 %v2517, %v2516
      %v2530 = vpack.c.b16 %v2519, %v2518
      %v2531 = vpack.c.b16 %v2521, %v2520
      %v2532 = vpack.c.b16 %v2523, %v2522
      %v2533 = vpack.c.b16 %v2525, %v2524
      %v2558 = vunpack.c.l.b16 %v2494
      %v2559 = vunpack.c.l.b16 %v2495
      %v2560 = vunpack.c.l.b16 %v2496
      %v2561 = vunpack.c.l.b16 %v2497
      %v2562 = vunpack.c.l.b16 %v2498
      %v2563 = vunpack.c.l.b16 %v2499
      %v2564 = vunpack.c.l.b16 %v2500
      %v2565 = vunpack.c.l.b16 %v2501
      %v2566 = vunpack.c.l.b16 %v2502
      %v2567 = vunpack.c.l.b16 %v2503
      %v2568 = vunpack.c.l.b16 %v2504
      %v2569 = vunpack.c.l.b16 %v2505
      %v2570 = vunpack.c.l.b16 %v2506
      %v2571 = vunpack.c.l.b16 %v2507
      %v2572 = vunpack.c.l.b16 %v2508
      %v2573 = vunpack.c.l.b16 %v2509
      %v2574 = vpack.c.b16 %v2559, %v2558
      %v2575 = vpack.c.b16 %v2561, %v2560
      %v2576 = vpack.c.b16 %v2563, %v2562
      %v2577 = vpack.c.b16 %v2565, %v2564
      %v2578 = vpack.c.b16 %v2567, %v2566
      %v2579 = vpack.c.b16 %v2569, %v2568
      %v2580 = vpack.c.b16 %v2571, %v2570
      %v2581 = vpack.c.b16 %v2573, %v2572
      %2590 = vmatprep.subr.bf16.mxu0 0
      %2591 = vmatpush1.bf16.msra.mxu0 %v2574
      %2592 = vmatprep.subr.bf16.mxu0 0
      %2593 = vmatpush1.bf16.msra.mxu0 %v2575
      %2594 = vmatprep.subr.bf16.mxu0 0
      %2595 = vmatpush1.bf16.msra.mxu0 %v2576
      %2596 = vmatprep.subr.bf16.mxu0 0
      %2597 = vmatpush1.bf16.msra.mxu0 %v2577
      %2598 = vmatprep.subr.bf16.mxu0 0
      %2599 = vmatpush1.bf16.msra.mxu0 %v2578
      %2600 = vmatprep.subr.bf16.mxu0 0
      %2601 = vmatpush1.bf16.msra.mxu0 %v2579
      %2602 = vmatprep.subr.bf16.mxu0 0
      %2603 = vmatpush1.bf16.msra.mxu0 %v2580
      %2604 = vmatprep.subr.bf16.mxu0 0
      %2605 = vmatpush1.bf16.msra.mxu0 %v2581
      %2606 = vmatprep.subr.bf16.mxu0 0
      %2607 = vmatpush1.bf16.msra.mxu0 0
      %2608 = vmatprep.subr.bf16.mxu0 0
      %2609 = vmatpush1.bf16.msra.mxu0 0
      %2610 = vmatprep.subr.bf16.mxu0 0
      %2611 = vmatpush1.bf16.msra.mxu0 0
      %2612 = vmatprep.subr.bf16.mxu0 0
      %2613 = vmatpush1.bf16.msra.mxu0 0
      %2614 = vmatprep.subr.bf16.mxu0 0
      %2615 = vmatpush1.bf16.msra.mxu0 0
      %2616 = vmatprep.subr.bf16.mxu0 0
      %2617 = vmatpush1.bf16.msra.mxu0 0
      %2618 = vmatprep.subr.bf16.mxu0 0
      %2619 = vmatpush1.bf16.msra.mxu0 0
      %2620 = vmatprep.subr.bf16.mxu0 0
      %2621 = vmatpush1.bf16.msra.mxu0 0
      %2622 = vmatprep.mubr.bf16.mxu0 0
      %2623 = vmatmul.mubr.bf16.gmra.mrb[0].mxu0 %v2526
      %v2624 = vpop.f32.mrb[0].mxu0
      %v2625 = vadd.f32 0.0, %v2624
      %v2626 = vpop.f32.mrb[0].mxu0
      %v2627 = vpop.f32.mrb[0].mxu0
      %v2628 = vadd.f32 0.0, %v2627
      %v2629 = vpop.f32.mrb[0].mxu0
      %2630 = vmatprep.mubr.bf16.mxu0 0
      %2631 = vmatmul.mubr.bf16.gmra.mrb[0].mxu0 %v2527
      %v2632 = vpop.f32.mrb[0].mxu0
      %v2633 = vadd.f32 0.0, %v2632
      %v2634 = vpop.f32.mrb[0].mxu0
      %v2635 = vpop.f32.mrb[0].mxu0
      %v2636 = vadd.f32 0.0, %v2635
      %v2637 = vpop.f32.mrb[0].mxu0
      %2638 = vmatprep.mubr.bf16.mxu0 0
      %2639 = vmatmul.mubr.bf16.gmra.mrb[0].mxu0 %v2528
      %v2640 = vpop.f32.mrb[0].mxu0
      %v2641 = vadd.f32 0.0, %v2640
      %v2642 = vpop.f32.mrb[0].mxu0
      %v2643 = vpop.f32.mrb[0].mxu0
      %v2644 = vadd.f32 0.0, %v2643
      %v2645 = vpop.f32.mrb[0].mxu0
      %2646 = vmatprep.mubr.bf16.mxu0 0
      %2647 = vmatmul.mubr.bf16.gmra.mrb[0].mxu0 %v2529
      %v2648 = vpop.f32.mrb[0].mxu0
      %v2649 = vadd.f32 0.0, %v2648
      %v2650 = vpop.f32.mrb[0].mxu0
      %v2651 = vpop.f32.mrb[0].mxu0
      %v2652 = vadd.f32 0.0, %v2651
      %v2653 = vpop.f32.mrb[0].mxu0
      %2654 = vmatprep.mubr.bf16.mxu0 0
      %2655 = vmatmul.mubr.bf16.gmra.mrb[0].mxu0 %v2530
      %v2656 = vpop.f32.mrb[0].mxu0
      %v2657 = vadd.f32 0.0, %v2656
      %v2658 = vpop.f32.mrb[0].mxu0
      %v2659 = vpop.f32.mrb[0].mxu0
      %v2660 = vadd.f32 0.0, %v2659
      %v2661 = vpop.f32.mrb[0].mxu0
      %2662 = vmatprep.mubr.bf16.mxu0 0
      %2663 = vmatmul.mubr.bf16.gmra.mrb[0].mxu0 %v2531
      %v2664 = vpop.f32.mrb[0].mxu0
      %v2665 = vadd.f32 0.0, %v2664
      %v2666 = vpop.f32.mrb[0].mxu0
      %v2667 = vpop.f32.mrb[0].mxu0
      %v2668 = vadd.f32 0.0, %v2667
      %v2669 = vpop.f32.mrb[0].mxu0
      %2670 = vmatprep.mubr.bf16.mxu0 0
      %2671 = vmatmul.mubr.bf16.gmra.mrb[0].mxu0 %v2532
      %v2672 = vpop.f32.mrb[0].mxu0
      %v2673 = vadd.f32 0.0, %v2672
      %v2674 = vpop.f32.mrb[0].mxu0
      %v2675 = vpop.f32.mrb[0].mxu0
      %v2676 = vadd.f32 0.0, %v2675
      %v2677 = vpop.f32.mrb[0].mxu0
      %2678 = vmatprep.mubr.bf16.mxu0 0
      %2679 = vmatmul.mubr.bf16.gmra.mrb[0].mxu0 %v2533
      %v2680 = vpop.f32.mrb[0].mxu0
      %v2681 = vadd.f32 0.0, %v2680
      %v2682 = vpop.f32.mrb[0].mxu0
      %v2683 = vpop.f32.mrb[0].mxu0
      %v2684 = vadd.f32 0.0, %v2683
      %v2685 = vpop.f32.mrb[0].mxu0
      %2686 = vdwg.mxu0
      %v2687 = vadd.f32 %v2369, %v2625
      %v2688 = vadd.f32 %v2370, %v2628
      %v2689 = vadd.f32 %v2371, %v2633
      %v2690 = vadd.f32 %v2372, %v2636
      %v2691 = vadd.f32 %v2373, %v2641
      %v2692 = vadd.f32 %v2374, %v2644
      %v2693 = vadd.f32 %v2375, %v2649
      %v2694 = vadd.f32 %v2376, %v2652
      %v2695 = vadd.f32 %v2377, %v2657
      %v2696 = vadd.f32 %v2378, %v2660
      %v2697 = vadd.f32 %v2379, %v2665
      %v2698 = vadd.f32 %v2380, %v2668
      %v2699 = vadd.f32 %v2381, %v2673
      %v2700 = vadd.f32 %v2382, %v2676
      %v2701 = vadd.f32 %v2383, %v2681
      %v2702 = vadd.f32 %v2384, %v2684
      %v2703 = vld [vmem:[%s2388 + $0x8] sm:$0xe]
      %v2704 = vld [vmem:[%s2388 + $0xc] sm:$0xf]
      %v2705 = vld [vmem:[%s2388 + $0x10] sm:$0x1]
      %v2706 = vld [vmem:[%s2388 + $0x24] sm:$0xe]
      %v2707 = vld [vmem:[%s2388 + $0x28] sm:$0xf]
      %v2708 = vld [vmem:[%s2388 + $0x2c] sm:$0x1]
      %v2709 = vld [vmem:[%s2388 + $0x40] sm:$0xe]
      %v2710 = vld [vmem:[%s2388 + $0x44] sm:$0xf]
      %v2711 = vld [vmem:[%s2388 + $0x48] sm:$0x1]
      %v2712 = vld [vmem:[%s2388 + $0x5c] sm:$0xe]
      %v2713 = vld [vmem:[%s2388 + $0x60] sm:$0xf]
      %v2714 = vld [vmem:[%s2388 + $0x64] sm:$0x1]
      %v2715 = vld [vmem:[%s2388 + $0x78] sm:$0xe]
      %v2716 = vld [vmem:[%s2388 + $0x7c] sm:$0xf]
      %v2717 = vld [vmem:[%s2388 + $0x80] sm:$0x1]
      %v2718 = vld [vmem:[%s2388 + $0x94] sm:$0xe]
      %v2719 = vld [vmem:[%s2388 + $0x98] sm:$0xf]
      %v2720 = vld [vmem:[%s2388 + $0x9c] sm:$0x1]
      %v2721 = vld [vmem:[%s2388 + $0xb0] sm:$0xe]
      %v2722 = vld [vmem:[%s2388 + $0xb4] sm:$0xf]
      %v2723 = vld [vmem:[%s2388 + $0xb8] sm:$0x1]
      %v2724 = vld [vmem:[%s2388 + $0xcc] sm:$0xe]
      %v2725 = vld [vmem:[%s2388 + $0xd0] sm:$0xf]
      %v2726 = vld [vmem:[%s2388 + $0xd4] sm:$0x1]
      %v2751 = vrot.slane %v2703, 5
      %v2752 = vrot.slane %v2751, 4
      %v2753 = vrot.slane %v2704, 5
      %v2754 = vsel %vm374, %v2752, %v2753
      %v2755 = vrot.slane %v2753, 4
      %v2756 = vrot.slane %v2705, 5
      %v2757 = vsel %vm374, %v2755, %v2756
      %v2758 = vrot.slane %v2706, 5
      %v2759 = vrot.slane %v2758, 4
      %v2760 = vrot.slane %v2707, 5
      %v2761 = vsel %vm374, %v2759, %v2760
      %v2762 = vrot.slane %v2760, 4
      %v2763 = vrot.slane %v2708, 5
      %v2764 = vsel %vm374, %v2762, %v2763
      %v2765 = vrot.slane %v2709, 5
      %v2766 = vrot.slane %v2765, 4
      %v2767 = vrot.slane %v2710, 5
      %v2768 = vsel %vm374, %v2766, %v2767
      %v2769 = vrot.slane %v2767, 4
      %v2770 = vrot.slane %v2711, 5
      %v2771 = vsel %vm374, %v2769, %v2770
      %v2772 = vrot.slane %v2712, 5
      %v2773 = vrot.slane %v2772, 4
      %v2774 = vrot.slane %v2713, 5
      %v2775 = vsel %vm374, %v2773, %v2774
      %v2776 = vrot.slane %v2774, 4
      %v2777 = vrot.slane %v2714, 5
      %v2778 = vsel %vm374, %v2776, %v2777
      %v2779 = vrot.slane %v2715, 5
      %v2780 = vrot.slane %v2779, 4
      %v2781 = vrot.slane %v2716, 5
      %v2782 = vsel %vm374, %v2780, %v2781
      %v2783 = vrot.slane %v2781, 4
      %v2784 = vrot.slane %v2717, 5
      %v2785 = vsel %vm374, %v2783, %v2784
      %v2786 = vrot.slane %v2718, 5
      %v2787 = vrot.slane %v2786, 4
      %v2788 = vrot.slane %v2719, 5
      %v2789 = vsel %vm374, %v2787, %v2788
      %v2790 = vrot.slane %v2788, 4
      %v2791 = vrot.slane %v2720, 5
      %v2792 = vsel %vm374, %v2790, %v2791
      %v2793 = vrot.slane %v2721, 5
      %v2794 = vrot.slane %v2793, 4
      %v2795 = vrot.slane %v2722, 5
      %v2796 = vsel %vm374, %v2794, %v2795
      %v2797 = vrot.slane %v2795, 4
      %v2798 = vrot.slane %v2723, 5
      %v2799 = vsel %vm374, %v2797, %v2798
      %v2800 = vrot.slane %v2724, 5
      %v2801 = vrot.slane %v2800, 4
      %v2802 = vrot.slane %v2725, 5
      %v2803 = vsel %vm374, %v2801, %v2802
      %v2804 = vrot.slane %v2802, 4
      %v2805 = vrot.slane %v2726, 5
      %v2806 = vsel %vm374, %v2804, %v2805
      %s2807 = scalar_lea.vmem %s4, 448
      %v2808 = vld [vmem:[%s2807] sm:$0xf]
      %v2809 = vld [vmem:[%s2807 + $0x4] sm:$0xf]
      %v2810 = vld [vmem:[%s2807 + $0x8] sm:$0xf]
      %v2811 = vld [vmem:[%s2807 + $0xc] sm:$0xf]
      %v2812 = vld [vmem:[%s2807 + $0x10] sm:$0xf]
      %v2813 = vld [vmem:[%s2807 + $0x14] sm:$0xf]
      %v2814 = vld [vmem:[%s2807 + $0x18] sm:$0xf]
      %v2815 = vld [vmem:[%s2807 + $0x1c] sm:$0xf]
      %v2816 = vld [vmem:[%s2807 + $0x20] sm:$0xf]
      %v2817 = vld [vmem:[%s2807 + $0x24] sm:$0xf]
      %v2818 = vld [vmem:[%s2807 + $0x28] sm:$0xf]
      %v2819 = vld [vmem:[%s2807 + $0x2c] sm:$0xf]
      %v2820 = vld [vmem:[%s2807 + $0x30] sm:$0xf]
      %v2821 = vld [vmem:[%s2807 + $0x34] sm:$0xf]
      %v2822 = vld [vmem:[%s2807 + $0x38] sm:$0xf]
      %v2823 = vld [vmem:[%s2807 + $0x3c] sm:$0xf]
      %v2824 = vunpack.c.l.b16 %v2754
      %v2825 = vunpack.c.l.b16 %v2757
      %v2826 = vunpack.c.l.b16 %v2761
      %v2827 = vunpack.c.l.b16 %v2764
      %v2828 = vunpack.c.l.b16 %v2768
      %v2829 = vunpack.c.l.b16 %v2771
      %v2830 = vunpack.c.l.b16 %v2775
      %v2831 = vunpack.c.l.b16 %v2778
      %v2832 = vunpack.c.l.b16 %v2782
      %v2833 = vunpack.c.l.b16 %v2785
      %v2834 = vunpack.c.l.b16 %v2789
      %v2835 = vunpack.c.l.b16 %v2792
      %v2836 = vunpack.c.l.b16 %v2796
      %v2837 = vunpack.c.l.b16 %v2799
      %v2838 = vunpack.c.l.b16 %v2803
      %v2839 = vunpack.c.l.b16 %v2806
      %v2840 = vpack.c.b16 %v2825, %v2824
      %v2841 = vpack.c.b16 %v2827, %v2826
      %v2842 = vpack.c.b16 %v2829, %v2828
      %v2843 = vpack.c.b16 %v2831, %v2830
      %v2844 = vpack.c.b16 %v2833, %v2832
      %v2845 = vpack.c.b16 %v2835, %v2834
      %v2846 = vpack.c.b16 %v2837, %v2836
      %v2847 = vpack.c.b16 %v2839, %v2838
      %v2872 = vunpack.c.l.b16 %v2808
      %v2873 = vunpack.c.l.b16 %v2809
      %v2874 = vunpack.c.l.b16 %v2810
      %v2875 = vunpack.c.l.b16 %v2811
      %v2876 = vunpack.c.l.b16 %v2812
      %v2877 = vunpack.c.l.b16 %v2813
      %v2878 = vunpack.c.l.b16 %v2814
      %v2879 = vunpack.c.l.b16 %v2815
      %v2880 = vunpack.c.l.b16 %v2816
      %v2881 = vunpack.c.l.b16 %v2817
      %v2882 = vunpack.c.l.b16 %v2818
      %v2883 = vunpack.c.l.b16 %v2819
      %v2884 = vunpack.c.l.b16 %v2820
      %v2885 = vunpack.c.l.b16 %v2821
      %v2886 = vunpack.c.l.b16 %v2822
      %v2887 = vunpack.c.l.b16 %v2823
      %v2888 = vpack.c.b16 %v2873, %v2872
      %v2889 = vpack.c.b16 %v2875, %v2874
      %v2890 = vpack.c.b16 %v2877, %v2876
      %v2891 = vpack.c.b16 %v2879, %v2878
      %v2892 = vpack.c.b16 %v2881, %v2880
      %v2893 = vpack.c.b16 %v2883, %v2882
      %v2894 = vpack.c.b16 %v2885, %v2884
      %v2895 = vpack.c.b16 %v2887, %v2886
      %2904 = vmatprep.subr.bf16.mxu0 0
      %2905 = vmatpush1.bf16.msra.mxu0 %v2888
      %2906 = vmatprep.subr.bf16.mxu0 0
      %2907 = vmatpush1.bf16.msra.mxu0 %v2889
      %2908 = vmatprep.subr.bf16.mxu0 0
      %2909 = vmatpush1.bf16.msra.mxu0 %v2890
      %2910 = vmatprep.subr.bf16.mxu0 0
      %2911 = vmatpush1.bf16.msra.mxu0 %v2891
      %2912 = vmatprep.subr.bf16.mxu0 0
      %2913 = vmatpush1.bf16.msra.mxu0 %v2892
      %2914 = vmatprep.subr.bf16.mxu0 0
      %2915 = vmatpush1.bf16.msra.mxu0 %v2893
      %2916 = vmatprep.subr.bf16.mxu0 0
      %2917 = vmatpush1.bf16.msra.mxu0 %v2894
      %2918 = vmatprep.subr.bf16.mxu0 0
      %2919 = vmatpush1.bf16.msra.mxu0 %v2895
      %2920 = vmatprep.subr.bf16.mxu0 0
      %2921 = vmatpush1.bf16.msra.mxu0 0
      %2922 = vmatprep.subr.bf16.mxu0 0
      %2923 = vmatpush1.bf16.msra.mxu0 0
      %2924 = vmatprep.subr.bf16.mxu0 0
      %2925 = vmatpush1.bf16.msra.mxu0 0
      %2926 = vmatprep.subr.bf16.mxu0 0
      %2927 = vmatpush1.bf16.msra.mxu0 0
      %2928 = vmatprep.subr.bf16.mxu0 0
      %2929 = vmatpush1.bf16.msra.mxu0 0
      %2930 = vmatprep.subr.bf16.mxu0 0
      %2931 = vmatpush1.bf16.msra.mxu0 0
      %2932 = vmatprep.subr.bf16.mxu0 0
      %2933 = vmatpush1.bf16.msra.mxu0 0
      %2934 = vmatprep.subr.bf16.mxu0 0
      %2935 = vmatpush1.bf16.msra.mxu0 0
      %2936 = vmatprep.mubr.bf16.mxu0 0
      %2937 = vmatmul.mubr.bf16.gmra.mrb[0].mxu0 %v2840
      %v2938 = vpop.f32.mrb[0].mxu0
      %v2939 = vadd.f32 0.0, %v2938
      %v2940 = vpop.f32.mrb[0].mxu0
      %v2941 = vpop.f32.mrb[0].mxu0
      %v2942 = vadd.f32 0.0, %v2941
      %v2943 = vpop.f32.mrb[0].mxu0
      %2944 = vmatprep.mubr.bf16.mxu0 0
      %2945 = vmatmul.mubr.bf16.gmra.mrb[0].mxu0 %v2841
      %v2946 = vpop.f32.mrb[0].mxu0
      %v2947 = vadd.f32 0.0, %v2946
      %v2948 = vpop.f32.mrb[0].mxu0
      %v2949 = vpop.f32.mrb[0].mxu0
      %v2950 = vadd.f32 0.0, %v2949
      %v2951 = vpop.f32.mrb[0].mxu0
      %2952 = vmatprep.mubr.bf16.mxu0 0
      %2953 = vmatmul.mubr.bf16.gmra.mrb[0].mxu0 %v2842
      %v2954 = vpop.f32.mrb[0].mxu0
      %v2955 = vadd.f32 0.0, %v2954
      %v2956 = vpop.f32.mrb[0].mxu0
      %v2957 = vpop.f32.mrb[0].mxu0
      %v2958 = vadd.f32 0.0, %v2957
      %v2959 = vpop.f32.mrb[0].mxu0
      %2960 = vmatprep.mubr.bf16.mxu0 0
      %2961 = vmatmul.mubr.bf16.gmra.mrb[0].mxu0 %v2843
      %v2962 = vpop.f32.mrb[0].mxu0
      %v2963 = vadd.f32 0.0, %v2962
      %v2964 = vpop.f32.mrb[0].mxu0
      %v2965 = vpop.f32.mrb[0].mxu0
      %v2966 = vadd.f32 0.0, %v2965
      %v2967 = vpop.f32.mrb[0].mxu0
      %2968 = vmatprep.mubr.bf16.mxu0 0
      %2969 = vmatmul.mubr.bf16.gmra.mrb[0].mxu0 %v2844
      %v2970 = vpop.f32.mrb[0].mxu0
      %v2971 = vadd.f32 0.0, %v2970
      %v2972 = vpop.f32.mrb[0].mxu0
      %v2973 = vpop.f32.mrb[0].mxu0
      %v2974 = vadd.f32 0.0, %v2973
      %v2975 = vpop.f32.mrb[0].mxu0
      %2976 = vmatprep.mubr.bf16.mxu0 0
      %2977 = vmatmul.mubr.bf16.gmra.mrb[0].mxu0 %v2845
      %v2978 = vpop.f32.mrb[0].mxu0
      %v2979 = vadd.f32 0.0, %v2978
      %v2980 = vpop.f32.mrb[0].mxu0
      %v2981 = vpop.f32.mrb[0].mxu0
      %v2982 = vadd.f32 0.0, %v2981
      %v2983 = vpop.f32.mrb[0].mxu0
      %2984 = vmatprep.mubr.bf16.mxu0 0
      %2985 = vmatmul.mubr.bf16.gmra.mrb[0].mxu0 %v2846
      %v2986 = vpop.f32.mrb[0].mxu0
      %v2987 = vadd.f32 0.0, %v2986
      %v2988 = vpop.f32.mrb[0].mxu0
      %v2989 = vpop.f32.mrb[0].mxu0
      %v2990 = vadd.f32 0.0, %v2989
      %v2991 = vpop.f32.mrb[0].mxu0
      %2992 = vmatprep.mubr.bf16.mxu0 0
      %2993 = vmatmul.mubr.bf16.gmra.mrb[0].mxu0 %v2847
      %v2994 = vpop.f32.mrb[0].mxu0
      %v2995 = vadd.f32 0.0, %v2994
      %v2996 = vpop.f32.mrb[0].mxu0
      %v2997 = vpop.f32.mrb[0].mxu0
      %v2998 = vadd.f32 0.0, %v2997
      %v2999 = vpop.f32.mrb[0].mxu0
      %3000 = vdwg.mxu0
      %v3001 = vadd.f32 %v2687, %v2939
      %v3002 = vadd.f32 %v2688, %v2942
      %v3003 = vadd.f32 %v2689, %v2947
      %v3004 = vadd.f32 %v2690, %v2950
      %v3005 = vadd.f32 %v2691, %v2955
      %v3006 = vadd.f32 %v2692, %v2958
      %v3007 = vadd.f32 %v2693, %v2963
      %v3008 = vadd.f32 %v2694, %v2966
      %v3009 = vadd.f32 %v2695, %v2971
      %v3010 = vadd.f32 %v2696, %v2974
      %v3011 = vadd.f32 %v2697, %v2979
      %v3012 = vadd.f32 %v2698, %v2982
      %v3013 = vadd.f32 %v2699, %v2987
      %v3014 = vadd.f32 %v2700, %v2990
      %v3015 = vadd.f32 %v2701, %v2995
      %v3016 = vadd.f32 %v2702, %v2998
      %v3017 = vld [vmem:[%s2388 + $0x10] sm:$0xf]
      %v3018 = vld [vmem:[%s2388 + $0x2c] sm:$0xf]
      %v3019 = vld [vmem:[%s2388 + $0x48] sm:$0xf]
      %v3020 = vld [vmem:[%s2388 + $0x64] sm:$0xf]
      %v3021 = vld [vmem:[%s2388 + $0x80] sm:$0xf]
      %v3022 = vld [vmem:[%s2388 + $0x9c] sm:$0xf]
      %v3023 = vld [vmem:[%s2388 + $0xb8] sm:$0xf]
      %v3024 = vld [vmem:[%s2388 + $0xd4] sm:$0xf]
      %s3025 = scalar_lea.vmem %s4, 512
      %v3026 = vld [vmem:[%s3025] sm:$0xf]
      %v3027 = vld [vmem:[%s3025 + $0x4] sm:$0xf]
      %v3028 = vld [vmem:[%s3025 + $0x8] sm:$0xf]
      %v3029 = vld [vmem:[%s3025 + $0xc] sm:$0xf]
      %v3030 = vld [vmem:[%s3025 + $0x10] sm:$0xf]
      %v3031 = vld [vmem:[%s3025 + $0x14] sm:$0xf]
      %v3032 = vld [vmem:[%s3025 + $0x18] sm:$0xf]
      %v3033 = vld [vmem:[%s3025 + $0x1c] sm:$0xf]
      %v3034 = vld [vmem:[%s3025 + $0x20] sm:$0xf]
      %v3035 = vld [vmem:[%s3025 + $0x24] sm:$0xf]
      %v3036 = vld [vmem:[%s3025 + $0x28] sm:$0xf]
      %v3037 = vld [vmem:[%s3025 + $0x2c] sm:$0xf]
      %v3038 = vld [vmem:[%s3025 + $0x30] sm:$0xf]
      %v3039 = vld [vmem:[%s3025 + $0x34] sm:$0xf]
      %v3040 = vld [vmem:[%s3025 + $0x38] sm:$0xf]
      %v3041 = vld [vmem:[%s3025 + $0x3c] sm:$0xf]
      %v3050 = vunpack.c.l.b16 %v2704
      %v3051 = vunpack.c.l.b16 %v3017
      %v3052 = vunpack.c.l.b16 %v2707
      %v3053 = vunpack.c.l.b16 %v3018
      %v3054 = vunpack.c.l.b16 %v2710
      %v3055 = vunpack.c.l.b16 %v3019
      %v3056 = vunpack.c.l.b16 %v2713
      %v3057 = vunpack.c.l.b16 %v3020
      %v3058 = vunpack.c.l.b16 %v2716
      %v3059 = vunpack.c.l.b16 %v3021
      %v3060 = vunpack.c.l.b16 %v2719
      %v3061 = vunpack.c.l.b16 %v3022
      %v3062 = vunpack.c.l.b16 %v2722
      %v3063 = vunpack.c.l.b16 %v3023
      %v3064 = vunpack.c.l.b16 %v2725
      %v3065 = vunpack.c.l.b16 %v3024
      %v3066 = vpack.c.b16 %v3051, %v3050
      %v3067 = vpack.c.b16 %v3053, %v3052
      %v3068 = vpack.c.b16 %v3055, %v3054
      %v3069 = vpack.c.b16 %v3057, %v3056
      %v3070 = vpack.c.b16 %v3059, %v3058
      %v3071 = vpack.c.b16 %v3061, %v3060
      %v3072 = vpack.c.b16 %v3063, %v3062
      %v3073 = vpack.c.b16 %v3065, %v3064
      %v3098 = vunpack.c.l.b16 %v3026
      %v3099 = vunpack.c.l.b16 %v3027
      %v3100 = vunpack.c.l.b16 %v3028
      %v3101 = vunpack.c.l.b16 %v3029
      %v3102 = vunpack.c.l.b16 %v3030
      %v3103 = vunpack.c.l.b16 %v3031
      %v3104 = vunpack.c.l.b16 %v3032
      %v3105 = vunpack.c.l.b16 %v3033
      %v3106 = vunpack.c.l.b16 %v3034
      %v3107 = vunpack.c.l.b16 %v3035
      %v3108 = vunpack.c.l.b16 %v3036
      %v3109 = vunpack.c.l.b16 %v3037
      %v3110 = vunpack.c.l.b16 %v3038
      %v3111 = vunpack.c.l.b16 %v3039
      %v3112 = vunpack.c.l.b16 %v3040
      %v3113 = vunpack.c.l.b16 %v3041
      %v3114 = vpack.c.b16 %v3099, %v3098
      %v3115 = vpack.c.b16 %v3101, %v3100
      %v3116 = vpack.c.b16 %v3103, %v3102
      %v3117 = vpack.c.b16 %v3105, %v3104
      %v3118 = vpack.c.b16 %v3107, %v3106
      %v3119 = vpack.c.b16 %v3109, %v3108
      %v3120 = vpack.c.b16 %v3111, %v3110
      %v3121 = vpack.c.b16 %v3113, %v3112
      %3130 = vmatprep.subr.bf16.mxu0 0
      %3131 = vmatpush1.bf16.msra.mxu0 %v3114
      %3132 = vmatprep.subr.bf16.mxu0 0
      %3133 = vmatpush1.bf16.msra.mxu0 %v3115
      %3134 = vmatprep.subr.bf16.mxu0 0
      %3135 = vmatpush1.bf16.msra.mxu0 %v3116
      %3136 = vmatprep.subr.bf16.mxu0 0
      %3137 = vmatpush1.bf16.msra.mxu0 %v3117
      %3138 = vmatprep.subr.bf16.mxu0 0
      %3139 = vmatpush1.bf16.msra.mxu0 %v3118
      %3140 = vmatprep.subr.bf16.mxu0 0
      %3141 = vmatpush1.bf16.msra.mxu0 %v3119
      %3142 = vmatprep.subr.bf16.mxu0 0
      %3143 = vmatpush1.bf16.msra.mxu0 %v3120
      %3144 = vmatprep.subr.bf16.mxu0 0
      %3145 = vmatpush1.bf16.msra.mxu0 %v3121
      %3146 = vmatprep.subr.bf16.mxu0 0
      %3147 = vmatpush1.bf16.msra.mxu0 0
      %3148 = vmatprep.subr.bf16.mxu0 0
      %3149 = vmatpush1.bf16.msra.mxu0 0
      %3150 = vmatprep.subr.bf16.mxu0 0
      %3151 = vmatpush1.bf16.msra.mxu0 0
      %3152 = vmatprep.subr.bf16.mxu0 0
      %3153 = vmatpush1.bf16.msra.mxu0 0
      %3154 = vmatprep.subr.bf16.mxu0 0
      %3155 = vmatpush1.bf16.msra.mxu0 0
      %3156 = vmatprep.subr.bf16.mxu0 0
      %3157 = vmatpush1.bf16.msra.mxu0 0
      %3158 = vmatprep.subr.bf16.mxu0 0
      %3159 = vmatpush1.bf16.msra.mxu0 0
      %3160 = vmatprep.subr.bf16.mxu0 0
      %3161 = vmatpush1.bf16.msra.mxu0 0
      %3162 = vmatprep.mubr.bf16.mxu0 0
      %3163 = vmatmul.mubr.bf16.gmra.mrb[0].mxu0 %v3066
      %v3164 = vpop.f32.mrb[0].mxu0
      %v3165 = vadd.f32 0.0, %v3164
      %v3166 = vpop.f32.mrb[0].mxu0
      %v3167 = vpop.f32.mrb[0].mxu0
      %v3168 = vadd.f32 0.0, %v3167
      %v3169 = vpop.f32.mrb[0].mxu0
      %3170 = vmatprep.mubr.bf16.mxu0 0
      %3171 = vmatmul.mubr.bf16.gmra.mrb[0].mxu0 %v3067
      %v3172 = vpop.f32.mrb[0].mxu0
      %v3173 = vadd.f32 0.0, %v3172
      %v3174 = vpop.f32.mrb[0].mxu0
      %v3175 = vpop.f32.mrb[0].mxu0
      %v3176 = vadd.f32 0.0, %v3175
      %v3177 = vpop.f32.mrb[0].mxu0
      %3178 = vmatprep.mubr.bf16.mxu0 0
      %3179 = vmatmul.mubr.bf16.gmra.mrb[0].mxu0 %v3068
      %v3180 = vpop.f32.mrb[0].mxu0
      %v3181 = vadd.f32 0.0, %v3180
      %v3182 = vpop.f32.mrb[0].mxu0
      %v3183 = vpop.f32.mrb[0].mxu0
      %v3184 = vadd.f32 0.0, %v3183
      %v3185 = vpop.f32.mrb[0].mxu0
      %3186 = vmatprep.mubr.bf16.mxu0 0
      %3187 = vmatmul.mubr.bf16.gmra.mrb[0].mxu0 %v3069
      %v3188 = vpop.f32.mrb[0].mxu0
      %v3189 = vadd.f32 0.0, %v3188
      %v3190 = vpop.f32.mrb[0].mxu0
      %v3191 = vpop.f32.mrb[0].mxu0
      %v3192 = vadd.f32 0.0, %v3191
      %v3193 = vpop.f32.mrb[0].mxu0
      %3194 = vmatprep.mubr.bf16.mxu0 0
      %3195 = vmatmul.mubr.bf16.gmra.mrb[0].mxu0 %v3070
      %v3196 = vpop.f32.mrb[0].mxu0
      %v3197 = vadd.f32 0.0, %v3196
      %v3198 = vpop.f32.mrb[0].mxu0
      %v3199 = vpop.f32.mrb[0].mxu0
      %v3200 = vadd.f32 0.0, %v3199
      %v3201 = vpop.f32.mrb[0].mxu0
      %3202 = vmatprep.mubr.bf16.mxu0 0
      %3203 = vmatmul.mubr.bf16.gmra.mrb[0].mxu0 %v3071
      %v3204 = vpop.f32.mrb[0].mxu0
      %v3205 = vadd.f32 0.0, %v3204
      %v3206 = vpop.f32.mrb[0].mxu0
      %v3207 = vpop.f32.mrb[0].mxu0
      %v3208 = vadd.f32 0.0, %v3207
      %v3209 = vpop.f32.mrb[0].mxu0
      %3210 = vmatprep.mubr.bf16.mxu0 0
      %3211 = vmatmul.mubr.bf16.gmra.mrb[0].mxu0 %v3072
      %v3212 = vpop.f32.mrb[0].mxu0
      %v3213 = vadd.f32 0.0, %v3212
      %v3214 = vpop.f32.mrb[0].mxu0
      %v3215 = vpop.f32.mrb[0].mxu0
      %v3216 = vadd.f32 0.0, %v3215
      %v3217 = vpop.f32.mrb[0].mxu0
      %3218 = vmatprep.mubr.bf16.mxu0 0
      %3219 = vmatmul.mubr.bf16.gmra.mrb[0].mxu0 %v3073
      %v3220 = vpop.f32.mrb[0].mxu0
      %v3221 = vadd.f32 0.0, %v3220
      %v3222 = vpop.f32.mrb[0].mxu0
      %v3223 = vpop.f32.mrb[0].mxu0
      %v3224 = vadd.f32 0.0, %v3223
      %v3225 = vpop.f32.mrb[0].mxu0
      %3226 = vdwg.mxu0
      %v3227 = vadd.f32 %v3001, %v3165
      %v3228 = vadd.f32 %v3002, %v3168
      %v3229 = vadd.f32 %v3003, %v3173
      %v3230 = vadd.f32 %v3004, %v3176
      %v3231 = vadd.f32 %v3005, %v3181
      %v3232 = vadd.f32 %v3006, %v3184
      %v3233 = vadd.f32 %v3007, %v3189
      %v3234 = vadd.f32 %v3008, %v3192
      %v3235 = vadd.f32 %v3009, %v3197
      %v3236 = vadd.f32 %v3010, %v3200
      %v3237 = vadd.f32 %v3011, %v3205
      %v3238 = vadd.f32 %v3012, %v3208
      %v3239 = vadd.f32 %v3013, %v3213
      %v3240 = vadd.f32 %v3014, %v3216
      %v3241 = vadd.f32 %v3015, %v3221
      %v3242 = vadd.f32 %v3016, %v3224
      %v3243 = vld [vmem:[%s5] sm:$0x1]
      %v3245 = vlaneseq
      %v3246 = vshrl.u32 %v3245, 7
      %v3247 = vsub.s32 0, %v3246
      %v3248 = vrot.slane %v3243, %v3247
      %v3250 = vadd.f32 %v3227, %v3248
      %v3251 = vadd.f32 %v3228, %v3248
      %v3252 = vadd.f32 %v3229, %v3248
      %v3253 = vadd.f32 %v3230, %v3248
      %v3254 = vadd.f32 %v3231, %v3248
      %v3255 = vadd.f32 %v3232, %v3248
      %v3256 = vadd.f32 %v3233, %v3248
      %v3257 = vadd.f32 %v3234, %v3248
      %v3258 = vadd.f32 %v3235, %v3248
      %v3259 = vadd.f32 %v3236, %v3248
      %v3260 = vadd.f32 %v3237, %v3248
      %v3261 = vadd.f32 %v3238, %v3248
      %v3262 = vadd.f32 %v3239, %v3248
      %v3263 = vadd.f32 %v3240, %v3248
      %v3264 = vadd.f32 %v3241, %v3248
      %v3265 = vadd.f32 %v3242, %v3248
      %v3266 = vmax.f32 %v3250, 0.0
      %v3267 = vmax.f32 %v3251, 0.0
      %v3268 = vmax.f32 %v3252, 0.0
      %v3269 = vmax.f32 %v3253, 0.0
      %v3270 = vmax.f32 %v3254, 0.0
      %v3271 = vmax.f32 %v3255, 0.0
      %v3272 = vmax.f32 %v3256, 0.0
      %v3273 = vmax.f32 %v3257, 0.0
      %v3274 = vmax.f32 %v3258, 0.0
      %v3275 = vmax.f32 %v3259, 0.0
      %v3276 = vmax.f32 %v3260, 0.0
      %v3277 = vmax.f32 %v3261, 0.0
      %v3278 = vmax.f32 %v3262, 0.0
      %v3279 = vmax.f32 %v3263, 0.0
      %v3280 = vmax.f32 %v3264, 0.0
      %v3281 = vmax.f32 %v3265, 0.0
      %v3282 = vpack.c.bf16 %v3267, %v3266
      %v3283 = vpack.c.bf16 %v3269, %v3268
      %v3284 = vpack.c.bf16 %v3271, %v3270
      %v3285 = vpack.c.bf16 %v3273, %v3272
      %v3286 = vpack.c.bf16 %v3275, %v3274
      %v3287 = vpack.c.bf16 %v3277, %v3276
      %v3288 = vpack.c.bf16 %v3279, %v3278
      %v3289 = vpack.c.bf16 %v3281, %v3280
      %s3290 = scalar_lea.vmem %s6, 64
      %v3291 = vld [vmem:[%s3290] sm:$0xf]
      %v3292 = vld [vmem:[%s3290 + $0x4] sm:$0xf]
      %v3293 = vld [vmem:[%s3290 + $0x8] sm:$0xf]
      %v3294 = vld [vmem:[%s3290 + $0xc] sm:$0xf]
      %v3295 = vld [vmem:[%s3290 + $0x10] sm:$0xf]
      %v3296 = vld [vmem:[%s3290 + $0x14] sm:$0xf]
      %v3297 = vld [vmem:[%s3290 + $0x18] sm:$0xf]
      %v3298 = vld [vmem:[%s3290 + $0x1c] sm:$0xf]
      %v3299 = vld [vmem:[%s3290 + $0x20] sm:$0xf]
      %v3300 = vld [vmem:[%s3290 + $0x24] sm:$0xf]
      %v3301 = vld [vmem:[%s3290 + $0x28] sm:$0xf]
      %v3302 = vld [vmem:[%s3290 + $0x2c] sm:$0xf]
      %v3303 = vld [vmem:[%s3290 + $0x30] sm:$0xf]
      %v3304 = vld [vmem:[%s3290 + $0x34] sm:$0xf]
      %v3305 = vld [vmem:[%s3290 + $0x38] sm:$0xf]
      %v3306 = vld [vmem:[%s3290 + $0x3c] sm:$0xf]
      %v3323 = vunpack.c.l.b16 %v3291
      %v3324 = vunpack.c.l.b16 %v3292
      %v3325 = vunpack.c.l.b16 %v3293
      %v3326 = vunpack.c.l.b16 %v3294
      %v3327 = vunpack.c.l.b16 %v3295
      %v3328 = vunpack.c.l.b16 %v3296
      %v3329 = vunpack.c.l.b16 %v3297
      %v3330 = vunpack.c.l.b16 %v3298
      %v3331 = vunpack.c.l.b16 %v3299
      %v3332 = vunpack.c.l.b16 %v3300
      %v3333 = vunpack.c.l.b16 %v3301
      %v3334 = vunpack.c.l.b16 %v3302
      %v3335 = vunpack.c.l.b16 %v3303
      %v3336 = vunpack.c.l.b16 %v3304
      %v3337 = vunpack.c.l.b16 %v3305
      %v3338 = vunpack.c.l.b16 %v3306
      %v3339 = vpack.c.b16 %v3324, %v3323
      %v3340 = vpack.c.b16 %v3326, %v3325
      %v3341 = vpack.c.b16 %v3328, %v3327
      %v3342 = vpack.c.b16 %v3330, %v3329
      %v3343 = vpack.c.b16 %v3332, %v3331
      %v3344 = vpack.c.b16 %v3334, %v3333
      %v3345 = vpack.c.b16 %v3336, %v3335
      %v3346 = vpack.c.b16 %v3338, %v3337
      %3355 = vmatprep.subr.bf16.mxu0 0
      %3356 = vmatpush1.bf16.msra.mxu0 %v3339
      %3357 = vmatprep.subr.bf16.mxu0 0
      %3358 = vmatpush1.bf16.msra.mxu0 %v3340
      %3359 = vmatprep.subr.bf16.mxu0 0
      %3360 = vmatpush1.bf16.msra.mxu0 %v3341
      %3361 = vmatprep.subr.bf16.mxu0 0
      %3362 = vmatpush1.bf16.msra.mxu0 %v3342
      %3363 = vmatprep.subr.bf16.mxu0 0
      %3364 = vmatpush1.bf16.msra.mxu0 %v3343
      %3365 = vmatprep.subr.bf16.mxu0 0
      %3366 = vmatpush1.bf16.msra.mxu0 %v3344
      %3367 = vmatprep.subr.bf16.mxu0 0
      %3368 = vmatpush1.bf16.msra.mxu0 %v3345
      %3369 = vmatprep.subr.bf16.mxu0 0
      %3370 = vmatpush1.bf16.msra.mxu0 %v3346
      %3371 = vmatprep.subr.bf16.mxu0 0
      %3372 = vmatpush1.bf16.msra.mxu0 0
      %3373 = vmatprep.subr.bf16.mxu0 0
      %3374 = vmatpush1.bf16.msra.mxu0 0
      %3375 = vmatprep.subr.bf16.mxu0 0
      %3376 = vmatpush1.bf16.msra.mxu0 0
      %3377 = vmatprep.subr.bf16.mxu0 0
      %3378 = vmatpush1.bf16.msra.mxu0 0
      %3379 = vmatprep.subr.bf16.mxu0 0
      %3380 = vmatpush1.bf16.msra.mxu0 0
      %3381 = vmatprep.subr.bf16.mxu0 0
      %3382 = vmatpush1.bf16.msra.mxu0 0
      %3383 = vmatprep.subr.bf16.mxu0 0
      %3384 = vmatpush1.bf16.msra.mxu0 0
      %3385 = vmatprep.subr.bf16.mxu0 0
      %3386 = vmatpush1.bf16.msra.mxu0 0
      %3387 = vmatprep.mubr.bf16.mxu0 0
      %3388 = vmatmul.mubr.bf16.gmra.mrb[0].mxu0 %v3282
      %v3389 = vpop.f32.mrb[0].mxu0
      %v3390 = vadd.f32 0.0, %v3389
      %v3391 = vpop.f32.mrb[0].mxu0
      %v3392 = vpop.f32.mrb[0].mxu0
      %v3393 = vadd.f32 0.0, %v3392
      %v3394 = vpop.f32.mrb[0].mxu0
      %3395 = vmatprep.mubr.bf16.mxu0 0
      %3396 = vmatmul.mubr.bf16.gmra.mrb[0].mxu0 %v3283
      %v3397 = vpop.f32.mrb[0].mxu0
      %v3398 = vadd.f32 0.0, %v3397
      %v3399 = vpop.f32.mrb[0].mxu0
      %v3400 = vpop.f32.mrb[0].mxu0
      %v3401 = vadd.f32 0.0, %v3400
      %v3402 = vpop.f32.mrb[0].mxu0
      %3403 = vmatprep.mubr.bf16.mxu0 0
      %3404 = vmatmul.mubr.bf16.gmra.mrb[0].mxu0 %v3284
      %v3405 = vpop.f32.mrb[0].mxu0
      %v3406 = vadd.f32 0.0, %v3405
      %v3407 = vpop.f32.mrb[0].mxu0
      %v3408 = vpop.f32.mrb[0].mxu0
      %v3409 = vadd.f32 0.0, %v3408
      %v3410 = vpop.f32.mrb[0].mxu0
      %3411 = vmatprep.mubr.bf16.mxu0 0
      %3412 = vmatmul.mubr.bf16.gmra.mrb[0].mxu0 %v3285
      %v3413 = vpop.f32.mrb[0].mxu0
      %v3414 = vadd.f32 0.0, %v3413
      %v3415 = vpop.f32.mrb[0].mxu0
      %v3416 = vpop.f32.mrb[0].mxu0
      %v3417 = vadd.f32 0.0, %v3416
      %v3418 = vpop.f32.mrb[0].mxu0
      %3419 = vmatprep.mubr.bf16.mxu0 0
      %3420 = vmatmul.mubr.bf16.gmra.mrb[0].mxu0 %v3286
      %v3421 = vpop.f32.mrb[0].mxu0
      %v3422 = vadd.f32 0.0, %v3421
      %v3423 = vpop.f32.mrb[0].mxu0
      %v3424 = vpop.f32.mrb[0].mxu0
      %v3425 = vadd.f32 0.0, %v3424
      %v3426 = vpop.f32.mrb[0].mxu0
      %3427 = vmatprep.mubr.bf16.mxu0 0
      %3428 = vmatmul.mubr.bf16.gmra.mrb[0].mxu0 %v3287
      %v3429 = vpop.f32.mrb[0].mxu0
      %v3430 = vadd.f32 0.0, %v3429
      %v3431 = vpop.f32.mrb[0].mxu0
      %v3432 = vpop.f32.mrb[0].mxu0
      %v3433 = vadd.f32 0.0, %v3432
      %v3434 = vpop.f32.mrb[0].mxu0
      %3435 = vmatprep.mubr.bf16.mxu0 0
      %3436 = vmatmul.mubr.bf16.gmra.mrb[0].mxu0 %v3288
      %v3437 = vpop.f32.mrb[0].mxu0
      %v3438 = vadd.f32 0.0, %v3437
      %v3439 = vpop.f32.mrb[0].mxu0
      %v3440 = vpop.f32.mrb[0].mxu0
      %v3441 = vadd.f32 0.0, %v3440
      %v3442 = vpop.f32.mrb[0].mxu0
      %3443 = vmatprep.mubr.bf16.mxu0 0
      %3444 = vmatmul.mubr.bf16.gmra.mrb[0].mxu0 %v3289
      %v3445 = vpop.f32.mrb[0].mxu0
      %v3446 = vadd.f32 0.0, %v3445
      %v3447 = vpop.f32.mrb[0].mxu0
      %v3448 = vpop.f32.mrb[0].mxu0
      %v3449 = vadd.f32 0.0, %v3448
      %v3450 = vpop.f32.mrb[0].mxu0
      %3451 = vdwg.mxu0
      %v3452 = vadd.f32 %v823, %v3390
      %v3453 = vadd.f32 %v824, %v3393
      %v3454 = vadd.f32 %v825, %v3398
      %v3455 = vadd.f32 %v826, %v3401
      %v3456 = vadd.f32 %v827, %v3406
      %v3457 = vadd.f32 %v828, %v3409
      %v3458 = vadd.f32 %v829, %v3414
      %v3459 = vadd.f32 %v830, %v3417
      %v3460 = vadd.f32 %v831, %v3422
      %v3461 = vadd.f32 %v832, %v3425
      %v3462 = vadd.f32 %v833, %v3430
      %v3463 = vadd.f32 %v834, %v3433
      %v3464 = vadd.f32 %v835, %v3438
      %v3465 = vadd.f32 %v836, %v3441
      %v3466 = vadd.f32 %v837, %v3446
      %v3467 = vadd.f32 %v838, %v3449
      %s3468 = sadd.s32 %s319, 6
      %s3469 = smul.u32 %s3468, 7
      %s3470 = smul.addr %s3469, 4
      %s3471 = scalar_lea.vmem %s303, %s3470
      %v3472 = vld [vmem:[%s3471] sm:$0x8]
      %v3473 = vld [vmem:[%s3471 + $0x4] sm:$0xf]
      %v3474 = vld [vmem:[%s3471 + $0x8] sm:$0x7]
      %v3475 = vld [vmem:[%s3471 + $0x1c] sm:$0x8]
      %v3476 = vld [vmem:[%s3471 + $0x20] sm:$0xf]
      %v3477 = vld [vmem:[%s3471 + $0x24] sm:$0x7]
      %v3478 = vld [vmem:[%s3471 + $0x38] sm:$0x8]
      %v3479 = vld [vmem:[%s3471 + $0x3c] sm:$0xf]
      %v3480 = vld [vmem:[%s3471 + $0x40] sm:$0x7]
      %v3481 = vld [vmem:[%s3471 + $0x54] sm:$0x8]
      %v3482 = vld [vmem:[%s3471 + $0x58] sm:$0xf]
      %v3483 = vld [vmem:[%s3471 + $0x5c] sm:$0x7]
      %v3484 = vld [vmem:[%s3471 + $0x70] sm:$0x8]
      %v3485 = vld [vmem:[%s3471 + $0x74] sm:$0xf]
      %v3486 = vld [vmem:[%s3471 + $0x78] sm:$0x7]
      %v3487 = vld [vmem:[%s3471 + $0x8c] sm:$0x8]
      %v3488 = vld [vmem:[%s3471 + $0x90] sm:$0xf]
      %v3489 = vld [vmem:[%s3471 + $0x94] sm:$0x7]
      %v3490 = vld [vmem:[%s3471 + $0xa8] sm:$0x8]
      %v3491 = vld [vmem:[%s3471 + $0xac] sm:$0xf]
      %v3492 = vld [vmem:[%s3471 + $0xb0] sm:$0x7]
      %v3493 = vld [vmem:[%s3471 + $0xc4] sm:$0x8]
      %v3494 = vld [vmem:[%s3471 + $0xc8] sm:$0xf]
      %v3495 = vld [vmem:[%s3471 + $0xcc] sm:$0x7]
      %vm3520 = vcmask 1040384
      %vm3521 = vcmask 1044484
      %vm3522 = vmor %vm3520, %vm3521
      %v3523 = vrot.slane %v3472, 7
      %v3524 = vrot.slane %v3523, 4
      %v3525 = vrot.slane %v3473, 7
      %v3526 = vsel %vm3522, %v3524, %v3525
      %v3527 = vrot.slane %v3525, 4
      %v3528 = vrot.slane %v3474, 7
      %v3529 = vsel %vm3522, %v3527, %v3528
      %v3530 = vrot.slane %v3475, 7
      %v3531 = vrot.slane %v3530, 4
      %v3532 = vrot.slane %v3476, 7
      %v3533 = vsel %vm3522, %v3531, %v3532
      %v3534 = vrot.slane %v3532, 4
      %v3535 = vrot.slane %v3477, 7
      %v3536 = vsel %vm3522, %v3534, %v3535
      %v3537 = vrot.slane %v3478, 7
      %v3538 = vrot.slane %v3537, 4
      %v3539 = vrot.slane %v3479, 7
      %v3540 = vsel %vm3522, %v3538, %v3539
      %v3541 = vrot.slane %v3539, 4
      %v3542 = vrot.slane %v3480, 7
      %v3543 = vsel %vm3522, %v3541, %v3542
      %v3544 = vrot.slane %v3481, 7
      %v3545 = vrot.slane %v3544, 4
      %v3546 = vrot.slane %v3482, 7
      %v3547 = vsel %vm3522, %v3545, %v3546
      %v3548 = vrot.slane %v3546, 4
      %v3549 = vrot.slane %v3483, 7
      %v3550 = vsel %vm3522, %v3548, %v3549
      %v3551 = vrot.slane %v3484, 7
      %v3552 = vrot.slane %v3551, 4
      %v3553 = vrot.slane %v3485, 7
      %v3554 = vsel %vm3522, %v3552, %v3553
      %v3555 = vrot.slane %v3553, 4
      %v3556 = vrot.slane %v3486, 7
      %v3557 = vsel %vm3522, %v3555, %v3556
      %v3558 = vrot.slane %v3487, 7
      %v3559 = vrot.slane %v3558, 4
      %v3560 = vrot.slane %v3488, 7
      %v3561 = vsel %vm3522, %v3559, %v3560
      %v3562 = vrot.slane %v3560, 4
      %v3563 = vrot.slane %v3489, 7
      %v3564 = vsel %vm3522, %v3562, %v3563
      %v3565 = vrot.slane %v3490, 7
      %v3566 = vrot.slane %v3565, 4
      %v3567 = vrot.slane %v3491, 7
      %v3568 = vsel %vm3522, %v3566, %v3567
      %v3569 = vrot.slane %v3567, 4
      %v3570 = vrot.slane %v3492, 7
      %v3571 = vsel %vm3522, %v3569, %v3570
      %v3572 = vrot.slane %v3493, 7
      %v3573 = vrot.slane %v3572, 4
      %v3574 = vrot.slane %v3494, 7
      %v3575 = vsel %vm3522, %v3573, %v3574
      %v3576 = vrot.slane %v3574, 4
      %v3577 = vrot.slane %v3495, 7
      %v3578 = vsel %vm3522, %v3576, %v3577
      %s3579 = scalar_lea.vmem %s4, 576
      %v3580 = vld [vmem:[%s3579] sm:$0xf]
      %v3581 = vld [vmem:[%s3579 + $0x4] sm:$0xf]
      %v3582 = vld [vmem:[%s3579 + $0x8] sm:$0xf]
      %v3583 = vld [vmem:[%s3579 + $0xc] sm:$0xf]
      %v3584 = vld [vmem:[%s3579 + $0x10] sm:$0xf]
      %v3585 = vld [vmem:[%s3579 + $0x14] sm:$0xf]
      %v3586 = vld [vmem:[%s3579 + $0x18] sm:$0xf]
      %v3587 = vld [vmem:[%s3579 + $0x1c] sm:$0xf]
      %v3588 = vld [vmem:[%s3579 + $0x20] sm:$0xf]
      %v3589 = vld [vmem:[%s3579 + $0x24] sm:$0xf]
      %v3590 = vld [vmem:[%s3579 + $0x28] sm:$0xf]
      %v3591 = vld [vmem:[%s3579 + $0x2c] sm:$0xf]
      %v3592 = vld [vmem:[%s3579 + $0x30] sm:$0xf]
      %v3593 = vld [vmem:[%s3579 + $0x34] sm:$0xf]
      %v3594 = vld [vmem:[%s3579 + $0x38] sm:$0xf]
      %v3595 = vld [vmem:[%s3579 + $0x3c] sm:$0xf]
      %v3596 = vld [vmem:[%s3471 + $0x8] sm:$0xe]
      %v3597 = vld [vmem:[%s3471 + $0xc] sm:$0xf]
      %v3598 = vld [vmem:[%s3471 + $0x10] sm:$0x1]
      %v3599 = vld [vmem:[%s3471 + $0x24] sm:$0xe]
      %v3600 = vld [vmem:[%s3471 + $0x28] sm:$0xf]
      %v3601 = vld [vmem:[%s3471 + $0x2c] sm:$0x1]
      %v3602 = vld [vmem:[%s3471 + $0x40] sm:$0xe]
      %v3603 = vld [vmem:[%s3471 + $0x44] sm:$0xf]
      %v3604 = vld [vmem:[%s3471 + $0x48] sm:$0x1]
      %v3605 = vld [vmem:[%s3471 + $0x5c] sm:$0xe]
      %v3606 = vld [vmem:[%s3471 + $0x60] sm:$0xf]
      %v3607 = vld [vmem:[%s3471 + $0x64] sm:$0x1]
      %v3608 = vld [vmem:[%s3471 + $0x78] sm:$0xe]
      %v3609 = vld [vmem:[%s3471 + $0x7c] sm:$0xf]
      %v3610 = vld [vmem:[%s3471 + $0x80] sm:$0x1]
      %v3611 = vld [vmem:[%s3471 + $0x94] sm:$0xe]
      %v3612 = vld [vmem:[%s3471 + $0x98] sm:$0xf]
      %v3613 = vld [vmem:[%s3471 + $0x9c] sm:$0x1]
      %v3614 = vld [vmem:[%s3471 + $0xb0] sm:$0xe]
      %v3615 = vld [vmem:[%s3471 + $0xb4] sm:$0xf]
      %v3616 = vld [vmem:[%s3471 + $0xb8] sm:$0x1]
      %v3617 = vld [vmem:[%s3471 + $0xcc] sm:$0xe]
      %v3618 = vld [vmem:[%s3471 + $0xd0] sm:$0xf]
      %v3619 = vld [vmem:[%s3471 + $0xd4] sm:$0x1]
      %v3644 = vrot.slane %v3596, 5
      %v3645 = vrot.slane %v3644, 4
      %v3646 = vrot.slane %v3597, 5
      %v3647 = vsel %vm374, %v3645, %v3646
      %v3648 = vrot.slane %v3646, 4
      %v3649 = vrot.slane %v3598, 5
      %v3650 = vsel %vm374, %v3648, %v3649
      %v3651 = vrot.slane %v3599, 5
      %v3652 = vrot.slane %v3651, 4
      %v3653 = vrot.slane %v3600, 5
      %v3654 = vsel %vm374, %v3652, %v3653
      %v3655 = vrot.slane %v3653, 4
      %v3656 = vrot.slane %v3601, 5
      %v3657 = vsel %vm374, %v3655, %v3656
      %v3658 = vrot.slane %v3602, 5
      %v3659 = vrot.slane %v3658, 4
      %v3660 = vrot.slane %v3603, 5
      %v3661 = vsel %vm374, %v3659, %v3660
      %v3662 = vrot.slane %v3660, 4
      %v3663 = vrot.slane %v3604, 5
      %v3664 = vsel %vm374, %v3662, %v3663
      %v3665 = vrot.slane %v3605, 5
      %v3666 = vrot.slane %v3665, 4
      %v3667 = vrot.slane %v3606, 5
      %v3668 = vsel %vm374, %v3666, %v3667
      %v3669 = vrot.slane %v3667, 4
      %v3670 = vrot.slane %v3607, 5
      %v3671 = vsel %vm374, %v3669, %v3670
      %v3672 = vrot.slane %v3608, 5
      %v3673 = vrot.slane %v3672, 4
      %v3674 = vrot.slane %v3609, 5
      %v3675 = vsel %vm374, %v3673, %v3674
      %v3676 = vrot.slane %v3674, 4
      %v3677 = vrot.slane %v3610, 5
      %v3678 = vsel %vm374, %v3676, %v3677
      %v3679 = vrot.slane %v3611, 5
      %v3680 = vrot.slane %v3679, 4
      %v3681 = vrot.slane %v3612, 5
      %v3682 = vsel %vm374, %v3680, %v3681
      %v3683 = vrot.slane %v3681, 4
      %v3684 = vrot.slane %v3613, 5
      %v3685 = vsel %vm374, %v3683, %v3684
      %v3686 = vrot.slane %v3614, 5
      %v3687 = vrot.slane %v3686, 4
      %v3688 = vrot.slane %v3615, 5
      %v3689 = vsel %vm374, %v3687, %v3688
      %v3690 = vrot.slane %v3688, 4
      %v3691 = vrot.slane %v3616, 5
      %v3692 = vsel %vm374, %v3690, %v3691
      %v3693 = vrot.slane %v3617, 5
      %v3694 = vrot.slane %v3693, 4
      %v3695 = vrot.slane %v3618, 5
      %v3696 = vsel %vm374, %v3694, %v3695
      %v3697 = vrot.slane %v3695, 4
      %v3698 = vrot.slane %v3619, 5
      %v3699 = vsel %vm374, %v3697, %v3698
      %s3700 = scalar_lea.vmem %s4, 640
      %v3701 = vld [vmem:[%s3700] sm:$0xf]
      %v3702 = vld [vmem:[%s3700 + $0x4] sm:$0xf]
      %v3703 = vld [vmem:[%s3700 + $0x8] sm:$0xf]
      %v3704 = vld [vmem:[%s3700 + $0xc] sm:$0xf]
      %v3705 = vld [vmem:[%s3700 + $0x10] sm:$0xf]
      %v3706 = vld [vmem:[%s3700 + $0x14] sm:$0xf]
      %v3707 = vld [vmem:[%s3700 + $0x18] sm:$0xf]
      %v3708 = vld [vmem:[%s3700 + $0x1c] sm:$0xf]
      %v3709 = vld [vmem:[%s3700 + $0x20] sm:$0xf]
      %v3710 = vld [vmem:[%s3700 + $0x24] sm:$0xf]
      %v3711 = vld [vmem:[%s3700 + $0x28] sm:$0xf]
      %v3712 = vld [vmem:[%s3700 + $0x2c] sm:$0xf]
      %v3713 = vld [vmem:[%s3700 + $0x30] sm:$0xf]
      %v3714 = vld [vmem:[%s3700 + $0x34] sm:$0xf]
      %v3715 = vld [vmem:[%s3700 + $0x38] sm:$0xf]
      %v3716 = vld [vmem:[%s3700 + $0x3c] sm:$0xf]
      %v3717 = vunpack.c.l.b16 %v3647
      %v3718 = vunpack.c.l.b16 %v3650
      %v3719 = vunpack.c.l.b16 %v3654
      %v3720 = vunpack.c.l.b16 %v3657
      %v3721 = vunpack.c.l.b16 %v3661
      %v3722 = vunpack.c.l.b16 %v3664
      %v3723 = vunpack.c.l.b16 %v3668
      %v3724 = vunpack.c.l.b16 %v3671
      %v3725 = vunpack.c.l.b16 %v3675
      %v3726 = vunpack.c.l.b16 %v3678
      %v3727 = vunpack.c.l.b16 %v3682
      %v3728 = vunpack.c.l.b16 %v3685
      %v3729 = vunpack.c.l.b16 %v3689
      %v3730 = vunpack.c.l.b16 %v3692
      %v3731 = vunpack.c.l.b16 %v3696
      %v3732 = vunpack.c.l.b16 %v3699
      %v3733 = vpack.c.b16 %v3718, %v3717
      %v3734 = vpack.c.b16 %v3720, %v3719
      %v3735 = vpack.c.b16 %v3722, %v3721
      %v3736 = vpack.c.b16 %v3724, %v3723
      %v3737 = vpack.c.b16 %v3726, %v3725
      %v3738 = vpack.c.b16 %v3728, %v3727
      %v3739 = vpack.c.b16 %v3730, %v3729
      %v3740 = vpack.c.b16 %v3732, %v3731
      %v3765 = vunpack.c.l.b16 %v3701
      %v3766 = vunpack.c.l.b16 %v3702
      %v3767 = vunpack.c.l.b16 %v3703
      %v3768 = vunpack.c.l.b16 %v3704
      %v3769 = vunpack.c.l.b16 %v3705
      %v3770 = vunpack.c.l.b16 %v3706
      %v3771 = vunpack.c.l.b16 %v3707
      %v3772 = vunpack.c.l.b16 %v3708
      %v3773 = vunpack.c.l.b16 %v3709
      %v3774 = vunpack.c.l.b16 %v3710
      %v3775 = vunpack.c.l.b16 %v3711
      %v3776 = vunpack.c.l.b16 %v3712
      %v3777 = vunpack.c.l.b16 %v3713
      %v3778 = vunpack.c.l.b16 %v3714
      %v3779 = vunpack.c.l.b16 %v3715
      %v3780 = vunpack.c.l.b16 %v3716
      %v3781 = vpack.c.b16 %v3766, %v3765
      %v3782 = vpack.c.b16 %v3768, %v3767
      %v3783 = vpack.c.b16 %v3770, %v3769
      %v3784 = vpack.c.b16 %v3772, %v3771
      %v3785 = vpack.c.b16 %v3774, %v3773
      %v3786 = vpack.c.b16 %v3776, %v3775
      %v3787 = vpack.c.b16 %v3778, %v3777
      %v3788 = vpack.c.b16 %v3780, %v3779
      %3797 = vmatprep.subr.bf16.mxu0 0
      %3798 = vmatpush1.bf16.msra.mxu0 %v3781
      %3799 = vmatprep.subr.bf16.mxu0 0
      %3800 = vmatpush1.bf16.msra.mxu0 %v3782
      %3801 = vmatprep.subr.bf16.mxu0 0
      %3802 = vmatpush1.bf16.msra.mxu0 %v3783
      %3803 = vmatprep.subr.bf16.mxu0 0
      %3804 = vmatpush1.bf16.msra.mxu0 %v3784
      %3805 = vmatprep.subr.bf16.mxu0 0
      %3806 = vmatpush1.bf16.msra.mxu0 %v3785
      %3807 = vmatprep.subr.bf16.mxu0 0
      %3808 = vmatpush1.bf16.msra.mxu0 %v3786
      %3809 = vmatprep.subr.bf16.mxu0 0
      %3810 = vmatpush1.bf16.msra.mxu0 %v3787
      %3811 = vmatprep.subr.bf16.mxu0 0
      %3812 = vmatpush1.bf16.msra.mxu0 %v3788
      %3813 = vmatprep.subr.bf16.mxu0 0
      %3814 = vmatpush1.bf16.msra.mxu0 0
      %3815 = vmatprep.subr.bf16.mxu0 0
      %3816 = vmatpush1.bf16.msra.mxu0 0
      %3817 = vmatprep.subr.bf16.mxu0 0
      %3818 = vmatpush1.bf16.msra.mxu0 0
      %3819 = vmatprep.subr.bf16.mxu0 0
      %3820 = vmatpush1.bf16.msra.mxu0 0
      %3821 = vmatprep.subr.bf16.mxu0 0
      %3822 = vmatpush1.bf16.msra.mxu0 0
      %3823 = vmatprep.subr.bf16.mxu0 0
      %3824 = vmatpush1.bf16.msra.mxu0 0
      %3825 = vmatprep.subr.bf16.mxu0 0
      %3826 = vmatpush1.bf16.msra.mxu0 0
      %3827 = vmatprep.subr.bf16.mxu0 0
      %3828 = vmatpush1.bf16.msra.mxu0 0
      %3829 = vmatprep.mubr.bf16.mxu0 0
      %3830 = vmatmul.mubr.bf16.gmra.mrb[0].mxu0 %v3733
      %v3831 = vpop.f32.mrb[0].mxu0
      %v3832 = vadd.f32 0.0, %v3831
      %v3833 = vpop.f32.mrb[0].mxu0
      %v3834 = vpop.f32.mrb[0].mxu0
      %v3835 = vadd.f32 0.0, %v3834
      %v3836 = vpop.f32.mrb[0].mxu0
      %3837 = vmatprep.mubr.bf16.mxu0 0
      %3838 = vmatmul.mubr.bf16.gmra.mrb[0].mxu0 %v3734
      %v3839 = vpop.f32.mrb[0].mxu0
      %v3840 = vadd.f32 0.0, %v3839
      %v3841 = vpop.f32.mrb[0].mxu0
      %v3842 = vpop.f32.mrb[0].mxu0
      %v3843 = vadd.f32 0.0, %v3842
      %v3844 = vpop.f32.mrb[0].mxu0
      %3845 = vmatprep.mubr.bf16.mxu0 0
      %3846 = vmatmul.mubr.bf16.gmra.mrb[0].mxu0 %v3735
      %v3847 = vpop.f32.mrb[0].mxu0
      %v3848 = vadd.f32 0.0, %v3847
      %v3849 = vpop.f32.mrb[0].mxu0
      %v3850 = vpop.f32.mrb[0].mxu0
      %v3851 = vadd.f32 0.0, %v3850
      %v3852 = vpop.f32.mrb[0].mxu0
      %3853 = vmatprep.mubr.bf16.mxu0 0
      %3854 = vmatmul.mubr.bf16.gmra.mrb[0].mxu0 %v3736
      %v3855 = vpop.f32.mrb[0].mxu0
      %v3856 = vadd.f32 0.0, %v3855
      %v3857 = vpop.f32.mrb[0].mxu0
      %v3858 = vpop.f32.mrb[0].mxu0
      %v3859 = vadd.f32 0.0, %v3858
      %v3860 = vpop.f32.mrb[0].mxu0
      %3861 = vmatprep.mubr.bf16.mxu0 0
      %3862 = vmatmul.mubr.bf16.gmra.mrb[0].mxu0 %v3737
      %v3863 = vpop.f32.mrb[0].mxu0
      %v3864 = vadd.f32 0.0, %v3863
      %v3865 = vpop.f32.mrb[0].mxu0
      %v3866 = vpop.f32.mrb[0].mxu0
      %v3867 = vadd.f32 0.0, %v3866
      %v3868 = vpop.f32.mrb[0].mxu0
      %3869 = vmatprep.mubr.bf16.mxu0 0
      %3870 = vmatmul.mubr.bf16.gmra.mrb[0].mxu0 %v3738
      %v3871 = vpop.f32.mrb[0].mxu0
      %v3872 = vadd.f32 0.0, %v3871
      %v3873 = vpop.f32.mrb[0].mxu0
      %v3874 = vpop.f32.mrb[0].mxu0
      %v3875 = vadd.f32 0.0, %v3874
      %v3876 = vpop.f32.mrb[0].mxu0
      %3877 = vmatprep.mubr.bf16.mxu0 0
      %3878 = vmatmul.mubr.bf16.gmra.mrb[0].mxu0 %v3739
      %v3879 = vpop.f32.mrb[0].mxu0
      %v3880 = vadd.f32 0.0, %v3879
      %v3881 = vpop.f32.mrb[0].mxu0
      %v3882 = vpop.f32.mrb[0].mxu0
      %v3883 = vadd.f32 0.0, %v3882
      %v3884 = vpop.f32.mrb[0].mxu0
      %3885 = vmatprep.mubr.bf16.mxu0 0
      %3886 = vmatmul.mubr.bf16.gmra.mrb[0].mxu0 %v3740
      %v3887 = vpop.f32.mrb[0].mxu0
      %v3888 = vadd.f32 0.0, %v3887
      %v3889 = vpop.f32.mrb[0].mxu0
      %v3890 = vpop.f32.mrb[0].mxu0
      %v3891 = vadd.f32 0.0, %v3890
      %v3892 = vpop.f32.mrb[0].mxu0
      %3893 = vdwg.mxu0
      %v3894 = vunpack.c.l.b16 %v3526
      %v3895 = vunpack.c.l.b16 %v3529
      %v3896 = vunpack.c.l.b16 %v3533
      %v3897 = vunpack.c.l.b16 %v3536
      %v3898 = vunpack.c.l.b16 %v3540
      %v3899 = vunpack.c.l.b16 %v3543
      %v3900 = vunpack.c.l.b16 %v3547
      %v3901 = vunpack.c.l.b16 %v3550
      %v3902 = vunpack.c.l.b16 %v3554
      %v3903 = vunpack.c.l.b16 %v3557
      %v3904 = vunpack.c.l.b16 %v3561
      %v3905 = vunpack.c.l.b16 %v3564
      %v3906 = vunpack.c.l.b16 %v3568
      %v3907 = vunpack.c.l.b16 %v3571
      %v3908 = vunpack.c.l.b16 %v3575
      %v3909 = vunpack.c.l.b16 %v3578
      %v3910 = vpack.c.b16 %v3895, %v3894
      %v3911 = vpack.c.b16 %v3897, %v3896
      %v3912 = vpack.c.b16 %v3899, %v3898
      %v3913 = vpack.c.b16 %v3901, %v3900
      %v3914 = vpack.c.b16 %v3903, %v3902
      %v3915 = vpack.c.b16 %v3905, %v3904
      %v3916 = vpack.c.b16 %v3907, %v3906
      %v3917 = vpack.c.b16 %v3909, %v3908
      %v3942 = vunpack.c.l.b16 %v3580
      %v3943 = vunpack.c.l.b16 %v3581
      %v3944 = vunpack.c.l.b16 %v3582
      %v3945 = vunpack.c.l.b16 %v3583
      %v3946 = vunpack.c.l.b16 %v3584
      %v3947 = vunpack.c.l.b16 %v3585
      %v3948 = vunpack.c.l.b16 %v3586
      %v3949 = vunpack.c.l.b16 %v3587
      %v3950 = vunpack.c.l.b16 %v3588
      %v3951 = vunpack.c.l.b16 %v3589
      %v3952 = vunpack.c.l.b16 %v3590
      %v3953 = vunpack.c.l.b16 %v3591
      %v3954 = vunpack.c.l.b16 %v3592
      %v3955 = vunpack.c.l.b16 %v3593
      %v3956 = vunpack.c.l.b16 %v3594
      %v3957 = vunpack.c.l.b16 %v3595
      %v3958 = vpack.c.b16 %v3943, %v3942
      %v3959 = vpack.c.b16 %v3945, %v3944
      %v3960 = vpack.c.b16 %v3947, %v3946
      %v3961 = vpack.c.b16 %v3949, %v3948
      %v3962 = vpack.c.b16 %v3951, %v3950
      %v3963 = vpack.c.b16 %v3953, %v3952
      %v3964 = vpack.c.b16 %v3955, %v3954
      %v3965 = vpack.c.b16 %v3957, %v3956
      %3974 = vmatprep.subr.bf16.mxu0 0
      %3975 = vmatpush1.bf16.msra.mxu0 %v3958
      %3976 = vmatprep.subr.bf16.mxu0 0
      %3977 = vmatpush1.bf16.msra.mxu0 %v3959
      %3978 = vmatprep.subr.bf16.mxu0 0
      %3979 = vmatpush1.bf16.msra.mxu0 %v3960
      %3980 = vmatprep.subr.bf16.mxu0 0
      %3981 = vmatpush1.bf16.msra.mxu0 %v3961
      %3982 = vmatprep.subr.bf16.mxu0 0
      %3983 = vmatpush1.bf16.msra.mxu0 %v3962
      %3984 = vmatprep.subr.bf16.mxu0 0
      %3985 = vmatpush1.bf16.msra.mxu0 %v3963
      %3986 = vmatprep.subr.bf16.mxu0 0
      %3987 = vmatpush1.bf16.msra.mxu0 %v3964
      %3988 = vmatprep.subr.bf16.mxu0 0
      %3989 = vmatpush1.bf16.msra.mxu0 %v3965
      %3990 = vmatprep.subr.bf16.mxu0 0
      %3991 = vmatpush1.bf16.msra.mxu0 0
      %3992 = vmatprep.subr.bf16.mxu0 0
      %3993 = vmatpush1.bf16.msra.mxu0 0
      %3994 = vmatprep.subr.bf16.mxu0 0
      %3995 = vmatpush1.bf16.msra.mxu0 0
      %3996 = vmatprep.subr.bf16.mxu0 0
      %3997 = vmatpush1.bf16.msra.mxu0 0
      %3998 = vmatprep.subr.bf16.mxu0 0
      %3999 = vmatpush1.bf16.msra.mxu0 0
      %4000 = vmatprep.subr.bf16.mxu0 0
      %4001 = vmatpush1.bf16.msra.mxu0 0
      %4002 = vmatprep.subr.bf16.mxu0 0
      %4003 = vmatpush1.bf16.msra.mxu0 0
      %4004 = vmatprep.subr.bf16.mxu0 0
      %4005 = vmatpush1.bf16.msra.mxu0 0
      %4006 = vmatprep.mubr.bf16.mxu0 0
      %4007 = vmatmul.mubr.bf16.gmra.mrb[0].mxu0 %v3910
      %v4008 = vpop.f32.mrb[0].mxu0
      %v4009 = vadd.f32 %v3832, %v4008
      %v4010 = vpop.f32.mrb[0].mxu0
      %v4011 = vpop.f32.mrb[0].mxu0
      %v4012 = vadd.f32 %v3835, %v4011
      %v4013 = vpop.f32.mrb[0].mxu0
      %4014 = vmatprep.mubr.bf16.mxu0 0
      %4015 = vmatmul.mubr.bf16.gmra.mrb[0].mxu0 %v3911
      %v4016 = vpop.f32.mrb[0].mxu0
      %v4017 = vadd.f32 %v3840, %v4016
      %v4018 = vpop.f32.mrb[0].mxu0
      %v4019 = vpop.f32.mrb[0].mxu0
      %v4020 = vadd.f32 %v3843, %v4019
      %v4021 = vpop.f32.mrb[0].mxu0
      %4022 = vmatprep.mubr.bf16.mxu0 0
      %4023 = vmatmul.mubr.bf16.gmra.mrb[0].mxu0 %v3912
      %v4024 = vpop.f32.mrb[0].mxu0
      %v4025 = vadd.f32 %v3848, %v4024
      %v4026 = vpop.f32.mrb[0].mxu0
      %v4027 = vpop.f32.mrb[0].mxu0
      %v4028 = vadd.f32 %v3851, %v4027
      %v4029 = vpop.f32.mrb[0].mxu0
      %4030 = vmatprep.mubr.bf16.mxu0 0
      %4031 = vmatmul.mubr.bf16.gmra.mrb[0].mxu0 %v3913
      %v4032 = vpop.f32.mrb[0].mxu0
      %v4033 = vadd.f32 %v3856, %v4032
      %v4034 = vpop.f32.mrb[0].mxu0
      %v4035 = vpop.f32.mrb[0].mxu0
      %v4036 = vadd.f32 %v3859, %v4035
      %v4037 = vpop.f32.mrb[0].mxu0
      %4038 = vmatprep.mubr.bf16.mxu0 0
      %4039 = vmatmul.mubr.bf16.gmra.mrb[0].mxu0 %v3914
      %v4040 = vpop.f32.mrb[0].mxu0
      %v4041 = vadd.f32 %v3864, %v4040
      %v4042 = vpop.f32.mrb[0].mxu0
      %v4043 = vpop.f32.mrb[0].mxu0
      %v4044 = vadd.f32 %v3867, %v4043
      %v4045 = vpop.f32.mrb[0].mxu0
      %4046 = vmatprep.mubr.bf16.mxu0 0
      %4047 = vmatmul.mubr.bf16.gmra.mrb[0].mxu0 %v3915
      %v4048 = vpop.f32.mrb[0].mxu0
      %v4049 = vadd.f32 %v3872, %v4048
      %v4050 = vpop.f32.mrb[0].mxu0
      %v4051 = vpop.f32.mrb[0].mxu0
      %v4052 = vadd.f32 %v3875, %v4051
      %v4053 = vpop.f32.mrb[0].mxu0
      %4054 = vmatprep.mubr.bf16.mxu0 0
      %4055 = vmatmul.mubr.bf16.gmra.mrb[0].mxu0 %v3916
      %v4056 = vpop.f32.mrb[0].mxu0
      %v4057 = vadd.f32 %v3880, %v4056
      %v4058 = vpop.f32.mrb[0].mxu0
      %v4059 = vpop.f32.mrb[0].mxu0
      %v4060 = vadd.f32 %v3883, %v4059
      %v4061 = vpop.f32.mrb[0].mxu0
      %4062 = vmatprep.mubr.bf16.mxu0 0
      %4063 = vmatmul.mubr.bf16.gmra.mrb[0].mxu0 %v3917
      %v4064 = vpop.f32.mrb[0].mxu0
      %v4065 = vadd.f32 %v3888, %v4064
      %v4066 = vpop.f32.mrb[0].mxu0
      %v4067 = vpop.f32.mrb[0].mxu0
      %v4068 = vadd.f32 %v3891, %v4067
      %v4069 = vpop.f32.mrb[0].mxu0
      %4070 = vdwg.mxu0
      %v4071 = vld [vmem:[%s3471 + $0xc] sm:$0x8]
      %v4072 = vld [vmem:[%s3471 + $0x10] sm:$0xf]
      %v4073 = vld [vmem:[%s3471 + $0x14] sm:$0x7]
      %v4074 = vld [vmem:[%s3471 + $0x28] sm:$0x8]
      %v4075 = vld [vmem:[%s3471 + $0x2c] sm:$0xf]
      %v4076 = vld [vmem:[%s3471 + $0x30] sm:$0x7]
      %v4077 = vld [vmem:[%s3471 + $0x44] sm:$0x8]
      %v4078 = vld [vmem:[%s3471 + $0x48] sm:$0xf]
      %v4079 = vld [vmem:[%s3471 + $0x4c] sm:$0x7]
      %v4080 = vld [vmem:[%s3471 + $0x60] sm:$0x8]
      %v4081 = vld [vmem:[%s3471 + $0x64] sm:$0xf]
      %v4082 = vld [vmem:[%s3471 + $0x68] sm:$0x7]
      %v4083 = vld [vmem:[%s3471 + $0x7c] sm:$0x8]
      %v4084 = vld [vmem:[%s3471 + $0x80] sm:$0xf]
      %v4085 = vld [vmem:[%s3471 + $0x84] sm:$0x7]
      %v4086 = vld [vmem:[%s3471 + $0x98] sm:$0x8]
      %v4087 = vld [vmem:[%s3471 + $0x9c] sm:$0xf]
      %v4088 = vld [vmem:[%s3471 + $0xa0] sm:$0x7]
      %v4089 = vld [vmem:[%s3471 + $0xb4] sm:$0x8]
      %v4090 = vld [vmem:[%s3471 + $0xb8] sm:$0xf]
      %v4091 = vld [vmem:[%s3471 + $0xbc] sm:$0x7]
      %v4092 = vld [vmem:[%s3471 + $0xd0] sm:$0x8]
      %v4093 = vld [vmem:[%s3471 + $0xd4] sm:$0xf]
      %v4094 = vld [vmem:[%s3471 + $0xd8] sm:$0x7]
      %v4119 = vrot.slane %v4071, 7
      %v4120 = vrot.slane %v4119, 4
      %v4121 = vrot.slane %v4072, 7
      %v4122 = vsel %vm3522, %v4120, %v4121
      %v4123 = vrot.slane %v4121, 4
      %v4124 = vrot.slane %v4073, 7
      %v4125 = vsel %vm3522, %v4123, %v4124
      %v4126 = vrot.slane %v4074, 7
      %v4127 = vrot.slane %v4126, 4
      %v4128 = vrot.slane %v4075, 7
      %v4129 = vsel %vm3522, %v4127, %v4128
      %v4130 = vrot.slane %v4128, 4
      %v4131 = vrot.slane %v4076, 7
      %v4132 = vsel %vm3522, %v4130, %v4131
      %v4133 = vrot.slane %v4077, 7
      %v4134 = vrot.slane %v4133, 4
      %v4135 = vrot.slane %v4078, 7
      %v4136 = vsel %vm3522, %v4134, %v4135
      %v4137 = vrot.slane %v4135, 4
      %v4138 = vrot.slane %v4079, 7
      %v4139 = vsel %vm3522, %v4137, %v4138
      %v4140 = vrot.slane %v4080, 7
      %v4141 = vrot.slane %v4140, 4
      %v4142 = vrot.slane %v4081, 7
      %v4143 = vsel %vm3522, %v4141, %v4142
      %v4144 = vrot.slane %v4142, 4
      %v4145 = vrot.slane %v4082, 7
      %v4146 = vsel %vm3522, %v4144, %v4145
      %v4147 = vrot.slane %v4083, 7
      %v4148 = vrot.slane %v4147, 4
      %v4149 = vrot.slane %v4084, 7
      %v4150 = vsel %vm3522, %v4148, %v4149
      %v4151 = vrot.slane %v4149, 4
      %v4152 = vrot.slane %v4085, 7
      %v4153 = vsel %vm3522, %v4151, %v4152
      %v4154 = vrot.slane %v4086, 7
      %v4155 = vrot.slane %v4154, 4
      %v4156 = vrot.slane %v4087, 7
      %v4157 = vsel %vm3522, %v4155, %v4156
      %v4158 = vrot.slane %v4156, 4
      %v4159 = vrot.slane %v4088, 7
      %v4160 = vsel %vm3522, %v4158, %v4159
      %v4161 = vrot.slane %v4089, 7
      %v4162 = vrot.slane %v4161, 4
      %v4163 = vrot.slane %v4090, 7
      %v4164 = vsel %vm3522, %v4162, %v4163
      %v4165 = vrot.slane %v4163, 4
      %v4166 = vrot.slane %v4091, 7
      %v4167 = vsel %vm3522, %v4165, %v4166
      %v4168 = vrot.slane %v4092, 7
      %v4169 = vrot.slane %v4168, 4
      %v4170 = vrot.slane %v4093, 7
      %v4171 = vsel %vm3522, %v4169, %v4170
      %v4172 = vrot.slane %v4170, 4
      %v4173 = vrot.slane %v4094, 7
      %v4174 = vsel %vm3522, %v4172, %v4173
      %s4175 = scalar_lea.vmem %s4, 704
      %v4176 = vld [vmem:[%s4175] sm:$0xf]
      %v4177 = vld [vmem:[%s4175 + $0x4] sm:$0xf]
      %v4178 = vld [vmem:[%s4175 + $0x8] sm:$0xf]
      %v4179 = vld [vmem:[%s4175 + $0xc] sm:$0xf]
      %v4180 = vld [vmem:[%s4175 + $0x10] sm:$0xf]
      %v4181 = vld [vmem:[%s4175 + $0x14] sm:$0xf]
      %v4182 = vld [vmem:[%s4175 + $0x18] sm:$0xf]
      %v4183 = vld [vmem:[%s4175 + $0x1c] sm:$0xf]
      %v4184 = vld [vmem:[%s4175 + $0x20] sm:$0xf]
      %v4185 = vld [vmem:[%s4175 + $0x24] sm:$0xf]
      %v4186 = vld [vmem:[%s4175 + $0x28] sm:$0xf]
      %v4187 = vld [vmem:[%s4175 + $0x2c] sm:$0xf]
      %v4188 = vld [vmem:[%s4175 + $0x30] sm:$0xf]
      %v4189 = vld [vmem:[%s4175 + $0x34] sm:$0xf]
      %v4190 = vld [vmem:[%s4175 + $0x38] sm:$0xf]
      %v4191 = vld [vmem:[%s4175 + $0x3c] sm:$0xf]
      %v4192 = vunpack.c.l.b16 %v4122
      %v4193 = vunpack.c.l.b16 %v4125
      %v4194 = vunpack.c.l.b16 %v4129
      %v4195 = vunpack.c.l.b16 %v4132
      %v4196 = vunpack.c.l.b16 %v4136
      %v4197 = vunpack.c.l.b16 %v4139
      %v4198 = vunpack.c.l.b16 %v4143
      %v4199 = vunpack.c.l.b16 %v4146
      %v4200 = vunpack.c.l.b16 %v4150
      %v4201 = vunpack.c.l.b16 %v4153
      %v4202 = vunpack.c.l.b16 %v4157
      %v4203 = vunpack.c.l.b16 %v4160
      %v4204 = vunpack.c.l.b16 %v4164
      %v4205 = vunpack.c.l.b16 %v4167
      %v4206 = vunpack.c.l.b16 %v4171
      %v4207 = vunpack.c.l.b16 %v4174
      %v4208 = vpack.c.b16 %v4193, %v4192
      %v4209 = vpack.c.b16 %v4195, %v4194
      %v4210 = vpack.c.b16 %v4197, %v4196
      %v4211 = vpack.c.b16 %v4199, %v4198
      %v4212 = vpack.c.b16 %v4201, %v4200
      %v4213 = vpack.c.b16 %v4203, %v4202
      %v4214 = vpack.c.b16 %v4205, %v4204
      %v4215 = vpack.c.b16 %v4207, %v4206
      %v4240 = vunpack.c.l.b16 %v4176
      %v4241 = vunpack.c.l.b16 %v4177
      %v4242 = vunpack.c.l.b16 %v4178
      %v4243 = vunpack.c.l.b16 %v4179
      %v4244 = vunpack.c.l.b16 %v4180
      %v4245 = vunpack.c.l.b16 %v4181
      %v4246 = vunpack.c.l.b16 %v4182
      %v4247 = vunpack.c.l.b16 %v4183
      %v4248 = vunpack.c.l.b16 %v4184
      %v4249 = vunpack.c.l.b16 %v4185
      %v4250 = vunpack.c.l.b16 %v4186
      %v4251 = vunpack.c.l.b16 %v4187
      %v4252 = vunpack.c.l.b16 %v4188
      %v4253 = vunpack.c.l.b16 %v4189
      %v4254 = vunpack.c.l.b16 %v4190
      %v4255 = vunpack.c.l.b16 %v4191
      %v4256 = vpack.c.b16 %v4241, %v4240
      %v4257 = vpack.c.b16 %v4243, %v4242
      %v4258 = vpack.c.b16 %v4245, %v4244
      %v4259 = vpack.c.b16 %v4247, %v4246
      %v4260 = vpack.c.b16 %v4249, %v4248
      %v4261 = vpack.c.b16 %v4251, %v4250
      %v4262 = vpack.c.b16 %v4253, %v4252
      %v4263 = vpack.c.b16 %v4255, %v4254
      %4272 = vmatprep.subr.bf16.mxu0 0
      %4273 = vmatpush1.bf16.msra.mxu0 %v4256
      %4274 = vmatprep.subr.bf16.mxu0 0
      %4275 = vmatpush1.bf16.msra.mxu0 %v4257
      %4276 = vmatprep.subr.bf16.mxu0 0
      %4277 = vmatpush1.bf16.msra.mxu0 %v4258
      %4278 = vmatprep.subr.bf16.mxu0 0
      %4279 = vmatpush1.bf16.msra.mxu0 %v4259
      %4280 = vmatprep.subr.bf16.mxu0 0
      %4281 = vmatpush1.bf16.msra.mxu0 %v4260
      %4282 = vmatprep.subr.bf16.mxu0 0
      %4283 = vmatpush1.bf16.msra.mxu0 %v4261
      %4284 = vmatprep.subr.bf16.mxu0 0
      %4285 = vmatpush1.bf16.msra.mxu0 %v4262
      %4286 = vmatprep.subr.bf16.mxu0 0
      %4287 = vmatpush1.bf16.msra.mxu0 %v4263
      %4288 = vmatprep.subr.bf16.mxu0 0
      %4289 = vmatpush1.bf16.msra.mxu0 0
      %4290 = vmatprep.subr.bf16.mxu0 0
      %4291 = vmatpush1.bf16.msra.mxu0 0
      %4292 = vmatprep.subr.bf16.mxu0 0
      %4293 = vmatpush1.bf16.msra.mxu0 0
      %4294 = vmatprep.subr.bf16.mxu0 0
      %4295 = vmatpush1.bf16.msra.mxu0 0
      %4296 = vmatprep.subr.bf16.mxu0 0
      %4297 = vmatpush1.bf16.msra.mxu0 0
      %4298 = vmatprep.subr.bf16.mxu0 0
      %4299 = vmatpush1.bf16.msra.mxu0 0
      %4300 = vmatprep.subr.bf16.mxu0 0
      %4301 = vmatpush1.bf16.msra.mxu0 0
      %4302 = vmatprep.subr.bf16.mxu0 0
      %4303 = vmatpush1.bf16.msra.mxu0 0
      %4304 = vmatprep.mubr.bf16.mxu0 0
      %4305 = vmatmul.mubr.bf16.gmra.mrb[0].mxu0 %v4208
      %v4306 = vpop.f32.mrb[0].mxu0
      %v4307 = vadd.f32 0.0, %v4306
      %v4308 = vpop.f32.mrb[0].mxu0
      %v4309 = vpop.f32.mrb[0].mxu0
      %v4310 = vadd.f32 0.0, %v4309
      %v4311 = vpop.f32.mrb[0].mxu0
      %4312 = vmatprep.mubr.bf16.mxu0 0
      %4313 = vmatmul.mubr.bf16.gmra.mrb[0].mxu0 %v4209
      %v4314 = vpop.f32.mrb[0].mxu0
      %v4315 = vadd.f32 0.0, %v4314
      %v4316 = vpop.f32.mrb[0].mxu0
      %v4317 = vpop.f32.mrb[0].mxu0
      %v4318 = vadd.f32 0.0, %v4317
      %v4319 = vpop.f32.mrb[0].mxu0
      %4320 = vmatprep.mubr.bf16.mxu0 0
      %4321 = vmatmul.mubr.bf16.gmra.mrb[0].mxu0 %v4210
      %v4322 = vpop.f32.mrb[0].mxu0
      %v4323 = vadd.f32 0.0, %v4322
      %v4324 = vpop.f32.mrb[0].mxu0
      %v4325 = vpop.f32.mrb[0].mxu0
      %v4326 = vadd.f32 0.0, %v4325
      %v4327 = vpop.f32.mrb[0].mxu0
      %4328 = vmatprep.mubr.bf16.mxu0 0
      %4329 = vmatmul.mubr.bf16.gmra.mrb[0].mxu0 %v4211
      %v4330 = vpop.f32.mrb[0].mxu0
      %v4331 = vadd.f32 0.0, %v4330
      %v4332 = vpop.f32.mrb[0].mxu0
      %v4333 = vpop.f32.mrb[0].mxu0
      %v4334 = vadd.f32 0.0, %v4333
      %v4335 = vpop.f32.mrb[0].mxu0
      %4336 = vmatprep.mubr.bf16.mxu0 0
      %4337 = vmatmul.mubr.bf16.gmra.mrb[0].mxu0 %v4212
      %v4338 = vpop.f32.mrb[0].mxu0
      %v4339 = vadd.f32 0.0, %v4338
      %v4340 = vpop.f32.mrb[0].mxu0
      %v4341 = vpop.f32.mrb[0].mxu0
      %v4342 = vadd.f32 0.0, %v4341
      %v4343 = vpop.f32.mrb[0].mxu0
      %4344 = vmatprep.mubr.bf16.mxu0 0
      %4345 = vmatmul.mubr.bf16.gmra.mrb[0].mxu0 %v4213
      %v4346 = vpop.f32.mrb[0].mxu0
      %v4347 = vadd.f32 0.0, %v4346
      %v4348 = vpop.f32.mrb[0].mxu0
      %v4349 = vpop.f32.mrb[0].mxu0
      %v4350 = vadd.f32 0.0, %v4349
      %v4351 = vpop.f32.mrb[0].mxu0
      %4352 = vmatprep.mubr.bf16.mxu0 0
      %4353 = vmatmul.mubr.bf16.gmra.mrb[0].mxu0 %v4214
      %v4354 = vpop.f32.mrb[0].mxu0
      %v4355 = vadd.f32 0.0, %v4354
      %v4356 = vpop.f32.mrb[0].mxu0
      %v4357 = vpop.f32.mrb[0].mxu0
      %v4358 = vadd.f32 0.0, %v4357
      %v4359 = vpop.f32.mrb[0].mxu0
      %4360 = vmatprep.mubr.bf16.mxu0 0
      %4361 = vmatmul.mubr.bf16.gmra.mrb[0].mxu0 %v4215
      %v4362 = vpop.f32.mrb[0].mxu0
      %v4363 = vadd.f32 0.0, %v4362
      %v4364 = vpop.f32.mrb[0].mxu0
      %v4365 = vpop.f32.mrb[0].mxu0
      %v4366 = vadd.f32 0.0, %v4365
      %v4367 = vpop.f32.mrb[0].mxu0
      %4368 = vdwg.mxu0
      %v4369 = vadd.f32 %v4009, %v4307
      %v4370 = vadd.f32 %v4012, %v4310
      %v4371 = vadd.f32 %v4017, %v4315
      %v4372 = vadd.f32 %v4020, %v4318
      %v4373 = vadd.f32 %v4025, %v4323
      %v4374 = vadd.f32 %v4028, %v4326
      %v4375 = vadd.f32 %v4033, %v4331
      %v4376 = vadd.f32 %v4036, %v4334
      %v4377 = vadd.f32 %v4041, %v4339
      %v4378 = vadd.f32 %v4044, %v4342
      %v4379 = vadd.f32 %v4049, %v4347
      %v4380 = vadd.f32 %v4052, %v4350
      %v4381 = vadd.f32 %v4057, %v4355
      %v4382 = vadd.f32 %v4060, %v4358
      %v4383 = vadd.f32 %v4065, %v4363
      %v4384 = vadd.f32 %v4068, %v4366
      %v4385 = vld [vmem:[%s323] sm:$0x8]
      %v4386 = vld [vmem:[%s323 + $0x4] sm:$0xf]
      %v4387 = vld [vmem:[%s323 + $0x8] sm:$0x7]
      %v4388 = vld [vmem:[%s323 + $0x1c] sm:$0x8]
      %v4389 = vld [vmem:[%s323 + $0x20] sm:$0xf]
      %v4390 = vld [vmem:[%s323 + $0x24] sm:$0x7]
      %v4391 = vld [vmem:[%s323 + $0x38] sm:$0x8]
      %v4392 = vld [vmem:[%s323 + $0x3c] sm:$0xf]
      %v4393 = vld [vmem:[%s323 + $0x40] sm:$0x7]
      %v4394 = vld [vmem:[%s323 + $0x54] sm:$0x8]
      %v4395 = vld [vmem:[%s323 + $0x58] sm:$0xf]
      %v4396 = vld [vmem:[%s323 + $0x5c] sm:$0x7]
      %v4397 = vld [vmem:[%s323 + $0x70] sm:$0x8]
      %v4398 = vld [vmem:[%s323 + $0x74] sm:$0xf]
      %v4399 = vld [vmem:[%s323 + $0x78] sm:$0x7]
      %v4400 = vld [vmem:[%s323 + $0x8c] sm:$0x8]
      %v4401 = vld [vmem:[%s323 + $0x90] sm:$0xf]
      %v4402 = vld [vmem:[%s323 + $0x94] sm:$0x7]
      %v4403 = vld [vmem:[%s323 + $0xa8] sm:$0x8]
      %v4404 = vld [vmem:[%s323 + $0xac] sm:$0xf]
      %v4405 = vld [vmem:[%s323 + $0xb0] sm:$0x7]
      %v4406 = vld [vmem:[%s323 + $0xc4] sm:$0x8]
      %v4407 = vld [vmem:[%s323 + $0xc8] sm:$0xf]
      %v4408 = vld [vmem:[%s323 + $0xcc] sm:$0x7]
      %v4433 = vrot.slane %v4385, 7
      %v4434 = vrot.slane %v4433, 4
      %v4435 = vrot.slane %v4386, 7
      %v4436 = vsel %vm3522, %v4434, %v4435
      %v4437 = vrot.slane %v4435, 4
      %v4438 = vrot.slane %v4387, 7
      %v4439 = vsel %vm3522, %v4437, %v4438
      %v4440 = vrot.slane %v4388, 7
      %v4441 = vrot.slane %v4440, 4
      %v4442 = vrot.slane %v4389, 7
      %v4443 = vsel %vm3522, %v4441, %v4442
      %v4444 = vrot.slane %v4442, 4
      %v4445 = vrot.slane %v4390, 7
      %v4446 = vsel %vm3522, %v4444, %v4445
      %v4447 = vrot.slane %v4391, 7
      %v4448 = vrot.slane %v4447, 4
      %v4449 = vrot.slane %v4392, 7
      %v4450 = vsel %vm3522, %v4448, %v4449
      %v4451 = vrot.slane %v4449, 4
      %v4452 = vrot.slane %v4393, 7
      %v4453 = vsel %vm3522, %v4451, %v4452
      %v4454 = vrot.slane %v4394, 7
      %v4455 = vrot.slane %v4454, 4
      %v4456 = vrot.slane %v4395, 7
      %v4457 = vsel %vm3522, %v4455, %v4456
      %v4458 = vrot.slane %v4456, 4
      %v4459 = vrot.slane %v4396, 7
      %v4460 = vsel %vm3522, %v4458, %v4459
      %v4461 = vrot.slane %v4397, 7
      %v4462 = vrot.slane %v4461, 4
      %v4463 = vrot.slane %v4398, 7
      %v4464 = vsel %vm3522, %v4462, %v4463
      %v4465 = vrot.slane %v4463, 4
      %v4466 = vrot.slane %v4399, 7
      %v4467 = vsel %vm3522, %v4465, %v4466
      %v4468 = vrot.slane %v4400, 7
      %v4469 = vrot.slane %v4468, 4
      %v4470 = vrot.slane %v4401, 7
      %v4471 = vsel %vm3522, %v4469, %v4470
      %v4472 = vrot.slane %v4470, 4
      %v4473 = vrot.slane %v4402, 7
      %v4474 = vsel %vm3522, %v4472, %v4473
      %v4475 = vrot.slane %v4403, 7
      %v4476 = vrot.slane %v4475, 4
      %v4477 = vrot.slane %v4404, 7
      %v4478 = vsel %vm3522, %v4476, %v4477
      %v4479 = vrot.slane %v4477, 4
      %v4480 = vrot.slane %v4405, 7
      %v4481 = vsel %vm3522, %v4479, %v4480
      %v4482 = vrot.slane %v4406, 7
      %v4483 = vrot.slane %v4482, 4
      %v4484 = vrot.slane %v4407, 7
      %v4485 = vsel %vm3522, %v4483, %v4484
      %v4486 = vrot.slane %v4484, 4
      %v4487 = vrot.slane %v4408, 7
      %v4488 = vsel %vm3522, %v4486, %v4487
      %s4489 = scalar_lea.vmem %s4, 768
      %v4490 = vld [vmem:[%s4489] sm:$0xf]
      %v4491 = vld [vmem:[%s4489 + $0x4] sm:$0xf]
      %v4492 = vld [vmem:[%s4489 + $0x8] sm:$0xf]
      %v4493 = vld [vmem:[%s4489 + $0xc] sm:$0xf]
      %v4494 = vld [vmem:[%s4489 + $0x10] sm:$0xf]
      %v4495 = vld [vmem:[%s4489 + $0x14] sm:$0xf]
      %v4496 = vld [vmem:[%s4489 + $0x18] sm:$0xf]
      %v4497 = vld [vmem:[%s4489 + $0x1c] sm:$0xf]
      %v4498 = vld [vmem:[%s4489 + $0x20] sm:$0xf]
      %v4499 = vld [vmem:[%s4489 + $0x24] sm:$0xf]
      %v4500 = vld [vmem:[%s4489 + $0x28] sm:$0xf]
      %v4501 = vld [vmem:[%s4489 + $0x2c] sm:$0xf]
      %v4502 = vld [vmem:[%s4489 + $0x30] sm:$0xf]
      %v4503 = vld [vmem:[%s4489 + $0x34] sm:$0xf]
      %v4504 = vld [vmem:[%s4489 + $0x38] sm:$0xf]
      %v4505 = vld [vmem:[%s4489 + $0x3c] sm:$0xf]
      %v4506 = vunpack.c.l.b16 %v4436
      %v4507 = vunpack.c.l.b16 %v4439
      %v4508 = vunpack.c.l.b16 %v4443
      %v4509 = vunpack.c.l.b16 %v4446
      %v4510 = vunpack.c.l.b16 %v4450
      %v4511 = vunpack.c.l.b16 %v4453
      %v4512 = vunpack.c.l.b16 %v4457
      %v4513 = vunpack.c.l.b16 %v4460
      %v4514 = vunpack.c.l.b16 %v4464
      %v4515 = vunpack.c.l.b16 %v4467
      %v4516 = vunpack.c.l.b16 %v4471
      %v4517 = vunpack.c.l.b16 %v4474
      %v4518 = vunpack.c.l.b16 %v4478
      %v4519 = vunpack.c.l.b16 %v4481
      %v4520 = vunpack.c.l.b16 %v4485
      %v4521 = vunpack.c.l.b16 %v4488
      %v4522 = vpack.c.b16 %v4507, %v4506
      %v4523 = vpack.c.b16 %v4509, %v4508
      %v4524 = vpack.c.b16 %v4511, %v4510
      %v4525 = vpack.c.b16 %v4513, %v4512
      %v4526 = vpack.c.b16 %v4515, %v4514
      %v4527 = vpack.c.b16 %v4517, %v4516
      %v4528 = vpack.c.b16 %v4519, %v4518
      %v4529 = vpack.c.b16 %v4521, %v4520
      %v4554 = vunpack.c.l.b16 %v4490
      %v4555 = vunpack.c.l.b16 %v4491
      %v4556 = vunpack.c.l.b16 %v4492
      %v4557 = vunpack.c.l.b16 %v4493
      %v4558 = vunpack.c.l.b16 %v4494
      %v4559 = vunpack.c.l.b16 %v4495
      %v4560 = vunpack.c.l.b16 %v4496
      %v4561 = vunpack.c.l.b16 %v4497
      %v4562 = vunpack.c.l.b16 %v4498
      %v4563 = vunpack.c.l.b16 %v4499
      %v4564 = vunpack.c.l.b16 %v4500
      %v4565 = vunpack.c.l.b16 %v4501
      %v4566 = vunpack.c.l.b16 %v4502
      %v4567 = vunpack.c.l.b16 %v4503
      %v4568 = vunpack.c.l.b16 %v4504
      %v4569 = vunpack.c.l.b16 %v4505
      %v4570 = vpack.c.b16 %v4555, %v4554
      %v4571 = vpack.c.b16 %v4557, %v4556
      %v4572 = vpack.c.b16 %v4559, %v4558
      %v4573 = vpack.c.b16 %v4561, %v4560
      %v4574 = vpack.c.b16 %v4563, %v4562
      %v4575 = vpack.c.b16 %v4565, %v4564
      %v4576 = vpack.c.b16 %v4567, %v4566
      %v4577 = vpack.c.b16 %v4569, %v4568
      %4586 = vmatprep.subr.bf16.mxu0 0
      %4587 = vmatpush1.bf16.msra.mxu0 %v4570
      %4588 = vmatprep.subr.bf16.mxu0 0
      %4589 = vmatpush1.bf16.msra.mxu0 %v4571
      %4590 = vmatprep.subr.bf16.mxu0 0
      %4591 = vmatpush1.bf16.msra.mxu0 %v4572
      %4592 = vmatprep.subr.bf16.mxu0 0
      %4593 = vmatpush1.bf16.msra.mxu0 %v4573
      %4594 = vmatprep.subr.bf16.mxu0 0
      %4595 = vmatpush1.bf16.msra.mxu0 %v4574
      %4596 = vmatprep.subr.bf16.mxu0 0
      %4597 = vmatpush1.bf16.msra.mxu0 %v4575
      %4598 = vmatprep.subr.bf16.mxu0 0
      %4599 = vmatpush1.bf16.msra.mxu0 %v4576
      %4600 = vmatprep.subr.bf16.mxu0 0
      %4601 = vmatpush1.bf16.msra.mxu0 %v4577
      %4602 = vmatprep.subr.bf16.mxu0 0
      %4603 = vmatpush1.bf16.msra.mxu0 0
      %4604 = vmatprep.subr.bf16.mxu0 0
      %4605 = vmatpush1.bf16.msra.mxu0 0
      %4606 = vmatprep.subr.bf16.mxu0 0
      %4607 = vmatpush1.bf16.msra.mxu0 0
      %4608 = vmatprep.subr.bf16.mxu0 0
      %4609 = vmatpush1.bf16.msra.mxu0 0
      %4610 = vmatprep.subr.bf16.mxu0 0
      %4611 = vmatpush1.bf16.msra.mxu0 0
      %4612 = vmatprep.subr.bf16.mxu0 0
      %4613 = vmatpush1.bf16.msra.mxu0 0
      %4614 = vmatprep.subr.bf16.mxu0 0
      %4615 = vmatpush1.bf16.msra.mxu0 0
      %4616 = vmatprep.subr.bf16.mxu0 0
      %4617 = vmatpush1.bf16.msra.mxu0 0
      %4618 = vmatprep.mubr.bf16.mxu0 0
      %4619 = vmatmul.mubr.bf16.gmra.mrb[0].mxu0 %v4522
      %v4620 = vpop.f32.mrb[0].mxu0
      %v4621 = vadd.f32 0.0, %v4620
      %v4622 = vpop.f32.mrb[0].mxu0
      %v4623 = vpop.f32.mrb[0].mxu0
      %v4624 = vadd.f32 0.0, %v4623
      %v4625 = vpop.f32.mrb[0].mxu0
      %4626 = vmatprep.mubr.bf16.mxu0 0
      %4627 = vmatmul.mubr.bf16.gmra.mrb[0].mxu0 %v4523
      %v4628 = vpop.f32.mrb[0].mxu0
      %v4629 = vadd.f32 0.0, %v4628
      %v4630 = vpop.f32.mrb[0].mxu0
      %v4631 = vpop.f32.mrb[0].mxu0
      %v4632 = vadd.f32 0.0, %v4631
      %v4633 = vpop.f32.mrb[0].mxu0
      %4634 = vmatprep.mubr.bf16.mxu0 0
      %4635 = vmatmul.mubr.bf16.gmra.mrb[0].mxu0 %v4524
      %v4636 = vpop.f32.mrb[0].mxu0
      %v4637 = vadd.f32 0.0, %v4636
      %v4638 = vpop.f32.mrb[0].mxu0
      %v4639 = vpop.f32.mrb[0].mxu0
      %v4640 = vadd.f32 0.0, %v4639
      %v4641 = vpop.f32.mrb[0].mxu0
      %4642 = vmatprep.mubr.bf16.mxu0 0
      %4643 = vmatmul.mubr.bf16.gmra.mrb[0].mxu0 %v4525
      %v4644 = vpop.f32.mrb[0].mxu0
      %v4645 = vadd.f32 0.0, %v4644
      %v4646 = vpop.f32.mrb[0].mxu0
      %v4647 = vpop.f32.mrb[0].mxu0
      %v4648 = vadd.f32 0.0, %v4647
      %v4649 = vpop.f32.mrb[0].mxu0
      %4650 = vmatprep.mubr.bf16.mxu0 0
      %4651 = vmatmul.mubr.bf16.gmra.mrb[0].mxu0 %v4526
      %v4652 = vpop.f32.mrb[0].mxu0
      %v4653 = vadd.f32 0.0, %v4652
      %v4654 = vpop.f32.mrb[0].mxu0
      %v4655 = vpop.f32.mrb[0].mxu0
      %v4656 = vadd.f32 0.0, %v4655
      %v4657 = vpop.f32.mrb[0].mxu0
      %4658 = vmatprep.mubr.bf16.mxu0 0
      %4659 = vmatmul.mubr.bf16.gmra.mrb[0].mxu0 %v4527
      %v4660 = vpop.f32.mrb[0].mxu0
      %v4661 = vadd.f32 0.0, %v4660
      %v4662 = vpop.f32.mrb[0].mxu0
      %v4663 = vpop.f32.mrb[0].mxu0
      %v4664 = vadd.f32 0.0, %v4663
      %v4665 = vpop.f32.mrb[0].mxu0
      %4666 = vmatprep.mubr.bf16.mxu0 0
      %4667 = vmatmul.mubr.bf16.gmra.mrb[0].mxu0 %v4528
      %v4668 = vpop.f32.mrb[0].mxu0
      %v4669 = vadd.f32 0.0, %v4668
      %v4670 = vpop.f32.mrb[0].mxu0
      %v4671 = vpop.f32.mrb[0].mxu0
      %v4672 = vadd.f32 0.0, %v4671
      %v4673 = vpop.f32.mrb[0].mxu0
      %4674 = vmatprep.mubr.bf16.mxu0 0
      %4675 = vmatmul.mubr.bf16.gmra.mrb[0].mxu0 %v4529
      %v4676 = vpop.f32.mrb[0].mxu0
      %v4677 = vadd.f32 0.0, %v4676
      %v4678 = vpop.f32.mrb[0].mxu0
      %v4679 = vpop.f32.mrb[0].mxu0
      %v4680 = vadd.f32 0.0, %v4679
      %v4681 = vpop.f32.mrb[0].mxu0
      %4682 = vdwg.mxu0
      %v4683 = vadd.f32 %v4369, %v4621
      %v4684 = vadd.f32 %v4370, %v4624
      %v4685 = vadd.f32 %v4371, %v4629
      %v4686 = vadd.f32 %v4372, %v4632
      %v4687 = vadd.f32 %v4373, %v4637
      %v4688 = vadd.f32 %v4374, %v4640
      %v4689 = vadd.f32 %v4375, %v4645
      %v4690 = vadd.f32 %v4376, %v4648
      %v4691 = vadd.f32 %v4377, %v4653
      %v4692 = vadd.f32 %v4378, %v4656
      %v4693 = vadd.f32 %v4379, %v4661
      %v4694 = vadd.f32 %v4380, %v4664
      %v4695 = vadd.f32 %v4381, %v4669
      %v4696 = vadd.f32 %v4382, %v4672
      %v4697 = vadd.f32 %v4383, %v4677
      %v4698 = vadd.f32 %v4384, %v4680
      %s4699 = scalar_lea.vmem %s4, 832
      %v4700 = vld [vmem:[%s4699] sm:$0xf]
      %v4701 = vld [vmem:[%s4699 + $0x4] sm:$0xf]
      %v4702 = vld [vmem:[%s4699 + $0x8] sm:$0xf]
      %v4703 = vld [vmem:[%s4699 + $0xc] sm:$0xf]
      %v4704 = vld [vmem:[%s4699 + $0x10] sm:$0xf]
      %v4705 = vld [vmem:[%s4699 + $0x14] sm:$0xf]
      %v4706 = vld [vmem:[%s4699 + $0x18] sm:$0xf]
      %v4707 = vld [vmem:[%s4699 + $0x1c] sm:$0xf]
      %v4708 = vld [vmem:[%s4699 + $0x20] sm:$0xf]
      %v4709 = vld [vmem:[%s4699 + $0x24] sm:$0xf]
      %v4710 = vld [vmem:[%s4699 + $0x28] sm:$0xf]
      %v4711 = vld [vmem:[%s4699 + $0x2c] sm:$0xf]
      %v4712 = vld [vmem:[%s4699 + $0x30] sm:$0xf]
      %v4713 = vld [vmem:[%s4699 + $0x34] sm:$0xf]
      %v4714 = vld [vmem:[%s4699 + $0x38] sm:$0xf]
      %v4715 = vld [vmem:[%s4699 + $0x3c] sm:$0xf]
      %v4732 = vunpack.c.l.b16 %v4700
      %v4733 = vunpack.c.l.b16 %v4701
      %v4734 = vunpack.c.l.b16 %v4702
      %v4735 = vunpack.c.l.b16 %v4703
      %v4736 = vunpack.c.l.b16 %v4704
      %v4737 = vunpack.c.l.b16 %v4705
      %v4738 = vunpack.c.l.b16 %v4706
      %v4739 = vunpack.c.l.b16 %v4707
      %v4740 = vunpack.c.l.b16 %v4708
      %v4741 = vunpack.c.l.b16 %v4709
      %v4742 = vunpack.c.l.b16 %v4710
      %v4743 = vunpack.c.l.b16 %v4711
      %v4744 = vunpack.c.l.b16 %v4712
      %v4745 = vunpack.c.l.b16 %v4713
      %v4746 = vunpack.c.l.b16 %v4714
      %v4747 = vunpack.c.l.b16 %v4715
      %v4748 = vpack.c.b16 %v4733, %v4732
      %v4749 = vpack.c.b16 %v4735, %v4734
      %v4750 = vpack.c.b16 %v4737, %v4736
      %v4751 = vpack.c.b16 %v4739, %v4738
      %v4752 = vpack.c.b16 %v4741, %v4740
      %v4753 = vpack.c.b16 %v4743, %v4742
      %v4754 = vpack.c.b16 %v4745, %v4744
      %v4755 = vpack.c.b16 %v4747, %v4746
      %4764 = vmatprep.subr.bf16.mxu0 0
      %4765 = vmatpush1.bf16.msra.mxu0 %v4748
      %4766 = vmatprep.subr.bf16.mxu0 0
      %4767 = vmatpush1.bf16.msra.mxu0 %v4749
      %4768 = vmatprep.subr.bf16.mxu0 0
      %4769 = vmatpush1.bf16.msra.mxu0 %v4750
      %4770 = vmatprep.subr.bf16.mxu0 0
      %4771 = vmatpush1.bf16.msra.mxu0 %v4751
      %4772 = vmatprep.subr.bf16.mxu0 0
      %4773 = vmatpush1.bf16.msra.mxu0 %v4752
      %4774 = vmatprep.subr.bf16.mxu0 0
      %4775 = vmatpush1.bf16.msra.mxu0 %v4753
      %4776 = vmatprep.subr.bf16.mxu0 0
      %4777 = vmatpush1.bf16.msra.mxu0 %v4754
      %4778 = vmatprep.subr.bf16.mxu0 0
      %4779 = vmatpush1.bf16.msra.mxu0 %v4755
      %4780 = vmatprep.subr.bf16.mxu0 0
      %4781 = vmatpush1.bf16.msra.mxu0 0
      %4782 = vmatprep.subr.bf16.mxu0 0
      %4783 = vmatpush1.bf16.msra.mxu0 0
      %4784 = vmatprep.subr.bf16.mxu0 0
      %4785 = vmatpush1.bf16.msra.mxu0 0
      %4786 = vmatprep.subr.bf16.mxu0 0
      %4787 = vmatpush1.bf16.msra.mxu0 0
      %4788 = vmatprep.subr.bf16.mxu0 0
      %4789 = vmatpush1.bf16.msra.mxu0 0
      %4790 = vmatprep.subr.bf16.mxu0 0
      %4791 = vmatpush1.bf16.msra.mxu0 0
      %4792 = vmatprep.subr.bf16.mxu0 0
      %4793 = vmatpush1.bf16.msra.mxu0 0
      %4794 = vmatprep.subr.bf16.mxu0 0
      %4795 = vmatpush1.bf16.msra.mxu0 0
      %4796 = vmatprep.mubr.bf16.mxu0 0
      %4797 = vmatmul.mubr.bf16.gmra.mrb[0].mxu0 %v470
      %v4798 = vpop.f32.mrb[0].mxu0
      %v4799 = vadd.f32 0.0, %v4798
      %v4800 = vpop.f32.mrb[0].mxu0
      %v4801 = vpop.f32.mrb[0].mxu0
      %v4802 = vadd.f32 0.0, %v4801
      %v4803 = vpop.f32.mrb[0].mxu0
      %4804 = vmatprep.mubr.bf16.mxu0 0
      %4805 = vmatmul.mubr.bf16.gmra.mrb[0].mxu0 %v471
      %v4806 = vpop.f32.mrb[0].mxu0
      %v4807 = vadd.f32 0.0, %v4806
      %v4808 = vpop.f32.mrb[0].mxu0
      %v4809 = vpop.f32.mrb[0].mxu0
      %v4810 = vadd.f32 0.0, %v4809
      %v4811 = vpop.f32.mrb[0].mxu0
      %4812 = vmatprep.mubr.bf16.mxu0 0
      %4813 = vmatmul.mubr.bf16.gmra.mrb[0].mxu0 %v472
      %v4814 = vpop.f32.mrb[0].mxu0
      %v4815 = vadd.f32 0.0, %v4814
      %v4816 = vpop.f32.mrb[0].mxu0
      %v4817 = vpop.f32.mrb[0].mxu0
      %v4818 = vadd.f32 0.0, %v4817
      %v4819 = vpop.f32.mrb[0].mxu0
      %4820 = vmatprep.mubr.bf16.mxu0 0
      %4821 = vmatmul.mubr.bf16.gmra.mrb[0].mxu0 %v473
      %v4822 = vpop.f32.mrb[0].mxu0
      %v4823 = vadd.f32 0.0, %v4822
      %v4824 = vpop.f32.mrb[0].mxu0
      %v4825 = vpop.f32.mrb[0].mxu0
      %v4826 = vadd.f32 0.0, %v4825
      %v4827 = vpop.f32.mrb[0].mxu0
      %4828 = vmatprep.mubr.bf16.mxu0 0
      %4829 = vmatmul.mubr.bf16.gmra.mrb[0].mxu0 %v474
      %v4830 = vpop.f32.mrb[0].mxu0
      %v4831 = vadd.f32 0.0, %v4830
      %v4832 = vpop.f32.mrb[0].mxu0
      %v4833 = vpop.f32.mrb[0].mxu0
      %v4834 = vadd.f32 0.0, %v4833
      %v4835 = vpop.f32.mrb[0].mxu0
      %4836 = vmatprep.mubr.bf16.mxu0 0
      %4837 = vmatmul.mubr.bf16.gmra.mrb[0].mxu0 %v475
      %v4838 = vpop.f32.mrb[0].mxu0
      %v4839 = vadd.f32 0.0, %v4838
      %v4840 = vpop.f32.mrb[0].mxu0
      %v4841 = vpop.f32.mrb[0].mxu0
      %v4842 = vadd.f32 0.0, %v4841
      %v4843 = vpop.f32.mrb[0].mxu0
      %4844 = vmatprep.mubr.bf16.mxu0 0
      %4845 = vmatmul.mubr.bf16.gmra.mrb[0].mxu0 %v476
      %v4846 = vpop.f32.mrb[0].mxu0
      %v4847 = vadd.f32 0.0, %v4846
      %v4848 = vpop.f32.mrb[0].mxu0
      %v4849 = vpop.f32.mrb[0].mxu0
      %v4850 = vadd.f32 0.0, %v4849
      %v4851 = vpop.f32.mrb[0].mxu0
      %4852 = vmatprep.mubr.bf16.mxu0 0
      %4853 = vmatmul.mubr.bf16.gmra.mrb[0].mxu0 %v477
      %v4854 = vpop.f32.mrb[0].mxu0
      %v4855 = vadd.f32 0.0, %v4854
      %v4856 = vpop.f32.mrb[0].mxu0
      %v4857 = vpop.f32.mrb[0].mxu0
      %v4858 = vadd.f32 0.0, %v4857
      %v4859 = vpop.f32.mrb[0].mxu0
      %4860 = vdwg.mxu0
      %v4861 = vadd.f32 %v4683, %v4799
      %v4862 = vadd.f32 %v4684, %v4802
      %v4863 = vadd.f32 %v4685, %v4807
      %v4864 = vadd.f32 %v4686, %v4810
      %v4865 = vadd.f32 %v4687, %v4815
      %v4866 = vadd.f32 %v4688, %v4818
      %v4867 = vadd.f32 %v4689, %v4823
      %v4868 = vadd.f32 %v4690, %v4826
      %v4869 = vadd.f32 %v4691, %v4831
      %v4870 = vadd.f32 %v4692, %v4834
      %v4871 = vadd.f32 %v4693, %v4839
      %v4872 = vadd.f32 %v4694, %v4842
      %v4873 = vadd.f32 %v4695, %v4847
      %v4874 = vadd.f32 %v4696, %v4850
      %v4875 = vadd.f32 %v4697, %v4855
      %v4876 = vadd.f32 %v4698, %v4858
      %v4877 = vld [vmem:[%s323 + $0xc] sm:$0x8]
      %v4878 = vld [vmem:[%s323 + $0x10] sm:$0xf]
      %v4879 = vld [vmem:[%s323 + $0x14] sm:$0x7]
      %v4880 = vld [vmem:[%s323 + $0x28] sm:$0x8]
      %v4881 = vld [vmem:[%s323 + $0x2c] sm:$0xf]
      %v4882 = vld [vmem:[%s323 + $0x30] sm:$0x7]
      %v4883 = vld [vmem:[%s323 + $0x44] sm:$0x8]
      %v4884 = vld [vmem:[%s323 + $0x48] sm:$0xf]
      %v4885 = vld [vmem:[%s323 + $0x4c] sm:$0x7]
      %v4886 = vld [vmem:[%s323 + $0x60] sm:$0x8]
      %v4887 = vld [vmem:[%s323 + $0x64] sm:$0xf]
      %v4888 = vld [vmem:[%s323 + $0x68] sm:$0x7]
      %v4889 = vld [vmem:[%s323 + $0x7c] sm:$0x8]
      %v4890 = vld [vmem:[%s323 + $0x80] sm:$0xf]
      %v4891 = vld [vmem:[%s323 + $0x84] sm:$0x7]
      %v4892 = vld [vmem:[%s323 + $0x98] sm:$0x8]
      %v4893 = vld [vmem:[%s323 + $0x9c] sm:$0xf]
      %v4894 = vld [vmem:[%s323 + $0xa0] sm:$0x7]
      %v4895 = vld [vmem:[%s323 + $0xb4] sm:$0x8]
      %v4896 = vld [vmem:[%s323 + $0xb8] sm:$0xf]
      %v4897 = vld [vmem:[%s323 + $0xbc] sm:$0x7]
      %v4898 = vld [vmem:[%s323 + $0xd0] sm:$0x8]
      %v4899 = vld [vmem:[%s323 + $0xd4] sm:$0xf]
      %v4900 = vld [vmem:[%s323 + $0xd8] sm:$0x7]
      %v4925 = vrot.slane %v4877, 7
      %v4926 = vrot.slane %v4925, 4
      %v4927 = vrot.slane %v4878, 7
      %v4928 = vsel %vm3522, %v4926, %v4927
      %v4929 = vrot.slane %v4927, 4
      %v4930 = vrot.slane %v4879, 7
      %v4931 = vsel %vm3522, %v4929, %v4930
      %v4932 = vrot.slane %v4880, 7
      %v4933 = vrot.slane %v4932, 4
      %v4934 = vrot.slane %v4881, 7
      %v4935 = vsel %vm3522, %v4933, %v4934
      %v4936 = vrot.slane %v4934, 4
      %v4937 = vrot.slane %v4882, 7
      %v4938 = vsel %vm3522, %v4936, %v4937
      %v4939 = vrot.slane %v4883, 7
      %v4940 = vrot.slane %v4939, 4
      %v4941 = vrot.slane %v4884, 7
      %v4942 = vsel %vm3522, %v4940, %v4941
      %v4943 = vrot.slane %v4941, 4
      %v4944 = vrot.slane %v4885, 7
      %v4945 = vsel %vm3522, %v4943, %v4944
      %v4946 = vrot.slane %v4886, 7
      %v4947 = vrot.slane %v4946, 4
      %v4948 = vrot.slane %v4887, 7
      %v4949 = vsel %vm3522, %v4947, %v4948
      %v4950 = vrot.slane %v4948, 4
      %v4951 = vrot.slane %v4888, 7
      %v4952 = vsel %vm3522, %v4950, %v4951
      %v4953 = vrot.slane %v4889, 7
      %v4954 = vrot.slane %v4953, 4
      %v4955 = vrot.slane %v4890, 7
      %v4956 = vsel %vm3522, %v4954, %v4955
      %v4957 = vrot.slane %v4955, 4
      %v4958 = vrot.slane %v4891, 7
      %v4959 = vsel %vm3522, %v4957, %v4958
      %v4960 = vrot.slane %v4892, 7
      %v4961 = vrot.slane %v4960, 4
      %v4962 = vrot.slane %v4893, 7
      %v4963 = vsel %vm3522, %v4961, %v4962
      %v4964 = vrot.slane %v4962, 4
      %v4965 = vrot.slane %v4894, 7
      %v4966 = vsel %vm3522, %v4964, %v4965
      %v4967 = vrot.slane %v4895, 7
      %v4968 = vrot.slane %v4967, 4
      %v4969 = vrot.slane %v4896, 7
      %v4970 = vsel %vm3522, %v4968, %v4969
      %v4971 = vrot.slane %v4969, 4
      %v4972 = vrot.slane %v4897, 7
      %v4973 = vsel %vm3522, %v4971, %v4972
      %v4974 = vrot.slane %v4898, 7
      %v4975 = vrot.slane %v4974, 4
      %v4976 = vrot.slane %v4899, 7
      %v4977 = vsel %vm3522, %v4975, %v4976
      %v4978 = vrot.slane %v4976, 4
      %v4979 = vrot.slane %v4900, 7
      %v4980 = vsel %vm3522, %v4978, %v4979
      %s4981 = scalar_lea.vmem %s4, 896
      %v4982 = vld [vmem:[%s4981] sm:$0xf]
      %v4983 = vld [vmem:[%s4981 + $0x4] sm:$0xf]
      %v4984 = vld [vmem:[%s4981 + $0x8] sm:$0xf]
      %v4985 = vld [vmem:[%s4981 + $0xc] sm:$0xf]
      %v4986 = vld [vmem:[%s4981 + $0x10] sm:$0xf]
      %v4987 = vld [vmem:[%s4981 + $0x14] sm:$0xf]
      %v4988 = vld [vmem:[%s4981 + $0x18] sm:$0xf]
      %v4989 = vld [vmem:[%s4981 + $0x1c] sm:$0xf]
      %v4990 = vld [vmem:[%s4981 + $0x20] sm:$0xf]
      %v4991 = vld [vmem:[%s4981 + $0x24] sm:$0xf]
      %v4992 = vld [vmem:[%s4981 + $0x28] sm:$0xf]
      %v4993 = vld [vmem:[%s4981 + $0x2c] sm:$0xf]
      %v4994 = vld [vmem:[%s4981 + $0x30] sm:$0xf]
      %v4995 = vld [vmem:[%s4981 + $0x34] sm:$0xf]
      %v4996 = vld [vmem:[%s4981 + $0x38] sm:$0xf]
      %v4997 = vld [vmem:[%s4981 + $0x3c] sm:$0xf]
      %v4998 = vunpack.c.l.b16 %v4928
      %v4999 = vunpack.c.l.b16 %v4931
      %v5000 = vunpack.c.l.b16 %v4935
      %v5001 = vunpack.c.l.b16 %v4938
      %v5002 = vunpack.c.l.b16 %v4942
      %v5003 = vunpack.c.l.b16 %v4945
      %v5004 = vunpack.c.l.b16 %v4949
      %v5005 = vunpack.c.l.b16 %v4952
      %v5006 = vunpack.c.l.b16 %v4956
      %v5007 = vunpack.c.l.b16 %v4959
      %v5008 = vunpack.c.l.b16 %v4963
      %v5009 = vunpack.c.l.b16 %v4966
      %v5010 = vunpack.c.l.b16 %v4970
      %v5011 = vunpack.c.l.b16 %v4973
      %v5012 = vunpack.c.l.b16 %v4977
      %v5013 = vunpack.c.l.b16 %v4980
      %v5014 = vpack.c.b16 %v4999, %v4998
      %v5015 = vpack.c.b16 %v5001, %v5000
      %v5016 = vpack.c.b16 %v5003, %v5002
      %v5017 = vpack.c.b16 %v5005, %v5004
      %v5018 = vpack.c.b16 %v5007, %v5006
      %v5019 = vpack.c.b16 %v5009, %v5008
      %v5020 = vpack.c.b16 %v5011, %v5010
      %v5021 = vpack.c.b16 %v5013, %v5012
      %v5046 = vunpack.c.l.b16 %v4982
      %v5047 = vunpack.c.l.b16 %v4983
      %v5048 = vunpack.c.l.b16 %v4984
      %v5049 = vunpack.c.l.b16 %v4985
      %v5050 = vunpack.c.l.b16 %v4986
      %v5051 = vunpack.c.l.b16 %v4987
      %v5052 = vunpack.c.l.b16 %v4988
      %v5053 = vunpack.c.l.b16 %v4989
      %v5054 = vunpack.c.l.b16 %v4990
      %v5055 = vunpack.c.l.b16 %v4991
      %v5056 = vunpack.c.l.b16 %v4992
      %v5057 = vunpack.c.l.b16 %v4993
      %v5058 = vunpack.c.l.b16 %v4994
      %v5059 = vunpack.c.l.b16 %v4995
      %v5060 = vunpack.c.l.b16 %v4996
      %v5061 = vunpack.c.l.b16 %v4997
      %v5062 = vpack.c.b16 %v5047, %v5046
      %v5063 = vpack.c.b16 %v5049, %v5048
      %v5064 = vpack.c.b16 %v5051, %v5050
      %v5065 = vpack.c.b16 %v5053, %v5052
      %v5066 = vpack.c.b16 %v5055, %v5054
      %v5067 = vpack.c.b16 %v5057, %v5056
      %v5068 = vpack.c.b16 %v5059, %v5058
      %v5069 = vpack.c.b16 %v5061, %v5060
      %5078 = vmatprep.subr.bf16.mxu0 0
      %5079 = vmatpush1.bf16.msra.mxu0 %v5062
      %5080 = vmatprep.subr.bf16.mxu0 0
      %5081 = vmatpush1.bf16.msra.mxu0 %v5063
      %5082 = vmatprep.subr.bf16.mxu0 0
      %5083 = vmatpush1.bf16.msra.mxu0 %v5064
      %5084 = vmatprep.subr.bf16.mxu0 0
      %5085 = vmatpush1.bf16.msra.mxu0 %v5065
      %5086 = vmatprep.subr.bf16.mxu0 0
      %5087 = vmatpush1.bf16.msra.mxu0 %v5066
      %5088 = vmatprep.subr.bf16.mxu0 0
      %5089 = vmatpush1.bf16.msra.mxu0 %v5067
      %5090 = vmatprep.subr.bf16.mxu0 0
      %5091 = vmatpush1.bf16.msra.mxu0 %v5068
      %5092 = vmatprep.subr.bf16.mxu0 0
      %5093 = vmatpush1.bf16.msra.mxu0 %v5069
      %5094 = vmatprep.subr.bf16.mxu0 0
      %5095 = vmatpush1.bf16.msra.mxu0 0
      %5096 = vmatprep.subr.bf16.mxu0 0
      %5097 = vmatpush1.bf16.msra.mxu0 0
      %5098 = vmatprep.subr.bf16.mxu0 0
      %5099 = vmatpush1.bf16.msra.mxu0 0
      %5100 = vmatprep.subr.bf16.mxu0 0
      %5101 = vmatpush1.bf16.msra.mxu0 0
      %5102 = vmatprep.subr.bf16.mxu0 0
      %5103 = vmatpush1.bf16.msra.mxu0 0
      %5104 = vmatprep.subr.bf16.mxu0 0
      %5105 = vmatpush1.bf16.msra.mxu0 0
      %5106 = vmatprep.subr.bf16.mxu0 0
      %5107 = vmatpush1.bf16.msra.mxu0 0
      %5108 = vmatprep.subr.bf16.mxu0 0
      %5109 = vmatpush1.bf16.msra.mxu0 0
      %5110 = vmatprep.mubr.bf16.mxu0 0
      %5111 = vmatmul.mubr.bf16.gmra.mrb[0].mxu0 %v5014
      %v5112 = vpop.f32.mrb[0].mxu0
      %v5113 = vadd.f32 0.0, %v5112
      %v5114 = vpop.f32.mrb[0].mxu0
      %v5115 = vpop.f32.mrb[0].mxu0
      %v5116 = vadd.f32 0.0, %v5115
      %v5117 = vpop.f32.mrb[0].mxu0
      %5118 = vmatprep.mubr.bf16.mxu0 0
      %5119 = vmatmul.mubr.bf16.gmra.mrb[0].mxu0 %v5015
      %v5120 = vpop.f32.mrb[0].mxu0
      %v5121 = vadd.f32 0.0, %v5120
      %v5122 = vpop.f32.mrb[0].mxu0
      %v5123 = vpop.f32.mrb[0].mxu0
      %v5124 = vadd.f32 0.0, %v5123
      %v5125 = vpop.f32.mrb[0].mxu0
      %5126 = vmatprep.mubr.bf16.mxu0 0
      %5127 = vmatmul.mubr.bf16.gmra.mrb[0].mxu0 %v5016
      %v5128 = vpop.f32.mrb[0].mxu0
      %v5129 = vadd.f32 0.0, %v5128
      %v5130 = vpop.f32.mrb[0].mxu0
      %v5131 = vpop.f32.mrb[0].mxu0
      %v5132 = vadd.f32 0.0, %v5131
      %v5133 = vpop.f32.mrb[0].mxu0
      %5134 = vmatprep.mubr.bf16.mxu0 0
      %5135 = vmatmul.mubr.bf16.gmra.mrb[0].mxu0 %v5017
      %v5136 = vpop.f32.mrb[0].mxu0
      %v5137 = vadd.f32 0.0, %v5136
      %v5138 = vpop.f32.mrb[0].mxu0
      %v5139 = vpop.f32.mrb[0].mxu0
      %v5140 = vadd.f32 0.0, %v5139
      %v5141 = vpop.f32.mrb[0].mxu0
      %5142 = vmatprep.mubr.bf16.mxu0 0
      %5143 = vmatmul.mubr.bf16.gmra.mrb[0].mxu0 %v5018
      %v5144 = vpop.f32.mrb[0].mxu0
      %v5145 = vadd.f32 0.0, %v5144
      %v5146 = vpop.f32.mrb[0].mxu0
      %v5147 = vpop.f32.mrb[0].mxu0
      %v5148 = vadd.f32 0.0, %v5147
      %v5149 = vpop.f32.mrb[0].mxu0
      %5150 = vmatprep.mubr.bf16.mxu0 0
      %5151 = vmatmul.mubr.bf16.gmra.mrb[0].mxu0 %v5019
      %v5152 = vpop.f32.mrb[0].mxu0
      %v5153 = vadd.f32 0.0, %v5152
      %v5154 = vpop.f32.mrb[0].mxu0
      %v5155 = vpop.f32.mrb[0].mxu0
      %v5156 = vadd.f32 0.0, %v5155
      %v5157 = vpop.f32.mrb[0].mxu0
      %5158 = vmatprep.mubr.bf16.mxu0 0
      %5159 = vmatmul.mubr.bf16.gmra.mrb[0].mxu0 %v5020
      %v5160 = vpop.f32.mrb[0].mxu0
      %v5161 = vadd.f32 0.0, %v5160
      %v5162 = vpop.f32.mrb[0].mxu0
      %v5163 = vpop.f32.mrb[0].mxu0
      %v5164 = vadd.f32 0.0, %v5163
      %v5165 = vpop.f32.mrb[0].mxu0
      %5166 = vmatprep.mubr.bf16.mxu0 0
      %5167 = vmatmul.mubr.bf16.gmra.mrb[0].mxu0 %v5021
      %v5168 = vpop.f32.mrb[0].mxu0
      %v5169 = vadd.f32 0.0, %v5168
      %v5170 = vpop.f32.mrb[0].mxu0
      %v5171 = vpop.f32.mrb[0].mxu0
      %v5172 = vadd.f32 0.0, %v5171
      %v5173 = vpop.f32.mrb[0].mxu0
      %5174 = vdwg.mxu0
      %v5175 = vadd.f32 %v4861, %v5113
      %v5176 = vadd.f32 %v4862, %v5116
      %v5177 = vadd.f32 %v4863, %v5121
      %v5178 = vadd.f32 %v4864, %v5124
      %v5179 = vadd.f32 %v4865, %v5129
      %v5180 = vadd.f32 %v4866, %v5132
      %v5181 = vadd.f32 %v4867, %v5137
      %v5182 = vadd.f32 %v4868, %v5140
      %v5183 = vadd.f32 %v4869, %v5145
      %v5184 = vadd.f32 %v4870, %v5148
      %v5185 = vadd.f32 %v4871, %v5153
      %v5186 = vadd.f32 %v4872, %v5156
      %v5187 = vadd.f32 %v4873, %v5161
      %v5188 = vadd.f32 %v4874, %v5164
      %v5189 = vadd.f32 %v4875, %v5169
      %v5190 = vadd.f32 %v4876, %v5172
      %s5191 = sadd.s32 %s319, 30
      %s5192 = smul.u32 %s5191, 7
      %s5193 = smul.addr %s5192, 4
      %s5194 = scalar_lea.vmem %s303, %s5193
      %v5195 = vld [vmem:[%s5194] sm:$0x8]
      %v5196 = vld [vmem:[%s5194 + $0x4] sm:$0xf]
      %v5197 = vld [vmem:[%s5194 + $0x8] sm:$0x7]
      %v5198 = vld [vmem:[%s5194 + $0x1c] sm:$0x8]
      %v5199 = vld [vmem:[%s5194 + $0x20] sm:$0xf]
      %v5200 = vld [vmem:[%s5194 + $0x24] sm:$0x7]
      %v5201 = vld [vmem:[%s5194 + $0x38] sm:$0x8]
      %v5202 = vld [vmem:[%s5194 + $0x3c] sm:$0xf]
      %v5203 = vld [vmem:[%s5194 + $0x40] sm:$0x7]
      %v5204 = vld [vmem:[%s5194 + $0x54] sm:$0x8]
      %v5205 = vld [vmem:[%s5194 + $0x58] sm:$0xf]
      %v5206 = vld [vmem:[%s5194 + $0x5c] sm:$0x7]
      %v5207 = vld [vmem:[%s5194 + $0x70] sm:$0x8]
      %v5208 = vld [vmem:[%s5194 + $0x74] sm:$0xf]
      %v5209 = vld [vmem:[%s5194 + $0x78] sm:$0x7]
      %v5210 = vld [vmem:[%s5194 + $0x8c] sm:$0x8]
      %v5211 = vld [vmem:[%s5194 + $0x90] sm:$0xf]
      %v5212 = vld [vmem:[%s5194 + $0x94] sm:$0x7]
      %v5213 = vld [vmem:[%s5194 + $0xa8] sm:$0x8]
      %v5214 = vld [vmem:[%s5194 + $0xac] sm:$0xf]
      %v5215 = vld [vmem:[%s5194 + $0xb0] sm:$0x7]
      %v5216 = vld [vmem:[%s5194 + $0xc4] sm:$0x8]
      %v5217 = vld [vmem:[%s5194 + $0xc8] sm:$0xf]
      %v5218 = vld [vmem:[%s5194 + $0xcc] sm:$0x7]
      %v5243 = vrot.slane %v5195, 7
      %v5244 = vrot.slane %v5243, 4
      %v5245 = vrot.slane %v5196, 7
      %v5246 = vsel %vm3522, %v5244, %v5245
      %v5247 = vrot.slane %v5245, 4
      %v5248 = vrot.slane %v5197, 7
      %v5249 = vsel %vm3522, %v5247, %v5248
      %v5250 = vrot.slane %v5198, 7
      %v5251 = vrot.slane %v5250, 4
      %v5252 = vrot.slane %v5199, 7
      %v5253 = vsel %vm3522, %v5251, %v5252
      %v5254 = vrot.slane %v5252, 4
      %v5255 = vrot.slane %v5200, 7
      %v5256 = vsel %vm3522, %v5254, %v5255
      %v5257 = vrot.slane %v5201, 7
      %v5258 = vrot.slane %v5257, 4
      %v5259 = vrot.slane %v5202, 7
      %v5260 = vsel %vm3522, %v5258, %v5259
      %v5261 = vrot.slane %v5259, 4
      %v5262 = vrot.slane %v5203, 7
      %v5263 = vsel %vm3522, %v5261, %v5262
      %v5264 = vrot.slane %v5204, 7
      %v5265 = vrot.slane %v5264, 4
      %v5266 = vrot.slane %v5205, 7
      %v5267 = vsel %vm3522, %v5265, %v5266
      %v5268 = vrot.slane %v5266, 4
      %v5269 = vrot.slane %v5206, 7
      %v5270 = vsel %vm3522, %v5268, %v5269
      %v5271 = vrot.slane %v5207, 7
      %v5272 = vrot.slane %v5271, 4
      %v5273 = vrot.slane %v5208, 7
      %v5274 = vsel %vm3522, %v5272, %v5273
      %v5275 = vrot.slane %v5273, 4
      %v5276 = vrot.slane %v5209, 7
      %v5277 = vsel %vm3522, %v5275, %v5276
      %v5278 = vrot.slane %v5210, 7
      %v5279 = vrot.slane %v5278, 4
      %v5280 = vrot.slane %v5211, 7
      %v5281 = vsel %vm3522, %v5279, %v5280
      %v5282 = vrot.slane %v5280, 4
      %v5283 = vrot.slane %v5212, 7
      %v5284 = vsel %vm3522, %v5282, %v5283
      %v5285 = vrot.slane %v5213, 7
      %v5286 = vrot.slane %v5285, 4
      %v5287 = vrot.slane %v5214, 7
      %v5288 = vsel %vm3522, %v5286, %v5287
      %v5289 = vrot.slane %v5287, 4
      %v5290 = vrot.slane %v5215, 7
      %v5291 = vsel %vm3522, %v5289, %v5290
      %v5292 = vrot.slane %v5216, 7
      %v5293 = vrot.slane %v5292, 4
      %v5294 = vrot.slane %v5217, 7
      %v5295 = vsel %vm3522, %v5293, %v5294
      %v5296 = vrot.slane %v5294, 4
      %v5297 = vrot.slane %v5218, 7
      %v5298 = vsel %vm3522, %v5296, %v5297
      %s5299 = scalar_lea.vmem %s4, 960
      %v5300 = vld [vmem:[%s5299] sm:$0xf]
      %v5301 = vld [vmem:[%s5299 + $0x4] sm:$0xf]
      %v5302 = vld [vmem:[%s5299 + $0x8] sm:$0xf]
      %v5303 = vld [vmem:[%s5299 + $0xc] sm:$0xf]
      %v5304 = vld [vmem:[%s5299 + $0x10] sm:$0xf]
      %v5305 = vld [vmem:[%s5299 + $0x14] sm:$0xf]
      %v5306 = vld [vmem:[%s5299 + $0x18] sm:$0xf]
      %v5307 = vld [vmem:[%s5299 + $0x1c] sm:$0xf]
      %v5308 = vld [vmem:[%s5299 + $0x20] sm:$0xf]
      %v5309 = vld [vmem:[%s5299 + $0x24] sm:$0xf]
      %v5310 = vld [vmem:[%s5299 + $0x28] sm:$0xf]
      %v5311 = vld [vmem:[%s5299 + $0x2c] sm:$0xf]
      %v5312 = vld [vmem:[%s5299 + $0x30] sm:$0xf]
      %v5313 = vld [vmem:[%s5299 + $0x34] sm:$0xf]
      %v5314 = vld [vmem:[%s5299 + $0x38] sm:$0xf]
      %v5315 = vld [vmem:[%s5299 + $0x3c] sm:$0xf]
      %v5316 = vunpack.c.l.b16 %v5246
      %v5317 = vunpack.c.l.b16 %v5249
      %v5318 = vunpack.c.l.b16 %v5253
      %v5319 = vunpack.c.l.b16 %v5256
      %v5320 = vunpack.c.l.b16 %v5260
      %v5321 = vunpack.c.l.b16 %v5263
      %v5322 = vunpack.c.l.b16 %v5267
      %v5323 = vunpack.c.l.b16 %v5270
      %v5324 = vunpack.c.l.b16 %v5274
      %v5325 = vunpack.c.l.b16 %v5277
      %v5326 = vunpack.c.l.b16 %v5281
      %v5327 = vunpack.c.l.b16 %v5284
      %v5328 = vunpack.c.l.b16 %v5288
      %v5329 = vunpack.c.l.b16 %v5291
      %v5330 = vunpack.c.l.b16 %v5295
      %v5331 = vunpack.c.l.b16 %v5298
      %v5332 = vpack.c.b16 %v5317, %v5316
      %v5333 = vpack.c.b16 %v5319, %v5318
      %v5334 = vpack.c.b16 %v5321, %v5320
      %v5335 = vpack.c.b16 %v5323, %v5322
      %v5336 = vpack.c.b16 %v5325, %v5324
      %v5337 = vpack.c.b16 %v5327, %v5326
      %v5338 = vpack.c.b16 %v5329, %v5328
      %v5339 = vpack.c.b16 %v5331, %v5330
      %v5364 = vunpack.c.l.b16 %v5300
      %v5365 = vunpack.c.l.b16 %v5301
      %v5366 = vunpack.c.l.b16 %v5302
      %v5367 = vunpack.c.l.b16 %v5303
      %v5368 = vunpack.c.l.b16 %v5304
      %v5369 = vunpack.c.l.b16 %v5305
      %v5370 = vunpack.c.l.b16 %v5306
      %v5371 = vunpack.c.l.b16 %v5307
      %v5372 = vunpack.c.l.b16 %v5308
      %v5373 = vunpack.c.l.b16 %v5309
      %v5374 = vunpack.c.l.b16 %v5310
      %v5375 = vunpack.c.l.b16 %v5311
      %v5376 = vunpack.c.l.b16 %v5312
      %v5377 = vunpack.c.l.b16 %v5313
      %v5378 = vunpack.c.l.b16 %v5314
      %v5379 = vunpack.c.l.b16 %v5315
      %v5380 = vpack.c.b16 %v5365, %v5364
      %v5381 = vpack.c.b16 %v5367, %v5366
      %v5382 = vpack.c.b16 %v5369, %v5368
      %v5383 = vpack.c.b16 %v5371, %v5370
      %v5384 = vpack.c.b16 %v5373, %v5372
      %v5385 = vpack.c.b16 %v5375, %v5374
      %v5386 = vpack.c.b16 %v5377, %v5376
      %v5387 = vpack.c.b16 %v5379, %v5378
      %5396 = vmatprep.subr.bf16.mxu0 0
      %5397 = vmatpush1.bf16.msra.mxu0 %v5380
      %5398 = vmatprep.subr.bf16.mxu0 0
      %5399 = vmatpush1.bf16.msra.mxu0 %v5381
      %5400 = vmatprep.subr.bf16.mxu0 0
      %5401 = vmatpush1.bf16.msra.mxu0 %v5382
      %5402 = vmatprep.subr.bf16.mxu0 0
      %5403 = vmatpush1.bf16.msra.mxu0 %v5383
      %5404 = vmatprep.subr.bf16.mxu0 0
      %5405 = vmatpush1.bf16.msra.mxu0 %v5384
      %5406 = vmatprep.subr.bf16.mxu0 0
      %5407 = vmatpush1.bf16.msra.mxu0 %v5385
      %5408 = vmatprep.subr.bf16.mxu0 0
      %5409 = vmatpush1.bf16.msra.mxu0 %v5386
      %5410 = vmatprep.subr.bf16.mxu0 0
      %5411 = vmatpush1.bf16.msra.mxu0 %v5387
      %5412 = vmatprep.subr.bf16.mxu0 0
      %5413 = vmatpush1.bf16.msra.mxu0 0
      %5414 = vmatprep.subr.bf16.mxu0 0
      %5415 = vmatpush1.bf16.msra.mxu0 0
      %5416 = vmatprep.subr.bf16.mxu0 0
      %5417 = vmatpush1.bf16.msra.mxu0 0
      %5418 = vmatprep.subr.bf16.mxu0 0
      %5419 = vmatpush1.bf16.msra.mxu0 0
      %5420 = vmatprep.subr.bf16.mxu0 0
      %5421 = vmatpush1.bf16.msra.mxu0 0
      %5422 = vmatprep.subr.bf16.mxu0 0
      %5423 = vmatpush1.bf16.msra.mxu0 0
      %5424 = vmatprep.subr.bf16.mxu0 0
      %5425 = vmatpush1.bf16.msra.mxu0 0
      %5426 = vmatprep.subr.bf16.mxu0 0
      %5427 = vmatpush1.bf16.msra.mxu0 0
      %5428 = vmatprep.mubr.bf16.mxu0 0
      %5429 = vmatmul.mubr.bf16.gmra.mrb[0].mxu0 %v5332
      %v5430 = vpop.f32.mrb[0].mxu0
      %v5431 = vadd.f32 0.0, %v5430
      %v5432 = vpop.f32.mrb[0].mxu0
      %v5433 = vpop.f32.mrb[0].mxu0
      %v5434 = vadd.f32 0.0, %v5433
      %v5435 = vpop.f32.mrb[0].mxu0
      %5436 = vmatprep.mubr.bf16.mxu0 0
      %5437 = vmatmul.mubr.bf16.gmra.mrb[0].mxu0 %v5333
      %v5438 = vpop.f32.mrb[0].mxu0
      %v5439 = vadd.f32 0.0, %v5438
      %v5440 = vpop.f32.mrb[0].mxu0
      %v5441 = vpop.f32.mrb[0].mxu0
      %v5442 = vadd.f32 0.0, %v5441
      %v5443 = vpop.f32.mrb[0].mxu0
      %5444 = vmatprep.mubr.bf16.mxu0 0
      %5445 = vmatmul.mubr.bf16.gmra.mrb[0].mxu0 %v5334
      %v5446 = vpop.f32.mrb[0].mxu0
      %v5447 = vadd.f32 0.0, %v5446
      %v5448 = vpop.f32.mrb[0].mxu0
      %v5449 = vpop.f32.mrb[0].mxu0
      %v5450 = vadd.f32 0.0, %v5449
      %v5451 = vpop.f32.mrb[0].mxu0
      %5452 = vmatprep.mubr.bf16.mxu0 0
      %5453 = vmatmul.mubr.bf16.gmra.mrb[0].mxu0 %v5335
      %v5454 = vpop.f32.mrb[0].mxu0
      %v5455 = vadd.f32 0.0, %v5454
      %v5456 = vpop.f32.mrb[0].mxu0
      %v5457 = vpop.f32.mrb[0].mxu0
      %v5458 = vadd.f32 0.0, %v5457
      %v5459 = vpop.f32.mrb[0].mxu0
      %5460 = vmatprep.mubr.bf16.mxu0 0
      %5461 = vmatmul.mubr.bf16.gmra.mrb[0].mxu0 %v5336
      %v5462 = vpop.f32.mrb[0].mxu0
      %v5463 = vadd.f32 0.0, %v5462
      %v5464 = vpop.f32.mrb[0].mxu0
      %v5465 = vpop.f32.mrb[0].mxu0
      %v5466 = vadd.f32 0.0, %v5465
      %v5467 = vpop.f32.mrb[0].mxu0
      %5468 = vmatprep.mubr.bf16.mxu0 0
      %5469 = vmatmul.mubr.bf16.gmra.mrb[0].mxu0 %v5337
      %v5470 = vpop.f32.mrb[0].mxu0
      %v5471 = vadd.f32 0.0, %v5470
      %v5472 = vpop.f32.mrb[0].mxu0
      %v5473 = vpop.f32.mrb[0].mxu0
      %v5474 = vadd.f32 0.0, %v5473
      %v5475 = vpop.f32.mrb[0].mxu0
      %5476 = vmatprep.mubr.bf16.mxu0 0
      %5477 = vmatmul.mubr.bf16.gmra.mrb[0].mxu0 %v5338
      %v5478 = vpop.f32.mrb[0].mxu0
      %v5479 = vadd.f32 0.0, %v5478
      %v5480 = vpop.f32.mrb[0].mxu0
      %v5481 = vpop.f32.mrb[0].mxu0
      %v5482 = vadd.f32 0.0, %v5481
      %v5483 = vpop.f32.mrb[0].mxu0
      %5484 = vmatprep.mubr.bf16.mxu0 0
      %5485 = vmatmul.mubr.bf16.gmra.mrb[0].mxu0 %v5339
      %v5486 = vpop.f32.mrb[0].mxu0
      %v5487 = vadd.f32 0.0, %v5486
      %v5488 = vpop.f32.mrb[0].mxu0
      %v5489 = vpop.f32.mrb[0].mxu0
      %v5490 = vadd.f32 0.0, %v5489
      %v5491 = vpop.f32.mrb[0].mxu0
      %5492 = vdwg.mxu0
      %v5493 = vadd.f32 %v5175, %v5431
      %v5494 = vadd.f32 %v5176, %v5434
      %v5495 = vadd.f32 %v5177, %v5439
      %v5496 = vadd.f32 %v5178, %v5442
      %v5497 = vadd.f32 %v5179, %v5447
      %v5498 = vadd.f32 %v5180, %v5450
      %v5499 = vadd.f32 %v5181, %v5455
      %v5500 = vadd.f32 %v5182, %v5458
      %v5501 = vadd.f32 %v5183, %v5463
      %v5502 = vadd.f32 %v5184, %v5466
      %v5503 = vadd.f32 %v5185, %v5471
      %v5504 = vadd.f32 %v5186, %v5474
      %v5505 = vadd.f32 %v5187, %v5479
      %v5506 = vadd.f32 %v5188, %v5482
      %v5507 = vadd.f32 %v5189, %v5487
      %v5508 = vadd.f32 %v5190, %v5490
      %v5509 = vld [vmem:[%s5194 + $0x8] sm:$0xe]
      %v5510 = vld [vmem:[%s5194 + $0xc] sm:$0xf]
      %v5511 = vld [vmem:[%s5194 + $0x10] sm:$0x1]
      %v5512 = vld [vmem:[%s5194 + $0x24] sm:$0xe]
      %v5513 = vld [vmem:[%s5194 + $0x28] sm:$0xf]
      %v5514 = vld [vmem:[%s5194 + $0x2c] sm:$0x1]
      %v5515 = vld [vmem:[%s5194 + $0x40] sm:$0xe]
      %v5516 = vld [vmem:[%s5194 + $0x44] sm:$0xf]
      %v5517 = vld [vmem:[%s5194 + $0x48] sm:$0x1]
      %v5518 = vld [vmem:[%s5194 + $0x5c] sm:$0xe]
      %v5519 = vld [vmem:[%s5194 + $0x60] sm:$0xf]
      %v5520 = vld [vmem:[%s5194 + $0x64] sm:$0x1]
      %v5521 = vld [vmem:[%s5194 + $0x78] sm:$0xe]
      %v5522 = vld [vmem:[%s5194 + $0x7c] sm:$0xf]
      %v5523 = vld [vmem:[%s5194 + $0x80] sm:$0x1]
      %v5524 = vld [vmem:[%s5194 + $0x94] sm:$0xe]
      %v5525 = vld [vmem:[%s5194 + $0x98] sm:$0xf]
      %v5526 = vld [vmem:[%s5194 + $0x9c] sm:$0x1]
      %v5527 = vld [vmem:[%s5194 + $0xb0] sm:$0xe]
      %v5528 = vld [vmem:[%s5194 + $0xb4] sm:$0xf]
      %v5529 = vld [vmem:[%s5194 + $0xb8] sm:$0x1]
      %v5530 = vld [vmem:[%s5194 + $0xcc] sm:$0xe]
      %v5531 = vld [vmem:[%s5194 + $0xd0] sm:$0xf]
      %v5532 = vld [vmem:[%s5194 + $0xd4] sm:$0x1]
      %v5557 = vrot.slane %v5509, 5
      %v5558 = vrot.slane %v5557, 4
      %v5559 = vrot.slane %v5510, 5
      %v5560 = vsel %vm374, %v5558, %v5559
      %v5561 = vrot.slane %v5559, 4
      %v5562 = vrot.slane %v5511, 5
      %v5563 = vsel %vm374, %v5561, %v5562
      %v5564 = vrot.slane %v5512, 5
      %v5565 = vrot.slane %v5564, 4
      %v5566 = vrot.slane %v5513, 5
      %v5567 = vsel %vm374, %v5565, %v5566
      %v5568 = vrot.slane %v5566, 4
      %v5569 = vrot.slane %v5514, 5
      %v5570 = vsel %vm374, %v5568, %v5569
      %v5571 = vrot.slane %v5515, 5
      %v5572 = vrot.slane %v5571, 4
      %v5573 = vrot.slane %v5516, 5
      %v5574 = vsel %vm374, %v5572, %v5573
      %v5575 = vrot.slane %v5573, 4
      %v5576 = vrot.slane %v5517, 5
      %v5577 = vsel %vm374, %v5575, %v5576
      %v5578 = vrot.slane %v5518, 5
      %v5579 = vrot.slane %v5578, 4
      %v5580 = vrot.slane %v5519, 5
      %v5581 = vsel %vm374, %v5579, %v5580
      %v5582 = vrot.slane %v5580, 4
      %v5583 = vrot.slane %v5520, 5
      %v5584 = vsel %vm374, %v5582, %v5583
      %v5585 = vrot.slane %v5521, 5
      %v5586 = vrot.slane %v5585, 4
      %v5587 = vrot.slane %v5522, 5
      %v5588 = vsel %vm374, %v5586, %v5587
      %v5589 = vrot.slane %v5587, 4
      %v5590 = vrot.slane %v5523, 5
      %v5591 = vsel %vm374, %v5589, %v5590
      %v5592 = vrot.slane %v5524, 5
      %v5593 = vrot.slane %v5592, 4
      %v5594 = vrot.slane %v5525, 5
      %v5595 = vsel %vm374, %v5593, %v5594
      %v5596 = vrot.slane %v5594, 4
      %v5597 = vrot.slane %v5526, 5
      %v5598 = vsel %vm374, %v5596, %v5597
      %v5599 = vrot.slane %v5527, 5
      %v5600 = vrot.slane %v5599, 4
      %v5601 = vrot.slane %v5528, 5
      %v5602 = vsel %vm374, %v5600, %v5601
      %v5603 = vrot.slane %v5601, 4
      %v5604 = vrot.slane %v5529, 5
      %v5605 = vsel %vm374, %v5603, %v5604
      %v5606 = vrot.slane %v5530, 5
      %v5607 = vrot.slane %v5606, 4
      %v5608 = vrot.slane %v5531, 5
      %v5609 = vsel %vm374, %v5607, %v5608
      %v5610 = vrot.slane %v5608, 4
      %v5611 = vrot.slane %v5532, 5
      %v5612 = vsel %vm374, %v5610, %v5611
      %s5613 = scalar_lea.vmem %s4, 1024
      %v5614 = vld [vmem:[%s5613] sm:$0xf]
      %v5615 = vld [vmem:[%s5613 + $0x4] sm:$0xf]
      %v5616 = vld [vmem:[%s5613 + $0x8] sm:$0xf]
      %v5617 = vld [vmem:[%s5613 + $0xc] sm:$0xf]
      %v5618 = vld [vmem:[%s5613 + $0x10] sm:$0xf]
      %v5619 = vld [vmem:[%s5613 + $0x14] sm:$0xf]
      %v5620 = vld [vmem:[%s5613 + $0x18] sm:$0xf]
      %v5621 = vld [vmem:[%s5613 + $0x1c] sm:$0xf]
      %v5622 = vld [vmem:[%s5613 + $0x20] sm:$0xf]
      %v5623 = vld [vmem:[%s5613 + $0x24] sm:$0xf]
      %v5624 = vld [vmem:[%s5613 + $0x28] sm:$0xf]
      %v5625 = vld [vmem:[%s5613 + $0x2c] sm:$0xf]
      %v5626 = vld [vmem:[%s5613 + $0x30] sm:$0xf]
      %v5627 = vld [vmem:[%s5613 + $0x34] sm:$0xf]
      %v5628 = vld [vmem:[%s5613 + $0x38] sm:$0xf]
      %v5629 = vld [vmem:[%s5613 + $0x3c] sm:$0xf]
      %v5630 = vunpack.c.l.b16 %v5560
      %v5631 = vunpack.c.l.b16 %v5563
      %v5632 = vunpack.c.l.b16 %v5567
      %v5633 = vunpack.c.l.b16 %v5570
      %v5634 = vunpack.c.l.b16 %v5574
      %v5635 = vunpack.c.l.b16 %v5577
      %v5636 = vunpack.c.l.b16 %v5581
      %v5637 = vunpack.c.l.b16 %v5584
      %v5638 = vunpack.c.l.b16 %v5588
      %v5639 = vunpack.c.l.b16 %v5591
      %v5640 = vunpack.c.l.b16 %v5595
      %v5641 = vunpack.c.l.b16 %v5598
      %v5642 = vunpack.c.l.b16 %v5602
      %v5643 = vunpack.c.l.b16 %v5605
      %v5644 = vunpack.c.l.b16 %v5609
      %v5645 = vunpack.c.l.b16 %v5612
      %v5646 = vpack.c.b16 %v5631, %v5630
      %v5647 = vpack.c.b16 %v5633, %v5632
      %v5648 = vpack.c.b16 %v5635, %v5634
      %v5649 = vpack.c.b16 %v5637, %v5636
      %v5650 = vpack.c.b16 %v5639, %v5638
      %v5651 = vpack.c.b16 %v5641, %v5640
      %v5652 = vpack.c.b16 %v5643, %v5642
      %v5653 = vpack.c.b16 %v5645, %v5644
      %v5678 = vunpack.c.l.b16 %v5614
      %v5679 = vunpack.c.l.b16 %v5615
      %v5680 = vunpack.c.l.b16 %v5616
      %v5681 = vunpack.c.l.b16 %v5617
      %v5682 = vunpack.c.l.b16 %v5618
      %v5683 = vunpack.c.l.b16 %v5619
      %v5684 = vunpack.c.l.b16 %v5620
      %v5685 = vunpack.c.l.b16 %v5621
      %v5686 = vunpack.c.l.b16 %v5622
      %v5687 = vunpack.c.l.b16 %v5623
      %v5688 = vunpack.c.l.b16 %v5624
      %v5689 = vunpack.c.l.b16 %v5625
      %v5690 = vunpack.c.l.b16 %v5626
      %v5691 = vunpack.c.l.b16 %v5627
      %v5692 = vunpack.c.l.b16 %v5628
      %v5693 = vunpack.c.l.b16 %v5629
      %v5694 = vpack.c.b16 %v5679, %v5678
      %v5695 = vpack.c.b16 %v5681, %v5680
      %v5696 = vpack.c.b16 %v5683, %v5682
      %v5697 = vpack.c.b16 %v5685, %v5684
      %v5698 = vpack.c.b16 %v5687, %v5686
      %v5699 = vpack.c.b16 %v5689, %v5688
      %v5700 = vpack.c.b16 %v5691, %v5690
      %v5701 = vpack.c.b16 %v5693, %v5692
      %5710 = vmatprep.subr.bf16.mxu0 0
      %5711 = vmatpush1.bf16.msra.mxu0 %v5694
      %5712 = vmatprep.subr.bf16.mxu0 0
      %5713 = vmatpush1.bf16.msra.mxu0 %v5695
      %5714 = vmatprep.subr.bf16.mxu0 0
      %5715 = vmatpush1.bf16.msra.mxu0 %v5696
      %5716 = vmatprep.subr.bf16.mxu0 0
      %5717 = vmatpush1.bf16.msra.mxu0 %v5697
      %5718 = vmatprep.subr.bf16.mxu0 0
      %5719 = vmatpush1.bf16.msra.mxu0 %v5698
      %5720 = vmatprep.subr.bf16.mxu0 0
      %5721 = vmatpush1.bf16.msra.mxu0 %v5699
      %5722 = vmatprep.subr.bf16.mxu0 0
      %5723 = vmatpush1.bf16.msra.mxu0 %v5700
      %5724 = vmatprep.subr.bf16.mxu0 0
      %5725 = vmatpush1.bf16.msra.mxu0 %v5701
      %5726 = vmatprep.subr.bf16.mxu0 0
      %5727 = vmatpush1.bf16.msra.mxu0 0
      %5728 = vmatprep.subr.bf16.mxu0 0
      %5729 = vmatpush1.bf16.msra.mxu0 0
      %5730 = vmatprep.subr.bf16.mxu0 0
      %5731 = vmatpush1.bf16.msra.mxu0 0
      %5732 = vmatprep.subr.bf16.mxu0 0
      %5733 = vmatpush1.bf16.msra.mxu0 0
      %5734 = vmatprep.subr.bf16.mxu0 0
      %5735 = vmatpush1.bf16.msra.mxu0 0
      %5736 = vmatprep.subr.bf16.mxu0 0
      %5737 = vmatpush1.bf16.msra.mxu0 0
      %5738 = vmatprep.subr.bf16.mxu0 0
      %5739 = vmatpush1.bf16.msra.mxu0 0
      %5740 = vmatprep.subr.bf16.mxu0 0
      %5741 = vmatpush1.bf16.msra.mxu0 0
      %5742 = vmatprep.mubr.bf16.mxu0 0
      %5743 = vmatmul.mubr.bf16.gmra.mrb[0].mxu0 %v5646
      %v5744 = vpop.f32.mrb[0].mxu0
      %v5745 = vadd.f32 0.0, %v5744
      %v5746 = vpop.f32.mrb[0].mxu0
      %v5747 = vpop.f32.mrb[0].mxu0
      %v5748 = vadd.f32 0.0, %v5747
      %v5749 = vpop.f32.mrb[0].mxu0
      %5750 = vmatprep.mubr.bf16.mxu0 0
      %5751 = vmatmul.mubr.bf16.gmra.mrb[0].mxu0 %v5647
      %v5752 = vpop.f32.mrb[0].mxu0
      %v5753 = vadd.f32 0.0, %v5752
      %v5754 = vpop.f32.mrb[0].mxu0
      %v5755 = vpop.f32.mrb[0].mxu0
      %v5756 = vadd.f32 0.0, %v5755
      %v5757 = vpop.f32.mrb[0].mxu0
      %5758 = vmatprep.mubr.bf16.mxu0 0
      %5759 = vmatmul.mubr.bf16.gmra.mrb[0].mxu0 %v5648
      %v5760 = vpop.f32.mrb[0].mxu0
      %v5761 = vadd.f32 0.0, %v5760
      %v5762 = vpop.f32.mrb[0].mxu0
      %v5763 = vpop.f32.mrb[0].mxu0
      %v5764 = vadd.f32 0.0, %v5763
      %v5765 = vpop.f32.mrb[0].mxu0
      %5766 = vmatprep.mubr.bf16.mxu0 0
      %5767 = vmatmul.mubr.bf16.gmra.mrb[0].mxu0 %v5649
      %v5768 = vpop.f32.mrb[0].mxu0
      %v5769 = vadd.f32 0.0, %v5768
      %v5770 = vpop.f32.mrb[0].mxu0
      %v5771 = vpop.f32.mrb[0].mxu0
      %v5772 = vadd.f32 0.0, %v5771
      %v5773 = vpop.f32.mrb[0].mxu0
      %5774 = vmatprep.mubr.bf16.mxu0 0
      %5775 = vmatmul.mubr.bf16.gmra.mrb[0].mxu0 %v5650
      %v5776 = vpop.f32.mrb[0].mxu0
      %v5777 = vadd.f32 0.0, %v5776
      %v5778 = vpop.f32.mrb[0].mxu0
      %v5779 = vpop.f32.mrb[0].mxu0
      %v5780 = vadd.f32 0.0, %v5779
      %v5781 = vpop.f32.mrb[0].mxu0
      %5782 = vmatprep.mubr.bf16.mxu0 0
      %5783 = vmatmul.mubr.bf16.gmra.mrb[0].mxu0 %v5651
      %v5784 = vpop.f32.mrb[0].mxu0
      %v5785 = vadd.f32 0.0, %v5784
      %v5786 = vpop.f32.mrb[0].mxu0
      %v5787 = vpop.f32.mrb[0].mxu0
      %v5788 = vadd.f32 0.0, %v5787
      %v5789 = vpop.f32.mrb[0].mxu0
      %5790 = vmatprep.mubr.bf16.mxu0 0
      %5791 = vmatmul.mubr.bf16.gmra.mrb[0].mxu0 %v5652
      %v5792 = vpop.f32.mrb[0].mxu0
      %v5793 = vadd.f32 0.0, %v5792
      %v5794 = vpop.f32.mrb[0].mxu0
      %v5795 = vpop.f32.mrb[0].mxu0
      %v5796 = vadd.f32 0.0, %v5795
      %v5797 = vpop.f32.mrb[0].mxu0
      %5798 = vmatprep.mubr.bf16.mxu0 0
      %5799 = vmatmul.mubr.bf16.gmra.mrb[0].mxu0 %v5653
      %v5800 = vpop.f32.mrb[0].mxu0
      %v5801 = vadd.f32 0.0, %v5800
      %v5802 = vpop.f32.mrb[0].mxu0
      %v5803 = vpop.f32.mrb[0].mxu0
      %v5804 = vadd.f32 0.0, %v5803
      %v5805 = vpop.f32.mrb[0].mxu0
      %5806 = vdwg.mxu0
      %v5807 = vadd.f32 %v5493, %v5745
      %v5808 = vadd.f32 %v5494, %v5748
      %v5809 = vadd.f32 %v5495, %v5753
      %v5810 = vadd.f32 %v5496, %v5756
      %v5811 = vadd.f32 %v5497, %v5761
      %v5812 = vadd.f32 %v5498, %v5764
      %v5813 = vadd.f32 %v5499, %v5769
      %v5814 = vadd.f32 %v5500, %v5772
      %v5815 = vadd.f32 %v5501, %v5777
      %v5816 = vadd.f32 %v5502, %v5780
      %v5817 = vadd.f32 %v5503, %v5785
      %v5818 = vadd.f32 %v5504, %v5788
      %v5819 = vadd.f32 %v5505, %v5793
      %v5820 = vadd.f32 %v5506, %v5796
      %v5821 = vadd.f32 %v5507, %v5801
      %v5822 = vadd.f32 %v5508, %v5804
      %v5823 = vld [vmem:[%s5194 + $0xc] sm:$0x8]
      %v5824 = vld [vmem:[%s5194 + $0x10] sm:$0xf]
      %v5825 = vld [vmem:[%s5194 + $0x14] sm:$0x7]
      %v5826 = vld [vmem:[%s5194 + $0x28] sm:$0x8]
      %v5827 = vld [vmem:[%s5194 + $0x2c] sm:$0xf]
      %v5828 = vld [vmem:[%s5194 + $0x30] sm:$0x7]
      %v5829 = vld [vmem:[%s5194 + $0x44] sm:$0x8]
      %v5830 = vld [vmem:[%s5194 + $0x48] sm:$0xf]
      %v5831 = vld [vmem:[%s5194 + $0x4c] sm:$0x7]
      %v5832 = vld [vmem:[%s5194 + $0x60] sm:$0x8]
      %v5833 = vld [vmem:[%s5194 + $0x64] sm:$0xf]
      %v5834 = vld [vmem:[%s5194 + $0x68] sm:$0x7]
      %v5835 = vld [vmem:[%s5194 + $0x7c] sm:$0x8]
      %v5836 = vld [vmem:[%s5194 + $0x80] sm:$0xf]
      %v5837 = vld [vmem:[%s5194 + $0x84] sm:$0x7]
      %v5838 = vld [vmem:[%s5194 + $0x98] sm:$0x8]
      %v5839 = vld [vmem:[%s5194 + $0x9c] sm:$0xf]
      %v5840 = vld [vmem:[%s5194 + $0xa0] sm:$0x7]
      %v5841 = vld [vmem:[%s5194 + $0xb4] sm:$0x8]
      %v5842 = vld [vmem:[%s5194 + $0xb8] sm:$0xf]
      %v5843 = vld [vmem:[%s5194 + $0xbc] sm:$0x7]
      %v5844 = vld [vmem:[%s5194 + $0xd0] sm:$0x8]
      %v5845 = vld [vmem:[%s5194 + $0xd4] sm:$0xf]
      %v5846 = vld [vmem:[%s5194 + $0xd8] sm:$0x7]
      %v5871 = vrot.slane %v5823, 7
      %v5872 = vrot.slane %v5871, 4
      %v5873 = vrot.slane %v5824, 7
      %v5874 = vsel %vm3522, %v5872, %v5873
      %v5875 = vrot.slane %v5873, 4
      %v5876 = vrot.slane %v5825, 7
      %v5877 = vsel %vm3522, %v5875, %v5876
      %v5878 = vrot.slane %v5826, 7
      %v5879 = vrot.slane %v5878, 4
      %v5880 = vrot.slane %v5827, 7
      %v5881 = vsel %vm3522, %v5879, %v5880
      %v5882 = vrot.slane %v5880, 4
      %v5883 = vrot.slane %v5828, 7
      %v5884 = vsel %vm3522, %v5882, %v5883
      %v5885 = vrot.slane %v5829, 7
      %v5886 = vrot.slane %v5885, 4
      %v5887 = vrot.slane %v5830, 7
      %v5888 = vsel %vm3522, %v5886, %v5887
      %v5889 = vrot.slane %v5887, 4
      %v5890 = vrot.slane %v5831, 7
      %v5891 = vsel %vm3522, %v5889, %v5890
      %v5892 = vrot.slane %v5832, 7
      %v5893 = vrot.slane %v5892, 4
      %v5894 = vrot.slane %v5833, 7
      %v5895 = vsel %vm3522, %v5893, %v5894
      %v5896 = vrot.slane %v5894, 4
      %v5897 = vrot.slane %v5834, 7
      %v5898 = vsel %vm3522, %v5896, %v5897
      %v5899 = vrot.slane %v5835, 7
      %v5900 = vrot.slane %v5899, 4
      %v5901 = vrot.slane %v5836, 7
      %v5902 = vsel %vm3522, %v5900, %v5901
      %v5903 = vrot.slane %v5901, 4
      %v5904 = vrot.slane %v5837, 7
      %v5905 = vsel %vm3522, %v5903, %v5904
      %v5906 = vrot.slane %v5838, 7
      %v5907 = vrot.slane %v5906, 4
      %v5908 = vrot.slane %v5839, 7
      %v5909 = vsel %vm3522, %v5907, %v5908
      %v5910 = vrot.slane %v5908, 4
      %v5911 = vrot.slane %v5840, 7
      %v5912 = vsel %vm3522, %v5910, %v5911
      %v5913 = vrot.slane %v5841, 7
      %v5914 = vrot.slane %v5913, 4
      %v5915 = vrot.slane %v5842, 7
      %v5916 = vsel %vm3522, %v5914, %v5915
      %v5917 = vrot.slane %v5915, 4
      %v5918 = vrot.slane %v5843, 7
      %v5919 = vsel %vm3522, %v5917, %v5918
      %v5920 = vrot.slane %v5844, 7
      %v5921 = vrot.slane %v5920, 4
      %v5922 = vrot.slane %v5845, 7
      %v5923 = vsel %vm3522, %v5921, %v5922
      %v5924 = vrot.slane %v5922, 4
      %v5925 = vrot.slane %v5846, 7
      %v5926 = vsel %vm3522, %v5924, %v5925
      %s5927 = scalar_lea.vmem %s4, 1088
      %v5928 = vld [vmem:[%s5927] sm:$0xf]
      %v5929 = vld [vmem:[%s5927 + $0x4] sm:$0xf]
      %v5930 = vld [vmem:[%s5927 + $0x8] sm:$0xf]
      %v5931 = vld [vmem:[%s5927 + $0xc] sm:$0xf]
      %v5932 = vld [vmem:[%s5927 + $0x10] sm:$0xf]
      %v5933 = vld [vmem:[%s5927 + $0x14] sm:$0xf]
      %v5934 = vld [vmem:[%s5927 + $0x18] sm:$0xf]
      %v5935 = vld [vmem:[%s5927 + $0x1c] sm:$0xf]
      %v5936 = vld [vmem:[%s5927 + $0x20] sm:$0xf]
      %v5937 = vld [vmem:[%s5927 + $0x24] sm:$0xf]
      %v5938 = vld [vmem:[%s5927 + $0x28] sm:$0xf]
      %v5939 = vld [vmem:[%s5927 + $0x2c] sm:$0xf]
      %v5940 = vld [vmem:[%s5927 + $0x30] sm:$0xf]
      %v5941 = vld [vmem:[%s5927 + $0x34] sm:$0xf]
      %v5942 = vld [vmem:[%s5927 + $0x38] sm:$0xf]
      %v5943 = vld [vmem:[%s5927 + $0x3c] sm:$0xf]
      %v5944 = vunpack.c.l.b16 %v5874
      %v5945 = vunpack.c.l.b16 %v5877
      %v5946 = vunpack.c.l.b16 %v5881
      %v5947 = vunpack.c.l.b16 %v5884
      %v5948 = vunpack.c.l.b16 %v5888
      %v5949 = vunpack.c.l.b16 %v5891
      %v5950 = vunpack.c.l.b16 %v5895
      %v5951 = vunpack.c.l.b16 %v5898
      %v5952 = vunpack.c.l.b16 %v5902
      %v5953 = vunpack.c.l.b16 %v5905
      %v5954 = vunpack.c.l.b16 %v5909
      %v5955 = vunpack.c.l.b16 %v5912
      %v5956 = vunpack.c.l.b16 %v5916
      %v5957 = vunpack.c.l.b16 %v5919
      %v5958 = vunpack.c.l.b16 %v5923
      %v5959 = vunpack.c.l.b16 %v5926
      %v5960 = vpack.c.b16 %v5945, %v5944
      %v5961 = vpack.c.b16 %v5947, %v5946
      %v5962 = vpack.c.b16 %v5949, %v5948
      %v5963 = vpack.c.b16 %v5951, %v5950
      %v5964 = vpack.c.b16 %v5953, %v5952
      %v5965 = vpack.c.b16 %v5955, %v5954
      %v5966 = vpack.c.b16 %v5957, %v5956
      %v5967 = vpack.c.b16 %v5959, %v5958
      %v5992 = vunpack.c.l.b16 %v5928
      %v5993 = vunpack.c.l.b16 %v5929
      %v5994 = vunpack.c.l.b16 %v5930
      %v5995 = vunpack.c.l.b16 %v5931
      %v5996 = vunpack.c.l.b16 %v5932
      %v5997 = vunpack.c.l.b16 %v5933
      %v5998 = vunpack.c.l.b16 %v5934
      %v5999 = vunpack.c.l.b16 %v5935
      %v6000 = vunpack.c.l.b16 %v5936
      %v6001 = vunpack.c.l.b16 %v5937
      %v6002 = vunpack.c.l.b16 %v5938
      %v6003 = vunpack.c.l.b16 %v5939
      %v6004 = vunpack.c.l.b16 %v5940
      %v6005 = vunpack.c.l.b16 %v5941
      %v6006 = vunpack.c.l.b16 %v5942
      %v6007 = vunpack.c.l.b16 %v5943
      %v6008 = vpack.c.b16 %v5993, %v5992
      %v6009 = vpack.c.b16 %v5995, %v5994
      %v6010 = vpack.c.b16 %v5997, %v5996
      %v6011 = vpack.c.b16 %v5999, %v5998
      %v6012 = vpack.c.b16 %v6001, %v6000
      %v6013 = vpack.c.b16 %v6003, %v6002
      %v6014 = vpack.c.b16 %v6005, %v6004
      %v6015 = vpack.c.b16 %v6007, %v6006
      %6024 = vmatprep.subr.bf16.mxu0 0
      %6025 = vmatpush1.bf16.msra.mxu0 %v6008
      %6026 = vmatprep.subr.bf16.mxu0 0
      %6027 = vmatpush1.bf16.msra.mxu0 %v6009
      %6028 = vmatprep.subr.bf16.mxu0 0
      %6029 = vmatpush1.bf16.msra.mxu0 %v6010
      %6030 = vmatprep.subr.bf16.mxu0 0
      %6031 = vmatpush1.bf16.msra.mxu0 %v6011
      %6032 = vmatprep.subr.bf16.mxu0 0
      %6033 = vmatpush1.bf16.msra.mxu0 %v6012
      %6034 = vmatprep.subr.bf16.mxu0 0
      %6035 = vmatpush1.bf16.msra.mxu0 %v6013
      %6036 = vmatprep.subr.bf16.mxu0 0
      %6037 = vmatpush1.bf16.msra.mxu0 %v6014
      %6038 = vmatprep.subr.bf16.mxu0 0
      %6039 = vmatpush1.bf16.msra.mxu0 %v6015
      %6040 = vmatprep.subr.bf16.mxu0 0
      %6041 = vmatpush1.bf16.msra.mxu0 0
      %6042 = vmatprep.subr.bf16.mxu0 0
      %6043 = vmatpush1.bf16.msra.mxu0 0
      %6044 = vmatprep.subr.bf16.mxu0 0
      %6045 = vmatpush1.bf16.msra.mxu0 0
      %6046 = vmatprep.subr.bf16.mxu0 0
      %6047 = vmatpush1.bf16.msra.mxu0 0
      %6048 = vmatprep.subr.bf16.mxu0 0
      %6049 = vmatpush1.bf16.msra.mxu0 0
      %6050 = vmatprep.subr.bf16.mxu0 0
      %6051 = vmatpush1.bf16.msra.mxu0 0
      %6052 = vmatprep.subr.bf16.mxu0 0
      %6053 = vmatpush1.bf16.msra.mxu0 0
      %6054 = vmatprep.subr.bf16.mxu0 0
      %6055 = vmatpush1.bf16.msra.mxu0 0
      %6056 = vmatprep.mubr.bf16.mxu0 0
      %6057 = vmatmul.mubr.bf16.gmra.mrb[0].mxu0 %v5960
      %v6058 = vpop.f32.mrb[0].mxu0
      %v6059 = vadd.f32 0.0, %v6058
      %v6060 = vpop.f32.mrb[0].mxu0
      %v6061 = vpop.f32.mrb[0].mxu0
      %v6062 = vadd.f32 0.0, %v6061
      %v6063 = vpop.f32.mrb[0].mxu0
      %6064 = vmatprep.mubr.bf16.mxu0 0
      %6065 = vmatmul.mubr.bf16.gmra.mrb[0].mxu0 %v5961
      %v6066 = vpop.f32.mrb[0].mxu0
      %v6067 = vadd.f32 0.0, %v6066
      %v6068 = vpop.f32.mrb[0].mxu0
      %v6069 = vpop.f32.mrb[0].mxu0
      %v6070 = vadd.f32 0.0, %v6069
      %v6071 = vpop.f32.mrb[0].mxu0
      %6072 = vmatprep.mubr.bf16.mxu0 0
      %6073 = vmatmul.mubr.bf16.gmra.mrb[0].mxu0 %v5962
      %v6074 = vpop.f32.mrb[0].mxu0
      %v6075 = vadd.f32 0.0, %v6074
      %v6076 = vpop.f32.mrb[0].mxu0
      %v6077 = vpop.f32.mrb[0].mxu0
      %v6078 = vadd.f32 0.0, %v6077
      %v6079 = vpop.f32.mrb[0].mxu0
      %6080 = vmatprep.mubr.bf16.mxu0 0
      %6081 = vmatmul.mubr.bf16.gmra.mrb[0].mxu0 %v5963
      %v6082 = vpop.f32.mrb[0].mxu0
      %v6083 = vadd.f32 0.0, %v6082
      %v6084 = vpop.f32.mrb[0].mxu0
      %v6085 = vpop.f32.mrb[0].mxu0
      %v6086 = vadd.f32 0.0, %v6085
      %v6087 = vpop.f32.mrb[0].mxu0
      %6088 = vmatprep.mubr.bf16.mxu0 0
      %6089 = vmatmul.mubr.bf16.gmra.mrb[0].mxu0 %v5964
      %v6090 = vpop.f32.mrb[0].mxu0
      %v6091 = vadd.f32 0.0, %v6090
      %v6092 = vpop.f32.mrb[0].mxu0
      %v6093 = vpop.f32.mrb[0].mxu0
      %v6094 = vadd.f32 0.0, %v6093
      %v6095 = vpop.f32.mrb[0].mxu0
      %6096 = vmatprep.mubr.bf16.mxu0 0
      %6097 = vmatmul.mubr.bf16.gmra.mrb[0].mxu0 %v5965
      %v6098 = vpop.f32.mrb[0].mxu0
      %v6099 = vadd.f32 0.0, %v6098
      %v6100 = vpop.f32.mrb[0].mxu0
      %v6101 = vpop.f32.mrb[0].mxu0
      %v6102 = vadd.f32 0.0, %v6101
      %v6103 = vpop.f32.mrb[0].mxu0
      %6104 = vmatprep.mubr.bf16.mxu0 0
      %6105 = vmatmul.mubr.bf16.gmra.mrb[0].mxu0 %v5966
      %v6106 = vpop.f32.mrb[0].mxu0
      %v6107 = vadd.f32 0.0, %v6106
      %v6108 = vpop.f32.mrb[0].mxu0
      %v6109 = vpop.f32.mrb[0].mxu0
      %v6110 = vadd.f32 0.0, %v6109
      %v6111 = vpop.f32.mrb[0].mxu0
      %6112 = vmatprep.mubr.bf16.mxu0 0
      %6113 = vmatmul.mubr.bf16.gmra.mrb[0].mxu0 %v5967
      %v6114 = vpop.f32.mrb[0].mxu0
      %v6115 = vadd.f32 0.0, %v6114
      %v6116 = vpop.f32.mrb[0].mxu0
      %v6117 = vpop.f32.mrb[0].mxu0
      %v6118 = vadd.f32 0.0, %v6117
      %v6119 = vpop.f32.mrb[0].mxu0
      %6120 = vdwg.mxu0
      %v6121 = vadd.f32 %v5807, %v6059
      %v6122 = vadd.f32 %v5808, %v6062
      %v6123 = vadd.f32 %v5809, %v6067
      %v6124 = vadd.f32 %v5810, %v6070
      %v6125 = vadd.f32 %v5811, %v6075
      %v6126 = vadd.f32 %v5812, %v6078
      %v6127 = vadd.f32 %v5813, %v6083
      %v6128 = vadd.f32 %v5814, %v6086
      %v6129 = vadd.f32 %v5815, %v6091
      %v6130 = vadd.f32 %v5816, %v6094
      %v6131 = vadd.f32 %v5817, %v6099
      %v6132 = vadd.f32 %v5818, %v6102
      %v6133 = vadd.f32 %v5819, %v6107
      %v6134 = vadd.f32 %v5820, %v6110
      %v6135 = vadd.f32 %v5821, %v6115
      %v6136 = vadd.f32 %v5822, %v6118
      %s6137 = scalar_lea.vmem %s5, 1
      %v6138 = vld [vmem:[%s6137] sm:$0x1]
      %v6140 = vlaneseq
      %v6141 = vshrl.u32 %v6140, 7
      %v6142 = vsub.s32 0, %v6141
      %v6143 = vrot.slane %v6138, %v6142
      %v6145 = vadd.f32 %v6121, %v6143
      %v6146 = vadd.f32 %v6122, %v6143
      %v6147 = vadd.f32 %v6123, %v6143
      %v6148 = vadd.f32 %v6124, %v6143
      %v6149 = vadd.f32 %v6125, %v6143
      %v6150 = vadd.f32 %v6126, %v6143
      %v6151 = vadd.f32 %v6127, %v6143
      %v6152 = vadd.f32 %v6128, %v6143
      %v6153 = vadd.f32 %v6129, %v6143
      %v6154 = vadd.f32 %v6130, %v6143
      %v6155 = vadd.f32 %v6131, %v6143
      %v6156 = vadd.f32 %v6132, %v6143
      %v6157 = vadd.f32 %v6133, %v6143
      %v6158 = vadd.f32 %v6134, %v6143
      %v6159 = vadd.f32 %v6135, %v6143
      %v6160 = vadd.f32 %v6136, %v6143
      %v6161 = vmax.f32 %v6145, 0.0
      %v6162 = vmax.f32 %v6146, 0.0
      %v6163 = vmax.f32 %v6147, 0.0
      %v6164 = vmax.f32 %v6148, 0.0
      %v6165 = vmax.f32 %v6149, 0.0
      %v6166 = vmax.f32 %v6150, 0.0
      %v6167 = vmax.f32 %v6151, 0.0
      %v6168 = vmax.f32 %v6152, 0.0
      %v6169 = vmax.f32 %v6153, 0.0
      %v6170 = vmax.f32 %v6154, 0.0
      %v6171 = vmax.f32 %v6155, 0.0
      %v6172 = vmax.f32 %v6156, 0.0
      %v6173 = vmax.f32 %v6157, 0.0
      %v6174 = vmax.f32 %v6158, 0.0
      %v6175 = vmax.f32 %v6159, 0.0
      %v6176 = vmax.f32 %v6160, 0.0
      %v6177 = vpack.c.bf16 %v6162, %v6161
      %v6178 = vpack.c.bf16 %v6164, %v6163
      %v6179 = vpack.c.bf16 %v6166, %v6165
      %v6180 = vpack.c.bf16 %v6168, %v6167
      %v6181 = vpack.c.bf16 %v6170, %v6169
      %v6182 = vpack.c.bf16 %v6172, %v6171
      %v6183 = vpack.c.bf16 %v6174, %v6173
      %v6184 = vpack.c.bf16 %v6176, %v6175
      %s6185 = scalar_lea.vmem %s6, 128
      %v6186 = vld [vmem:[%s6185] sm:$0xf]
      %v6187 = vld [vmem:[%s6185 + $0x4] sm:$0xf]
      %v6188 = vld [vmem:[%s6185 + $0x8] sm:$0xf]
      %v6189 = vld [vmem:[%s6185 + $0xc] sm:$0xf]
      %v6190 = vld [vmem:[%s6185 + $0x10] sm:$0xf]
      %v6191 = vld [vmem:[%s6185 + $0x14] sm:$0xf]
      %v6192 = vld [vmem:[%s6185 + $0x18] sm:$0xf]
      %v6193 = vld [vmem:[%s6185 + $0x1c] sm:$0xf]
      %v6194 = vld [vmem:[%s6185 + $0x20] sm:$0xf]
      %v6195 = vld [vmem:[%s6185 + $0x24] sm:$0xf]
      %v6196 = vld [vmem:[%s6185 + $0x28] sm:$0xf]
      %v6197 = vld [vmem:[%s6185 + $0x2c] sm:$0xf]
      %v6198 = vld [vmem:[%s6185 + $0x30] sm:$0xf]
      %v6199 = vld [vmem:[%s6185 + $0x34] sm:$0xf]
      %v6200 = vld [vmem:[%s6185 + $0x38] sm:$0xf]
      %v6201 = vld [vmem:[%s6185 + $0x3c] sm:$0xf]
      %v6218 = vunpack.c.l.b16 %v6186
      %v6219 = vunpack.c.l.b16 %v6187
      %v6220 = vunpack.c.l.b16 %v6188
      %v6221 = vunpack.c.l.b16 %v6189
      %v6222 = vunpack.c.l.b16 %v6190
      %v6223 = vunpack.c.l.b16 %v6191
      %v6224 = vunpack.c.l.b16 %v6192
      %v6225 = vunpack.c.l.b16 %v6193
      %v6226 = vunpack.c.l.b16 %v6194
      %v6227 = vunpack.c.l.b16 %v6195
      %v6228 = vunpack.c.l.b16 %v6196
      %v6229 = vunpack.c.l.b16 %v6197
      %v6230 = vunpack.c.l.b16 %v6198
      %v6231 = vunpack.c.l.b16 %v6199
      %v6232 = vunpack.c.l.b16 %v6200
      %v6233 = vunpack.c.l.b16 %v6201
      %v6234 = vpack.c.b16 %v6219, %v6218
      %v6235 = vpack.c.b16 %v6221, %v6220
      %v6236 = vpack.c.b16 %v6223, %v6222
      %v6237 = vpack.c.b16 %v6225, %v6224
      %v6238 = vpack.c.b16 %v6227, %v6226
      %v6239 = vpack.c.b16 %v6229, %v6228
      %v6240 = vpack.c.b16 %v6231, %v6230
      %v6241 = vpack.c.b16 %v6233, %v6232
      %6250 = vmatprep.subr.bf16.mxu0 0
      %6251 = vmatpush1.bf16.msra.mxu0 %v6234
      %6252 = vmatprep.subr.bf16.mxu0 0
      %6253 = vmatpush1.bf16.msra.mxu0 %v6235
      %6254 = vmatprep.subr.bf16.mxu0 0
      %6255 = vmatpush1.bf16.msra.mxu0 %v6236
      %6256 = vmatprep.subr.bf16.mxu0 0
      %6257 = vmatpush1.bf16.msra.mxu0 %v6237
      %6258 = vmatprep.subr.bf16.mxu0 0
      %6259 = vmatpush1.bf16.msra.mxu0 %v6238
      %6260 = vmatprep.subr.bf16.mxu0 0
      %6261 = vmatpush1.bf16.msra.mxu0 %v6239
      %6262 = vmatprep.subr.bf16.mxu0 0
      %6263 = vmatpush1.bf16.msra.mxu0 %v6240
      %6264 = vmatprep.subr.bf16.mxu0 0
      %6265 = vmatpush1.bf16.msra.mxu0 %v6241
      %6266 = vmatprep.subr.bf16.mxu0 0
      %6267 = vmatpush1.bf16.msra.mxu0 0
      %6268 = vmatprep.subr.bf16.mxu0 0
      %6269 = vmatpush1.bf16.msra.mxu0 0
      %6270 = vmatprep.subr.bf16.mxu0 0
      %6271 = vmatpush1.bf16.msra.mxu0 0
      %6272 = vmatprep.subr.bf16.mxu0 0
      %6273 = vmatpush1.bf16.msra.mxu0 0
      %6274 = vmatprep.subr.bf16.mxu0 0
      %6275 = vmatpush1.bf16.msra.mxu0 0
      %6276 = vmatprep.subr.bf16.mxu0 0
      %6277 = vmatpush1.bf16.msra.mxu0 0
      %6278 = vmatprep.subr.bf16.mxu0 0
      %6279 = vmatpush1.bf16.msra.mxu0 0
      %6280 = vmatprep.subr.bf16.mxu0 0
      %6281 = vmatpush1.bf16.msra.mxu0 0
      %6282 = vmatprep.mubr.bf16.mxu0 0
      %6283 = vmatmul.mubr.bf16.gmra.mrb[0].mxu0 %v6177
      %v6284 = vpop.f32.mrb[0].mxu0
      %v6285 = vadd.f32 0.0, %v6284
      %v6286 = vpop.f32.mrb[0].mxu0
      %v6287 = vpop.f32.mrb[0].mxu0
      %v6288 = vadd.f32 0.0, %v6287
      %v6289 = vpop.f32.mrb[0].mxu0
      %6290 = vmatprep.mubr.bf16.mxu0 0
      %6291 = vmatmul.mubr.bf16.gmra.mrb[0].mxu0 %v6178
      %v6292 = vpop.f32.mrb[0].mxu0
      %v6293 = vadd.f32 0.0, %v6292
      %v6294 = vpop.f32.mrb[0].mxu0
      %v6295 = vpop.f32.mrb[0].mxu0
      %v6296 = vadd.f32 0.0, %v6295
      %v6297 = vpop.f32.mrb[0].mxu0
      %6298 = vmatprep.mubr.bf16.mxu0 0
      %6299 = vmatmul.mubr.bf16.gmra.mrb[0].mxu0 %v6179
      %v6300 = vpop.f32.mrb[0].mxu0
      %v6301 = vadd.f32 0.0, %v6300
      %v6302 = vpop.f32.mrb[0].mxu0
      %v6303 = vpop.f32.mrb[0].mxu0
      %v6304 = vadd.f32 0.0, %v6303
      %v6305 = vpop.f32.mrb[0].mxu0
      %6306 = vmatprep.mubr.bf16.mxu0 0
      %6307 = vmatmul.mubr.bf16.gmra.mrb[0].mxu0 %v6180
      %v6308 = vpop.f32.mrb[0].mxu0
      %v6309 = vadd.f32 0.0, %v6308
      %v6310 = vpop.f32.mrb[0].mxu0
      %v6311 = vpop.f32.mrb[0].mxu0
      %v6312 = vadd.f32 0.0, %v6311
      %v6313 = vpop.f32.mrb[0].mxu0
      %6314 = vmatprep.mubr.bf16.mxu0 0
      %6315 = vmatmul.mubr.bf16.gmra.mrb[0].mxu0 %v6181
      %v6316 = vpop.f32.mrb[0].mxu0
      %v6317 = vadd.f32 0.0, %v6316
      %v6318 = vpop.f32.mrb[0].mxu0
      %v6319 = vpop.f32.mrb[0].mxu0
      %v6320 = vadd.f32 0.0, %v6319
      %v6321 = vpop.f32.mrb[0].mxu0
      %6322 = vmatprep.mubr.bf16.mxu0 0
      %6323 = vmatmul.mubr.bf16.gmra.mrb[0].mxu0 %v6182
      %v6324 = vpop.f32.mrb[0].mxu0
      %v6325 = vadd.f32 0.0, %v6324
      %v6326 = vpop.f32.mrb[0].mxu0
      %v6327 = vpop.f32.mrb[0].mxu0
      %v6328 = vadd.f32 0.0, %v6327
      %v6329 = vpop.f32.mrb[0].mxu0
      %6330 = vmatprep.mubr.bf16.mxu0 0
      %6331 = vmatmul.mubr.bf16.gmra.mrb[0].mxu0 %v6183
      %v6332 = vpop.f32.mrb[0].mxu0
      %v6333 = vadd.f32 0.0, %v6332
      %v6334 = vpop.f32.mrb[0].mxu0
      %v6335 = vpop.f32.mrb[0].mxu0
      %v6336 = vadd.f32 0.0, %v6335
      %v6337 = vpop.f32.mrb[0].mxu0
      %6338 = vmatprep.mubr.bf16.mxu0 0
      %6339 = vmatmul.mubr.bf16.gmra.mrb[0].mxu0 %v6184
      %v6340 = vpop.f32.mrb[0].mxu0
      %v6341 = vadd.f32 0.0, %v6340
      %v6342 = vpop.f32.mrb[0].mxu0
      %v6343 = vpop.f32.mrb[0].mxu0
      %v6344 = vadd.f32 0.0, %v6343
      %v6345 = vpop.f32.mrb[0].mxu0
      %6346 = vdwg.mxu0
      %v6347 = vadd.f32 %v3452, %v6285
      %v6348 = vadd.f32 %v3453, %v6288
      %v6349 = vadd.f32 %v3454, %v6293
      %v6350 = vadd.f32 %v3455, %v6296
      %v6351 = vadd.f32 %v3456, %v6301
      %v6352 = vadd.f32 %v3457, %v6304
      %v6353 = vadd.f32 %v3458, %v6309
      %v6354 = vadd.f32 %v3459, %v6312
      %v6355 = vadd.f32 %v3460, %v6317
      %v6356 = vadd.f32 %v3461, %v6320
      %v6357 = vadd.f32 %v3462, %v6325
      %v6358 = vadd.f32 %v3463, %v6328
      %v6359 = vadd.f32 %v3464, %v6333
      %v6360 = vadd.f32 %v3465, %v6336
      %v6361 = vadd.f32 %v3466, %v6341
      %v6362 = vadd.f32 %v3467, %v6344
      %s6363 = smul.u32 %s319, 7
      %s6364 = smul.addr %s6363, 4
      %s6365 = scalar_lea.vmem %s303, %s6364
      %v6366 = vld [vmem:[%s6365] sm:$0xf]
      %v6367 = vld [vmem:[%s6365 + $0x4] sm:$0xf]
      %v6368 = vld [vmem:[%s6365 + $0x1c] sm:$0xf]
      %v6369 = vld [vmem:[%s6365 + $0x20] sm:$0xf]
      %v6370 = vld [vmem:[%s6365 + $0x38] sm:$0xf]
      %v6371 = vld [vmem:[%s6365 + $0x3c] sm:$0xf]
      %v6372 = vld [vmem:[%s6365 + $0x54] sm:$0xf]
      %v6373 = vld [vmem:[%s6365 + $0x58] sm:$0xf]
      %v6374 = vld [vmem:[%s6365 + $0x70] sm:$0xf]
      %v6375 = vld [vmem:[%s6365 + $0x74] sm:$0xf]
      %v6376 = vld [vmem:[%s6365 + $0x8c] sm:$0xf]
      %v6377 = vld [vmem:[%s6365 + $0x90] sm:$0xf]
      %v6378 = vld [vmem:[%s6365 + $0xa8] sm:$0xf]
      %v6379 = vld [vmem:[%s6365 + $0xac] sm:$0xf]
      %v6380 = vld [vmem:[%s6365 + $0xc4] sm:$0xf]
      %v6381 = vld [vmem:[%s6365 + $0xc8] sm:$0xf]
      %s6382 = scalar_lea.vmem %s4, 1152
      %v6383 = vld [vmem:[%s6382] sm:$0xf]
      %v6384 = vld [vmem:[%s6382 + $0x4] sm:$0xf]
      %v6385 = vld [vmem:[%s6382 + $0x8] sm:$0xf]
      %v6386 = vld [vmem:[%s6382 + $0xc] sm:$0xf]
      %v6387 = vld [vmem:[%s6382 + $0x10] sm:$0xf]
      %v6388 = vld [vmem:[%s6382 + $0x14] sm:$0xf]
      %v6389 = vld [vmem:[%s6382 + $0x18] sm:$0xf]
      %v6390 = vld [vmem:[%s6382 + $0x1c] sm:$0xf]
      %v6391 = vld [vmem:[%s6382 + $0x20] sm:$0xf]
      %v6392 = vld [vmem:[%s6382 + $0x24] sm:$0xf]
      %v6393 = vld [vmem:[%s6382 + $0x28] sm:$0xf]
      %v6394 = vld [vmem:[%s6382 + $0x2c] sm:$0xf]
      %v6395 = vld [vmem:[%s6382 + $0x30] sm:$0xf]
      %v6396 = vld [vmem:[%s6382 + $0x34] sm:$0xf]
      %v6397 = vld [vmem:[%s6382 + $0x38] sm:$0xf]
      %v6398 = vld [vmem:[%s6382 + $0x3c] sm:$0xf]
      %v6399 = vld [vmem:[%s6365 + $0x8] sm:$0xe]
      %v6400 = vld [vmem:[%s6365 + $0xc] sm:$0xf]
      %v6401 = vld [vmem:[%s6365 + $0x10] sm:$0x1]
      %v6402 = vld [vmem:[%s6365 + $0x24] sm:$0xe]
      %v6403 = vld [vmem:[%s6365 + $0x28] sm:$0xf]
      %v6404 = vld [vmem:[%s6365 + $0x2c] sm:$0x1]
      %v6405 = vld [vmem:[%s6365 + $0x40] sm:$0xe]
      %v6406 = vld [vmem:[%s6365 + $0x44] sm:$0xf]
      %v6407 = vld [vmem:[%s6365 + $0x48] sm:$0x1]
      %v6408 = vld [vmem:[%s6365 + $0x5c] sm:$0xe]
      %v6409 = vld [vmem:[%s6365 + $0x60] sm:$0xf]
      %v6410 = vld [vmem:[%s6365 + $0x64] sm:$0x1]
      %v6411 = vld [vmem:[%s6365 + $0x78] sm:$0xe]
      %v6412 = vld [vmem:[%s6365 + $0x7c] sm:$0xf]
      %v6413 = vld [vmem:[%s6365 + $0x80] sm:$0x1]
      %v6414 = vld [vmem:[%s6365 + $0x94] sm:$0xe]
      %v6415 = vld [vmem:[%s6365 + $0x98] sm:$0xf]
      %v6416 = vld [vmem:[%s6365 + $0x9c] sm:$0x1]
      %v6417 = vld [vmem:[%s6365 + $0xb0] sm:$0xe]
      %v6418 = vld [vmem:[%s6365 + $0xb4] sm:$0xf]
      %v6419 = vld [vmem:[%s6365 + $0xb8] sm:$0x1]
      %v6420 = vld [vmem:[%s6365 + $0xcc] sm:$0xe]
      %v6421 = vld [vmem:[%s6365 + $0xd0] sm:$0xf]
      %v6422 = vld [vmem:[%s6365 + $0xd4] sm:$0x1]
      %v6447 = vrot.slane %v6399, 5
      %v6448 = vrot.slane %v6447, 4
      %v6449 = vrot.slane %v6400, 5
      %v6450 = vsel %vm374, %v6448, %v6449
      %v6451 = vrot.slane %v6449, 4
      %v6452 = vrot.slane %v6401, 5
      %v6453 = vsel %vm374, %v6451, %v6452
      %v6454 = vrot.slane %v6402, 5
      %v6455 = vrot.slane %v6454, 4
      %v6456 = vrot.slane %v6403, 5
      %v6457 = vsel %vm374, %v6455, %v6456
      %v6458 = vrot.slane %v6456, 4
      %v6459 = vrot.slane %v6404, 5
      %v6460 = vsel %vm374, %v6458, %v6459
      %v6461 = vrot.slane %v6405, 5
      %v6462 = vrot.slane %v6461, 4
      %v6463 = vrot.slane %v6406, 5
      %v6464 = vsel %vm374, %v6462, %v6463
      %v6465 = vrot.slane %v6463, 4
      %v6466 = vrot.slane %v6407, 5
      %v6467 = vsel %vm374, %v6465, %v6466
      %v6468 = vrot.slane %v6408, 5
      %v6469 = vrot.slane %v6468, 4
      %v6470 = vrot.slane %v6409, 5
      %v6471 = vsel %vm374, %v6469, %v6470
      %v6472 = vrot.slane %v6470, 4
      %v6473 = vrot.slane %v6410, 5
      %v6474 = vsel %vm374, %v6472, %v6473
      %v6475 = vrot.slane %v6411, 5
      %v6476 = vrot.slane %v6475, 4
      %v6477 = vrot.slane %v6412, 5
      %v6478 = vsel %vm374, %v6476, %v6477
      %v6479 = vrot.slane %v6477, 4
      %v6480 = vrot.slane %v6413, 5
      %v6481 = vsel %vm374, %v6479, %v6480
      %v6482 = vrot.slane %v6414, 5
      %v6483 = vrot.slane %v6482, 4
      %v6484 = vrot.slane %v6415, 5
      %v6485 = vsel %vm374, %v6483, %v6484
      %v6486 = vrot.slane %v6484, 4
      %v6487 = vrot.slane %v6416, 5
      %v6488 = vsel %vm374, %v6486, %v6487
      %v6489 = vrot.slane %v6417, 5
      %v6490 = vrot.slane %v6489, 4
      %v6491 = vrot.slane %v6418, 5
      %v6492 = vsel %vm374, %v6490, %v6491
      %v6493 = vrot.slane %v6491, 4
      %v6494 = vrot.slane %v6419, 5
      %v6495 = vsel %vm374, %v6493, %v6494
      %v6496 = vrot.slane %v6420, 5
      %v6497 = vrot.slane %v6496, 4
      %v6498 = vrot.slane %v6421, 5
      %v6499 = vsel %vm374, %v6497, %v6498
      %v6500 = vrot.slane %v6498, 4
      %v6501 = vrot.slane %v6422, 5
      %v6502 = vsel %vm374, %v6500, %v6501
      %s6503 = scalar_lea.vmem %s4, 1216
      %v6504 = vld [vmem:[%s6503] sm:$0xf]
      %v6505 = vld [vmem:[%s6503 + $0x4] sm:$0xf]
      %v6506 = vld [vmem:[%s6503 + $0x8] sm:$0xf]
      %v6507 = vld [vmem:[%s6503 + $0xc] sm:$0xf]
      %v6508 = vld [vmem:[%s6503 + $0x10] sm:$0xf]
      %v6509 = vld [vmem:[%s6503 + $0x14] sm:$0xf]
      %v6510 = vld [vmem:[%s6503 + $0x18] sm:$0xf]
      %v6511 = vld [vmem:[%s6503 + $0x1c] sm:$0xf]
      %v6512 = vld [vmem:[%s6503 + $0x20] sm:$0xf]
      %v6513 = vld [vmem:[%s6503 + $0x24] sm:$0xf]
      %v6514 = vld [vmem:[%s6503 + $0x28] sm:$0xf]
      %v6515 = vld [vmem:[%s6503 + $0x2c] sm:$0xf]
      %v6516 = vld [vmem:[%s6503 + $0x30] sm:$0xf]
      %v6517 = vld [vmem:[%s6503 + $0x34] sm:$0xf]
      %v6518 = vld [vmem:[%s6503 + $0x38] sm:$0xf]
      %v6519 = vld [vmem:[%s6503 + $0x3c] sm:$0xf]
      %v6520 = vunpack.c.l.b16 %v6450
      %v6521 = vunpack.c.l.b16 %v6453
      %v6522 = vunpack.c.l.b16 %v6457
      %v6523 = vunpack.c.l.b16 %v6460
      %v6524 = vunpack.c.l.b16 %v6464
      %v6525 = vunpack.c.l.b16 %v6467
      %v6526 = vunpack.c.l.b16 %v6471
      %v6527 = vunpack.c.l.b16 %v6474
      %v6528 = vunpack.c.l.b16 %v6478
      %v6529 = vunpack.c.l.b16 %v6481
      %v6530 = vunpack.c.l.b16 %v6485
      %v6531 = vunpack.c.l.b16 %v6488
      %v6532 = vunpack.c.l.b16 %v6492
      %v6533 = vunpack.c.l.b16 %v6495
      %v6534 = vunpack.c.l.b16 %v6499
      %v6535 = vunpack.c.l.b16 %v6502
      %v6536 = vpack.c.b16 %v6521, %v6520
      %v6537 = vpack.c.b16 %v6523, %v6522
      %v6538 = vpack.c.b16 %v6525, %v6524
      %v6539 = vpack.c.b16 %v6527, %v6526
      %v6540 = vpack.c.b16 %v6529, %v6528
      %v6541 = vpack.c.b16 %v6531, %v6530
      %v6542 = vpack.c.b16 %v6533, %v6532
      %v6543 = vpack.c.b16 %v6535, %v6534
      %v6568 = vunpack.c.l.b16 %v6504
      %v6569 = vunpack.c.l.b16 %v6505
      %v6570 = vunpack.c.l.b16 %v6506
      %v6571 = vunpack.c.l.b16 %v6507
      %v6572 = vunpack.c.l.b16 %v6508
      %v6573 = vunpack.c.l.b16 %v6509
      %v6574 = vunpack.c.l.b16 %v6510
      %v6575 = vunpack.c.l.b16 %v6511
      %v6576 = vunpack.c.l.b16 %v6512
      %v6577 = vunpack.c.l.b16 %v6513
      %v6578 = vunpack.c.l.b16 %v6514
      %v6579 = vunpack.c.l.b16 %v6515
      %v6580 = vunpack.c.l.b16 %v6516
      %v6581 = vunpack.c.l.b16 %v6517
      %v6582 = vunpack.c.l.b16 %v6518
      %v6583 = vunpack.c.l.b16 %v6519
      %v6584 = vpack.c.b16 %v6569, %v6568
      %v6585 = vpack.c.b16 %v6571, %v6570
      %v6586 = vpack.c.b16 %v6573, %v6572
      %v6587 = vpack.c.b16 %v6575, %v6574
      %v6588 = vpack.c.b16 %v6577, %v6576
      %v6589 = vpack.c.b16 %v6579, %v6578
      %v6590 = vpack.c.b16 %v6581, %v6580
      %v6591 = vpack.c.b16 %v6583, %v6582
      %6600 = vmatprep.subr.bf16.mxu0 0
      %6601 = vmatpush1.bf16.msra.mxu0 %v6584
      %6602 = vmatprep.subr.bf16.mxu0 0
      %6603 = vmatpush1.bf16.msra.mxu0 %v6585
      %6604 = vmatprep.subr.bf16.mxu0 0
      %6605 = vmatpush1.bf16.msra.mxu0 %v6586
      %6606 = vmatprep.subr.bf16.mxu0 0
      %6607 = vmatpush1.bf16.msra.mxu0 %v6587
      %6608 = vmatprep.subr.bf16.mxu0 0
      %6609 = vmatpush1.bf16.msra.mxu0 %v6588
      %6610 = vmatprep.subr.bf16.mxu0 0
      %6611 = vmatpush1.bf16.msra.mxu0 %v6589
      %6612 = vmatprep.subr.bf16.mxu0 0
      %6613 = vmatpush1.bf16.msra.mxu0 %v6590
      %6614 = vmatprep.subr.bf16.mxu0 0
      %6615 = vmatpush1.bf16.msra.mxu0 %v6591
      %6616 = vmatprep.subr.bf16.mxu0 0
      %6617 = vmatpush1.bf16.msra.mxu0 0
      %6618 = vmatprep.subr.bf16.mxu0 0
      %6619 = vmatpush1.bf16.msra.mxu0 0
      %6620 = vmatprep.subr.bf16.mxu0 0
      %6621 = vmatpush1.bf16.msra.mxu0 0
      %6622 = vmatprep.subr.bf16.mxu0 0
      %6623 = vmatpush1.bf16.msra.mxu0 0
      %6624 = vmatprep.subr.bf16.mxu0 0
      %6625 = vmatpush1.bf16.msra.mxu0 0
      %6626 = vmatprep.subr.bf16.mxu0 0
      %6627 = vmatpush1.bf16.msra.mxu0 0
      %6628 = vmatprep.subr.bf16.mxu0 0
      %6629 = vmatpush1.bf16.msra.mxu0 0
      %6630 = vmatprep.subr.bf16.mxu0 0
      %6631 = vmatpush1.bf16.msra.mxu0 0
      %6632 = vmatprep.mubr.bf16.mxu0 0
      %6633 = vmatmul.mubr.bf16.gmra.mrb[0].mxu0 %v6536
      %v6634 = vpop.f32.mrb[0].mxu0
      %v6635 = vadd.f32 0.0, %v6634
      %v6636 = vpop.f32.mrb[0].mxu0
      %v6637 = vpop.f32.mrb[0].mxu0
      %v6638 = vadd.f32 0.0, %v6637
      %v6639 = vpop.f32.mrb[0].mxu0
      %6640 = vmatprep.mubr.bf16.mxu0 0
      %6641 = vmatmul.mubr.bf16.gmra.mrb[0].mxu0 %v6537
      %v6642 = vpop.f32.mrb[0].mxu0
      %v6643 = vadd.f32 0.0, %v6642
      %v6644 = vpop.f32.mrb[0].mxu0
      %v6645 = vpop.f32.mrb[0].mxu0
      %v6646 = vadd.f32 0.0, %v6645
      %v6647 = vpop.f32.mrb[0].mxu0
      %6648 = vmatprep.mubr.bf16.mxu0 0
      %6649 = vmatmul.mubr.bf16.gmra.mrb[0].mxu0 %v6538
      %v6650 = vpop.f32.mrb[0].mxu0
      %v6651 = vadd.f32 0.0, %v6650
      %v6652 = vpop.f32.mrb[0].mxu0
      %v6653 = vpop.f32.mrb[0].mxu0
      %v6654 = vadd.f32 0.0, %v6653
      %v6655 = vpop.f32.mrb[0].mxu0
      %6656 = vmatprep.mubr.bf16.mxu0 0
      %6657 = vmatmul.mubr.bf16.gmra.mrb[0].mxu0 %v6539
      %v6658 = vpop.f32.mrb[0].mxu0
      %v6659 = vadd.f32 0.0, %v6658
      %v6660 = vpop.f32.mrb[0].mxu0
      %v6661 = vpop.f32.mrb[0].mxu0
      %v6662 = vadd.f32 0.0, %v6661
      %v6663 = vpop.f32.mrb[0].mxu0
      %6664 = vmatprep.mubr.bf16.mxu0 0
      %6665 = vmatmul.mubr.bf16.gmra.mrb[0].mxu0 %v6540
      %v6666 = vpop.f32.mrb[0].mxu0
      %v6667 = vadd.f32 0.0, %v6666
      %v6668 = vpop.f32.mrb[0].mxu0
      %v6669 = vpop.f32.mrb[0].mxu0
      %v6670 = vadd.f32 0.0, %v6669
      %v6671 = vpop.f32.mrb[0].mxu0
      %6672 = vmatprep.mubr.bf16.mxu0 0
      %6673 = vmatmul.mubr.bf16.gmra.mrb[0].mxu0 %v6541
      %v6674 = vpop.f32.mrb[0].mxu0
      %v6675 = vadd.f32 0.0, %v6674
      %v6676 = vpop.f32.mrb[0].mxu0
      %v6677 = vpop.f32.mrb[0].mxu0
      %v6678 = vadd.f32 0.0, %v6677
      %v6679 = vpop.f32.mrb[0].mxu0
      %6680 = vmatprep.mubr.bf16.mxu0 0
      %6681 = vmatmul.mubr.bf16.gmra.mrb[0].mxu0 %v6542
      %v6682 = vpop.f32.mrb[0].mxu0
      %v6683 = vadd.f32 0.0, %v6682
      %v6684 = vpop.f32.mrb[0].mxu0
      %v6685 = vpop.f32.mrb[0].mxu0
      %v6686 = vadd.f32 0.0, %v6685
      %v6687 = vpop.f32.mrb[0].mxu0
      %6688 = vmatprep.mubr.bf16.mxu0 0
      %6689 = vmatmul.mubr.bf16.gmra.mrb[0].mxu0 %v6543
      %v6690 = vpop.f32.mrb[0].mxu0
      %v6691 = vadd.f32 0.0, %v6690
      %v6692 = vpop.f32.mrb[0].mxu0
      %v6693 = vpop.f32.mrb[0].mxu0
      %v6694 = vadd.f32 0.0, %v6693
      %v6695 = vpop.f32.mrb[0].mxu0
      %6696 = vdwg.mxu0
      %v6713 = vunpack.c.l.b16 %v6366
      %v6714 = vunpack.c.l.b16 %v6367
      %v6715 = vunpack.c.l.b16 %v6368
      %v6716 = vunpack.c.l.b16 %v6369
      %v6717 = vunpack.c.l.b16 %v6370
      %v6718 = vunpack.c.l.b16 %v6371
      %v6719 = vunpack.c.l.b16 %v6372
      %v6720 = vunpack.c.l.b16 %v6373
      %v6721 = vunpack.c.l.b16 %v6374
      %v6722 = vunpack.c.l.b16 %v6375
      %v6723 = vunpack.c.l.b16 %v6376
      %v6724 = vunpack.c.l.b16 %v6377
      %v6725 = vunpack.c.l.b16 %v6378
      %v6726 = vunpack.c.l.b16 %v6379
      %v6727 = vunpack.c.l.b16 %v6380
      %v6728 = vunpack.c.l.b16 %v6381
      %v6729 = vpack.c.b16 %v6714, %v6713
      %v6730 = vpack.c.b16 %v6716, %v6715
      %v6731 = vpack.c.b16 %v6718, %v6717
      %v6732 = vpack.c.b16 %v6720, %v6719
      %v6733 = vpack.c.b16 %v6722, %v6721
      %v6734 = vpack.c.b16 %v6724, %v6723
      %v6735 = vpack.c.b16 %v6726, %v6725
      %v6736 = vpack.c.b16 %v6728, %v6727
      %v6761 = vunpack.c.l.b16 %v6383
      %v6762 = vunpack.c.l.b16 %v6384
      %v6763 = vunpack.c.l.b16 %v6385
      %v6764 = vunpack.c.l.b16 %v6386
      %v6765 = vunpack.c.l.b16 %v6387
      %v6766 = vunpack.c.l.b16 %v6388
      %v6767 = vunpack.c.l.b16 %v6389
      %v6768 = vunpack.c.l.b16 %v6390
      %v6769 = vunpack.c.l.b16 %v6391
      %v6770 = vunpack.c.l.b16 %v6392
      %v6771 = vunpack.c.l.b16 %v6393
      %v6772 = vunpack.c.l.b16 %v6394
      %v6773 = vunpack.c.l.b16 %v6395
      %v6774 = vunpack.c.l.b16 %v6396
      %v6775 = vunpack.c.l.b16 %v6397
      %v6776 = vunpack.c.l.b16 %v6398
      %v6777 = vpack.c.b16 %v6762, %v6761
      %v6778 = vpack.c.b16 %v6764, %v6763
      %v6779 = vpack.c.b16 %v6766, %v6765
      %v6780 = vpack.c.b16 %v6768, %v6767
      %v6781 = vpack.c.b16 %v6770, %v6769
      %v6782 = vpack.c.b16 %v6772, %v6771
      %v6783 = vpack.c.b16 %v6774, %v6773
      %v6784 = vpack.c.b16 %v6776, %v6775
      %6793 = vmatprep.subr.bf16.mxu0 0
      %6794 = vmatpush1.bf16.msra.mxu0 %v6777
      %6795 = vmatprep.subr.bf16.mxu0 0
      %6796 = vmatpush1.bf16.msra.mxu0 %v6778
      %6797 = vmatprep.subr.bf16.mxu0 0
      %6798 = vmatpush1.bf16.msra.mxu0 %v6779
      %6799 = vmatprep.subr.bf16.mxu0 0
      %6800 = vmatpush1.bf16.msra.mxu0 %v6780
      %6801 = vmatprep.subr.bf16.mxu0 0
      %6802 = vmatpush1.bf16.msra.mxu0 %v6781
      %6803 = vmatprep.subr.bf16.mxu0 0
      %6804 = vmatpush1.bf16.msra.mxu0 %v6782
      %6805 = vmatprep.subr.bf16.mxu0 0
      %6806 = vmatpush1.bf16.msra.mxu0 %v6783
      %6807 = vmatprep.subr.bf16.mxu0 0
      %6808 = vmatpush1.bf16.msra.mxu0 %v6784
      %6809 = vmatprep.subr.bf16.mxu0 0
      %6810 = vmatpush1.bf16.msra.mxu0 0
      %6811 = vmatprep.subr.bf16.mxu0 0
      %6812 = vmatpush1.bf16.msra.mxu0 0
      %6813 = vmatprep.subr.bf16.mxu0 0
      %6814 = vmatpush1.bf16.msra.mxu0 0
      %6815 = vmatprep.subr.bf16.mxu0 0
      %6816 = vmatpush1.bf16.msra.mxu0 0
      %6817 = vmatprep.subr.bf16.mxu0 0
      %6818 = vmatpush1.bf16.msra.mxu0 0
      %6819 = vmatprep.subr.bf16.mxu0 0
      %6820 = vmatpush1.bf16.msra.mxu0 0
      %6821 = vmatprep.subr.bf16.mxu0 0
      %6822 = vmatpush1.bf16.msra.mxu0 0
      %6823 = vmatprep.subr.bf16.mxu0 0
      %6824 = vmatpush1.bf16.msra.mxu0 0
      %6825 = vmatprep.mubr.bf16.mxu0 0
      %6826 = vmatmul.mubr.bf16.gmra.mrb[0].mxu0 %v6729
      %v6827 = vpop.f32.mrb[0].mxu0
      %v6828 = vadd.f32 %v6635, %v6827
      %v6829 = vpop.f32.mrb[0].mxu0
      %v6830 = vpop.f32.mrb[0].mxu0
      %v6831 = vadd.f32 %v6638, %v6830
      %v6832 = vpop.f32.mrb[0].mxu0
      %6833 = vmatprep.mubr.bf16.mxu0 0
      %6834 = vmatmul.mubr.bf16.gmra.mrb[0].mxu0 %v6730
      %v6835 = vpop.f32.mrb[0].mxu0
      %v6836 = vadd.f32 %v6643, %v6835
      %v6837 = vpop.f32.mrb[0].mxu0
      %v6838 = vpop.f32.mrb[0].mxu0
      %v6839 = vadd.f32 %v6646, %v6838
      %v6840 = vpop.f32.mrb[0].mxu0
      %6841 = vmatprep.mubr.bf16.mxu0 0
      %6842 = vmatmul.mubr.bf16.gmra.mrb[0].mxu0 %v6731
      %v6843 = vpop.f32.mrb[0].mxu0
      %v6844 = vadd.f32 %v6651, %v6843
      %v6845 = vpop.f32.mrb[0].mxu0
      %v6846 = vpop.f32.mrb[0].mxu0
      %v6847 = vadd.f32 %v6654, %v6846
      %v6848 = vpop.f32.mrb[0].mxu0
      %6849 = vmatprep.mubr.bf16.mxu0 0
      %6850 = vmatmul.mubr.bf16.gmra.mrb[0].mxu0 %v6732
      %v6851 = vpop.f32.mrb[0].mxu0
      %v6852 = vadd.f32 %v6659, %v6851
      %v6853 = vpop.f32.mrb[0].mxu0
      %v6854 = vpop.f32.mrb[0].mxu0
      %v6855 = vadd.f32 %v6662, %v6854
      %v6856 = vpop.f32.mrb[0].mxu0
      %6857 = vmatprep.mubr.bf16.mxu0 0
      %6858 = vmatmul.mubr.bf16.gmra.mrb[0].mxu0 %v6733
      %v6859 = vpop.f32.mrb[0].mxu0
      %v6860 = vadd.f32 %v6667, %v6859
      %v6861 = vpop.f32.mrb[0].mxu0
      %v6862 = vpop.f32.mrb[0].mxu0
      %v6863 = vadd.f32 %v6670, %v6862
      %v6864 = vpop.f32.mrb[0].mxu0
      %6865 = vmatprep.mubr.bf16.mxu0 0
      %6866 = vmatmul.mubr.bf16.gmra.mrb[0].mxu0 %v6734
      %v6867 = vpop.f32.mrb[0].mxu0
      %v6868 = vadd.f32 %v6675, %v6867
      %v6869 = vpop.f32.mrb[0].mxu0
      %v6870 = vpop.f32.mrb[0].mxu0
      %v6871 = vadd.f32 %v6678, %v6870
      %v6872 = vpop.f32.mrb[0].mxu0
      %6873 = vmatprep.mubr.bf16.mxu0 0
      %6874 = vmatmul.mubr.bf16.gmra.mrb[0].mxu0 %v6735
      %v6875 = vpop.f32.mrb[0].mxu0
      %v6876 = vadd.f32 %v6683, %v6875
      %v6877 = vpop.f32.mrb[0].mxu0
      %v6878 = vpop.f32.mrb[0].mxu0
      %v6879 = vadd.f32 %v6686, %v6878
      %v6880 = vpop.f32.mrb[0].mxu0
      %6881 = vmatprep.mubr.bf16.mxu0 0
      %6882 = vmatmul.mubr.bf16.gmra.mrb[0].mxu0 %v6736
      %v6883 = vpop.f32.mrb[0].mxu0
      %v6884 = vadd.f32 %v6691, %v6883
      %v6885 = vpop.f32.mrb[0].mxu0
      %v6886 = vpop.f32.mrb[0].mxu0
      %v6887 = vadd.f32 %v6694, %v6886
      %v6888 = vpop.f32.mrb[0].mxu0
      %6889 = vdwg.mxu0
      %v6890 = vld [vmem:[%s6365 + $0x10] sm:$0xc]
      %v6891 = vld [vmem:[%s6365 + $0x14] sm:$0xf]
      %v6892 = vld [vmem:[%s6365 + $0x18] sm:$0x3]
      %v6893 = vld [vmem:[%s6365 + $0x2c] sm:$0xc]
      %v6894 = vld [vmem:[%s6365 + $0x30] sm:$0xf]
      %v6895 = vld [vmem:[%s6365 + $0x34] sm:$0x3]
      %v6896 = vld [vmem:[%s6365 + $0x48] sm:$0xc]
      %v6897 = vld [vmem:[%s6365 + $0x4c] sm:$0xf]
      %v6898 = vld [vmem:[%s6365 + $0x50] sm:$0x3]
      %v6899 = vld [vmem:[%s6365 + $0x64] sm:$0xc]
      %v6900 = vld [vmem:[%s6365 + $0x68] sm:$0xf]
      %v6901 = vld [vmem:[%s6365 + $0x6c] sm:$0x3]
      %v6902 = vld [vmem:[%s6365 + $0x80] sm:$0xc]
      %v6903 = vld [vmem:[%s6365 + $0x84] sm:$0xf]
      %v6904 = vld [vmem:[%s6365 + $0x88] sm:$0x3]
      %v6905 = vld [vmem:[%s6365 + $0x9c] sm:$0xc]
      %v6906 = vld [vmem:[%s6365 + $0xa0] sm:$0xf]
      %v6907 = vld [vmem:[%s6365 + $0xa4] sm:$0x3]
      %v6908 = vld [vmem:[%s6365 + $0xb8] sm:$0xc]
      %v6909 = vld [vmem:[%s6365 + $0xbc] sm:$0xf]
      %v6910 = vld [vmem:[%s6365 + $0xc0] sm:$0x3]
      %v6911 = vld [vmem:[%s6365 + $0xd4] sm:$0xc]
      %v6912 = vld [vmem:[%s6365 + $0xd8] sm:$0xf]
      %v6913 = vld [vmem:[%s6365 + $0xdc] sm:$0x3]
      %v6938 = vrot.slane %v6890, 6
      %v6939 = vrot.slane %v6938, 4
      %v6940 = vrot.slane %v6891, 6
      %v6941 = vsel %vm893, %v6939, %v6940
      %v6942 = vrot.slane %v6940, 4
      %v6943 = vrot.slane %v6892, 6
      %v6944 = vsel %vm893, %v6942, %v6943
      %v6945 = vrot.slane %v6893, 6
      %v6946 = vrot.slane %v6945, 4
      %v6947 = vrot.slane %v6894, 6
      %v6948 = vsel %vm893, %v6946, %v6947
      %v6949 = vrot.slane %v6947, 4
      %v6950 = vrot.slane %v6895, 6
      %v6951 = vsel %vm893, %v6949, %v6950
      %v6952 = vrot.slane %v6896, 6
      %v6953 = vrot.slane %v6952, 4
      %v6954 = vrot.slane %v6897, 6
      %v6955 = vsel %vm893, %v6953, %v6954
      %v6956 = vrot.slane %v6954, 4
      %v6957 = vrot.slane %v6898, 6
      %v6958 = vsel %vm893, %v6956, %v6957
      %v6959 = vrot.slane %v6899, 6
      %v6960 = vrot.slane %v6959, 4
      %v6961 = vrot.slane %v6900, 6
      %v6962 = vsel %vm893, %v6960, %v6961
      %v6963 = vrot.slane %v6961, 4
      %v6964 = vrot.slane %v6901, 6
      %v6965 = vsel %vm893, %v6963, %v6964
      %v6966 = vrot.slane %v6902, 6
      %v6967 = vrot.slane %v6966, 4
      %v6968 = vrot.slane %v6903, 6
      %v6969 = vsel %vm893, %v6967, %v6968
      %v6970 = vrot.slane %v6968, 4
      %v6971 = vrot.slane %v6904, 6
      %v6972 = vsel %vm893, %v6970, %v6971
      %v6973 = vrot.slane %v6905, 6
      %v6974 = vrot.slane %v6973, 4
      %v6975 = vrot.slane %v6906, 6
      %v6976 = vsel %vm893, %v6974, %v6975
      %v6977 = vrot.slane %v6975, 4
      %v6978 = vrot.slane %v6907, 6
      %v6979 = vsel %vm893, %v6977, %v6978
      %v6980 = vrot.slane %v6908, 6
      %v6981 = vrot.slane %v6980, 4
      %v6982 = vrot.slane %v6909, 6
      %v6983 = vsel %vm893, %v6981, %v6982
      %v6984 = vrot.slane %v6982, 4
      %v6985 = vrot.slane %v6910, 6
      %v6986 = vsel %vm893, %v6984, %v6985
      %v6987 = vrot.slane %v6911, 6
      %v6988 = vrot.slane %v6987, 4
      %v6989 = vrot.slane %v6912, 6
      %v6990 = vsel %vm893, %v6988, %v6989
      %v6991 = vrot.slane %v6989, 4
      %v6992 = vrot.slane %v6913, 6
      %v6993 = vsel %vm893, %v6991, %v6992
      %s6994 = scalar_lea.vmem %s4, 1280
      %v6995 = vld [vmem:[%s6994] sm:$0xf]
      %v6996 = vld [vmem:[%s6994 + $0x4] sm:$0xf]
      %v6997 = vld [vmem:[%s6994 + $0x8] sm:$0xf]
      %v6998 = vld [vmem:[%s6994 + $0xc] sm:$0xf]
      %v6999 = vld [vmem:[%s6994 + $0x10] sm:$0xf]
      %v7000 = vld [vmem:[%s6994 + $0x14] sm:$0xf]
      %v7001 = vld [vmem:[%s6994 + $0x18] sm:$0xf]
      %v7002 = vld [vmem:[%s6994 + $0x1c] sm:$0xf]
      %v7003 = vld [vmem:[%s6994 + $0x20] sm:$0xf]
      %v7004 = vld [vmem:[%s6994 + $0x24] sm:$0xf]
      %v7005 = vld [vmem:[%s6994 + $0x28] sm:$0xf]
      %v7006 = vld [vmem:[%s6994 + $0x2c] sm:$0xf]
      %v7007 = vld [vmem:[%s6994 + $0x30] sm:$0xf]
      %v7008 = vld [vmem:[%s6994 + $0x34] sm:$0xf]
      %v7009 = vld [vmem:[%s6994 + $0x38] sm:$0xf]
      %v7010 = vld [vmem:[%s6994 + $0x3c] sm:$0xf]
      %v7011 = vunpack.c.l.b16 %v6941
      %v7012 = vunpack.c.l.b16 %v6944
      %v7013 = vunpack.c.l.b16 %v6948
      %v7014 = vunpack.c.l.b16 %v6951
      %v7015 = vunpack.c.l.b16 %v6955
      %v7016 = vunpack.c.l.b16 %v6958
      %v7017 = vunpack.c.l.b16 %v6962
      %v7018 = vunpack.c.l.b16 %v6965
      %v7019 = vunpack.c.l.b16 %v6969
      %v7020 = vunpack.c.l.b16 %v6972
      %v7021 = vunpack.c.l.b16 %v6976
      %v7022 = vunpack.c.l.b16 %v6979
      %v7023 = vunpack.c.l.b16 %v6983
      %v7024 = vunpack.c.l.b16 %v6986
      %v7025 = vunpack.c.l.b16 %v6990
      %v7026 = vunpack.c.l.b16 %v6993
      %v7027 = vpack.c.b16 %v7012, %v7011
      %v7028 = vpack.c.b16 %v7014, %v7013
      %v7029 = vpack.c.b16 %v7016, %v7015
      %v7030 = vpack.c.b16 %v7018, %v7017
      %v7031 = vpack.c.b16 %v7020, %v7019
      %v7032 = vpack.c.b16 %v7022, %v7021
      %v7033 = vpack.c.b16 %v7024, %v7023
      %v7034 = vpack.c.b16 %v7026, %v7025
      %v7059 = vunpack.c.l.b16 %v6995
      %v7060 = vunpack.c.l.b16 %v6996
      %v7061 = vunpack.c.l.b16 %v6997
      %v7062 = vunpack.c.l.b16 %v6998
      %v7063 = vunpack.c.l.b16 %v6999
      %v7064 = vunpack.c.l.b16 %v7000
      %v7065 = vunpack.c.l.b16 %v7001
      %v7066 = vunpack.c.l.b16 %v7002
      %v7067 = vunpack.c.l.b16 %v7003
      %v7068 = vunpack.c.l.b16 %v7004
      %v7069 = vunpack.c.l.b16 %v7005
      %v7070 = vunpack.c.l.b16 %v7006
      %v7071 = vunpack.c.l.b16 %v7007
      %v7072 = vunpack.c.l.b16 %v7008
      %v7073 = vunpack.c.l.b16 %v7009
      %v7074 = vunpack.c.l.b16 %v7010
      %v7075 = vpack.c.b16 %v7060, %v7059
      %v7076 = vpack.c.b16 %v7062, %v7061
      %v7077 = vpack.c.b16 %v7064, %v7063
      %v7078 = vpack.c.b16 %v7066, %v7065
      %v7079 = vpack.c.b16 %v7068, %v7067
      %v7080 = vpack.c.b16 %v7070, %v7069
      %v7081 = vpack.c.b16 %v7072, %v7071
      %v7082 = vpack.c.b16 %v7074, %v7073
      %7091 = vmatprep.subr.bf16.mxu0 0
      %7092 = vmatpush1.bf16.msra.mxu0 %v7075
      %7093 = vmatprep.subr.bf16.mxu0 0
      %7094 = vmatpush1.bf16.msra.mxu0 %v7076
      %7095 = vmatprep.subr.bf16.mxu0 0
      %7096 = vmatpush1.bf16.msra.mxu0 %v7077
      %7097 = vmatprep.subr.bf16.mxu0 0
      %7098 = vmatpush1.bf16.msra.mxu0 %v7078
      %7099 = vmatprep.subr.bf16.mxu0 0
      %7100 = vmatpush1.bf16.msra.mxu0 %v7079
      %7101 = vmatprep.subr.bf16.mxu0 0
      %7102 = vmatpush1.bf16.msra.mxu0 %v7080
      %7103 = vmatprep.subr.bf16.mxu0 0
      %7104 = vmatpush1.bf16.msra.mxu0 %v7081
      %7105 = vmatprep.subr.bf16.mxu0 0
      %7106 = vmatpush1.bf16.msra.mxu0 %v7082
      %7107 = vmatprep.subr.bf16.mxu0 0
      %7108 = vmatpush1.bf16.msra.mxu0 0
      %7109 = vmatprep.subr.bf16.mxu0 0
      %7110 = vmatpush1.bf16.msra.mxu0 0
      %7111 = vmatprep.subr.bf16.mxu0 0
      %7112 = vmatpush1.bf16.msra.mxu0 0
      %7113 = vmatprep.subr.bf16.mxu0 0
      %7114 = vmatpush1.bf16.msra.mxu0 0
      %7115 = vmatprep.subr.bf16.mxu0 0
      %7116 = vmatpush1.bf16.msra.mxu0 0
      %7117 = vmatprep.subr.bf16.mxu0 0
      %7118 = vmatpush1.bf16.msra.mxu0 0
      %7119 = vmatprep.subr.bf16.mxu0 0
      %7120 = vmatpush1.bf16.msra.mxu0 0
      %7121 = vmatprep.subr.bf16.mxu0 0
      %7122 = vmatpush1.bf16.msra.mxu0 0
      %7123 = vmatprep.mubr.bf16.mxu0 0
      %7124 = vmatmul.mubr.bf16.gmra.mrb[0].mxu0 %v7027
      %v7125 = vpop.f32.mrb[0].mxu0
      %v7126 = vadd.f32 0.0, %v7125
      %v7127 = vpop.f32.mrb[0].mxu0
      %v7128 = vpop.f32.mrb[0].mxu0
      %v7129 = vadd.f32 0.0, %v7128
      %v7130 = vpop.f32.mrb[0].mxu0
      %7131 = vmatprep.mubr.bf16.mxu0 0
      %7132 = vmatmul.mubr.bf16.gmra.mrb[0].mxu0 %v7028
      %v7133 = vpop.f32.mrb[0].mxu0
      %v7134 = vadd.f32 0.0, %v7133
      %v7135 = vpop.f32.mrb[0].mxu0
      %v7136 = vpop.f32.mrb[0].mxu0
      %v7137 = vadd.f32 0.0, %v7136
      %v7138 = vpop.f32.mrb[0].mxu0
      %7139 = vmatprep.mubr.bf16.mxu0 0
      %7140 = vmatmul.mubr.bf16.gmra.mrb[0].mxu0 %v7029
      %v7141 = vpop.f32.mrb[0].mxu0
      %v7142 = vadd.f32 0.0, %v7141
      %v7143 = vpop.f32.mrb[0].mxu0
      %v7144 = vpop.f32.mrb[0].mxu0
      %v7145 = vadd.f32 0.0, %v7144
      %v7146 = vpop.f32.mrb[0].mxu0
      %7147 = vmatprep.mubr.bf16.mxu0 0
      %7148 = vmatmul.mubr.bf16.gmra.mrb[0].mxu0 %v7030
      %v7149 = vpop.f32.mrb[0].mxu0
      %v7150 = vadd.f32 0.0, %v7149
      %v7151 = vpop.f32.mrb[0].mxu0
      %v7152 = vpop.f32.mrb[0].mxu0
      %v7153 = vadd.f32 0.0, %v7152
      %v7154 = vpop.f32.mrb[0].mxu0
      %7155 = vmatprep.mubr.bf16.mxu0 0
      %7156 = vmatmul.mubr.bf16.gmra.mrb[0].mxu0 %v7031
      %v7157 = vpop.f32.mrb[0].mxu0
      %v7158 = vadd.f32 0.0, %v7157
      %v7159 = vpop.f32.mrb[0].mxu0
      %v7160 = vpop.f32.mrb[0].mxu0
      %v7161 = vadd.f32 0.0, %v7160
      %v7162 = vpop.f32.mrb[0].mxu0
      %7163 = vmatprep.mubr.bf16.mxu0 0
      %7164 = vmatmul.mubr.bf16.gmra.mrb[0].mxu0 %v7032
      %v7165 = vpop.f32.mrb[0].mxu0
      %v7166 = vadd.f32 0.0, %v7165
      %v7167 = vpop.f32.mrb[0].mxu0
      %v7168 = vpop.f32.mrb[0].mxu0
      %v7169 = vadd.f32 0.0, %v7168
      %v7170 = vpop.f32.mrb[0].mxu0
      %7171 = vmatprep.mubr.bf16.mxu0 0
      %7172 = vmatmul.mubr.bf16.gmra.mrb[0].mxu0 %v7033
      %v7173 = vpop.f32.mrb[0].mxu0
      %v7174 = vadd.f32 0.0, %v7173
      %v7175 = vpop.f32.mrb[0].mxu0
      %v7176 = vpop.f32.mrb[0].mxu0
      %v7177 = vadd.f32 0.0, %v7176
      %v7178 = vpop.f32.mrb[0].mxu0
      %7179 = vmatprep.mubr.bf16.mxu0 0
      %7180 = vmatmul.mubr.bf16.gmra.mrb[0].mxu0 %v7034
      %v7181 = vpop.f32.mrb[0].mxu0
      %v7182 = vadd.f32 0.0, %v7181
      %v7183 = vpop.f32.mrb[0].mxu0
      %v7184 = vpop.f32.mrb[0].mxu0
      %v7185 = vadd.f32 0.0, %v7184
      %v7186 = vpop.f32.mrb[0].mxu0
      %7187 = vdwg.mxu0
      %v7188 = vadd.f32 %v6828, %v7126
      %v7189 = vadd.f32 %v6831, %v7129
      %v7190 = vadd.f32 %v6836, %v7134
      %v7191 = vadd.f32 %v6839, %v7137
      %v7192 = vadd.f32 %v6844, %v7142
      %v7193 = vadd.f32 %v6847, %v7145
      %v7194 = vadd.f32 %v6852, %v7150
      %v7195 = vadd.f32 %v6855, %v7153
      %v7196 = vadd.f32 %v6860, %v7158
      %v7197 = vadd.f32 %v6863, %v7161
      %v7198 = vadd.f32 %v6868, %v7166
      %v7199 = vadd.f32 %v6871, %v7169
      %v7200 = vadd.f32 %v6876, %v7174
      %v7201 = vadd.f32 %v6879, %v7177
      %v7202 = vadd.f32 %v6884, %v7182
      %v7203 = vadd.f32 %v6887, %v7185
      %v7204 = vld [vmem:[%s323] sm:$0xf]
      %v7205 = vld [vmem:[%s323 + $0x4] sm:$0xf]
      %v7206 = vld [vmem:[%s323 + $0x1c] sm:$0xf]
      %v7207 = vld [vmem:[%s323 + $0x20] sm:$0xf]
      %v7208 = vld [vmem:[%s323 + $0x38] sm:$0xf]
      %v7209 = vld [vmem:[%s323 + $0x3c] sm:$0xf]
      %v7210 = vld [vmem:[%s323 + $0x54] sm:$0xf]
      %v7211 = vld [vmem:[%s323 + $0x58] sm:$0xf]
      %v7212 = vld [vmem:[%s323 + $0x70] sm:$0xf]
      %v7213 = vld [vmem:[%s323 + $0x74] sm:$0xf]
      %v7214 = vld [vmem:[%s323 + $0x8c] sm:$0xf]
      %v7215 = vld [vmem:[%s323 + $0x90] sm:$0xf]
      %v7216 = vld [vmem:[%s323 + $0xa8] sm:$0xf]
      %v7217 = vld [vmem:[%s323 + $0xac] sm:$0xf]
      %v7218 = vld [vmem:[%s323 + $0xc4] sm:$0xf]
      %v7219 = vld [vmem:[%s323 + $0xc8] sm:$0xf]
      %s7220 = scalar_lea.vmem %s4, 1344
      %v7221 = vld [vmem:[%s7220] sm:$0xf]
      %v7222 = vld [vmem:[%s7220 + $0x4] sm:$0xf]
      %v7223 = vld [vmem:[%s7220 + $0x8] sm:$0xf]
      %v7224 = vld [vmem:[%s7220 + $0xc] sm:$0xf]
      %v7225 = vld [vmem:[%s7220 + $0x10] sm:$0xf]
      %v7226 = vld [vmem:[%s7220 + $0x14] sm:$0xf]
      %v7227 = vld [vmem:[%s7220 + $0x18] sm:$0xf]
      %v7228 = vld [vmem:[%s7220 + $0x1c] sm:$0xf]
      %v7229 = vld [vmem:[%s7220 + $0x20] sm:$0xf]
      %v7230 = vld [vmem:[%s7220 + $0x24] sm:$0xf]
      %v7231 = vld [vmem:[%s7220 + $0x28] sm:$0xf]
      %v7232 = vld [vmem:[%s7220 + $0x2c] sm:$0xf]
      %v7233 = vld [vmem:[%s7220 + $0x30] sm:$0xf]
      %v7234 = vld [vmem:[%s7220 + $0x34] sm:$0xf]
      %v7235 = vld [vmem:[%s7220 + $0x38] sm:$0xf]
      %v7236 = vld [vmem:[%s7220 + $0x3c] sm:$0xf]
      %v7253 = vunpack.c.l.b16 %v7204
      %v7254 = vunpack.c.l.b16 %v7205
      %v7255 = vunpack.c.l.b16 %v7206
      %v7256 = vunpack.c.l.b16 %v7207
      %v7257 = vunpack.c.l.b16 %v7208
      %v7258 = vunpack.c.l.b16 %v7209
      %v7259 = vunpack.c.l.b16 %v7210
      %v7260 = vunpack.c.l.b16 %v7211
      %v7261 = vunpack.c.l.b16 %v7212
      %v7262 = vunpack.c.l.b16 %v7213
      %v7263 = vunpack.c.l.b16 %v7214
      %v7264 = vunpack.c.l.b16 %v7215
      %v7265 = vunpack.c.l.b16 %v7216
      %v7266 = vunpack.c.l.b16 %v7217
      %v7267 = vunpack.c.l.b16 %v7218
      %v7268 = vunpack.c.l.b16 %v7219
      %v7269 = vpack.c.b16 %v7254, %v7253
      %v7270 = vpack.c.b16 %v7256, %v7255
      %v7271 = vpack.c.b16 %v7258, %v7257
      %v7272 = vpack.c.b16 %v7260, %v7259
      %v7273 = vpack.c.b16 %v7262, %v7261
      %v7274 = vpack.c.b16 %v7264, %v7263
      %v7275 = vpack.c.b16 %v7266, %v7265
      %v7276 = vpack.c.b16 %v7268, %v7267
      %v7301 = vunpack.c.l.b16 %v7221
      %v7302 = vunpack.c.l.b16 %v7222
      %v7303 = vunpack.c.l.b16 %v7223
      %v7304 = vunpack.c.l.b16 %v7224
      %v7305 = vunpack.c.l.b16 %v7225
      %v7306 = vunpack.c.l.b16 %v7226
      %v7307 = vunpack.c.l.b16 %v7227
      %v7308 = vunpack.c.l.b16 %v7228
      %v7309 = vunpack.c.l.b16 %v7229
      %v7310 = vunpack.c.l.b16 %v7230
      %v7311 = vunpack.c.l.b16 %v7231
      %v7312 = vunpack.c.l.b16 %v7232
      %v7313 = vunpack.c.l.b16 %v7233
      %v7314 = vunpack.c.l.b16 %v7234
      %v7315 = vunpack.c.l.b16 %v7235
      %v7316 = vunpack.c.l.b16 %v7236
      %v7317 = vpack.c.b16 %v7302, %v7301
      %v7318 = vpack.c.b16 %v7304, %v7303
      %v7319 = vpack.c.b16 %v7306, %v7305
      %v7320 = vpack.c.b16 %v7308, %v7307
      %v7321 = vpack.c.b16 %v7310, %v7309
      %v7322 = vpack.c.b16 %v7312, %v7311
      %v7323 = vpack.c.b16 %v7314, %v7313
      %v7324 = vpack.c.b16 %v7316, %v7315
      %7333 = vmatprep.subr.bf16.mxu0 0
      %7334 = vmatpush1.bf16.msra.mxu0 %v7317
      %7335 = vmatprep.subr.bf16.mxu0 0
      %7336 = vmatpush1.bf16.msra.mxu0 %v7318
      %7337 = vmatprep.subr.bf16.mxu0 0
      %7338 = vmatpush1.bf16.msra.mxu0 %v7319
      %7339 = vmatprep.subr.bf16.mxu0 0
      %7340 = vmatpush1.bf16.msra.mxu0 %v7320
      %7341 = vmatprep.subr.bf16.mxu0 0
      %7342 = vmatpush1.bf16.msra.mxu0 %v7321
      %7343 = vmatprep.subr.bf16.mxu0 0
      %7344 = vmatpush1.bf16.msra.mxu0 %v7322
      %7345 = vmatprep.subr.bf16.mxu0 0
      %7346 = vmatpush1.bf16.msra.mxu0 %v7323
      %7347 = vmatprep.subr.bf16.mxu0 0
      %7348 = vmatpush1.bf16.msra.mxu0 %v7324
      %7349 = vmatprep.subr.bf16.mxu0 0
      %7350 = vmatpush1.bf16.msra.mxu0 0
      %7351 = vmatprep.subr.bf16.mxu0 0
      %7352 = vmatpush1.bf16.msra.mxu0 0
      %7353 = vmatprep.subr.bf16.mxu0 0
      %7354 = vmatpush1.bf16.msra.mxu0 0
      %7355 = vmatprep.subr.bf16.mxu0 0
      %7356 = vmatpush1.bf16.msra.mxu0 0
      %7357 = vmatprep.subr.bf16.mxu0 0
      %7358 = vmatpush1.bf16.msra.mxu0 0
      %7359 = vmatprep.subr.bf16.mxu0 0
      %7360 = vmatpush1.bf16.msra.mxu0 0
      %7361 = vmatprep.subr.bf16.mxu0 0
      %7362 = vmatpush1.bf16.msra.mxu0 0
      %7363 = vmatprep.subr.bf16.mxu0 0
      %7364 = vmatpush1.bf16.msra.mxu0 0
      %7365 = vmatprep.mubr.bf16.mxu0 0
      %7366 = vmatmul.mubr.bf16.gmra.mrb[0].mxu0 %v7269
      %v7367 = vpop.f32.mrb[0].mxu0
      %v7368 = vadd.f32 0.0, %v7367
      %v7369 = vpop.f32.mrb[0].mxu0
      %v7370 = vpop.f32.mrb[0].mxu0
      %v7371 = vadd.f32 0.0, %v7370
      %v7372 = vpop.f32.mrb[0].mxu0
      %7373 = vmatprep.mubr.bf16.mxu0 0
      %7374 = vmatmul.mubr.bf16.gmra.mrb[0].mxu0 %v7270
      %v7375 = vpop.f32.mrb[0].mxu0
      %v7376 = vadd.f32 0.0, %v7375
      %v7377 = vpop.f32.mrb[0].mxu0
      %v7378 = vpop.f32.mrb[0].mxu0
      %v7379 = vadd.f32 0.0, %v7378
      %v7380 = vpop.f32.mrb[0].mxu0
      %7381 = vmatprep.mubr.bf16.mxu0 0
      %7382 = vmatmul.mubr.bf16.gmra.mrb[0].mxu0 %v7271
      %v7383 = vpop.f32.mrb[0].mxu0
      %v7384 = vadd.f32 0.0, %v7383
      %v7385 = vpop.f32.mrb[0].mxu0
      %v7386 = vpop.f32.mrb[0].mxu0
      %v7387 = vadd.f32 0.0, %v7386
      %v7388 = vpop.f32.mrb[0].mxu0
      %7389 = vmatprep.mubr.bf16.mxu0 0
      %7390 = vmatmul.mubr.bf16.gmra.mrb[0].mxu0 %v7272
      %v7391 = vpop.f32.mrb[0].mxu0
      %v7392 = vadd.f32 0.0, %v7391
      %v7393 = vpop.f32.mrb[0].mxu0
      %v7394 = vpop.f32.mrb[0].mxu0
      %v7395 = vadd.f32 0.0, %v7394
      %v7396 = vpop.f32.mrb[0].mxu0
      %7397 = vmatprep.mubr.bf16.mxu0 0
      %7398 = vmatmul.mubr.bf16.gmra.mrb[0].mxu0 %v7273
      %v7399 = vpop.f32.mrb[0].mxu0
      %v7400 = vadd.f32 0.0, %v7399
      %v7401 = vpop.f32.mrb[0].mxu0
      %v7402 = vpop.f32.mrb[0].mxu0
      %v7403 = vadd.f32 0.0, %v7402
      %v7404 = vpop.f32.mrb[0].mxu0
      %7405 = vmatprep.mubr.bf16.mxu0 0
      %7406 = vmatmul.mubr.bf16.gmra.mrb[0].mxu0 %v7274
      %v7407 = vpop.f32.mrb[0].mxu0
      %v7408 = vadd.f32 0.0, %v7407
      %v7409 = vpop.f32.mrb[0].mxu0
      %v7410 = vpop.f32.mrb[0].mxu0
      %v7411 = vadd.f32 0.0, %v7410
      %v7412 = vpop.f32.mrb[0].mxu0
      %7413 = vmatprep.mubr.bf16.mxu0 0
      %7414 = vmatmul.mubr.bf16.gmra.mrb[0].mxu0 %v7275
      %v7415 = vpop.f32.mrb[0].mxu0
      %v7416 = vadd.f32 0.0, %v7415
      %v7417 = vpop.f32.mrb[0].mxu0
      %v7418 = vpop.f32.mrb[0].mxu0
      %v7419 = vadd.f32 0.0, %v7418
      %v7420 = vpop.f32.mrb[0].mxu0
      %7421 = vmatprep.mubr.bf16.mxu0 0
      %7422 = vmatmul.mubr.bf16.gmra.mrb[0].mxu0 %v7276
      %v7423 = vpop.f32.mrb[0].mxu0
      %v7424 = vadd.f32 0.0, %v7423
      %v7425 = vpop.f32.mrb[0].mxu0
      %v7426 = vpop.f32.mrb[0].mxu0
      %v7427 = vadd.f32 0.0, %v7426
      %v7428 = vpop.f32.mrb[0].mxu0
      %7429 = vdwg.mxu0
      %v7430 = vadd.f32 %v7188, %v7368
      %v7431 = vadd.f32 %v7189, %v7371
      %v7432 = vadd.f32 %v7190, %v7376
      %v7433 = vadd.f32 %v7191, %v7379
      %v7434 = vadd.f32 %v7192, %v7384
      %v7435 = vadd.f32 %v7193, %v7387
      %v7436 = vadd.f32 %v7194, %v7392
      %v7437 = vadd.f32 %v7195, %v7395
      %v7438 = vadd.f32 %v7196, %v7400
      %v7439 = vadd.f32 %v7197, %v7403
      %v7440 = vadd.f32 %v7198, %v7408
      %v7441 = vadd.f32 %v7199, %v7411
      %v7442 = vadd.f32 %v7200, %v7416
      %v7443 = vadd.f32 %v7201, %v7419
      %v7444 = vadd.f32 %v7202, %v7424
      %v7445 = vadd.f32 %v7203, %v7427
      %s7446 = scalar_lea.vmem %s4, 1408
      %v7447 = vld [vmem:[%s7446] sm:$0xf]
      %v7448 = vld [vmem:[%s7446 + $0x4] sm:$0xf]
      %v7449 = vld [vmem:[%s7446 + $0x8] sm:$0xf]
      %v7450 = vld [vmem:[%s7446 + $0xc] sm:$0xf]
      %v7451 = vld [vmem:[%s7446 + $0x10] sm:$0xf]
      %v7452 = vld [vmem:[%s7446 + $0x14] sm:$0xf]
      %v7453 = vld [vmem:[%s7446 + $0x18] sm:$0xf]
      %v7454 = vld [vmem:[%s7446 + $0x1c] sm:$0xf]
      %v7455 = vld [vmem:[%s7446 + $0x20] sm:$0xf]
      %v7456 = vld [vmem:[%s7446 + $0x24] sm:$0xf]
      %v7457 = vld [vmem:[%s7446 + $0x28] sm:$0xf]
      %v7458 = vld [vmem:[%s7446 + $0x2c] sm:$0xf]
      %v7459 = vld [vmem:[%s7446 + $0x30] sm:$0xf]
      %v7460 = vld [vmem:[%s7446 + $0x34] sm:$0xf]
      %v7461 = vld [vmem:[%s7446 + $0x38] sm:$0xf]
      %v7462 = vld [vmem:[%s7446 + $0x3c] sm:$0xf]
      %v7479 = vunpack.c.l.b16 %v7447
      %v7480 = vunpack.c.l.b16 %v7448
      %v7481 = vunpack.c.l.b16 %v7449
      %v7482 = vunpack.c.l.b16 %v7450
      %v7483 = vunpack.c.l.b16 %v7451
      %v7484 = vunpack.c.l.b16 %v7452
      %v7485 = vunpack.c.l.b16 %v7453
      %v7486 = vunpack.c.l.b16 %v7454
      %v7487 = vunpack.c.l.b16 %v7455
      %v7488 = vunpack.c.l.b16 %v7456
      %v7489 = vunpack.c.l.b16 %v7457
      %v7490 = vunpack.c.l.b16 %v7458
      %v7491 = vunpack.c.l.b16 %v7459
      %v7492 = vunpack.c.l.b16 %v7460
      %v7493 = vunpack.c.l.b16 %v7461
      %v7494 = vunpack.c.l.b16 %v7462
      %v7495 = vpack.c.b16 %v7480, %v7479
      %v7496 = vpack.c.b16 %v7482, %v7481
      %v7497 = vpack.c.b16 %v7484, %v7483
      %v7498 = vpack.c.b16 %v7486, %v7485
      %v7499 = vpack.c.b16 %v7488, %v7487
      %v7500 = vpack.c.b16 %v7490, %v7489
      %v7501 = vpack.c.b16 %v7492, %v7491
      %v7502 = vpack.c.b16 %v7494, %v7493
      %7511 = vmatprep.subr.bf16.mxu0 0
      %7512 = vmatpush1.bf16.msra.mxu0 %v7495
      %7513 = vmatprep.subr.bf16.mxu0 0
      %7514 = vmatpush1.bf16.msra.mxu0 %v7496
      %7515 = vmatprep.subr.bf16.mxu0 0
      %7516 = vmatpush1.bf16.msra.mxu0 %v7497
      %7517 = vmatprep.subr.bf16.mxu0 0
      %7518 = vmatpush1.bf16.msra.mxu0 %v7498
      %7519 = vmatprep.subr.bf16.mxu0 0
      %7520 = vmatpush1.bf16.msra.mxu0 %v7499
      %7521 = vmatprep.subr.bf16.mxu0 0
      %7522 = vmatpush1.bf16.msra.mxu0 %v7500
      %7523 = vmatprep.subr.bf16.mxu0 0
      %7524 = vmatpush1.bf16.msra.mxu0 %v7501
      %7525 = vmatprep.subr.bf16.mxu0 0
      %7526 = vmatpush1.bf16.msra.mxu0 %v7502
      %7527 = vmatprep.subr.bf16.mxu0 0
      %7528 = vmatpush1.bf16.msra.mxu0 0
      %7529 = vmatprep.subr.bf16.mxu0 0
      %7530 = vmatpush1.bf16.msra.mxu0 0
      %7531 = vmatprep.subr.bf16.mxu0 0
      %7532 = vmatpush1.bf16.msra.mxu0 0
      %7533 = vmatprep.subr.bf16.mxu0 0
      %7534 = vmatpush1.bf16.msra.mxu0 0
      %7535 = vmatprep.subr.bf16.mxu0 0
      %7536 = vmatpush1.bf16.msra.mxu0 0
      %7537 = vmatprep.subr.bf16.mxu0 0
      %7538 = vmatpush1.bf16.msra.mxu0 0
      %7539 = vmatprep.subr.bf16.mxu0 0
      %7540 = vmatpush1.bf16.msra.mxu0 0
      %7541 = vmatprep.subr.bf16.mxu0 0
      %7542 = vmatpush1.bf16.msra.mxu0 0
      %7543 = vmatprep.mubr.bf16.mxu0 0
      %7544 = vmatmul.mubr.bf16.gmra.mrb[0].mxu0 %v470
      %v7545 = vpop.f32.mrb[0].mxu0
      %v7546 = vadd.f32 0.0, %v7545
      %v7547 = vpop.f32.mrb[0].mxu0
      %v7548 = vpop.f32.mrb[0].mxu0
      %v7549 = vadd.f32 0.0, %v7548
      %v7550 = vpop.f32.mrb[0].mxu0
      %7551 = vmatprep.mubr.bf16.mxu0 0
      %7552 = vmatmul.mubr.bf16.gmra.mrb[0].mxu0 %v471
      %v7553 = vpop.f32.mrb[0].mxu0
      %v7554 = vadd.f32 0.0, %v7553
      %v7555 = vpop.f32.mrb[0].mxu0
      %v7556 = vpop.f32.mrb[0].mxu0
      %v7557 = vadd.f32 0.0, %v7556
      %v7558 = vpop.f32.mrb[0].mxu0
      %7559 = vmatprep.mubr.bf16.mxu0 0
      %7560 = vmatmul.mubr.bf16.gmra.mrb[0].mxu0 %v472
      %v7561 = vpop.f32.mrb[0].mxu0
      %v7562 = vadd.f32 0.0, %v7561
      %v7563 = vpop.f32.mrb[0].mxu0
      %v7564 = vpop.f32.mrb[0].mxu0
      %v7565 = vadd.f32 0.0, %v7564
      %v7566 = vpop.f32.mrb[0].mxu0
      %7567 = vmatprep.mubr.bf16.mxu0 0
      %7568 = vmatmul.mubr.bf16.gmra.mrb[0].mxu0 %v473
      %v7569 = vpop.f32.mrb[0].mxu0
      %v7570 = vadd.f32 0.0, %v7569
      %v7571 = vpop.f32.mrb[0].mxu0
      %v7572 = vpop.f32.mrb[0].mxu0
      %v7573 = vadd.f32 0.0, %v7572
      %v7574 = vpop.f32.mrb[0].mxu0
      %7575 = vmatprep.mubr.bf16.mxu0 0
      %7576 = vmatmul.mubr.bf16.gmra.mrb[0].mxu0 %v474
      %v7577 = vpop.f32.mrb[0].mxu0
      %v7578 = vadd.f32 0.0, %v7577
      %v7579 = vpop.f32.mrb[0].mxu0
      %v7580 = vpop.f32.mrb[0].mxu0
      %v7581 = vadd.f32 0.0, %v7580
      %v7582 = vpop.f32.mrb[0].mxu0
      %7583 = vmatprep.mubr.bf16.mxu0 0
      %7584 = vmatmul.mubr.bf16.gmra.mrb[0].mxu0 %v475
      %v7585 = vpop.f32.mrb[0].mxu0
      %v7586 = vadd.f32 0.0, %v7585
      %v7587 = vpop.f32.mrb[0].mxu0
      %v7588 = vpop.f32.mrb[0].mxu0
      %v7589 = vadd.f32 0.0, %v7588
      %v7590 = vpop.f32.mrb[0].mxu0
      %7591 = vmatprep.mubr.bf16.mxu0 0
      %7592 = vmatmul.mubr.bf16.gmra.mrb[0].mxu0 %v476
      %v7593 = vpop.f32.mrb[0].mxu0
      %v7594 = vadd.f32 0.0, %v7593
      %v7595 = vpop.f32.mrb[0].mxu0
      %v7596 = vpop.f32.mrb[0].mxu0
      %v7597 = vadd.f32 0.0, %v7596
      %v7598 = vpop.f32.mrb[0].mxu0
      %7599 = vmatprep.mubr.bf16.mxu0 0
      %7600 = vmatmul.mubr.bf16.gmra.mrb[0].mxu0 %v477
      %v7601 = vpop.f32.mrb[0].mxu0
      %v7602 = vadd.f32 0.0, %v7601
      %v7603 = vpop.f32.mrb[0].mxu0
      %v7604 = vpop.f32.mrb[0].mxu0
      %v7605 = vadd.f32 0.0, %v7604
      %v7606 = vpop.f32.mrb[0].mxu0
      %7607 = vdwg.mxu0
      %v7608 = vadd.f32 %v7430, %v7546
      %v7609 = vadd.f32 %v7431, %v7549
      %v7610 = vadd.f32 %v7432, %v7554
      %v7611 = vadd.f32 %v7433, %v7557
      %v7612 = vadd.f32 %v7434, %v7562
      %v7613 = vadd.f32 %v7435, %v7565
      %v7614 = vadd.f32 %v7436, %v7570
      %v7615 = vadd.f32 %v7437, %v7573
      %v7616 = vadd.f32 %v7438, %v7578
      %v7617 = vadd.f32 %v7439, %v7581
      %v7618 = vadd.f32 %v7440, %v7586
      %v7619 = vadd.f32 %v7441, %v7589
      %v7620 = vadd.f32 %v7442, %v7594
      %v7621 = vadd.f32 %v7443, %v7597
      %v7622 = vadd.f32 %v7444, %v7602
      %v7623 = vadd.f32 %v7445, %v7605
      %v7624 = vld [vmem:[%s323 + $0x10] sm:$0xc]
      %v7625 = vld [vmem:[%s323 + $0x14] sm:$0xf]
      %v7626 = vld [vmem:[%s323 + $0x18] sm:$0x3]
      %v7627 = vld [vmem:[%s323 + $0x2c] sm:$0xc]
      %v7628 = vld [vmem:[%s323 + $0x30] sm:$0xf]
      %v7629 = vld [vmem:[%s323 + $0x34] sm:$0x3]
      %v7630 = vld [vmem:[%s323 + $0x48] sm:$0xc]
      %v7631 = vld [vmem:[%s323 + $0x4c] sm:$0xf]
      %v7632 = vld [vmem:[%s323 + $0x50] sm:$0x3]
      %v7633 = vld [vmem:[%s323 + $0x64] sm:$0xc]
      %v7634 = vld [vmem:[%s323 + $0x68] sm:$0xf]
      %v7635 = vld [vmem:[%s323 + $0x6c] sm:$0x3]
      %v7636 = vld [vmem:[%s323 + $0x80] sm:$0xc]
      %v7637 = vld [vmem:[%s323 + $0x84] sm:$0xf]
      %v7638 = vld [vmem:[%s323 + $0x88] sm:$0x3]
      %v7639 = vld [vmem:[%s323 + $0x9c] sm:$0xc]
      %v7640 = vld [vmem:[%s323 + $0xa0] sm:$0xf]
      %v7641 = vld [vmem:[%s323 + $0xa4] sm:$0x3]
      %v7642 = vld [vmem:[%s323 + $0xb8] sm:$0xc]
      %v7643 = vld [vmem:[%s323 + $0xbc] sm:$0xf]
      %v7644 = vld [vmem:[%s323 + $0xc0] sm:$0x3]
      %v7645 = vld [vmem:[%s323 + $0xd4] sm:$0xc]
      %v7646 = vld [vmem:[%s323 + $0xd8] sm:$0xf]
      %v7647 = vld [vmem:[%s323 + $0xdc] sm:$0x3]
      %v7672 = vrot.slane %v7624, 6
      %v7673 = vrot.slane %v7672, 4
      %v7674 = vrot.slane %v7625, 6
      %v7675 = vsel %vm893, %v7673, %v7674
      %v7676 = vrot.slane %v7674, 4
      %v7677 = vrot.slane %v7626, 6
      %v7678 = vsel %vm893, %v7676, %v7677
      %v7679 = vrot.slane %v7627, 6
      %v7680 = vrot.slane %v7679, 4
      %v7681 = vrot.slane %v7628, 6
      %v7682 = vsel %vm893, %v7680, %v7681
      %v7683 = vrot.slane %v7681, 4
      %v7684 = vrot.slane %v7629, 6
      %v7685 = vsel %vm893, %v7683, %v7684
      %v7686 = vrot.slane %v7630, 6
      %v7687 = vrot.slane %v7686, 4
      %v7688 = vrot.slane %v7631, 6
      %v7689 = vsel %vm893, %v7687, %v7688
      %v7690 = vrot.slane %v7688, 4
      %v7691 = vrot.slane %v7632, 6
      %v7692 = vsel %vm893, %v7690, %v7691
      %v7693 = vrot.slane %v7633, 6
      %v7694 = vrot.slane %v7693, 4
      %v7695 = vrot.slane %v7634, 6
      %v7696 = vsel %vm893, %v7694, %v7695
      %v7697 = vrot.slane %v7695, 4
      %v7698 = vrot.slane %v7635, 6
      %v7699 = vsel %vm893, %v7697, %v7698
      %v7700 = vrot.slane %v7636, 6
      %v7701 = vrot.slane %v7700, 4
      %v7702 = vrot.slane %v7637, 6
      %v7703 = vsel %vm893, %v7701, %v7702
      %v7704 = vrot.slane %v7702, 4
      %v7705 = vrot.slane %v7638, 6
      %v7706 = vsel %vm893, %v7704, %v7705
      %v7707 = vrot.slane %v7639, 6
      %v7708 = vrot.slane %v7707, 4
      %v7709 = vrot.slane %v7640, 6
      %v7710 = vsel %vm893, %v7708, %v7709
      %v7711 = vrot.slane %v7709, 4
      %v7712 = vrot.slane %v7641, 6
      %v7713 = vsel %vm893, %v7711, %v7712
      %v7714 = vrot.slane %v7642, 6
      %v7715 = vrot.slane %v7714, 4
      %v7716 = vrot.slane %v7643, 6
      %v7717 = vsel %vm893, %v7715, %v7716
      %v7718 = vrot.slane %v7716, 4
      %v7719 = vrot.slane %v7644, 6
      %v7720 = vsel %vm893, %v7718, %v7719
      %v7721 = vrot.slane %v7645, 6
      %v7722 = vrot.slane %v7721, 4
      %v7723 = vrot.slane %v7646, 6
      %v7724 = vsel %vm893, %v7722, %v7723
      %v7725 = vrot.slane %v7723, 4
      %v7726 = vrot.slane %v7647, 6
      %v7727 = vsel %vm893, %v7725, %v7726
      %s7728 = scalar_lea.vmem %s4, 1472
      %v7729 = vld [vmem:[%s7728] sm:$0xf]
      %v7730 = vld [vmem:[%s7728 + $0x4] sm:$0xf]
      %v7731 = vld [vmem:[%s7728 + $0x8] sm:$0xf]
      %v7732 = vld [vmem:[%s7728 + $0xc] sm:$0xf]
      %v7733 = vld [vmem:[%s7728 + $0x10] sm:$0xf]
      %v7734 = vld [vmem:[%s7728 + $0x14] sm:$0xf]
      %v7735 = vld [vmem:[%s7728 + $0x18] sm:$0xf]
      %v7736 = vld [vmem:[%s7728 + $0x1c] sm:$0xf]
      %v7737 = vld [vmem:[%s7728 + $0x20] sm:$0xf]
      %v7738 = vld [vmem:[%s7728 + $0x24] sm:$0xf]
      %v7739 = vld [vmem:[%s7728 + $0x28] sm:$0xf]
      %v7740 = vld [vmem:[%s7728 + $0x2c] sm:$0xf]
      %v7741 = vld [vmem:[%s7728 + $0x30] sm:$0xf]
      %v7742 = vld [vmem:[%s7728 + $0x34] sm:$0xf]
      %v7743 = vld [vmem:[%s7728 + $0x38] sm:$0xf]
      %v7744 = vld [vmem:[%s7728 + $0x3c] sm:$0xf]
      %v7745 = vunpack.c.l.b16 %v7675
      %v7746 = vunpack.c.l.b16 %v7678
      %v7747 = vunpack.c.l.b16 %v7682
      %v7748 = vunpack.c.l.b16 %v7685
      %v7749 = vunpack.c.l.b16 %v7689
      %v7750 = vunpack.c.l.b16 %v7692
      %v7751 = vunpack.c.l.b16 %v7696
      %v7752 = vunpack.c.l.b16 %v7699
      %v7753 = vunpack.c.l.b16 %v7703
      %v7754 = vunpack.c.l.b16 %v7706
      %v7755 = vunpack.c.l.b16 %v7710
      %v7756 = vunpack.c.l.b16 %v7713
      %v7757 = vunpack.c.l.b16 %v7717
      %v7758 = vunpack.c.l.b16 %v7720
      %v7759 = vunpack.c.l.b16 %v7724
      %v7760 = vunpack.c.l.b16 %v7727
      %v7761 = vpack.c.b16 %v7746, %v7745
      %v7762 = vpack.c.b16 %v7748, %v7747
      %v7763 = vpack.c.b16 %v7750, %v7749
      %v7764 = vpack.c.b16 %v7752, %v7751
      %v7765 = vpack.c.b16 %v7754, %v7753
      %v7766 = vpack.c.b16 %v7756, %v7755
      %v7767 = vpack.c.b16 %v7758, %v7757
      %v7768 = vpack.c.b16 %v7760, %v7759
      %v7793 = vunpack.c.l.b16 %v7729
      %v7794 = vunpack.c.l.b16 %v7730
      %v7795 = vunpack.c.l.b16 %v7731
      %v7796 = vunpack.c.l.b16 %v7732
      %v7797 = vunpack.c.l.b16 %v7733
      %v7798 = vunpack.c.l.b16 %v7734
      %v7799 = vunpack.c.l.b16 %v7735
      %v7800 = vunpack.c.l.b16 %v7736
      %v7801 = vunpack.c.l.b16 %v7737
      %v7802 = vunpack.c.l.b16 %v7738
      %v7803 = vunpack.c.l.b16 %v7739
      %v7804 = vunpack.c.l.b16 %v7740
      %v7805 = vunpack.c.l.b16 %v7741
      %v7806 = vunpack.c.l.b16 %v7742
      %v7807 = vunpack.c.l.b16 %v7743
      %v7808 = vunpack.c.l.b16 %v7744
      %v7809 = vpack.c.b16 %v7794, %v7793
      %v7810 = vpack.c.b16 %v7796, %v7795
      %v7811 = vpack.c.b16 %v7798, %v7797
      %v7812 = vpack.c.b16 %v7800, %v7799
      %v7813 = vpack.c.b16 %v7802, %v7801
      %v7814 = vpack.c.b16 %v7804, %v7803
      %v7815 = vpack.c.b16 %v7806, %v7805
      %v7816 = vpack.c.b16 %v7808, %v7807
      %7825 = vmatprep.subr.bf16.mxu0 0
      %7826 = vmatpush1.bf16.msra.mxu0 %v7809
      %7827 = vmatprep.subr.bf16.mxu0 0
      %7828 = vmatpush1.bf16.msra.mxu0 %v7810
      %7829 = vmatprep.subr.bf16.mxu0 0
      %7830 = vmatpush1.bf16.msra.mxu0 %v7811
      %7831 = vmatprep.subr.bf16.mxu0 0
      %7832 = vmatpush1.bf16.msra.mxu0 %v7812
      %7833 = vmatprep.subr.bf16.mxu0 0
      %7834 = vmatpush1.bf16.msra.mxu0 %v7813
      %7835 = vmatprep.subr.bf16.mxu0 0
      %7836 = vmatpush1.bf16.msra.mxu0 %v7814
      %7837 = vmatprep.subr.bf16.mxu0 0
      %7838 = vmatpush1.bf16.msra.mxu0 %v7815
      %7839 = vmatprep.subr.bf16.mxu0 0
      %7840 = vmatpush1.bf16.msra.mxu0 %v7816
      %7841 = vmatprep.subr.bf16.mxu0 0
      %7842 = vmatpush1.bf16.msra.mxu0 0
      %7843 = vmatprep.subr.bf16.mxu0 0
      %7844 = vmatpush1.bf16.msra.mxu0 0
      %7845 = vmatprep.subr.bf16.mxu0 0
      %7846 = vmatpush1.bf16.msra.mxu0 0
      %7847 = vmatprep.subr.bf16.mxu0 0
      %7848 = vmatpush1.bf16.msra.mxu0 0
      %7849 = vmatprep.subr.bf16.mxu0 0
      %7850 = vmatpush1.bf16.msra.mxu0 0
      %7851 = vmatprep.subr.bf16.mxu0 0
      %7852 = vmatpush1.bf16.msra.mxu0 0
      %7853 = vmatprep.subr.bf16.mxu0 0
      %7854 = vmatpush1.bf16.msra.mxu0 0
      %7855 = vmatprep.subr.bf16.mxu0 0
      %7856 = vmatpush1.bf16.msra.mxu0 0
      %7857 = vmatprep.mubr.bf16.mxu0 0
      %7858 = vmatmul.mubr.bf16.gmra.mrb[0].mxu0 %v7761
      %v7859 = vpop.f32.mrb[0].mxu0
      %v7860 = vadd.f32 0.0, %v7859
      %v7861 = vpop.f32.mrb[0].mxu0
      %v7862 = vpop.f32.mrb[0].mxu0
      %v7863 = vadd.f32 0.0, %v7862
      %v7864 = vpop.f32.mrb[0].mxu0
      %7865 = vmatprep.mubr.bf16.mxu0 0
      %7866 = vmatmul.mubr.bf16.gmra.mrb[0].mxu0 %v7762
      %v7867 = vpop.f32.mrb[0].mxu0
      %v7868 = vadd.f32 0.0, %v7867
      %v7869 = vpop.f32.mrb[0].mxu0
      %v7870 = vpop.f32.mrb[0].mxu0
      %v7871 = vadd.f32 0.0, %v7870
      %v7872 = vpop.f32.mrb[0].mxu0
      %7873 = vmatprep.mubr.bf16.mxu0 0
      %7874 = vmatmul.mubr.bf16.gmra.mrb[0].mxu0 %v7763
      %v7875 = vpop.f32.mrb[0].mxu0
      %v7876 = vadd.f32 0.0, %v7875
      %v7877 = vpop.f32.mrb[0].mxu0
      %v7878 = vpop.f32.mrb[0].mxu0
      %v7879 = vadd.f32 0.0, %v7878
      %v7880 = vpop.f32.mrb[0].mxu0
      %7881 = vmatprep.mubr.bf16.mxu0 0
      %7882 = vmatmul.mubr.bf16.gmra.mrb[0].mxu0 %v7764
      %v7883 = vpop.f32.mrb[0].mxu0
      %v7884 = vadd.f32 0.0, %v7883
      %v7885 = vpop.f32.mrb[0].mxu0
      %v7886 = vpop.f32.mrb[0].mxu0
      %v7887 = vadd.f32 0.0, %v7886
      %v7888 = vpop.f32.mrb[0].mxu0
      %7889 = vmatprep.mubr.bf16.mxu0 0
      %7890 = vmatmul.mubr.bf16.gmra.mrb[0].mxu0 %v7765
      %v7891 = vpop.f32.mrb[0].mxu0
      %v7892 = vadd.f32 0.0, %v7891
      %v7893 = vpop.f32.mrb[0].mxu0
      %v7894 = vpop.f32.mrb[0].mxu0
      %v7895 = vadd.f32 0.0, %v7894
      %v7896 = vpop.f32.mrb[0].mxu0
      %7897 = vmatprep.mubr.bf16.mxu0 0
      %7898 = vmatmul.mubr.bf16.gmra.mrb[0].mxu0 %v7766
      %v7899 = vpop.f32.mrb[0].mxu0
      %v7900 = vadd.f32 0.0, %v7899
      %v7901 = vpop.f32.mrb[0].mxu0
      %v7902 = vpop.f32.mrb[0].mxu0
      %v7903 = vadd.f32 0.0, %v7902
      %v7904 = vpop.f32.mrb[0].mxu0
      %7905 = vmatprep.mubr.bf16.mxu0 0
      %7906 = vmatmul.mubr.bf16.gmra.mrb[0].mxu0 %v7767
      %v7907 = vpop.f32.mrb[0].mxu0
      %v7908 = vadd.f32 0.0, %v7907
      %v7909 = vpop.f32.mrb[0].mxu0
      %v7910 = vpop.f32.mrb[0].mxu0
      %v7911 = vadd.f32 0.0, %v7910
      %v7912 = vpop.f32.mrb[0].mxu0
      %7913 = vmatprep.mubr.bf16.mxu0 0
      %7914 = vmatmul.mubr.bf16.gmra.mrb[0].mxu0 %v7768
      %v7915 = vpop.f32.mrb[0].mxu0
      %v7916 = vadd.f32 0.0, %v7915
      %v7917 = vpop.f32.mrb[0].mxu0
      %v7918 = vpop.f32.mrb[0].mxu0
      %v7919 = vadd.f32 0.0, %v7918
      %v7920 = vpop.f32.mrb[0].mxu0
      %7921 = vdwg.mxu0
      %v7922 = vadd.f32 %v7608, %v7860
      %v7923 = vadd.f32 %v7609, %v7863
      %v7924 = vadd.f32 %v7610, %v7868
      %v7925 = vadd.f32 %v7611, %v7871
      %v7926 = vadd.f32 %v7612, %v7876
      %v7927 = vadd.f32 %v7613, %v7879
      %v7928 = vadd.f32 %v7614, %v7884
      %v7929 = vadd.f32 %v7615, %v7887
      %v7930 = vadd.f32 %v7616, %v7892
      %v7931 = vadd.f32 %v7617, %v7895
      %v7932 = vadd.f32 %v7618, %v7900
      %v7933 = vadd.f32 %v7619, %v7903
      %v7934 = vadd.f32 %v7620, %v7908
      %v7935 = vadd.f32 %v7621, %v7911
      %v7936 = vadd.f32 %v7622, %v7916
      %v7937 = vadd.f32 %v7623, %v7919
      %s7938 = sadd.s32 %s319, 36
      %s7939 = smul.u32 %s7938, 7
      %s7940 = smul.addr %s7939, 4
      %s7941 = scalar_lea.vmem %s303, %s7940
      %v7942 = vld [vmem:[%s7941] sm:$0xf]
      %v7943 = vld [vmem:[%s7941 + $0x4] sm:$0xf]
      %v7944 = vld [vmem:[%s7941 + $0x1c] sm:$0xf]
      %v7945 = vld [vmem:[%s7941 + $0x20] sm:$0xf]
      %v7946 = vld [vmem:[%s7941 + $0x38] sm:$0xf]
      %v7947 = vld [vmem:[%s7941 + $0x3c] sm:$0xf]
      %v7948 = vld [vmem:[%s7941 + $0x54] sm:$0xf]
      %v7949 = vld [vmem:[%s7941 + $0x58] sm:$0xf]
      %v7950 = vld [vmem:[%s7941 + $0x70] sm:$0xf]
      %v7951 = vld [vmem:[%s7941 + $0x74] sm:$0xf]
      %v7952 = vld [vmem:[%s7941 + $0x8c] sm:$0xf]
      %v7953 = vld [vmem:[%s7941 + $0x90] sm:$0xf]
      %v7954 = vld [vmem:[%s7941 + $0xa8] sm:$0xf]
      %v7955 = vld [vmem:[%s7941 + $0xac] sm:$0xf]
      %v7956 = vld [vmem:[%s7941 + $0xc4] sm:$0xf]
      %v7957 = vld [vmem:[%s7941 + $0xc8] sm:$0xf]
      %s7958 = scalar_lea.vmem %s4, 1536
      %v7959 = vld [vmem:[%s7958] sm:$0xf]
      %v7960 = vld [vmem:[%s7958 + $0x4] sm:$0xf]
      %v7961 = vld [vmem:[%s7958 + $0x8] sm:$0xf]
      %v7962 = vld [vmem:[%s7958 + $0xc] sm:$0xf]
      %v7963 = vld [vmem:[%s7958 + $0x10] sm:$0xf]
      %v7964 = vld [vmem:[%s7958 + $0x14] sm:$0xf]
      %v7965 = vld [vmem:[%s7958 + $0x18] sm:$0xf]
      %v7966 = vld [vmem:[%s7958 + $0x1c] sm:$0xf]
      %v7967 = vld [vmem:[%s7958 + $0x20] sm:$0xf]
      %v7968 = vld [vmem:[%s7958 + $0x24] sm:$0xf]
      %v7969 = vld [vmem:[%s7958 + $0x28] sm:$0xf]
      %v7970 = vld [vmem:[%s7958 + $0x2c] sm:$0xf]
      %v7971 = vld [vmem:[%s7958 + $0x30] sm:$0xf]
      %v7972 = vld [vmem:[%s7958 + $0x34] sm:$0xf]
      %v7973 = vld [vmem:[%s7958 + $0x38] sm:$0xf]
      %v7974 = vld [vmem:[%s7958 + $0x3c] sm:$0xf]
      %v7991 = vunpack.c.l.b16 %v7942
      %v7992 = vunpack.c.l.b16 %v7943
      %v7993 = vunpack.c.l.b16 %v7944
      %v7994 = vunpack.c.l.b16 %v7945
      %v7995 = vunpack.c.l.b16 %v7946
      %v7996 = vunpack.c.l.b16 %v7947
      %v7997 = vunpack.c.l.b16 %v7948
      %v7998 = vunpack.c.l.b16 %v7949
      %v7999 = vunpack.c.l.b16 %v7950
      %v8000 = vunpack.c.l.b16 %v7951
      %v8001 = vunpack.c.l.b16 %v7952
      %v8002 = vunpack.c.l.b16 %v7953
      %v8003 = vunpack.c.l.b16 %v7954
      %v8004 = vunpack.c.l.b16 %v7955
      %v8005 = vunpack.c.l.b16 %v7956
      %v8006 = vunpack.c.l.b16 %v7957
      %v8007 = vpack.c.b16 %v7992, %v7991
      %v8008 = vpack.c.b16 %v7994, %v7993
      %v8009 = vpack.c.b16 %v7996, %v7995
      %v8010 = vpack.c.b16 %v7998, %v7997
      %v8011 = vpack.c.b16 %v8000, %v7999
      %v8012 = vpack.c.b16 %v8002, %v8001
      %v8013 = vpack.c.b16 %v8004, %v8003
      %v8014 = vpack.c.b16 %v8006, %v8005
      %v8039 = vunpack.c.l.b16 %v7959
      %v8040 = vunpack.c.l.b16 %v7960
      %v8041 = vunpack.c.l.b16 %v7961
      %v8042 = vunpack.c.l.b16 %v7962
      %v8043 = vunpack.c.l.b16 %v7963
      %v8044 = vunpack.c.l.b16 %v7964
      %v8045 = vunpack.c.l.b16 %v7965
      %v8046 = vunpack.c.l.b16 %v7966
      %v8047 = vunpack.c.l.b16 %v7967
      %v8048 = vunpack.c.l.b16 %v7968
      %v8049 = vunpack.c.l.b16 %v7969
      %v8050 = vunpack.c.l.b16 %v7970
      %v8051 = vunpack.c.l.b16 %v7971
      %v8052 = vunpack.c.l.b16 %v7972
      %v8053 = vunpack.c.l.b16 %v7973
      %v8054 = vunpack.c.l.b16 %v7974
      %v8055 = vpack.c.b16 %v8040, %v8039
      %v8056 = vpack.c.b16 %v8042, %v8041
      %v8057 = vpack.c.b16 %v8044, %v8043
      %v8058 = vpack.c.b16 %v8046, %v8045
      %v8059 = vpack.c.b16 %v8048, %v8047
      %v8060 = vpack.c.b16 %v8050, %v8049
      %v8061 = vpack.c.b16 %v8052, %v8051
      %v8062 = vpack.c.b16 %v8054, %v8053
      %8071 = vmatprep.subr.bf16.mxu0 0
      %8072 = vmatpush1.bf16.msra.mxu0 %v8055
      %8073 = vmatprep.subr.bf16.mxu0 0
      %8074 = vmatpush1.bf16.msra.mxu0 %v8056
      %8075 = vmatprep.subr.bf16.mxu0 0
      %8076 = vmatpush1.bf16.msra.mxu0 %v8057
      %8077 = vmatprep.subr.bf16.mxu0 0
      %8078 = vmatpush1.bf16.msra.mxu0 %v8058
      %8079 = vmatprep.subr.bf16.mxu0 0
      %8080 = vmatpush1.bf16.msra.mxu0 %v8059
      %8081 = vmatprep.subr.bf16.mxu0 0
      %8082 = vmatpush1.bf16.msra.mxu0 %v8060
      %8083 = vmatprep.subr.bf16.mxu0 0
      %8084 = vmatpush1.bf16.msra.mxu0 %v8061
      %8085 = vmatprep.subr.bf16.mxu0 0
      %8086 = vmatpush1.bf16.msra.mxu0 %v8062
      %8087 = vmatprep.subr.bf16.mxu0 0
      %8088 = vmatpush1.bf16.msra.mxu0 0
      %8089 = vmatprep.subr.bf16.mxu0 0
      %8090 = vmatpush1.bf16.msra.mxu0 0
      %8091 = vmatprep.subr.bf16.mxu0 0
      %8092 = vmatpush1.bf16.msra.mxu0 0
      %8093 = vmatprep.subr.bf16.mxu0 0
      %8094 = vmatpush1.bf16.msra.mxu0 0
      %8095 = vmatprep.subr.bf16.mxu0 0
      %8096 = vmatpush1.bf16.msra.mxu0 0
      %8097 = vmatprep.subr.bf16.mxu0 0
      %8098 = vmatpush1.bf16.msra.mxu0 0
      %8099 = vmatprep.subr.bf16.mxu0 0
      %8100 = vmatpush1.bf16.msra.mxu0 0
      %8101 = vmatprep.subr.bf16.mxu0 0
      %8102 = vmatpush1.bf16.msra.mxu0 0
      %8103 = vmatprep.mubr.bf16.mxu0 0
      %8104 = vmatmul.mubr.bf16.gmra.mrb[0].mxu0 %v8007
      %v8105 = vpop.f32.mrb[0].mxu0
      %v8106 = vadd.f32 0.0, %v8105
      %v8107 = vpop.f32.mrb[0].mxu0
      %v8108 = vpop.f32.mrb[0].mxu0
      %v8109 = vadd.f32 0.0, %v8108
      %v8110 = vpop.f32.mrb[0].mxu0
      %8111 = vmatprep.mubr.bf16.mxu0 0
      %8112 = vmatmul.mubr.bf16.gmra.mrb[0].mxu0 %v8008
      %v8113 = vpop.f32.mrb[0].mxu0
      %v8114 = vadd.f32 0.0, %v8113
      %v8115 = vpop.f32.mrb[0].mxu0
      %v8116 = vpop.f32.mrb[0].mxu0
      %v8117 = vadd.f32 0.0, %v8116
      %v8118 = vpop.f32.mrb[0].mxu0
      %8119 = vmatprep.mubr.bf16.mxu0 0
      %8120 = vmatmul.mubr.bf16.gmra.mrb[0].mxu0 %v8009
      %v8121 = vpop.f32.mrb[0].mxu0
      %v8122 = vadd.f32 0.0, %v8121
      %v8123 = vpop.f32.mrb[0].mxu0
      %v8124 = vpop.f32.mrb[0].mxu0
      %v8125 = vadd.f32 0.0, %v8124
      %v8126 = vpop.f32.mrb[0].mxu0
      %8127 = vmatprep.mubr.bf16.mxu0 0
      %8128 = vmatmul.mubr.bf16.gmra.mrb[0].mxu0 %v8010
      %v8129 = vpop.f32.mrb[0].mxu0
      %v8130 = vadd.f32 0.0, %v8129
      %v8131 = vpop.f32.mrb[0].mxu0
      %v8132 = vpop.f32.mrb[0].mxu0
      %v8133 = vadd.f32 0.0, %v8132
      %v8134 = vpop.f32.mrb[0].mxu0
      %8135 = vmatprep.mubr.bf16.mxu0 0
      %8136 = vmatmul.mubr.bf16.gmra.mrb[0].mxu0 %v8011
      %v8137 = vpop.f32.mrb[0].mxu0
      %v8138 = vadd.f32 0.0, %v8137
      %v8139 = vpop.f32.mrb[0].mxu0
      %v8140 = vpop.f32.mrb[0].mxu0
      %v8141 = vadd.f32 0.0, %v8140
      %v8142 = vpop.f32.mrb[0].mxu0
      %8143 = vmatprep.mubr.bf16.mxu0 0
      %8144 = vmatmul.mubr.bf16.gmra.mrb[0].mxu0 %v8012
      %v8145 = vpop.f32.mrb[0].mxu0
      %v8146 = vadd.f32 0.0, %v8145
      %v8147 = vpop.f32.mrb[0].mxu0
      %v8148 = vpop.f32.mrb[0].mxu0
      %v8149 = vadd.f32 0.0, %v8148
      %v8150 = vpop.f32.mrb[0].mxu0
      %8151 = vmatprep.mubr.bf16.mxu0 0
      %8152 = vmatmul.mubr.bf16.gmra.mrb[0].mxu0 %v8013
      %v8153 = vpop.f32.mrb[0].mxu0
      %v8154 = vadd.f32 0.0, %v8153
      %v8155 = vpop.f32.mrb[0].mxu0
      %v8156 = vpop.f32.mrb[0].mxu0
      %v8157 = vadd.f32 0.0, %v8156
      %v8158 = vpop.f32.mrb[0].mxu0
      %8159 = vmatprep.mubr.bf16.mxu0 0
      %8160 = vmatmul.mubr.bf16.gmra.mrb[0].mxu0 %v8014
      %v8161 = vpop.f32.mrb[0].mxu0
      %v8162 = vadd.f32 0.0, %v8161
      %v8163 = vpop.f32.mrb[0].mxu0
      %v8164 = vpop.f32.mrb[0].mxu0
      %v8165 = vadd.f32 0.0, %v8164
      %v8166 = vpop.f32.mrb[0].mxu0
      %8167 = vdwg.mxu0
      %v8168 = vadd.f32 %v7922, %v8106
      %v8169 = vadd.f32 %v7923, %v8109
      %v8170 = vadd.f32 %v7924, %v8114
      %v8171 = vadd.f32 %v7925, %v8117
      %v8172 = vadd.f32 %v7926, %v8122
      %v8173 = vadd.f32 %v7927, %v8125
      %v8174 = vadd.f32 %v7928, %v8130
      %v8175 = vadd.f32 %v7929, %v8133
      %v8176 = vadd.f32 %v7930, %v8138
      %v8177 = vadd.f32 %v7931, %v8141
      %v8178 = vadd.f32 %v7932, %v8146
      %v8179 = vadd.f32 %v7933, %v8149
      %v8180 = vadd.f32 %v7934, %v8154
      %v8181 = vadd.f32 %v7935, %v8157
      %v8182 = vadd.f32 %v7936, %v8162
      %v8183 = vadd.f32 %v7937, %v8165
      %v8184 = vld [vmem:[%s7941 + $0x8] sm:$0xe]
      %v8185 = vld [vmem:[%s7941 + $0xc] sm:$0xf]
      %v8186 = vld [vmem:[%s7941 + $0x10] sm:$0x1]
      %v8187 = vld [vmem:[%s7941 + $0x24] sm:$0xe]
      %v8188 = vld [vmem:[%s7941 + $0x28] sm:$0xf]
      %v8189 = vld [vmem:[%s7941 + $0x2c] sm:$0x1]
      %v8190 = vld [vmem:[%s7941 + $0x40] sm:$0xe]
      %v8191 = vld [vmem:[%s7941 + $0x44] sm:$0xf]
      %v8192 = vld [vmem:[%s7941 + $0x48] sm:$0x1]
      %v8193 = vld [vmem:[%s7941 + $0x5c] sm:$0xe]
      %v8194 = vld [vmem:[%s7941 + $0x60] sm:$0xf]
      %v8195 = vld [vmem:[%s7941 + $0x64] sm:$0x1]
      %v8196 = vld [vmem:[%s7941 + $0x78] sm:$0xe]
      %v8197 = vld [vmem:[%s7941 + $0x7c] sm:$0xf]
      %v8198 = vld [vmem:[%s7941 + $0x80] sm:$0x1]
      %v8199 = vld [vmem:[%s7941 + $0x94] sm:$0xe]
      %v8200 = vld [vmem:[%s7941 + $0x98] sm:$0xf]
      %v8201 = vld [vmem:[%s7941 + $0x9c] sm:$0x1]
      %v8202 = vld [vmem:[%s7941 + $0xb0] sm:$0xe]
      %v8203 = vld [vmem:[%s7941 + $0xb4] sm:$0xf]
      %v8204 = vld [vmem:[%s7941 + $0xb8] sm:$0x1]
      %v8205 = vld [vmem:[%s7941 + $0xcc] sm:$0xe]
      %v8206 = vld [vmem:[%s7941 + $0xd0] sm:$0xf]
      %v8207 = vld [vmem:[%s7941 + $0xd4] sm:$0x1]
      %v8232 = vrot.slane %v8184, 5
      %v8233 = vrot.slane %v8232, 4
      %v8234 = vrot.slane %v8185, 5
      %v8235 = vsel %vm374, %v8233, %v8234
      %v8236 = vrot.slane %v8234, 4
      %v8237 = vrot.slane %v8186, 5
      %v8238 = vsel %vm374, %v8236, %v8237
      %v8239 = vrot.slane %v8187, 5
      %v8240 = vrot.slane %v8239, 4
      %v8241 = vrot.slane %v8188, 5
      %v8242 = vsel %vm374, %v8240, %v8241
      %v8243 = vrot.slane %v8241, 4
      %v8244 = vrot.slane %v8189, 5
      %v8245 = vsel %vm374, %v8243, %v8244
      %v8246 = vrot.slane %v8190, 5
      %v8247 = vrot.slane %v8246, 4
      %v8248 = vrot.slane %v8191, 5
      %v8249 = vsel %vm374, %v8247, %v8248
      %v8250 = vrot.slane %v8248, 4
      %v8251 = vrot.slane %v8192, 5
      %v8252 = vsel %vm374, %v8250, %v8251
      %v8253 = vrot.slane %v8193, 5
      %v8254 = vrot.slane %v8253, 4
      %v8255 = vrot.slane %v8194, 5
      %v8256 = vsel %vm374, %v8254, %v8255
      %v8257 = vrot.slane %v8255, 4
      %v8258 = vrot.slane %v8195, 5
      %v8259 = vsel %vm374, %v8257, %v8258
      %v8260 = vrot.slane %v8196, 5
      %v8261 = vrot.slane %v8260, 4
      %v8262 = vrot.slane %v8197, 5
      %v8263 = vsel %vm374, %v8261, %v8262
      %v8264 = vrot.slane %v8262, 4
      %v8265 = vrot.slane %v8198, 5
      %v8266 = vsel %vm374, %v8264, %v8265
      %v8267 = vrot.slane %v8199, 5
      %v8268 = vrot.slane %v8267, 4
      %v8269 = vrot.slane %v8200, 5
      %v8270 = vsel %vm374, %v8268, %v8269
      %v8271 = vrot.slane %v8269, 4
      %v8272 = vrot.slane %v8201, 5
      %v8273 = vsel %vm374, %v8271, %v8272
      %v8274 = vrot.slane %v8202, 5
      %v8275 = vrot.slane %v8274, 4
      %v8276 = vrot.slane %v8203, 5
      %v8277 = vsel %vm374, %v8275, %v8276
      %v8278 = vrot.slane %v8276, 4
      %v8279 = vrot.slane %v8204, 5
      %v8280 = vsel %vm374, %v8278, %v8279
      %v8281 = vrot.slane %v8205, 5
      %v8282 = vrot.slane %v8281, 4
      %v8283 = vrot.slane %v8206, 5
      %v8284 = vsel %vm374, %v8282, %v8283
      %v8285 = vrot.slane %v8283, 4
      %v8286 = vrot.slane %v8207, 5
      %v8287 = vsel %vm374, %v8285, %v8286
      %s8288 = scalar_lea.vmem %s4, 1600
      %v8289 = vld [vmem:[%s8288] sm:$0xf]
      %v8290 = vld [vmem:[%s8288 + $0x4] sm:$0xf]
      %v8291 = vld [vmem:[%s8288 + $0x8] sm:$0xf]
      %v8292 = vld [vmem:[%s8288 + $0xc] sm:$0xf]
      %v8293 = vld [vmem:[%s8288 + $0x10] sm:$0xf]
      %v8294 = vld [vmem:[%s8288 + $0x14] sm:$0xf]
      %v8295 = vld [vmem:[%s8288 + $0x18] sm:$0xf]
      %v8296 = vld [vmem:[%s8288 + $0x1c] sm:$0xf]
      %v8297 = vld [vmem:[%s8288 + $0x20] sm:$0xf]
      %v8298 = vld [vmem:[%s8288 + $0x24] sm:$0xf]
      %v8299 = vld [vmem:[%s8288 + $0x28] sm:$0xf]
      %v8300 = vld [vmem:[%s8288 + $0x2c] sm:$0xf]
      %v8301 = vld [vmem:[%s8288 + $0x30] sm:$0xf]
      %v8302 = vld [vmem:[%s8288 + $0x34] sm:$0xf]
      %v8303 = vld [vmem:[%s8288 + $0x38] sm:$0xf]
      %v8304 = vld [vmem:[%s8288 + $0x3c] sm:$0xf]
      %v8305 = vunpack.c.l.b16 %v8235
      %v8306 = vunpack.c.l.b16 %v8238
      %v8307 = vunpack.c.l.b16 %v8242
      %v8308 = vunpack.c.l.b16 %v8245
      %v8309 = vunpack.c.l.b16 %v8249
      %v8310 = vunpack.c.l.b16 %v8252
      %v8311 = vunpack.c.l.b16 %v8256
      %v8312 = vunpack.c.l.b16 %v8259
      %v8313 = vunpack.c.l.b16 %v8263
      %v8314 = vunpack.c.l.b16 %v8266
      %v8315 = vunpack.c.l.b16 %v8270
      %v8316 = vunpack.c.l.b16 %v8273
      %v8317 = vunpack.c.l.b16 %v8277
      %v8318 = vunpack.c.l.b16 %v8280
      %v8319 = vunpack.c.l.b16 %v8284
      %v8320 = vunpack.c.l.b16 %v8287
      %v8321 = vpack.c.b16 %v8306, %v8305
      %v8322 = vpack.c.b16 %v8308, %v8307
      %v8323 = vpack.c.b16 %v8310, %v8309
      %v8324 = vpack.c.b16 %v8312, %v8311
      %v8325 = vpack.c.b16 %v8314, %v8313
      %v8326 = vpack.c.b16 %v8316, %v8315
      %v8327 = vpack.c.b16 %v8318, %v8317
      %v8328 = vpack.c.b16 %v8320, %v8319
      %v8353 = vunpack.c.l.b16 %v8289
      %v8354 = vunpack.c.l.b16 %v8290
      %v8355 = vunpack.c.l.b16 %v8291
      %v8356 = vunpack.c.l.b16 %v8292
      %v8357 = vunpack.c.l.b16 %v8293
      %v8358 = vunpack.c.l.b16 %v8294
      %v8359 = vunpack.c.l.b16 %v8295
      %v8360 = vunpack.c.l.b16 %v8296
      %v8361 = vunpack.c.l.b16 %v8297
      %v8362 = vunpack.c.l.b16 %v8298
      %v8363 = vunpack.c.l.b16 %v8299
      %v8364 = vunpack.c.l.b16 %v8300
      %v8365 = vunpack.c.l.b16 %v8301
      %v8366 = vunpack.c.l.b16 %v8302
      %v8367 = vunpack.c.l.b16 %v8303
      %v8368 = vunpack.c.l.b16 %v8304
      %v8369 = vpack.c.b16 %v8354, %v8353
      %v8370 = vpack.c.b16 %v8356, %v8355
      %v8371 = vpack.c.b16 %v8358, %v8357
      %v8372 = vpack.c.b16 %v8360, %v8359
      %v8373 = vpack.c.b16 %v8362, %v8361
      %v8374 = vpack.c.b16 %v8364, %v8363
      %v8375 = vpack.c.b16 %v8366, %v8365
      %v8376 = vpack.c.b16 %v8368, %v8367
      %8385 = vmatprep.subr.bf16.mxu0 0
      %8386 = vmatpush1.bf16.msra.mxu0 %v8369
      %8387 = vmatprep.subr.bf16.mxu0 0
      %8388 = vmatpush1.bf16.msra.mxu0 %v8370
      %8389 = vmatprep.subr.bf16.mxu0 0
      %8390 = vmatpush1.bf16.msra.mxu0 %v8371
      %8391 = vmatprep.subr.bf16.mxu0 0
      %8392 = vmatpush1.bf16.msra.mxu0 %v8372
      %8393 = vmatprep.subr.bf16.mxu0 0
      %8394 = vmatpush1.bf16.msra.mxu0 %v8373
      %8395 = vmatprep.subr.bf16.mxu0 0
      %8396 = vmatpush1.bf16.msra.mxu0 %v8374
      %8397 = vmatprep.subr.bf16.mxu0 0
      %8398 = vmatpush1.bf16.msra.mxu0 %v8375
      %8399 = vmatprep.subr.bf16.mxu0 0
      %8400 = vmatpush1.bf16.msra.mxu0 %v8376
      %8401 = vmatprep.subr.bf16.mxu0 0
      %8402 = vmatpush1.bf16.msra.mxu0 0
      %8403 = vmatprep.subr.bf16.mxu0 0
      %8404 = vmatpush1.bf16.msra.mxu0 0
      %8405 = vmatprep.subr.bf16.mxu0 0
      %8406 = vmatpush1.bf16.msra.mxu0 0
      %8407 = vmatprep.subr.bf16.mxu0 0
      %8408 = vmatpush1.bf16.msra.mxu0 0
      %8409 = vmatprep.subr.bf16.mxu0 0
      %8410 = vmatpush1.bf16.msra.mxu0 0
      %8411 = vmatprep.subr.bf16.mxu0 0
      %8412 = vmatpush1.bf16.msra.mxu0 0
      %8413 = vmatprep.subr.bf16.mxu0 0
      %8414 = vmatpush1.bf16.msra.mxu0 0
      %8415 = vmatprep.subr.bf16.mxu0 0
      %8416 = vmatpush1.bf16.msra.mxu0 0
      %8417 = vmatprep.mubr.bf16.mxu0 0
      %8418 = vmatmul.mubr.bf16.gmra.mrb[0].mxu0 %v8321
      %v8419 = vpop.f32.mrb[0].mxu0
      %v8420 = vadd.f32 0.0, %v8419
      %v8421 = vpop.f32.mrb[0].mxu0
      %v8422 = vpop.f32.mrb[0].mxu0
      %v8423 = vadd.f32 0.0, %v8422
      %v8424 = vpop.f32.mrb[0].mxu0
      %8425 = vmatprep.mubr.bf16.mxu0 0
      %8426 = vmatmul.mubr.bf16.gmra.mrb[0].mxu0 %v8322
      %v8427 = vpop.f32.mrb[0].mxu0
      %v8428 = vadd.f32 0.0, %v8427
      %v8429 = vpop.f32.mrb[0].mxu0
      %v8430 = vpop.f32.mrb[0].mxu0
      %v8431 = vadd.f32 0.0, %v8430
      %v8432 = vpop.f32.mrb[0].mxu0
      %8433 = vmatprep.mubr.bf16.mxu0 0
      %8434 = vmatmul.mubr.bf16.gmra.mrb[0].mxu0 %v8323
      %v8435 = vpop.f32.mrb[0].mxu0
      %v8436 = vadd.f32 0.0, %v8435
      %v8437 = vpop.f32.mrb[0].mxu0
      %v8438 = vpop.f32.mrb[0].mxu0
      %v8439 = vadd.f32 0.0, %v8438
      %v8440 = vpop.f32.mrb[0].mxu0
      %8441 = vmatprep.mubr.bf16.mxu0 0
      %8442 = vmatmul.mubr.bf16.gmra.mrb[0].mxu0 %v8324
      %v8443 = vpop.f32.mrb[0].mxu0
      %v8444 = vadd.f32 0.0, %v8443
      %v8445 = vpop.f32.mrb[0].mxu0
      %v8446 = vpop.f32.mrb[0].mxu0
      %v8447 = vadd.f32 0.0, %v8446
      %v8448 = vpop.f32.mrb[0].mxu0
      %8449 = vmatprep.mubr.bf16.mxu0 0
      %8450 = vmatmul.mubr.bf16.gmra.mrb[0].mxu0 %v8325
      %v8451 = vpop.f32.mrb[0].mxu0
      %v8452 = vadd.f32 0.0, %v8451
      %v8453 = vpop.f32.mrb[0].mxu0
      %v8454 = vpop.f32.mrb[0].mxu0
      %v8455 = vadd.f32 0.0, %v8454
      %v8456 = vpop.f32.mrb[0].mxu0
      %8457 = vmatprep.mubr.bf16.mxu0 0
      %8458 = vmatmul.mubr.bf16.gmra.mrb[0].mxu0 %v8326
      %v8459 = vpop.f32.mrb[0].mxu0
      %v8460 = vadd.f32 0.0, %v8459
      %v8461 = vpop.f32.mrb[0].mxu0
      %v8462 = vpop.f32.mrb[0].mxu0
      %v8463 = vadd.f32 0.0, %v8462
      %v8464 = vpop.f32.mrb[0].mxu0
      %8465 = vmatprep.mubr.bf16.mxu0 0
      %8466 = vmatmul.mubr.bf16.gmra.mrb[0].mxu0 %v8327
      %v8467 = vpop.f32.mrb[0].mxu0
      %v8468 = vadd.f32 0.0, %v8467
      %v8469 = vpop.f32.mrb[0].mxu0
      %v8470 = vpop.f32.mrb[0].mxu0
      %v8471 = vadd.f32 0.0, %v8470
      %v8472 = vpop.f32.mrb[0].mxu0
      %8473 = vmatprep.mubr.bf16.mxu0 0
      %8474 = vmatmul.mubr.bf16.gmra.mrb[0].mxu0 %v8328
      %v8475 = vpop.f32.mrb[0].mxu0
      %v8476 = vadd.f32 0.0, %v8475
      %v8477 = vpop.f32.mrb[0].mxu0
      %v8478 = vpop.f32.mrb[0].mxu0
      %v8479 = vadd.f32 0.0, %v8478
      %v8480 = vpop.f32.mrb[0].mxu0
      %8481 = vdwg.mxu0
      %v8482 = vadd.f32 %v8168, %v8420
      %v8483 = vadd.f32 %v8169, %v8423
      %v8484 = vadd.f32 %v8170, %v8428
      %v8485 = vadd.f32 %v8171, %v8431
      %v8486 = vadd.f32 %v8172, %v8436
      %v8487 = vadd.f32 %v8173, %v8439
      %v8488 = vadd.f32 %v8174, %v8444
      %v8489 = vadd.f32 %v8175, %v8447
      %v8490 = vadd.f32 %v8176, %v8452
      %v8491 = vadd.f32 %v8177, %v8455
      %v8492 = vadd.f32 %v8178, %v8460
      %v8493 = vadd.f32 %v8179, %v8463
      %v8494 = vadd.f32 %v8180, %v8468
      %v8495 = vadd.f32 %v8181, %v8471
      %v8496 = vadd.f32 %v8182, %v8476
      %v8497 = vadd.f32 %v8183, %v8479
      %v8498 = vld [vmem:[%s7941 + $0x10] sm:$0xc]
      %v8499 = vld [vmem:[%s7941 + $0x14] sm:$0xf]
      %v8500 = vld [vmem:[%s7941 + $0x18] sm:$0x3]
      %v8501 = vld [vmem:[%s7941 + $0x2c] sm:$0xc]
      %v8502 = vld [vmem:[%s7941 + $0x30] sm:$0xf]
      %v8503 = vld [vmem:[%s7941 + $0x34] sm:$0x3]
      %v8504 = vld [vmem:[%s7941 + $0x48] sm:$0xc]
      %v8505 = vld [vmem:[%s7941 + $0x4c] sm:$0xf]
      %v8506 = vld [vmem:[%s7941 + $0x50] sm:$0x3]
      %v8507 = vld [vmem:[%s7941 + $0x64] sm:$0xc]
      %v8508 = vld [vmem:[%s7941 + $0x68] sm:$0xf]
      %v8509 = vld [vmem:[%s7941 + $0x6c] sm:$0x3]
      %v8510 = vld [vmem:[%s7941 + $0x80] sm:$0xc]
      %v8511 = vld [vmem:[%s7941 + $0x84] sm:$0xf]
      %v8512 = vld [vmem:[%s7941 + $0x88] sm:$0x3]
      %v8513 = vld [vmem:[%s7941 + $0x9c] sm:$0xc]
      %v8514 = vld [vmem:[%s7941 + $0xa0] sm:$0xf]
      %v8515 = vld [vmem:[%s7941 + $0xa4] sm:$0x3]
      %v8516 = vld [vmem:[%s7941 + $0xb8] sm:$0xc]
      %v8517 = vld [vmem:[%s7941 + $0xbc] sm:$0xf]
      %v8518 = vld [vmem:[%s7941 + $0xc0] sm:$0x3]
      %v8519 = vld [vmem:[%s7941 + $0xd4] sm:$0xc]
      %v8520 = vld [vmem:[%s7941 + $0xd8] sm:$0xf]
      %v8521 = vld [vmem:[%s7941 + $0xdc] sm:$0x3]
      %v8546 = vrot.slane %v8498, 6
      %v8547 = vrot.slane %v8546, 4
      %v8548 = vrot.slane %v8499, 6
      %v8549 = vsel %vm893, %v8547, %v8548
      %v8550 = vrot.slane %v8548, 4
      %v8551 = vrot.slane %v8500, 6
      %v8552 = vsel %vm893, %v8550, %v8551
      %v8553 = vrot.slane %v8501, 6
      %v8554 = vrot.slane %v8553, 4
      %v8555 = vrot.slane %v8502, 6
      %v8556 = vsel %vm893, %v8554, %v8555
      %v8557 = vrot.slane %v8555, 4
      %v8558 = vrot.slane %v8503, 6
      %v8559 = vsel %vm893, %v8557, %v8558
      %v8560 = vrot.slane %v8504, 6
      %v8561 = vrot.slane %v8560, 4
      %v8562 = vrot.slane %v8505, 6
      %v8563 = vsel %vm893, %v8561, %v8562
      %v8564 = vrot.slane %v8562, 4
      %v8565 = vrot.slane %v8506, 6
      %v8566 = vsel %vm893, %v8564, %v8565
      %v8567 = vrot.slane %v8507, 6
      %v8568 = vrot.slane %v8567, 4
      %v8569 = vrot.slane %v8508, 6
      %v8570 = vsel %vm893, %v8568, %v8569
      %v8571 = vrot.slane %v8569, 4
      %v8572 = vrot.slane %v8509, 6
      %v8573 = vsel %vm893, %v8571, %v8572
      %v8574 = vrot.slane %v8510, 6
      %v8575 = vrot.slane %v8574, 4
      %v8576 = vrot.slane %v8511, 6
      %v8577 = vsel %vm893, %v8575, %v8576
      %v8578 = vrot.slane %v8576, 4
      %v8579 = vrot.slane %v8512, 6
      %v8580 = vsel %vm893, %v8578, %v8579
      %v8581 = vrot.slane %v8513, 6
      %v8582 = vrot.slane %v8581, 4
      %v8583 = vrot.slane %v8514, 6
      %v8584 = vsel %vm893, %v8582, %v8583
      %v8585 = vrot.slane %v8583, 4
      %v8586 = vrot.slane %v8515, 6
      %v8587 = vsel %vm893, %v8585, %v8586
      %v8588 = vrot.slane %v8516, 6
      %v8589 = vrot.slane %v8588, 4
      %v8590 = vrot.slane %v8517, 6
      %v8591 = vsel %vm893, %v8589, %v8590
      %v8592 = vrot.slane %v8590, 4
      %v8593 = vrot.slane %v8518, 6
      %v8594 = vsel %vm893, %v8592, %v8593
      %v8595 = vrot.slane %v8519, 6
      %v8596 = vrot.slane %v8595, 4
      %v8597 = vrot.slane %v8520, 6
      %v8598 = vsel %vm893, %v8596, %v8597
      %v8599 = vrot.slane %v8597, 4
      %v8600 = vrot.slane %v8521, 6
      %v8601 = vsel %vm893, %v8599, %v8600
      %s8602 = scalar_lea.vmem %s4, 1664
      %v8603 = vld [vmem:[%s8602] sm:$0xf]
      %v8604 = vld [vmem:[%s8602 + $0x4] sm:$0xf]
      %v8605 = vld [vmem:[%s8602 + $0x8] sm:$0xf]
      %v8606 = vld [vmem:[%s8602 + $0xc] sm:$0xf]
      %v8607 = vld [vmem:[%s8602 + $0x10] sm:$0xf]
      %v8608 = vld [vmem:[%s8602 + $0x14] sm:$0xf]
      %v8609 = vld [vmem:[%s8602 + $0x18] sm:$0xf]
      %v8610 = vld [vmem:[%s8602 + $0x1c] sm:$0xf]
      %v8611 = vld [vmem:[%s8602 + $0x20] sm:$0xf]
      %v8612 = vld [vmem:[%s8602 + $0x24] sm:$0xf]
      %v8613 = vld [vmem:[%s8602 + $0x28] sm:$0xf]
      %v8614 = vld [vmem:[%s8602 + $0x2c] sm:$0xf]
      %v8615 = vld [vmem:[%s8602 + $0x30] sm:$0xf]
      %v8616 = vld [vmem:[%s8602 + $0x34] sm:$0xf]
      %v8617 = vld [vmem:[%s8602 + $0x38] sm:$0xf]
      %v8618 = vld [vmem:[%s8602 + $0x3c] sm:$0xf]
      %v8619 = vunpack.c.l.b16 %v8549
      %v8620 = vunpack.c.l.b16 %v8552
      %v8621 = vunpack.c.l.b16 %v8556
      %v8622 = vunpack.c.l.b16 %v8559
      %v8623 = vunpack.c.l.b16 %v8563
      %v8624 = vunpack.c.l.b16 %v8566
      %v8625 = vunpack.c.l.b16 %v8570
      %v8626 = vunpack.c.l.b16 %v8573
      %v8627 = vunpack.c.l.b16 %v8577
      %v8628 = vunpack.c.l.b16 %v8580
      %v8629 = vunpack.c.l.b16 %v8584
      %v8630 = vunpack.c.l.b16 %v8587
      %v8631 = vunpack.c.l.b16 %v8591
      %v8632 = vunpack.c.l.b16 %v8594
      %v8633 = vunpack.c.l.b16 %v8598
      %v8634 = vunpack.c.l.b16 %v8601
      %v8635 = vpack.c.b16 %v8620, %v8619
      %v8636 = vpack.c.b16 %v8622, %v8621
      %v8637 = vpack.c.b16 %v8624, %v8623
      %v8638 = vpack.c.b16 %v8626, %v8625
      %v8639 = vpack.c.b16 %v8628, %v8627
      %v8640 = vpack.c.b16 %v8630, %v8629
      %v8641 = vpack.c.b16 %v8632, %v8631
      %v8642 = vpack.c.b16 %v8634, %v8633
      %v8667 = vunpack.c.l.b16 %v8603
      %v8668 = vunpack.c.l.b16 %v8604
      %v8669 = vunpack.c.l.b16 %v8605
      %v8670 = vunpack.c.l.b16 %v8606
      %v8671 = vunpack.c.l.b16 %v8607
      %v8672 = vunpack.c.l.b16 %v8608
      %v8673 = vunpack.c.l.b16 %v8609
      %v8674 = vunpack.c.l.b16 %v8610
      %v8675 = vunpack.c.l.b16 %v8611
      %v8676 = vunpack.c.l.b16 %v8612
      %v8677 = vunpack.c.l.b16 %v8613
      %v8678 = vunpack.c.l.b16 %v8614
      %v8679 = vunpack.c.l.b16 %v8615
      %v8680 = vunpack.c.l.b16 %v8616
      %v8681 = vunpack.c.l.b16 %v8617
      %v8682 = vunpack.c.l.b16 %v8618
      %v8683 = vpack.c.b16 %v8668, %v8667
      %v8684 = vpack.c.b16 %v8670, %v8669
      %v8685 = vpack.c.b16 %v8672, %v8671
      %v8686 = vpack.c.b16 %v8674, %v8673
      %v8687 = vpack.c.b16 %v8676, %v8675
      %v8688 = vpack.c.b16 %v8678, %v8677
      %v8689 = vpack.c.b16 %v8680, %v8679
      %v8690 = vpack.c.b16 %v8682, %v8681
      %8699 = vmatprep.subr.bf16.mxu0 0
      %8700 = vmatpush1.bf16.msra.mxu0 %v8683
      %8701 = vmatprep.subr.bf16.mxu0 0
      %8702 = vmatpush1.bf16.msra.mxu0 %v8684
      %8703 = vmatprep.subr.bf16.mxu0 0
      %8704 = vmatpush1.bf16.msra.mxu0 %v8685
      %8705 = vmatprep.subr.bf16.mxu0 0
      %8706 = vmatpush1.bf16.msra.mxu0 %v8686
      %8707 = vmatprep.subr.bf16.mxu0 0
      %8708 = vmatpush1.bf16.msra.mxu0 %v8687
      %8709 = vmatprep.subr.bf16.mxu0 0
      %8710 = vmatpush1.bf16.msra.mxu0 %v8688
      %8711 = vmatprep.subr.bf16.mxu0 0
      %8712 = vmatpush1.bf16.msra.mxu0 %v8689
      %8713 = vmatprep.subr.bf16.mxu0 0
      %8714 = vmatpush1.bf16.msra.mxu0 %v8690
      %8715 = vmatprep.subr.bf16.mxu0 0
      %8716 = vmatpush1.bf16.msra.mxu0 0
      %8717 = vmatprep.subr.bf16.mxu0 0
      %8718 = vmatpush1.bf16.msra.mxu0 0
      %8719 = vmatprep.subr.bf16.mxu0 0
      %8720 = vmatpush1.bf16.msra.mxu0 0
      %8721 = vmatprep.subr.bf16.mxu0 0
      %8722 = vmatpush1.bf16.msra.mxu0 0
      %8723 = vmatprep.subr.bf16.mxu0 0
      %8724 = vmatpush1.bf16.msra.mxu0 0
      %8725 = vmatprep.subr.bf16.mxu0 0
      %8726 = vmatpush1.bf16.msra.mxu0 0
      %8727 = vmatprep.subr.bf16.mxu0 0
      %8728 = vmatpush1.bf16.msra.mxu0 0
      %8729 = vmatprep.subr.bf16.mxu0 0
      %8730 = vmatpush1.bf16.msra.mxu0 0
      %8731 = vmatprep.mubr.bf16.mxu0 0
      %8732 = vmatmul.mubr.bf16.gmra.mrb[0].mxu0 %v8635
      %v8733 = vpop.f32.mrb[0].mxu0
      %v8734 = vadd.f32 0.0, %v8733
      %v8735 = vpop.f32.mrb[0].mxu0
      %v8736 = vpop.f32.mrb[0].mxu0
      %v8737 = vadd.f32 0.0, %v8736
      %v8738 = vpop.f32.mrb[0].mxu0
      %8739 = vmatprep.mubr.bf16.mxu0 0
      %8740 = vmatmul.mubr.bf16.gmra.mrb[0].mxu0 %v8636
      %v8741 = vpop.f32.mrb[0].mxu0
      %v8742 = vadd.f32 0.0, %v8741
      %v8743 = vpop.f32.mrb[0].mxu0
      %v8744 = vpop.f32.mrb[0].mxu0
      %v8745 = vadd.f32 0.0, %v8744
      %v8746 = vpop.f32.mrb[0].mxu0
      %8747 = vmatprep.mubr.bf16.mxu0 0
      %8748 = vmatmul.mubr.bf16.gmra.mrb[0].mxu0 %v8637
      %v8749 = vpop.f32.mrb[0].mxu0
      %v8750 = vadd.f32 0.0, %v8749
      %v8751 = vpop.f32.mrb[0].mxu0
      %v8752 = vpop.f32.mrb[0].mxu0
      %v8753 = vadd.f32 0.0, %v8752
      %v8754 = vpop.f32.mrb[0].mxu0
      %8755 = vmatprep.mubr.bf16.mxu0 0
      %8756 = vmatmul.mubr.bf16.gmra.mrb[0].mxu0 %v8638
      %v8757 = vpop.f32.mrb[0].mxu0
      %v8758 = vadd.f32 0.0, %v8757
      %v8759 = vpop.f32.mrb[0].mxu0
      %v8760 = vpop.f32.mrb[0].mxu0
      %v8761 = vadd.f32 0.0, %v8760
      %v8762 = vpop.f32.mrb[0].mxu0
      %8763 = vmatprep.mubr.bf16.mxu0 0
      %8764 = vmatmul.mubr.bf16.gmra.mrb[0].mxu0 %v8639
      %v8765 = vpop.f32.mrb[0].mxu0
      %v8766 = vadd.f32 0.0, %v8765
      %v8767 = vpop.f32.mrb[0].mxu0
      %v8768 = vpop.f32.mrb[0].mxu0
      %v8769 = vadd.f32 0.0, %v8768
      %v8770 = vpop.f32.mrb[0].mxu0
      %8771 = vmatprep.mubr.bf16.mxu0 0
      %8772 = vmatmul.mubr.bf16.gmra.mrb[0].mxu0 %v8640
      %v8773 = vpop.f32.mrb[0].mxu0
      %v8774 = vadd.f32 0.0, %v8773
      %v8775 = vpop.f32.mrb[0].mxu0
      %v8776 = vpop.f32.mrb[0].mxu0
      %v8777 = vadd.f32 0.0, %v8776
      %v8778 = vpop.f32.mrb[0].mxu0
      %8779 = vmatprep.mubr.bf16.mxu0 0
      %8780 = vmatmul.mubr.bf16.gmra.mrb[0].mxu0 %v8641
      %v8781 = vpop.f32.mrb[0].mxu0
      %v8782 = vadd.f32 0.0, %v8781
      %v8783 = vpop.f32.mrb[0].mxu0
      %v8784 = vpop.f32.mrb[0].mxu0
      %v8785 = vadd.f32 0.0, %v8784
      %v8786 = vpop.f32.mrb[0].mxu0
      %8787 = vmatprep.mubr.bf16.mxu0 0
      %8788 = vmatmul.mubr.bf16.gmra.mrb[0].mxu0 %v8642
      %v8789 = vpop.f32.mrb[0].mxu0
      %v8790 = vadd.f32 0.0, %v8789
      %v8791 = vpop.f32.mrb[0].mxu0
      %v8792 = vpop.f32.mrb[0].mxu0
      %v8793 = vadd.f32 0.0, %v8792
      %v8794 = vpop.f32.mrb[0].mxu0
      %8795 = vdwg.mxu0
      %v8796 = vadd.f32 %v8482, %v8734
      %v8797 = vadd.f32 %v8483, %v8737
      %v8798 = vadd.f32 %v8484, %v8742
      %v8799 = vadd.f32 %v8485, %v8745
      %v8800 = vadd.f32 %v8486, %v8750
      %v8801 = vadd.f32 %v8487, %v8753
      %v8802 = vadd.f32 %v8488, %v8758
      %v8803 = vadd.f32 %v8489, %v8761
      %v8804 = vadd.f32 %v8490, %v8766
      %v8805 = vadd.f32 %v8491, %v8769
      %v8806 = vadd.f32 %v8492, %v8774
      %v8807 = vadd.f32 %v8493, %v8777
      %v8808 = vadd.f32 %v8494, %v8782
      %v8809 = vadd.f32 %v8495, %v8785
      %v8810 = vadd.f32 %v8496, %v8790
      %v8811 = vadd.f32 %v8497, %v8793
      %s8812 = scalar_lea.vmem %s5, 2
      %v8813 = vld [vmem:[%s8812] sm:$0x1]
      %v8815 = vlaneseq
      %v8816 = vshrl.u32 %v8815, 7
      %v8817 = vsub.s32 0, %v8816
      %v8818 = vrot.slane %v8813, %v8817
      %v8820 = vadd.f32 %v8796, %v8818
      %v8821 = vadd.f32 %v8797, %v8818
      %v8822 = vadd.f32 %v8798, %v8818
      %v8823 = vadd.f32 %v8799, %v8818
      %v8824 = vadd.f32 %v8800, %v8818
      %v8825 = vadd.f32 %v8801, %v8818
      %v8826 = vadd.f32 %v8802, %v8818
      %v8827 = vadd.f32 %v8803, %v8818
      %v8828 = vadd.f32 %v8804, %v8818
      %v8829 = vadd.f32 %v8805, %v8818
      %v8830 = vadd.f32 %v8806, %v8818
      %v8831 = vadd.f32 %v8807, %v8818
      %v8832 = vadd.f32 %v8808, %v8818
      %v8833 = vadd.f32 %v8809, %v8818
      %v8834 = vadd.f32 %v8810, %v8818
      %v8835 = vadd.f32 %v8811, %v8818
      %v8836 = vmax.f32 %v8820, 0.0
      %v8837 = vmax.f32 %v8821, 0.0
      %v8838 = vmax.f32 %v8822, 0.0
      %v8839 = vmax.f32 %v8823, 0.0
      %v8840 = vmax.f32 %v8824, 0.0
      %v8841 = vmax.f32 %v8825, 0.0
      %v8842 = vmax.f32 %v8826, 0.0
      %v8843 = vmax.f32 %v8827, 0.0
      %v8844 = vmax.f32 %v8828, 0.0
      %v8845 = vmax.f32 %v8829, 0.0
      %v8846 = vmax.f32 %v8830, 0.0
      %v8847 = vmax.f32 %v8831, 0.0
      %v8848 = vmax.f32 %v8832, 0.0
      %v8849 = vmax.f32 %v8833, 0.0
      %v8850 = vmax.f32 %v8834, 0.0
      %v8851 = vmax.f32 %v8835, 0.0
      %v8852 = vpack.c.bf16 %v8837, %v8836
      %v8853 = vpack.c.bf16 %v8839, %v8838
      %v8854 = vpack.c.bf16 %v8841, %v8840
      %v8855 = vpack.c.bf16 %v8843, %v8842
      %v8856 = vpack.c.bf16 %v8845, %v8844
      %v8857 = vpack.c.bf16 %v8847, %v8846
      %v8858 = vpack.c.bf16 %v8849, %v8848
      %v8859 = vpack.c.bf16 %v8851, %v8850
      %s8860 = scalar_lea.vmem %s6, 192
      %v8861 = vld [vmem:[%s8860] sm:$0xf]
      %v8862 = vld [vmem:[%s8860 + $0x4] sm:$0xf]
      %v8863 = vld [vmem:[%s8860 + $0x8] sm:$0xf]
      %v8864 = vld [vmem:[%s8860 + $0xc] sm:$0xf]
      %v8865 = vld [vmem:[%s8860 + $0x10] sm:$0xf]
      %v8866 = vld [vmem:[%s8860 + $0x14] sm:$0xf]
      %v8867 = vld [vmem:[%s8860 + $0x18] sm:$0xf]
      %v8868 = vld [vmem:[%s8860 + $0x1c] sm:$0xf]
      %v8869 = vld [vmem:[%s8860 + $0x20] sm:$0xf]
      %v8870 = vld [vmem:[%s8860 + $0x24] sm:$0xf]
      %v8871 = vld [vmem:[%s8860 + $0x28] sm:$0xf]
      %v8872 = vld [vmem:[%s8860 + $0x2c] sm:$0xf]
      %v8873 = vld [vmem:[%s8860 + $0x30] sm:$0xf]
      %v8874 = vld [vmem:[%s8860 + $0x34] sm:$0xf]
      %v8875 = vld [vmem:[%s8860 + $0x38] sm:$0xf]
      %v8876 = vld [vmem:[%s8860 + $0x3c] sm:$0xf]
      %v8893 = vunpack.c.l.b16 %v8861
      %v8894 = vunpack.c.l.b16 %v8862
      %v8895 = vunpack.c.l.b16 %v8863
      %v8896 = vunpack.c.l.b16 %v8864
      %v8897 = vunpack.c.l.b16 %v8865
      %v8898 = vunpack.c.l.b16 %v8866
      %v8899 = vunpack.c.l.b16 %v8867
      %v8900 = vunpack.c.l.b16 %v8868
      %v8901 = vunpack.c.l.b16 %v8869
      %v8902 = vunpack.c.l.b16 %v8870
      %v8903 = vunpack.c.l.b16 %v8871
      %v8904 = vunpack.c.l.b16 %v8872
      %v8905 = vunpack.c.l.b16 %v8873
      %v8906 = vunpack.c.l.b16 %v8874
      %v8907 = vunpack.c.l.b16 %v8875
      %v8908 = vunpack.c.l.b16 %v8876
      %v8909 = vpack.c.b16 %v8894, %v8893
      %v8910 = vpack.c.b16 %v8896, %v8895
      %v8911 = vpack.c.b16 %v8898, %v8897
      %v8912 = vpack.c.b16 %v8900, %v8899
      %v8913 = vpack.c.b16 %v8902, %v8901
      %v8914 = vpack.c.b16 %v8904, %v8903
      %v8915 = vpack.c.b16 %v8906, %v8905
      %v8916 = vpack.c.b16 %v8908, %v8907
      %8925 = vmatprep.subr.bf16.mxu0 0
      %8926 = vmatpush1.bf16.msra.mxu0 %v8909
      %8927 = vmatprep.subr.bf16.mxu0 0
      %8928 = vmatpush1.bf16.msra.mxu0 %v8910
      %8929 = vmatprep.subr.bf16.mxu0 0
      %8930 = vmatpush1.bf16.msra.mxu0 %v8911
      %8931 = vmatprep.subr.bf16.mxu0 0
      %8932 = vmatpush1.bf16.msra.mxu0 %v8912
      %8933 = vmatprep.subr.bf16.mxu0 0
      %8934 = vmatpush1.bf16.msra.mxu0 %v8913
      %8935 = vmatprep.subr.bf16.mxu0 0
      %8936 = vmatpush1.bf16.msra.mxu0 %v8914
      %8937 = vmatprep.subr.bf16.mxu0 0
      %8938 = vmatpush1.bf16.msra.mxu0 %v8915
      %8939 = vmatprep.subr.bf16.mxu0 0
      %8940 = vmatpush1.bf16.msra.mxu0 %v8916
      %8941 = vmatprep.subr.bf16.mxu0 0
      %8942 = vmatpush1.bf16.msra.mxu0 0
      %8943 = vmatprep.subr.bf16.mxu0 0
      %8944 = vmatpush1.bf16.msra.mxu0 0
      %8945 = vmatprep.subr.bf16.mxu0 0
      %8946 = vmatpush1.bf16.msra.mxu0 0
      %8947 = vmatprep.subr.bf16.mxu0 0
      %8948 = vmatpush1.bf16.msra.mxu0 0
      %8949 = vmatprep.subr.bf16.mxu0 0
      %8950 = vmatpush1.bf16.msra.mxu0 0
      %8951 = vmatprep.subr.bf16.mxu0 0
      %8952 = vmatpush1.bf16.msra.mxu0 0
      %8953 = vmatprep.subr.bf16.mxu0 0
      %8954 = vmatpush1.bf16.msra.mxu0 0
      %8955 = vmatprep.subr.bf16.mxu0 0
      %8956 = vmatpush1.bf16.msra.mxu0 0
      %8957 = vmatprep.mubr.bf16.mxu0 0
      %8958 = vmatmul.mubr.bf16.gmra.mrb[0].mxu0 %v8852
      %v8959 = vpop.f32.mrb[0].mxu0
      %v8960 = vadd.f32 0.0, %v8959
      %v8961 = vpop.f32.mrb[0].mxu0
      %v8962 = vpop.f32.mrb[0].mxu0
      %v8963 = vadd.f32 0.0, %v8962
      %v8964 = vpop.f32.mrb[0].mxu0
      %8965 = vmatprep.mubr.bf16.mxu0 0
      %8966 = vmatmul.mubr.bf16.gmra.mrb[0].mxu0 %v8853
      %v8967 = vpop.f32.mrb[0].mxu0
      %v8968 = vadd.f32 0.0, %v8967
      %v8969 = vpop.f32.mrb[0].mxu0
      %v8970 = vpop.f32.mrb[0].mxu0
      %v8971 = vadd.f32 0.0, %v8970
      %v8972 = vpop.f32.mrb[0].mxu0
      %8973 = vmatprep.mubr.bf16.mxu0 0
      %8974 = vmatmul.mubr.bf16.gmra.mrb[0].mxu0 %v8854
      %v8975 = vpop.f32.mrb[0].mxu0
      %v8976 = vadd.f32 0.0, %v8975
      %v8977 = vpop.f32.mrb[0].mxu0
      %v8978 = vpop.f32.mrb[0].mxu0
      %v8979 = vadd.f32 0.0, %v8978
      %v8980 = vpop.f32.mrb[0].mxu0
      %8981 = vmatprep.mubr.bf16.mxu0 0
      %8982 = vmatmul.mubr.bf16.gmra.mrb[0].mxu0 %v8855
      %v8983 = vpop.f32.mrb[0].mxu0
      %v8984 = vadd.f32 0.0, %v8983
      %v8985 = vpop.f32.mrb[0].mxu0
      %v8986 = vpop.f32.mrb[0].mxu0
      %v8987 = vadd.f32 0.0, %v8986
      %v8988 = vpop.f32.mrb[0].mxu0
      %8989 = vmatprep.mubr.bf16.mxu0 0
      %8990 = vmatmul.mubr.bf16.gmra.mrb[0].mxu0 %v8856
      %v8991 = vpop.f32.mrb[0].mxu0
      %v8992 = vadd.f32 0.0, %v8991
      %v8993 = vpop.f32.mrb[0].mxu0
      %v8994 = vpop.f32.mrb[0].mxu0
      %v8995 = vadd.f32 0.0, %v8994
      %v8996 = vpop.f32.mrb[0].mxu0
      %8997 = vmatprep.mubr.bf16.mxu0 0
      %8998 = vmatmul.mubr.bf16.gmra.mrb[0].mxu0 %v8857
      %v8999 = vpop.f32.mrb[0].mxu0
      %v9000 = vadd.f32 0.0, %v8999
      %v9001 = vpop.f32.mrb[0].mxu0
      %v9002 = vpop.f32.mrb[0].mxu0
      %v9003 = vadd.f32 0.0, %v9002
      %v9004 = vpop.f32.mrb[0].mxu0
      %9005 = vmatprep.mubr.bf16.mxu0 0
      %9006 = vmatmul.mubr.bf16.gmra.mrb[0].mxu0 %v8858
      %v9007 = vpop.f32.mrb[0].mxu0
      %v9008 = vadd.f32 0.0, %v9007
      %v9009 = vpop.f32.mrb[0].mxu0
      %v9010 = vpop.f32.mrb[0].mxu0
      %v9011 = vadd.f32 0.0, %v9010
      %v9012 = vpop.f32.mrb[0].mxu0
      %9013 = vmatprep.mubr.bf16.mxu0 0
      %9014 = vmatmul.mubr.bf16.gmra.mrb[0].mxu0 %v8859
      %v9015 = vpop.f32.mrb[0].mxu0
      %v9016 = vadd.f32 0.0, %v9015
      %v9017 = vpop.f32.mrb[0].mxu0
      %v9018 = vpop.f32.mrb[0].mxu0
      %v9019 = vadd.f32 0.0, %v9018
      %v9020 = vpop.f32.mrb[0].mxu0
      %9021 = vdwg.mxu0
      %v9022 = vadd.f32 %v6347, %v8960
      %v9023 = vadd.f32 %v6348, %v8963
      %v9024 = vadd.f32 %v6349, %v8968
      %v9025 = vadd.f32 %v6350, %v8971
      %v9026 = vadd.f32 %v6351, %v8976
      %v9027 = vadd.f32 %v6352, %v8979
      %v9028 = vadd.f32 %v6353, %v8984
      %v9029 = vadd.f32 %v6354, %v8987
      %v9030 = vadd.f32 %v6355, %v8992
      %v9031 = vadd.f32 %v6356, %v8995
      %v9032 = vadd.f32 %v6357, %v9000
      %v9033 = vadd.f32 %v6358, %v9003
      %v9034 = vadd.f32 %v6359, %v9008
      %v9035 = vadd.f32 %v6360, %v9011
      %v9036 = vadd.f32 %v6361, %v9016
      %v9037 = vadd.f32 %v6362, %v9019
      %9038 = vst [vmem:[%s316] sm:$0xff] %v9022
      %9039 = vst [vmem:[%s316 + $0x8] sm:$0xff] %v9023
      %9040 = vst [vmem:[%s316 + $0x10] sm:$0xff] %v9024
      %9041 = vst [vmem:[%s316 + $0x18] sm:$0xff] %v9025
      %9042 = vst [vmem:[%s316 + $0x20] sm:$0xff] %v9026
      %9043 = vst [vmem:[%s316 + $0x28] sm:$0xff] %v9027
      %9044 = vst [vmem:[%s316 + $0x30] sm:$0xff] %v9028
      %9045 = vst [vmem:[%s316 + $0x38] sm:$0xff] %v9029
      %9046 = vst [vmem:[%s316 + $0x40] sm:$0xff] %v9030
      %9047 = vst [vmem:[%s316 + $0x48] sm:$0xff] %v9031
      %9048 = vst [vmem:[%s316 + $0x50] sm:$0xff] %v9032
      %9049 = vst [vmem:[%s316 + $0x58] sm:$0xff] %v9033
      %9050 = vst [vmem:[%s316 + $0x60] sm:$0xff] %v9034
      %9051 = vst [vmem:[%s316 + $0x68] sm:$0xff] %v9035
      %9052 = vst [vmem:[%s316 + $0x70] sm:$0xff] %v9036
      %9053 = vst [vmem:[%s316 + $0x78] sm:$0xff] %v9037
      %s9054 = smul.u32 8, %s23
      %p9055 = scmp.lt.s32.totalorder %s22, 1
      %s9056 = scalar_select %p9055, %s22, 1
      %p9057 = scmp.lt.s32.totalorder %s9054, 15
      %s9058 = scalar_select %p9057, %s9054, 15
      %s9059 = smul.addr %s9058, 2
      %s9060 = smul.addr %s9056, 32
      %s9061 = sadd.s32 %s9059, %s9060
      %s9062 = smul.addr %s9061, 8
      %s9063 = scalar_lea.vmem %s7, %s9062
      // Predicated region
      $region49: #{aspp_forward.1} parent=47 // pred_check
        %p9064 = pneg %p207
      $region50: #{aspp_forward.1} parent=47 // pred_check_branch
        %9066 = sbr.rel (%p9064) target = $region52
      $region51: #{aspp_forward.1} parent=47 // pred_region
        %s9067 = smul.u32 8, %s23
      $region52: #{aspp_forward.1} parent=47 // pred_fallthru
        _
    $region48: #{aspp_forward.1} parent=5 // pred_fallthru
      _
    %p9068 = scmp.le.s32.totalorder 2, %s13
    // Predicated region
    $region53: #{aspp_forward.1} parent=5 // pred_check
      %p9069 = pneg %p9068
    $region54: #{aspp_forward.1} parent=5 // pred_check_branch
      %9071 = sbr.rel (%p9069) target = $region56
    $region55: #{aspp_forward.1} parent=5 // pred_region
      %s9072 = ssub.s32 %s13, 2
      // Predicated region
      $region57: #{aspp_forward.1} parent=55 // pred_check
        %p9073 = pneg %p213
      $region58: #{aspp_forward.1} parent=55 // pred_check_branch
        %9075 = sbr.rel (%p9073) target = $region60
      $region59: #{aspp_forward.1} parent=55 // pred_region
        %s9076 = smul.u32 8, %s25
        %p9077 = scmp.lt.s32.totalorder %s24, 1
        %s9078 = scalar_select %p9077, %s24, 1
        %p9079 = scmp.lt.s32.totalorder %s9076, 15
        %s9080 = scalar_select %p9079, %s9076, 15
        %s9081 = smul.addr %s9080, 2
        %s9082 = smul.addr %s9078, 32
        %s9083 = sadd.s32 %s9081, %s9082
        %s9084 = smul.addr %s9083, 8
        %s9085 = scalar_lea.vmem %s7, %s9084
      $region60: #{aspp_forward.1} parent=55 // pred_fallthru
        _
    $region56: #{aspp_forward.1} parent=5 // pred_fallthru
      _
  $region6: #{aspp_forward.1} parent=0 // loop_footer
    %s17 = sadd.s32 1, %s13
  $region7: #{aspp_forward.1} parent=0 // loop_footer_branch
    %12 = sbr.rel target = $region3
  $region8: #{aspp_forward.1} parent=0 // loop_exit
    _

</llo_original>
